<compile_context>
chip_gen: v6e
topology: v6e:2x2x1
jax: 0.10.0
libtpu: 0.0.40
codegen_flags: <defaults>
</compile_context>

<pallas_src>
import functools

import numpy as np

import jax
import jax.numpy as jnp
from jax import lax
from jax.experimental import pallas as pl
from jax.experimental.pallas import tpu as pltpu

BN_EPS = 1e-5


def _largest_divisor_leq(n, cap):
    cap = max(1, min(n, cap))
    for d in range(cap, 0, -1):
        if n % d == 0:
            return d
    return 1


# -----------------------------------------------------------------------------
# Pallas kernels
# -----------------------------------------------------------------------------
def conv_stats_kernel(x_ref, t_ref, y_ref, ssum_ref, ssq_ref, *, stride, ho, tn):
    """Pass 1: 3x3 conv as 3 row-tap matmuls + cross-tile BN statistics.

    x_ref   : (P, TN, Hp, W*Cin)  bf16   H-padded (and H-phase-split if stride=2) input
    t_ref   : (3, W*Cin, Wo*Cout) bf16   width-unrolled Toeplitz weight (VMEM resident)
    y_ref   : (TN, Ho, Wo*Cout)   bf16   conv output tile (lane-dense)
    ssum_ref: (1, 1, Wo*Cout)     f32    resident per-(w,c) sum       (per core)
    ssq_ref : (1, 1, Wo*Cout)     f32    resident per-(w,c) sum of sq (per core)
    """
    @pl.when(pl.program_id(1) == 0)
    def _():
        ssum_ref[...] = jnp.zeros_like(ssum_ref)
        ssq_ref[...] = jnp.zeros_like(ssq_ref)

    lout = y_ref.shape[-1]
    psum = jnp.zeros((1, lout), jnp.float32)
    psq = jnp.zeros((1, lout), jnp.float32)
    for img in range(tn):
        acc = None
        for di in range(3):
            if stride == 1:
                ph, off = 0, di
            else:
                ph, off = di % 2, di // 2
            xs = x_ref[ph, img, off:off + ho, :]                  # (Ho, W*Cin) bf16
            part = jnp.dot(xs, t_ref[di], preferred_element_type=jnp.float32)
            acc = part if acc is None else acc + part
        y_ref[img] = acc.astype(y_ref.dtype)
        psum = psum + jnp.sum(acc, axis=0, keepdims=True)
        psq = psq + jnp.sum(acc * acc, axis=0, keepdims=True)
    ssum_ref[...] = ssum_ref[...] + psum[None]
    ssq_ref[...] = ssq_ref[...] + psq[None]


def bn_act_kernel(y_ref, a_ref, b_ref, o_ref):
    """Pass 2: y*scale + shift, ReLU.  scale/shift already folded per (w,c) lane."""
    y = y_ref[...].astype(jnp.float32)
    o_ref[...] = jnp.maximum(y * a_ref[...] + b_ref[...], 0.0).astype(o_ref.dtype)


def bn_res_act_kernel(y_ref, a_ref, b_ref, r_ref, o_ref):
    y = y_ref[...].astype(jnp.float32) * a_ref[...] + b_ref[...]
    y = y + r_ref[...].astype(jnp.float32)
    o_ref[...] = jnp.maximum(y, 0.0).astype(o_ref.dtype)


def head_kernel(x_ref, w_ref, b_ref, o_ref):
    """AdaptiveAvgPool2d(1) -> Flatten -> Linear, with the mean-pool folded into w.

    x_ref: (N, Ho, Wo*C) bf16, w_ref: (Wo*C, num_classes) f32 (pre-scaled by 1/(Ho*Wo)),
    b_ref: (1, num_classes) f32.
    """
    x = x_ref[...].astype(jnp.float32)
    pooled = jnp.sum(x, axis=1)                                   # (N, Wo*C)
    o_ref[...] = (jnp.dot(pooled, w_ref[...], preferred_element_type=jnp.float32)
                  + b_ref[...])


_VMEM_SPEC = pl.BlockSpec(memory_space=pltpu.MemorySpace.VMEM)


# -----------------------------------------------------------------------------
# Weight transform: unroll the 3x3 kernel over the width axis (incl. W stride and
# W zero-padding) into 3 row-tap matrices of shape (W*Cin, Wo*Cout).
# -----------------------------------------------------------------------------
def make_row_toeplitz(w9, width, stride):
    """w9: (3, 3, Cin, Cout) -> (3, width*Cin, Wo*Cout)."""
    _, _, cin, cout = w9.shape
    wo = (width - 1) // stride + 1
    jj = np.arange(wo)
    taps = []
    for di in range(3):
        t4 = jnp.zeros((width, cin, wo, cout), w9.dtype)
        for dj in range(3):
            src = jj * stride + dj - 1                 # unpadded input column index
            keep = (src >= 0) & (src < width)          # out-of-range == zero padding
            if not np.any(keep):
                continue
            t4 = t4.at[src[keep], :, jj[keep], :].add(w9[di, dj][None, :, :])
        taps.append(t4.reshape(width * cin, wo * cout))
    return jnp.stack(taps, axis=0)


# -----------------------------------------------------------------------------
# conv3x3 (pad=1, no bias) + training-mode BN + optional residual + ReLU
# -----------------------------------------------------------------------------
def conv_bn_relu(x, w9, gamma, beta, stride=1, residual=None):
    """x: (N, H, W, Cin) activation; w9: (3,3,Cin,Cout). Returns (N, Ho, Wo, Cout) bf16."""
    n, h, w, cin = x.shape
    cout = w9.shape[-1]
    assert stride in (1, 2) and (stride == 1 or h % 2 == 0)
    ho = (h - 1) // stride + 1
    wo = (w - 1) // stride + 1
    lin = w * cin
    lout = wo * cout

    # Fold (W, C) into the lane dim and H-pad on the host; W padding lives in the
    # Toeplitz weight, so there is no im2col / input amplification anywhere.
    xf = x.astype(jnp.bfloat16).reshape(n, h, lin)
    xf = jnp.pad(xf, ((0, 0), (1, 1), (0, 0)))
    if stride == 1:
        xph = xf[None]                                            # (1, N, H+2, Lin)
    else:
        xph = jnp.stack([xf[:, 0::2, :], xf[:, 1::2, :]], 0)      # (2, N, Ho+1, Lin)
    nph, _, hp, _ = xph.shape

    t = make_row_toeplitz(w9, w, stride).astype(jnp.bfloat16)     # (3, Lin, Lout)

    # ---- Pass 1: conv + per-(w,c) sum / sum-of-squares -----------------------
    tn = _largest_divisor_leq(n, 8)            # images per grid step
    tiles = n // tn
    ncs = 2 if tiles % 2 == 0 else 1           # v7x: shard batch tiles over 2 TCs
    tpc = tiles // ncs

    y, ssum, ssq = pl.pallas_call(
        functools.partial(conv_stats_kernel, stride=stride, ho=ho, tn=tn),
        grid_spec=pltpu.PrefetchScalarGridSpec(
            num_scalar_prefetch=0,
            grid=(ncs, tpc),
            in_specs=[
                pl.BlockSpec((nph, tn, hp, lin), lambda c, i: (0, c * tpc + i, 0, 0)),
                pl.BlockSpec((3, lin, lout), lambda c, i: (0, 0, 0)),   # resident weight
            ],
            out_specs=[
                pl.BlockSpec((tn, ho, lout), lambda c, i: (c * tpc + i, 0, 0)),
                pl.BlockSpec((1, 1, lout), lambda c, i: (c, 0, 0)),     # per-core sum
                pl.BlockSpec((1, 1, lout), lambda c, i: (c, 0, 0)),     # per-core sumsq
            ],
        ),
        out_shape=[
            jax.ShapeDtypeStruct((n, ho, lout), jnp.bfloat16),
            jax.ShapeDtypeStruct((ncs, 1, lout), jnp.float32),
            jax.ShapeDtypeStruct((ncs, 1, lout), jnp.float32),
        ],
        compiler_params=pltpu.CompilerParams(
            dimension_semantics=("parallel", "arbitrary"),
            vmem_limit_bytes=32 * 1024 * 1024),
    )(xph, t)

    # ---- Tiny glue: fold per-core/per-(w,c) stats to per-channel BN coeffs ---
    m = float(n * ho * wo)                       # true element count per channel
    sum_c = jnp.sum(ssum.reshape(ncs, wo, cout), axis=(0, 1))
    sq_c = jnp.sum(ssq.reshape(ncs, wo, cout), axis=(0, 1))
    mean = sum_c / m
    var = jnp.maximum(sq_c / m - mean * mean, 0.0)
    scale_c = gamma.astype(jnp.float32) * lax.rsqrt(var + BN_EPS)
    shift_c = beta.astype(jnp.float32) - mean * scale_c
    a_row = jnp.tile(scale_c, wo).reshape(1, 1, lout)
    b_row = jnp.tile(shift_c, wo).reshape(1, 1, lout)

    # ---- Pass 2: normalize (+ residual) + ReLU -------------------------------
    tn2 = _largest_divisor_leq(n, max(1, 1024 // ho))
    y_spec = pl.BlockSpec((tn2, ho, lout), lambda i: (i, 0, 0))
    vec_spec = pl.BlockSpec((1, 1, lout), lambda i: (0, 0, 0))
    if residual is None:
        kern = bn_act_kernel
        operands = (y, a_row, b_row)
        in_specs = [y_spec, vec_spec, vec_spec]
    else:
        r = residual.astype(jnp.bfloat16).reshape(n, ho, lout)    # bf16 residual read
        kern = bn_res_act_kernel
        operands = (y, a_row, b_row, r)
        in_specs = [y_spec, vec_spec, vec_spec, y_spec]

    out = pl.pallas_call(
        kern,
        grid_spec=pltpu.PrefetchScalarGridSpec(
            num_scalar_prefetch=0,
            grid=(n // tn2,),
            in_specs=in_specs,
            out_specs=pl.BlockSpec((tn2, ho, lout), lambda i: (i, 0, 0)),
        ),
        out_shape=jax.ShapeDtypeStruct((n, ho, lout), jnp.bfloat16),
        input_output_aliases={0: 0},             # reuse the conv_out HBM buffer
        compiler_params=pltpu.CompilerParams(
            dimension_semantics=("parallel",),
            vmem_limit_bytes=32 * 1024 * 1024),
    )(*operands)

    return out.reshape(n, ho, wo, cout)


# -----------------------------------------------------------------------------
# Model glue
# -----------------------------------------------------------------------------
def basic_block(x, blk):
    """CIFAR BasicBlock, option-'A' shortcut (strided subsample + zero channel pad)."""
    stride = blk["stride"]
    in_planes = blk["in_planes"]
    planes = blk["planes"]
    if stride != 1 or in_planes != planes:
        sc = x[:, ::stride, ::stride, :]
        padc = planes // 4
        sc = jnp.pad(sc, ((0, 0), (0, 0), (0, 0), (padc, padc)))
    else:
        sc = x
    h1 = conv_bn_relu(x, blk["w1"], blk["g1"], blk["b1"], stride=stride)
    return conv_bn_relu(h1, blk["w2"], blk["g2"], blk["b2"], stride=1, residual=sc)


def resnet_forward(x_nchw, params):
    x = jnp.transpose(x_nchw, (0, 2, 3, 1)).astype(jnp.float32)   # NCHW -> NHWC
    x = conv_bn_relu(x, params["conv1_w"], params["bn1_g"], params["bn1_b"], stride=1)
    for blk in params["blocks"]:
        x = basic_block(x, blk)
    n, ho, wo, c = x.shape
    x3 = x.reshape(n, ho, wo * c)
    num_classes = params["fc_w"].shape[-1]
    # Fold mean-pooling (over Ho rows and the Wo lane groups) into the FC weight.
    w_head = jnp.tile(params["fc_w"] / float(ho * wo), (wo, 1)).astype(jnp.float32)
    out = pl.pallas_call(
        head_kernel,
        out_shape=jax.ShapeDtypeStruct((n, num_classes), jnp.float32),
        in_specs=[_VMEM_SPEC] * 3,
        out_specs=_VMEM_SPEC,
    )(x3, w_head, params["fc_b"].reshape(1, -1))
    return out


# -----------------------------------------------------------------------------
# Deterministic parameters (kaiming-normal conv/linear weights, BN gamma=1/beta=0).
# -----------------------------------------------------------------------------
def make_params(key, num_blocks=(1, 1, 1), num_classes=10):
    keys = iter(jax.random.split(key, 128))

    def conv_w(cin, cout):
        std = (2.0 / (cin * 9)) ** 0.5
        return jax.random.normal(next(keys), (3, 3, cin, cout), jnp.float32) * std

    params = {
        "conv1_w": conv_w(3, 16),
        "bn1_g": jnp.ones((16,), jnp.float32),
        "bn1_b": jnp.zeros((16,), jnp.float32),
        "blocks": [],
    }
    in_planes = 16
    for planes, nb, stride in [(16, num_blocks[0], 1),
                               (32, num_blocks[1], 2),
                               (64, num_blocks[2], 2)]:
        strides = [stride] + [1] * (nb - 1)
        for s in strides:
            params["blocks"].append({
                "w1": conv_w(in_planes, planes),
                "g1": jnp.ones((planes,), jnp.float32),
                "b1": jnp.zeros((planes,), jnp.float32),
                "w2": conv_w(planes, planes),
                "g2": jnp.ones((planes,), jnp.float32),
                "b2": jnp.zeros((planes,), jnp.float32),
                "stride": s,
                "in_planes": in_planes,
                "planes": planes,
            })
            in_planes = planes
    std_fc = (2.0 / 64) ** 0.5
    params["fc_w"] = jax.random.normal(next(keys), (64, num_classes), jnp.float32) * std_fc
    bound = 1.0 / (64 ** 0.5)
    params["fc_b"] = jax.random.uniform(
        next(keys), (num_classes,), jnp.float32, minval=-bound, maxval=bound)
    return params


if __name__ == "__main__":
    key = jax.random.PRNGKey(0)
    pkey, xkey = jax.random.split(key)
    params = make_params(pkey, num_blocks=(1, 1, 1), num_classes=10)
    # Small CIFAR-like input: batch=2, 3 channels, 16x16 spatial (NCHW like PyTorch).
    x = jax.random.normal(xkey, (2, 3, 16, 16), jnp.float32)
    fwd = jax.jit(lambda inp: resnet_forward(inp, params))
    out = jax.block_until_ready(fwd(x))
    assert out.shape == (2, 10) and out.dtype == jnp.float32
    print("KERNEL_OK")
</pallas_src>

<mosaic_0001>
module attributes {stable_mosaic.version = 11 : i64} {
  func.func @conv_stats_kernel(%arg0: i32, %arg1: i32, %arg2: memref<1x2x18x48xbf16, #tpu.memory_space<vmem>>, %arg3: memref<3x48x256xbf16, #tpu.memory_space<vmem>>, %arg4: memref<2x16x256xbf16, #tpu.memory_space<vmem>>, %arg5: memref<1x1x256xf32, #tpu.memory_space<vmem>>, %arg6: memref<1x1x256xf32, #tpu.memory_space<vmem>>) attributes {dimension_semantics = [#tpu.dimension_semantics<parallel>, #tpu.dimension_semantics<arbitrary>], iteration_bounds = array<i64: 1, 1>, scalar_prefetch = 0 : i64, scratch_operands = 0 : i64, tpu.core_type = #tpu.core_type<tc>, window_params = [{transform_indices = @transform_0, window_bounds = array<i64: 1, 2, 18, 48>}, {pipeline_mode = #tpu.pipeline_mode<synchronous>, transform_indices = @transform_1, window_bounds = array<i64: 3, 48, 256>}, {transform_indices = @transform_2, window_bounds = array<i64: 2, 16, 256>}, {transform_indices = @transform_3, window_bounds = array<i64: 1, 1, 256>}, {transform_indices = @transform_4, window_bounds = array<i64: 1, 1, 256>}]} {
    %c0_i32 = arith.constant 0 : i32
    %0 = arith.cmpi eq, %arg1, %c0_i32 : i32
    %1 = arith.extui %0 : i1 to i32
    %c0_i32_0 = arith.constant 0 : i32
    %2 = arith.cmpi ne, %1, %c0_i32_0 : i32
    scf.if %2 {
      %cst_69 = arith.constant 0.000000e+00 : f32
      %69 = vector.broadcast %cst_69 : f32 to vector<1x1x256xf32>
      %c0_70 = arith.constant 0 : index
      %c0_71 = arith.constant 0 : index
      %c0_72 = arith.constant 0 : index
      %70 = vector.load %arg5[%c0_70, %c0_71, %c0_72] : memref<1x1x256xf32, #tpu.memory_space<vmem>>, vector<1x1x256xf32>
      tpu.vector_store %arg5[%c0_70, %c0_71, %c0_72], %69 {strides = array<i32>} : memref<1x1x256xf32, #tpu.memory_space<vmem>>, vector<1x1x256xf32>,
      %cst_73 = arith.constant 0.000000e+00 : f32
      %71 = vector.broadcast %cst_73 : f32 to vector<1x1x256xf32>
      %c0_74 = arith.constant 0 : index
      %c0_75 = arith.constant 0 : index
      %c0_76 = arith.constant 0 : index
      %72 = vector.load %arg6[%c0_74, %c0_75, %c0_76] : memref<1x1x256xf32, #tpu.memory_space<vmem>>, vector<1x1x256xf32>
      tpu.vector_store %arg6[%c0_74, %c0_75, %c0_76], %71 {strides = array<i32>} : memref<1x1x256xf32, #tpu.memory_space<vmem>>, vector<1x1x256xf32>,
    } else {
    }
    %cst = arith.constant 0.000000e+00 : f32
    %3 = vector.broadcast %cst : f32 to vector<1x256xf32>
    %cst_1 = arith.constant 0.000000e+00 : f32
    %4 = vector.broadcast %cst_1 : f32 to vector<1x256xf32>
    %c0 = arith.constant 0 : index
    %c0_2 = arith.constant 0 : index
    %c0_3 = arith.constant 0 : index
    %c0_4 = arith.constant 0 : index
    %5 = vector.load %arg2[%c0, %c0_2, %c0_3, %c0_4] : memref<1x2x18x48xbf16, #tpu.memory_space<vmem>>, vector<1x1x16x48xbf16>
    %6 = vector.shape_cast %5 : vector<1x1x16x48xbf16> to vector<16x48xbf16>
    %c0_5 = arith.constant 0 : index
    %c0_6 = arith.constant 0 : index
    %c0_7 = arith.constant 0 : index
    %7 = vector.load %arg3[%c0_5, %c0_6, %c0_7] : memref<3x48x256xbf16, #tpu.memory_space<vmem>>, vector<1x48x256xbf16>
    %8 = vector.shape_cast %7 : vector<1x48x256xbf16> to vector<48x256xbf16>
    %cst_8 = arith.constant dense<0.000000e+00> : vector<16x256xf32>
    %9 = tpu.matmul %6, %8, %cst_8 {dimension_numbers = #tpu.dot_dimension_numbers<[1], [0], [0], [1], [0, 0, 1, 1], [], []>} : vector<16x48xbf16>, vector<48x256xbf16>, vector<16x256xf32> -> vector<16x256xf32>
    %c0_9 = arith.constant 0 : index
    %c0_10 = arith.constant 0 : index
    %c1 = arith.constant 1 : index
    %c0_11 = arith.constant 0 : index
    %10 = vector.load %arg2[%c0_9, %c0_10, %c1, %c0_11] : memref<1x2x18x48xbf16, #tpu.memory_space<vmem>>, vector<1x1x16x48xbf16>
    %11 = vector.shape_cast %10 : vector<1x1x16x48xbf16> to vector<16x48xbf16>
    %c1_12 = arith.constant 1 : index
    %c0_13 = arith.constant 0 : index
    %c0_14 = arith.constant 0 : index
    %12 = vector.load %arg3[%c1_12, %c0_13, %c0_14] : memref<3x48x256xbf16, #tpu.memory_space<vmem>>, vector<1x48x256xbf16>
    %13 = vector.shape_cast %12 : vector<1x48x256xbf16> to vector<48x256xbf16>
    %cst_15 = arith.constant dense<0.000000e+00> : vector<16x256xf32>
    %14 = tpu.matmul %11, %13, %cst_15 {dimension_numbers = #tpu.dot_dimension_numbers<[1], [0], [0], [1], [0, 0, 1, 1], [], []>} : vector<16x48xbf16>, vector<48x256xbf16>, vector<16x256xf32> -> vector<16x256xf32>
    %15 = arith.addf %9, %14 : vector<16x256xf32>
    %c0_16 = arith.constant 0 : index
    %c0_17 = arith.constant 0 : index
    %c2 = arith.constant 2 : index
    %c0_18 = arith.constant 0 : index
    %16 = vector.load %arg2[%c0_16, %c0_17, %c2, %c0_18] : memref<1x2x18x48xbf16, #tpu.memory_space<vmem>>, vector<1x1x16x48xbf16>
    %17 = vector.shape_cast %16 : vector<1x1x16x48xbf16> to vector<16x48xbf16>
    %c2_19 = arith.constant 2 : index
    %c0_20 = arith.constant 0 : index
    %c0_21 = arith.constant 0 : index
    %18 = vector.load %arg3[%c2_19, %c0_20, %c0_21] : memref<3x48x256xbf16, #tpu.memory_space<vmem>>, vector<1x48x256xbf16>
    %19 = vector.shape_cast %18 : vector<1x48x256xbf16> to vector<48x256xbf16>
    %cst_22 = arith.constant dense<0.000000e+00> : vector<16x256xf32>
    %20 = tpu.matmul %17, %19, %cst_22 {dimension_numbers = #tpu.dot_dimension_numbers<[1], [0], [0], [1], [0, 0, 1, 1], [], []>} : vector<16x48xbf16>, vector<48x256xbf16>, vector<16x256xf32> -> vector<16x256xf32>
    %21 = arith.addf %15, %20 : vector<16x256xf32>
    %22 = arith.truncf %21 : vector<16x256xf32> to vector<16x256xbf16>
    %c0_23 = arith.constant 0 : index
    %c0_24 = arith.constant 0 : index
    %c0_25 = arith.constant 0 : index
    %23 = vector.load %arg4[%c0_23, %c0_24, %c0_25] : memref<2x16x256xbf16, #tpu.memory_space<vmem>>, vector<1x16x256xbf16>
    %24 = vector.shape_cast %23 : vector<1x16x256xbf16> to vector<16x256xbf16>
    %25 = vector.shape_cast %22 : vector<16x256xbf16> to vector<1x16x256xbf16>
    tpu.vector_store %arg4[%c0_23, %c0_24, %c0_25], %25 {strides = array<i32>} : memref<2x16x256xbf16, #tpu.memory_space<vmem>>, vector<1x16x256xbf16>,
    %cst_26 = arith.constant dense<0.000000e+00> : vector<256xf32>
    %26 = vector.multi_reduction <add>, %21, %cst_26 [0] : vector<16x256xf32> to vector<256xf32>
    %27 = vector.shape_cast %26 : vector<256xf32> to vector<1x256xf32>
    %28 = arith.addf %3, %27 : vector<1x256xf32>
    %29 = arith.mulf %21, %21 : vector<16x256xf32>
    %cst_27 = arith.constant dense<0.000000e+00> : vector<256xf32>
    %30 = vector.multi_reduction <add>, %29, %cst_27 [0] : vector<16x256xf32> to vector<256xf32>
    %31 = vector.shape_cast %30 : vector<256xf32> to vector<1x256xf32>
    %32 = arith.addf %4, %31 : vector<1x256xf32>
    %c0_28 = arith.constant 0 : index
    %c1_29 = arith.constant 1 : index
    %c0_30 = arith.constant 0 : index
    %c0_31 = arith.constant 0 : index
    %33 = vector.load %arg2[%c0_28, %c1_29, %c0_30, %c0_31] : memref<1x2x18x48xbf16, #tpu.memory_space<vmem>>, vector<1x1x16x48xbf16>
    %34 = vector.shape_cast %33 : vector<1x1x16x48xbf16> to vector<16x48xbf16>
    %c0_32 = arith.constant 0 : index
    %c0_33 = arith.constant 0 : index
    %c0_34 = arith.constant 0 : index
    %35 = vector.load %arg3[%c0_32, %c0_33, %c0_34] : memref<3x48x256xbf16, #tpu.memory_space<vmem>>, vector<1x48x256xbf16>
    %36 = vector.shape_cast %35 : vector<1x48x256xbf16> to vector<48x256xbf16>
    %cst_35 = arith.constant dense<0.000000e+00> : vector<16x256xf32>
    %37 = tpu.matmul %34, %36, %cst_35 {dimension_numbers = #tpu.dot_dimension_numbers<[1], [0], [0], [1], [0, 0, 1, 1], [], []>} : vector<16x48xbf16>, vector<48x256xbf16>, vector<16x256xf32> -> vector<16x256xf32>
    %c0_36 = arith.constant 0 : index
    %c1_37 = arith.constant 1 : index
    %c1_38 = arith.constant 1 : index
    %c0_39 = arith.constant 0 : index
    %38 = vector.load %arg2[%c0_36, %c1_37, %c1_38, %c0_39] : memref<1x2x18x48xbf16, #tpu.memory_space<vmem>>, vector<1x1x16x48xbf16>
    %39 = vector.shape_cast %38 : vector<1x1x16x48xbf16> to vector<16x48xbf16>
    %c1_40 = arith.constant 1 : index
    %c0_41 = arith.constant 0 : index
    %c0_42 = arith.constant 0 : index
    %40 = vector.load %arg3[%c1_40, %c0_41, %c0_42] : memref<3x48x256xbf16, #tpu.memory_space<vmem>>, vector<1x48x256xbf16>
    %41 = vector.shape_cast %40 : vector<1x48x256xbf16> to vector<48x256xbf16>
    %cst_43 = arith.constant dense<0.000000e+00> : vector<16x256xf32>
    %42 = tpu.matmul %39, %41, %cst_43 {dimension_numbers = #tpu.dot_dimension_numbers<[1], [0], [0], [1], [0, 0, 1, 1], [], []>} : vector<16x48xbf16>, vector<48x256xbf16>, vector<16x256xf32> -> vector<16x256xf32>
    %43 = arith.addf %37, %42 : vector<16x256xf32>
    %c0_44 = arith.constant 0 : index
    %c1_45 = arith.constant 1 : index
    %c2_46 = arith.constant 2 : index
    %c0_47 = arith.constant 0 : index
    %44 = vector.load %arg2[%c0_44, %c1_45, %c2_46, %c0_47] : memref<1x2x18x48xbf16, #tpu.memory_space<vmem>>, vector<1x1x16x48xbf16>
    %45 = vector.shape_cast %44 : vector<1x1x16x48xbf16> to vector<16x48xbf16>
    %c2_48 = arith.constant 2 : index
    %c0_49 = arith.constant 0 : index
    %c0_50 = arith.constant 0 : index
    %46 = vector.load %arg3[%c2_48, %c0_49, %c0_50] : memref<3x48x256xbf16, #tpu.memory_space<vmem>>, vector<1x48x256xbf16>
    %47 = vector.shape_cast %46 : vector<1x48x256xbf16> to vector<48x256xbf16>
    %cst_51 = arith.constant dense<0.000000e+00> : vector<16x256xf32>
    %48 = tpu.matmul %45, %47, %cst_51 {dimension_numbers = #tpu.dot_dimension_numbers<[1], [0], [0], [1], [0, 0, 1, 1], [], []>} : vector<16x48xbf16>, vector<48x256xbf16>, vector<16x256xf32> -> vector<16x256xf32>
    %49 = arith.addf %43, %48 : vector<16x256xf32>
    %50 = arith.truncf %49 : vector<16x256xf32> to vector<16x256xbf16>
    %c1_52 = arith.constant 1 : index
    %c0_53 = arith.constant 0 : index
    %c0_54 = arith.constant 0 : index
    %51 = vector.load %arg4[%c1_52, %c0_53, %c0_54] : memref<2x16x256xbf16, #tpu.memory_space<vmem>>, vector<1x16x256xbf16>
    %52 = vector.shape_cast %51 : vector<1x16x256xbf16> to vector<16x256xbf16>
    %53 = vector.shape_cast %50 : vector<16x256xbf16> to vector<1x16x256xbf16>
    tpu.vector_store %arg4[%c1_52, %c0_53, %c0_54], %53 {strides = array<i32>} : memref<2x16x256xbf16, #tpu.memory_space<vmem>>, vector<1x16x256xbf16>,
    %cst_55 = arith.constant dense<0.000000e+00> : vector<256xf32>
    %54 = vector.multi_reduction <add>, %49, %cst_55 [0] : vector<16x256xf32> to vector<256xf32>
    %55 = vector.shape_cast %54 : vector<256xf32> to vector<1x256xf32>
    %56 = arith.addf %28, %55 : vector<1x256xf32>
    %57 = arith.mulf %49, %49 : vector<16x256xf32>
    %cst_56 = arith.constant dense<0.000000e+00> : vector<256xf32>
    %58 = vector.multi_reduction <add>, %57, %cst_56 [0] : vector<16x256xf32> to vector<256xf32>
    %59 = vector.shape_cast %58 : vector<256xf32> to vector<1x256xf32>
    %60 = arith.addf %32, %59 : vector<1x256xf32>
    %c0_57 = arith.constant 0 : index
    %c0_58 = arith.constant 0 : index
    %c0_59 = arith.constant 0 : index
    %61 = vector.load %arg5[%c0_57, %c0_58, %c0_59] : memref<1x1x256xf32, #tpu.memory_space<vmem>>, vector<1x1x256xf32>
    %62 = vector.shape_cast %56 : vector<1x256xf32> to vector<1x1x256xf32>
    %63 = arith.addf %61, %62 : vector<1x1x256xf32>
    %c0_60 = arith.constant 0 : index
    %c0_61 = arith.constant 0 : index
    %c0_62 = arith.constant 0 : index
    %64 = vector.load %arg5[%c0_60, %c0_61, %c0_62] : memref<1x1x256xf32, #tpu.memory_space<vmem>>, vector<1x1x256xf32>
    tpu.vector_store %arg5[%c0_60, %c0_61, %c0_62], %63 {strides = array<i32>} : memref<1x1x256xf32, #tpu.memory_space<vmem>>, vector<1x1x256xf32>,
    %c0_63 = arith.constant 0 : index
    %c0_64 = arith.constant 0 : index
    %c0_65 = arith.constant 0 : index
    %65 = vector.load %arg6[%c0_63, %c0_64, %c0_65] : memref<1x1x256xf32, #tpu.memory_space<vmem>>, vector<1x1x256xf32>
    %66 = vector.shape_cast %60 : vector<1x256xf32> to vector<1x1x256xf32>
    %67 = arith.addf %65, %66 : vector<1x1x256xf32>
    %c0_66 = arith.constant 0 : index
    %c0_67 = arith.constant 0 : index
    %c0_68 = arith.constant 0 : index
    %68 = vector.load %arg6[%c0_66, %c0_67, %c0_68] : memref<1x1x256xf32, #tpu.memory_space<vmem>>, vector<1x1x256xf32>
    tpu.vector_store %arg6[%c0_66, %c0_67, %c0_68], %67 {strides = array<i32>} : memref<1x1x256xf32, #tpu.memory_space<vmem>>, vector<1x1x256xf32>,
    return
  }
  func.func @transform_0(%arg0: i32, %arg1: i32) -> (i32, i32, i32, i32) {
    %c1_i32 = arith.constant 1 : i32
    %0 = arith.muli %arg0, %c1_i32 : i32
    %1 = arith.addi %0, %arg1 : i32
    %c0_i32 = arith.constant 0 : i32
    %c0_i32_0 = arith.constant 0 : i32
    %c0_i32_1 = arith.constant 0 : i32
    %c0_i32_2 = arith.constant 0 : i32
    return %c0_i32, %1, %c0_i32_0, %c0_i32_1 : i32, i32, i32, i32
  }
  func.func @transform_1(%arg0: i32, %arg1: i32) -> (i32, i32, i32) {
    %c0_i32 = arith.constant 0 : i32
    %c0_i32_0 = arith.constant 0 : i32
    %c0_i32_1 = arith.constant 0 : i32
    %c0_i32_2 = arith.constant 0 : i32
    return %c0_i32, %c0_i32_0, %c0_i32_1 : i32, i32, i32
  }
  func.func @transform_2(%arg0: i32, %arg1: i32) -> (i32, i32, i32) {
    %c1_i32 = arith.constant 1 : i32
    %0 = arith.muli %arg0, %c1_i32 : i32
    %1 = arith.addi %0, %arg1 : i32
    %c0_i32 = arith.constant 0 : i32
    %c0_i32_0 = arith.constant 0 : i32
    %c0_i32_1 = arith.constant 0 : i32
    return %1, %c0_i32, %c0_i32_0 : i32, i32, i32
  }
  func.func @transform_3(%arg0: i32, %arg1: i32) -> (i32, i32, i32) {
    %c0_i32 = arith.constant 0 : i32
    %c0_i32_0 = arith.constant 0 : i32
    %c0_i32_1 = arith.constant 0 : i32
    return %arg0, %c0_i32, %c0_i32_0 : i32, i32, i32
  }
  func.func @transform_4(%arg0: i32, %arg1: i32) -> (i32, i32, i32) {
    %c0_i32 = arith.constant 0 : i32
    %c0_i32_0 = arith.constant 0 : i32
    %c0_i32_1 = arith.constant 0 : i32
    return %arg0, %c0_i32, %c0_i32_0 : i32, i32, i32
  }
}

module attributes {stable_mosaic.version = 11 : i64} {
  func.func @bn_act_kernel(%arg0: i32, %arg1: memref<2x16x256xbf16, #tpu.memory_space<vmem>>, %arg2: memref<1x1x256xf32, #tpu.memory_space<vmem>>, %arg3: memref<1x1x256xf32, #tpu.memory_space<vmem>>, %arg4: memref<2x16x256xbf16, #tpu.memory_space<vmem>>) attributes {dimension_semantics = [#tpu.dimension_semantics<parallel>], iteration_bounds = array<i64: 1>, scalar_prefetch = 0 : i64, scratch_operands = 0 : i64, tpu.core_type = #tpu.core_type<tc>, window_params = [{transform_indices = @transform_0, window_bounds = array<i64: 2, 16, 256>}, {pipeline_mode = #tpu.pipeline_mode<synchronous>, transform_indices = @transform_1, window_bounds = array<i64: 1, 1, 256>}, {pipeline_mode = #tpu.pipeline_mode<synchronous>, transform_indices = @transform_2, window_bounds = array<i64: 1, 1, 256>}, {transform_indices = @transform_3, window_bounds = array<i64: 2, 16, 256>}]} {
    %c0 = arith.constant 0 : index
    %c0_0 = arith.constant 0 : index
    %c0_1 = arith.constant 0 : index
    %0 = vector.load %arg1[%c0, %c0_0, %c0_1] : memref<2x16x256xbf16, #tpu.memory_space<vmem>>, vector<2x16x256xbf16>
    %1 = arith.extf %0 : vector<2x16x256xbf16> to vector<2x16x256xf32>
    %c0_2 = arith.constant 0 : index
    %c0_3 = arith.constant 0 : index
    %c0_4 = arith.constant 0 : index
    %2 = vector.load %arg2[%c0_2, %c0_3, %c0_4] : memref<1x1x256xf32, #tpu.memory_space<vmem>>, vector<1x1x256xf32>
    %3 = vector.broadcast %2 : vector<1x1x256xf32> to vector<2x16x256xf32>
    %4 = arith.mulf %1, %3 : vector<2x16x256xf32>
    %c0_5 = arith.constant 0 : index
    %c0_6 = arith.constant 0 : index
    %c0_7 = arith.constant 0 : index
    %5 = vector.load %arg3[%c0_5, %c0_6, %c0_7] : memref<1x1x256xf32, #tpu.memory_space<vmem>>, vector<1x1x256xf32>
    %6 = vector.broadcast %5 : vector<1x1x256xf32> to vector<2x16x256xf32>
    %7 = arith.addf %4, %6 : vector<2x16x256xf32>
    %cst = arith.constant 0.000000e+00 : f32
    %8 = vector.broadcast %cst : f32 to vector<2x16x256xf32>
    %9 = arith.maximumf %7, %8 : vector<2x16x256xf32>
    %10 = arith.truncf %9 : vector<2x16x256xf32> to vector<2x16x256xbf16>
    %c0_8 = arith.constant 0 : index
    %c0_9 = arith.constant 0 : index
    %c0_10 = arith.constant 0 : index
    %11 = vector.load %arg4[%c0_8, %c0_9, %c0_10] : memref<2x16x256xbf16, #tpu.memory_space<vmem>>, vector<2x16x256xbf16>
    tpu.vector_store %arg4[%c0_8, %c0_9, %c0_10], %10 {strides = array<i32>} : memref<2x16x256xbf16, #tpu.memory_space<vmem>>, vector<2x16x256xbf16>,
    return
  }
  func.func @transform_0(%arg0: i32) -> (i32, i32, i32) {
    %c0_i32 = arith.constant 0 : i32
    %c0_i32_0 = arith.constant 0 : i32
    %c0_i32_1 = arith.constant 0 : i32
    return %arg0, %c0_i32, %c0_i32_0 : i32, i32, i32
  }
  func.func @transform_1(%arg0: i32) -> (i32, i32, i32) {
    %c0_i32 = arith.constant 0 : i32
    %c0_i32_0 = arith.constant 0 : i32
    %c0_i32_1 = arith.constant 0 : i32
    %c0_i32_2 = arith.constant 0 : i32
    return %c0_i32, %c0_i32_0, %c0_i32_1 : i32, i32, i32
  }
  func.func @transform_2(%arg0: i32) -> (i32, i32, i32) {
    %c0_i32 = arith.constant 0 : i32
    %c0_i32_0 = arith.constant 0 : i32
    %c0_i32_1 = arith.constant 0 : i32
    %c0_i32_2 = arith.constant 0 : i32
    return %c0_i32, %c0_i32_0, %c0_i32_1 : i32, i32, i32
  }
  func.func @transform_3(%arg0: i32) -> (i32, i32, i32) {
    %c0_i32 = arith.constant 0 : i32
    %c0_i32_0 = arith.constant 0 : i32
    %c0_i32_1 = arith.constant 0 : i32
    return %arg0, %c0_i32, %c0_i32_0 : i32, i32, i32
  }
}

module attributes {stable_mosaic.version = 11 : i64} {
  func.func @conv_stats_kernel(%arg0: i32, %arg1: i32, %arg2: memref<1x2x18x256xbf16, #tpu.memory_space<vmem>>, %arg3: memref<3x256x256xbf16, #tpu.memory_space<vmem>>, %arg4: memref<2x16x256xbf16, #tpu.memory_space<vmem>>, %arg5: memref<1x1x256xf32, #tpu.memory_space<vmem>>, %arg6: memref<1x1x256xf32, #tpu.memory_space<vmem>>) attributes {dimension_semantics = [#tpu.dimension_semantics<parallel>, #tpu.dimension_semantics<arbitrary>], iteration_bounds = array<i64: 1, 1>, scalar_prefetch = 0 : i64, scratch_operands = 0 : i64, tpu.core_type = #tpu.core_type<tc>, window_params = [{transform_indices = @transform_0, window_bounds = array<i64: 1, 2, 18, 256>}, {pipeline_mode = #tpu.pipeline_mode<synchronous>, transform_indices = @transform_1, window_bounds = array<i64: 3, 256, 256>}, {transform_indices = @transform_2, window_bounds = array<i64: 2, 16, 256>}, {transform_indices = @transform_3, window_bounds = array<i64: 1, 1, 256>}, {transform_indices = @transform_4, window_bounds = array<i64: 1, 1, 256>}]} {
    %c0_i32 = arith.constant 0 : i32
    %0 = arith.cmpi eq, %arg1, %c0_i32 : i32
    %1 = arith.extui %0 : i1 to i32
    %c0_i32_0 = arith.constant 0 : i32
    %2 = arith.cmpi ne, %1, %c0_i32_0 : i32
    scf.if %2 {
      %cst_69 = arith.constant 0.000000e+00 : f32
      %69 = vector.broadcast %cst_69 : f32 to vector<1x1x256xf32>
      %c0_70 = arith.constant 0 : index
      %c0_71 = arith.constant 0 : index
      %c0_72 = arith.constant 0 : index
      %70 = vector.load %arg5[%c0_70, %c0_71, %c0_72] : memref<1x1x256xf32, #tpu.memory_space<vmem>>, vector<1x1x256xf32>
      tpu.vector_store %arg5[%c0_70, %c0_71, %c0_72], %69 {strides = array<i32>} : memref<1x1x256xf32, #tpu.memory_space<vmem>>, vector<1x1x256xf32>,
      %cst_73 = arith.constant 0.000000e+00 : f32
      %71 = vector.broadcast %cst_73 : f32 to vector<1x1x256xf32>
      %c0_74 = arith.constant 0 : index
      %c0_75 = arith.constant 0 : index
      %c0_76 = arith.constant 0 : index
      %72 = vector.load %arg6[%c0_74, %c0_75, %c0_76] : memref<1x1x256xf32, #tpu.memory_space<vmem>>, vector<1x1x256xf32>
      tpu.vector_store %arg6[%c0_74, %c0_75, %c0_76], %71 {strides = array<i32>} : memref<1x1x256xf32, #tpu.memory_space<vmem>>, vector<1x1x256xf32>,
    } else {
    }
    %cst = arith.constant 0.000000e+00 : f32
    %3 = vector.broadcast %cst : f32 to vector<1x256xf32>
    %cst_1 = arith.constant 0.000000e+00 : f32
    %4 = vector.broadcast %cst_1 : f32 to vector<1x256xf32>
    %c0 = arith.constant 0 : index
    %c0_2 = arith.constant 0 : index
    %c0_3 = arith.constant 0 : index
    %c0_4 = arith.constant 0 : index
    %5 = vector.load %arg2[%c0, %c0_2, %c0_3, %c0_4] : memref<1x2x18x256xbf16, #tpu.memory_space<vmem>>, vector<1x1x16x256xbf16>
    %6 = vector.shape_cast %5 : vector<1x1x16x256xbf16> to vector<16x256xbf16>
    %c0_5 = arith.constant 0 : index
    %c0_6 = arith.constant 0 : index
    %c0_7 = arith.constant 0 : index
    %7 = vector.load %arg3[%c0_5, %c0_6, %c0_7] : memref<3x256x256xbf16, #tpu.memory_space<vmem>>, vector<1x256x256xbf16>
    %8 = vector.shape_cast %7 : vector<1x256x256xbf16> to vector<256x256xbf16>
    %cst_8 = arith.constant dense<0.000000e+00> : vector<16x256xf32>
    %9 = tpu.matmul %6, %8, %cst_8 {dimension_numbers = #tpu.dot_dimension_numbers<[1], [0], [0], [1], [0, 0, 1, 1], [], []>} : vector<16x256xbf16>, vector<256x256xbf16>, vector<16x256xf32> -> vector<16x256xf32>
    %c0_9 = arith.constant 0 : index
    %c0_10 = arith.constant 0 : index
    %c1 = arith.constant 1 : index
    %c0_11 = arith.constant 0 : index
    %10 = vector.load %arg2[%c0_9, %c0_10, %c1, %c0_11] : memref<1x2x18x256xbf16, #tpu.memory_space<vmem>>, vector<1x1x16x256xbf16>
    %11 = vector.shape_cast %10 : vector<1x1x16x256xbf16> to vector<16x256xbf16>
    %c1_12 = arith.constant 1 : index
    %c0_13 = arith.constant 0 : index
    %c0_14 = arith.constant 0 : index
    %12 = vector.load %arg3[%c1_12, %c0_13, %c0_14] : memref<3x256x256xbf16, #tpu.memory_space<vmem>>, vector<1x256x256xbf16>
    %13 = vector.shape_cast %12 : vector<1x256x256xbf16> to vector<256x256xbf16>
    %cst_15 = arith.constant dense<0.000000e+00> : vector<16x256xf32>
    %14 = tpu.matmul %11, %13, %cst_15 {dimension_numbers = #tpu.dot_dimension_numbers<[1], [0], [0], [1], [0, 0, 1, 1], [], []>} : vector<16x256xbf16>, vector<256x256xbf16>, vector<16x256xf32> -> vector<16x256xf32>
    %15 = arith.addf %9, %14 : vector<16x256xf32>
    %c0_16 = arith.constant 0 : index
    %c0_17 = arith.constant 0 : index
    %c2 = arith.constant 2 : index
    %c0_18 = arith.constant 0 : index
    %16 = vector.load %arg2[%c0_16, %c0_17, %c2, %c0_18] : memref<1x2x18x256xbf16, #tpu.memory_space<vmem>>, vector<1x1x16x256xbf16>
    %17 = vector.shape_cast %16 : vector<1x1x16x256xbf16> to vector<16x256xbf16>
    %c2_19 = arith.constant 2 : index
    %c0_20 = arith.constant 0 : index
    %c0_21 = arith.constant 0 : index
    %18 = vector.load %arg3[%c2_19, %c0_20, %c0_21] : memref<3x256x256xbf16, #tpu.memory_space<vmem>>, vector<1x256x256xbf16>
    %19 = vector.shape_cast %18 : vector<1x256x256xbf16> to vector<256x256xbf16>
    %cst_22 = arith.constant dense<0.000000e+00> : vector<16x256xf32>
    %20 = tpu.matmul %17, %19, %cst_22 {dimension_numbers = #tpu.dot_dimension_numbers<[1], [0], [0], [1], [0, 0, 1, 1], [], []>} : vector<16x256xbf16>, vector<256x256xbf16>, vector<16x256xf32> -> vector<16x256xf32>
    %21 = arith.addf %15, %20 : vector<16x256xf32>
    %22 = arith.truncf %21 : vector<16x256xf32> to vector<16x256xbf16>
    %c0_23 = arith.constant 0 : index
    %c0_24 = arith.constant 0 : index
    %c0_25 = arith.constant 0 : index
    %23 = vector.load %arg4[%c0_23, %c0_24, %c0_25] : memref<2x16x256xbf16, #tpu.memory_space<vmem>>, vector<1x16x256xbf16>
    %24 = vector.shape_cast %23 : vector<1x16x256xbf16> to vector<16x256xbf16>
    %25 = vector.shape_cast %22 : vector<16x256xbf16> to vector<1x16x256xbf16>
    tpu.vector_store %arg4[%c0_23, %c0_24, %c0_25], %25 {strides = array<i32>} : memref<2x16x256xbf16, #tpu.memory_space<vmem>>, vector<1x16x256xbf16>,
    %cst_26 = arith.constant dense<0.000000e+00> : vector<256xf32>
    %26 = vector.multi_reduction <add>, %21, %cst_26 [0] : vector<16x256xf32> to vector<256xf32>
    %27 = vector.shape_cast %26 : vector<256xf32> to vector<1x256xf32>
    %28 = arith.addf %3, %27 : vector<1x256xf32>
    %29 = arith.mulf %21, %21 : vector<16x256xf32>
    %cst_27 = arith.constant dense<0.000000e+00> : vector<256xf32>
    %30 = vector.multi_reduction <add>, %29, %cst_27 [0] : vector<16x256xf32> to vector<256xf32>
    %31 = vector.shape_cast %30 : vector<256xf32> to vector<1x256xf32>
    %32 = arith.addf %4, %31 : vector<1x256xf32>
    %c0_28 = arith.constant 0 : index
    %c1_29 = arith.constant 1 : index
    %c0_30 = arith.constant 0 : index
    %c0_31 = arith.constant 0 : index
    %33 = vector.load %arg2[%c0_28, %c1_29, %c0_30, %c0_31] : memref<1x2x18x256xbf16, #tpu.memory_space<vmem>>, vector<1x1x16x256xbf16>
    %34 = vector.shape_cast %33 : vector<1x1x16x256xbf16> to vector<16x256xbf16>
    %c0_32 = arith.constant 0 : index
    %c0_33 = arith.constant 0 : index
    %c0_34 = arith.constant 0 : index
    %35 = vector.load %arg3[%c0_32, %c0_33, %c0_34] : memref<3x256x256xbf16, #tpu.memory_space<vmem>>, vector<1x256x256xbf16>
    %36 = vector.shape_cast %35 : vector<1x256x256xbf16> to vector<256x256xbf16>
    %cst_35 = arith.constant dense<0.000000e+00> : vector<16x256xf32>
    %37 = tpu.matmul %34, %36, %cst_35 {dimension_numbers = #tpu.dot_dimension_numbers<[1], [0], [0], [1], [0, 0, 1, 1], [], []>} : vector<16x256xbf16>, vector<256x256xbf16>, vector<16x256xf32> -> vector<16x256xf32>
    %c0_36 = arith.constant 0 : index
    %c1_37 = arith.constant 1 : index
    %c1_38 = arith.constant 1 : index
    %c0_39 = arith.constant 0 : index
    %38 = vector.load %arg2[%c0_36, %c1_37, %c1_38, %c0_39] : memref<1x2x18x256xbf16, #tpu.memory_space<vmem>>, vector<1x1x16x256xbf16>
    %39 = vector.shape_cast %38 : vector<1x1x16x256xbf16> to vector<16x256xbf16>
    %c1_40 = arith.constant 1 : index
    %c0_41 = arith.constant 0 : index
    %c0_42 = arith.constant 0 : index
    %40 = vector.load %arg3[%c1_40, %c0_41, %c0_42] : memref<3x256x256xbf16, #tpu.memory_space<vmem>>, vector<1x256x256xbf16>
    %41 = vector.shape_cast %40 : vector<1x256x256xbf16> to vector<256x256xbf16>
    %cst_43 = arith.constant dense<0.000000e+00> : vector<16x256xf32>
    %42 = tpu.matmul %39, %41, %cst_43 {dimension_numbers = #tpu.dot_dimension_numbers<[1], [0], [0], [1], [0, 0, 1, 1], [], []>} : vector<16x256xbf16>, vector<256x256xbf16>, vector<16x256xf32> -> vector<16x256xf32>
    %43 = arith.addf %37, %42 : vector<16x256xf32>
    %c0_44 = arith.constant 0 : index
    %c1_45 = arith.constant 1 : index
    %c2_46 = arith.constant 2 : index
    %c0_47 = arith.constant 0 : index
    %44 = vector.load %arg2[%c0_44, %c1_45, %c2_46, %c0_47] : memref<1x2x18x256xbf16, #tpu.memory_space<vmem>>, vector<1x1x16x256xbf16>
    %45 = vector.shape_cast %44 : vector<1x1x16x256xbf16> to vector<16x256xbf16>
    %c2_48 = arith.constant 2 : index
    %c0_49 = arith.constant 0 : index
    %c0_50 = arith.constant 0 : index
    %46 = vector.load %arg3[%c2_48, %c0_49, %c0_50] : memref<3x256x256xbf16, #tpu.memory_space<vmem>>, vector<1x256x256xbf16>
    %47 = vector.shape_cast %46 : vector<1x256x256xbf16> to vector<256x256xbf16>
    %cst_51 = arith.constant dense<0.000000e+00> : vector<16x256xf32>
    %48 = tpu.matmul %45, %47, %cst_51 {dimension_numbers = #tpu.dot_dimension_numbers<[1], [0], [0], [1], [0, 0, 1, 1], [], []>} : vector<16x256xbf16>, vector<256x256xbf16>, vector<16x256xf32> -> vector<16x256xf32>
    %49 = arith.addf %43, %48 : vector<16x256xf32>
    %50 = arith.truncf %49 : vector<16x256xf32> to vector<16x256xbf16>
    %c1_52 = arith.constant 1 : index
    %c0_53 = arith.constant 0 : index
    %c0_54 = arith.constant 0 : index
    %51 = vector.load %arg4[%c1_52, %c0_53, %c0_54] : memref<2x16x256xbf16, #tpu.memory_space<vmem>>, vector<1x16x256xbf16>
    %52 = vector.shape_cast %51 : vector<1x16x256xbf16> to vector<16x256xbf16>
    %53 = vector.shape_cast %50 : vector<16x256xbf16> to vector<1x16x256xbf16>
    tpu.vector_store %arg4[%c1_52, %c0_53, %c0_54], %53 {strides = array<i32>} : memref<2x16x256xbf16, #tpu.memory_space<vmem>>, vector<1x16x256xbf16>,
    %cst_55 = arith.constant dense<0.000000e+00> : vector<256xf32>
    %54 = vector.multi_reduction <add>, %49, %cst_55 [0] : vector<16x256xf32> to vector<256xf32>
    %55 = vector.shape_cast %54 : vector<256xf32> to vector<1x256xf32>
    %56 = arith.addf %28, %55 : vector<1x256xf32>
    %57 = arith.mulf %49, %49 : vector<16x256xf32>
    %cst_56 = arith.constant dense<0.000000e+00> : vector<256xf32>
    %58 = vector.multi_reduction <add>, %57, %cst_56 [0] : vector<16x256xf32> to vector<256xf32>
    %59 = vector.shape_cast %58 : vector<256xf32> to vector<1x256xf32>
    %60 = arith.addf %32, %59 : vector<1x256xf32>
    %c0_57 = arith.constant 0 : index
    %c0_58 = arith.constant 0 : index
    %c0_59 = arith.constant 0 : index
    %61 = vector.load %arg5[%c0_57, %c0_58, %c0_59] : memref<1x1x256xf32, #tpu.memory_space<vmem>>, vector<1x1x256xf32>
    %62 = vector.shape_cast %56 : vector<1x256xf32> to vector<1x1x256xf32>
    %63 = arith.addf %61, %62 : vector<1x1x256xf32>
    %c0_60 = arith.constant 0 : index
    %c0_61 = arith.constant 0 : index
    %c0_62 = arith.constant 0 : index
    %64 = vector.load %arg5[%c0_60, %c0_61, %c0_62] : memref<1x1x256xf32, #tpu.memory_space<vmem>>, vector<1x1x256xf32>
    tpu.vector_store %arg5[%c0_60, %c0_61, %c0_62], %63 {strides = array<i32>} : memref<1x1x256xf32, #tpu.memory_space<vmem>>, vector<1x1x256xf32>,
    %c0_63 = arith.constant 0 : index
    %c0_64 = arith.constant 0 : index
    %c0_65 = arith.constant 0 : index
    %65 = vector.load %arg6[%c0_63, %c0_64, %c0_65] : memref<1x1x256xf32, #tpu.memory_space<vmem>>, vector<1x1x256xf32>
    %66 = vector.shape_cast %60 : vector<1x256xf32> to vector<1x1x256xf32>
    %67 = arith.addf %65, %66 : vector<1x1x256xf32>
    %c0_66 = arith.constant 0 : index
    %c0_67 = arith.constant 0 : index
    %c0_68 = arith.constant 0 : index
    %68 = vector.load %arg6[%c0_66, %c0_67, %c0_68] : memref<1x1x256xf32, #tpu.memory_space<vmem>>, vector<1x1x256xf32>
    tpu.vector_store %arg6[%c0_66, %c0_67, %c0_68], %67 {strides = array<i32>} : memref<1x1x256xf32, #tpu.memory_space<vmem>>, vector<1x1x256xf32>,
    return
  }
  func.func @transform_0(%arg0: i32, %arg1: i32) -> (i32, i32, i32, i32) {
    %c1_i32 = arith.constant 1 : i32
    %0 = arith.muli %arg0, %c1_i32 : i32
    %1 = arith.addi %0, %arg1 : i32
    %c0_i32 = arith.constant 0 : i32
    %c0_i32_0 = arith.constant 0 : i32
    %c0_i32_1 = arith.constant 0 : i32
    %c0_i32_2 = arith.constant 0 : i32
    return %c0_i32, %1, %c0_i32_0, %c0_i32_1 : i32, i32, i32, i32
  }
  func.func @transform_1(%arg0: i32, %arg1: i32) -> (i32, i32, i32) {
    %c0_i32 = arith.constant 0 : i32
    %c0_i32_0 = arith.constant 0 : i32
    %c0_i32_1 = arith.constant 0 : i32
    %c0_i32_2 = arith.constant 0 : i32
    return %c0_i32, %c0_i32_0, %c0_i32_1 : i32, i32, i32
  }
  func.func @transform_2(%arg0: i32, %arg1: i32) -> (i32, i32, i32) {
    %c1_i32 = arith.constant 1 : i32
    %0 = arith.muli %arg0, %c1_i32 : i32
    %1 = arith.addi %0, %arg1 : i32
    %c0_i32 = arith.constant 0 : i32
    %c0_i32_0 = arith.constant 0 : i32
    %c0_i32_1 = arith.constant 0 : i32
    return %1, %c0_i32, %c0_i32_0 : i32, i32, i32
  }
  func.func @transform_3(%arg0: i32, %arg1: i32) -> (i32, i32, i32) {
    %c0_i32 = arith.constant 0 : i32
    %c0_i32_0 = arith.constant 0 : i32
    %c0_i32_1 = arith.constant 0 : i32
    return %arg0, %c0_i32, %c0_i32_0 : i32, i32, i32
  }
  func.func @transform_4(%arg0: i32, %arg1: i32) -> (i32, i32, i32) {
    %c0_i32 = arith.constant 0 : i32
    %c0_i32_0 = arith.constant 0 : i32
    %c0_i32_1 = arith.constant 0 : i32
    return %arg0, %c0_i32, %c0_i32_0 : i32, i32, i32
  }
}

module attributes {stable_mosaic.version = 11 : i64} {
  func.func @bn_res_act_kernel(%arg0: i32, %arg1: memref<2x16x256xbf16, #tpu.memory_space<vmem>>, %arg2: memref<1x1x256xf32, #tpu.memory_space<vmem>>, %arg3: memref<1x1x256xf32, #tpu.memory_space<vmem>>, %arg4: memref<2x16x256xbf16, #tpu.memory_space<vmem>>, %arg5: memref<2x16x256xbf16, #tpu.memory_space<vmem>>) attributes {dimension_semantics = [#tpu.dimension_semantics<parallel>], iteration_bounds = array<i64: 1>, scalar_prefetch = 0 : i64, scratch_operands = 0 : i64, tpu.core_type = #tpu.core_type<tc>, window_params = [{transform_indices = @transform_0, window_bounds = array<i64: 2, 16, 256>}, {pipeline_mode = #tpu.pipeline_mode<synchronous>, transform_indices = @transform_1, window_bounds = array<i64: 1, 1, 256>}, {pipeline_mode = #tpu.pipeline_mode<synchronous>, transform_indices = @transform_2, window_bounds = array<i64: 1, 1, 256>}, {transform_indices = @transform_3, window_bounds = array<i64: 2, 16, 256>}, {transform_indices = @transform_4, window_bounds = array<i64: 2, 16, 256>}]} {
    %c0 = arith.constant 0 : index
    %c0_0 = arith.constant 0 : index
    %c0_1 = arith.constant 0 : index
    %0 = vector.load %arg1[%c0, %c0_0, %c0_1] : memref<2x16x256xbf16, #tpu.memory_space<vmem>>, vector<2x16x256xbf16>
    %1 = arith.extf %0 : vector<2x16x256xbf16> to vector<2x16x256xf32>
    %c0_2 = arith.constant 0 : index
    %c0_3 = arith.constant 0 : index
    %c0_4 = arith.constant 0 : index
    %2 = vector.load %arg2[%c0_2, %c0_3, %c0_4] : memref<1x1x256xf32, #tpu.memory_space<vmem>>, vector<1x1x256xf32>
    %3 = vector.broadcast %2 : vector<1x1x256xf32> to vector<2x16x256xf32>
    %4 = arith.mulf %1, %3 : vector<2x16x256xf32>
    %c0_5 = arith.constant 0 : index
    %c0_6 = arith.constant 0 : index
    %c0_7 = arith.constant 0 : index
    %5 = vector.load %arg3[%c0_5, %c0_6, %c0_7] : memref<1x1x256xf32, #tpu.memory_space<vmem>>, vector<1x1x256xf32>
    %6 = vector.broadcast %5 : vector<1x1x256xf32> to vector<2x16x256xf32>
    %7 = arith.addf %4, %6 : vector<2x16x256xf32>
    %c0_8 = arith.constant 0 : index
    %c0_9 = arith.constant 0 : index
    %c0_10 = arith.constant 0 : index
    %8 = vector.load %arg4[%c0_8, %c0_9, %c0_10] : memref<2x16x256xbf16, #tpu.memory_space<vmem>>, vector<2x16x256xbf16>
    %9 = arith.extf %8 : vector<2x16x256xbf16> to vector<2x16x256xf32>
    %10 = arith.addf %7, %9 : vector<2x16x256xf32>
    %cst = arith.constant 0.000000e+00 : f32
    %11 = vector.broadcast %cst : f32 to vector<2x16x256xf32>
    %12 = arith.maximumf %10, %11 : vector<2x16x256xf32>
    %13 = arith.truncf %12 : vector<2x16x256xf32> to vector<2x16x256xbf16>
    %c0_11 = arith.constant 0 : index
    %c0_12 = arith.constant 0 : index
    %c0_13 = arith.constant 0 : index
    %14 = vector.load %arg5[%c0_11, %c0_12, %c0_13] : memref<2x16x256xbf16, #tpu.memory_space<vmem>>, vector<2x16x256xbf16>
    tpu.vector_store %arg5[%c0_11, %c0_12, %c0_13], %13 {strides = array<i32>} : memref<2x16x256xbf16, #tpu.memory_space<vmem>>, vector<2x16x256xbf16>,
    return
  }
  func.func @transform_0(%arg0: i32) -> (i32, i32, i32) {
    %c0_i32 = arith.constant 0 : i32
    %c0_i32_0 = arith.constant 0 : i32
    %c0_i32_1 = arith.constant 0 : i32
    return %arg0, %c0_i32, %c0_i32_0 : i32, i32, i32
  }
  func.func @transform_1(%arg0: i32) -> (i32, i32, i32) {
    %c0_i32 = arith.constant 0 : i32
    %c0_i32_0 = arith.constant 0 : i32
    %c0_i32_1 = arith.constant 0 : i32
    %c0_i32_2 = arith.constant 0 : i32
    return %c0_i32, %c0_i32_0, %c0_i32_1 : i32, i32, i32
  }
  func.func @transform_2(%arg0: i32) -> (i32, i32, i32) {
    %c0_i32 = arith.constant 0 : i32
    %c0_i32_0 = arith.constant 0 : i32
    %c0_i32_1 = arith.constant 0 : i32
    %c0_i32_2 = arith.constant 0 : i32
    return %c0_i32, %c0_i32_0, %c0_i32_1 : i32, i32, i32
  }
  func.func @transform_3(%arg0: i32) -> (i32, i32, i32) {
    %c0_i32 = arith.constant 0 : i32
    %c0_i32_0 = arith.constant 0 : i32
    %c0_i32_1 = arith.constant 0 : i32
    return %arg0, %c0_i32, %c0_i32_0 : i32, i32, i32
  }
  func.func @transform_4(%arg0: i32) -> (i32, i32, i32) {
    %c0_i32 = arith.constant 0 : i32
    %c0_i32_0 = arith.constant 0 : i32
    %c0_i32_1 = arith.constant 0 : i32
    return %arg0, %c0_i32, %c0_i32_0 : i32, i32, i32
  }
}

module attributes {stable_mosaic.version = 11 : i64} {
  func.func @conv_stats_kernel(%arg0: i32, %arg1: i32, %arg2: memref<2x2x9x256xbf16, #tpu.memory_space<vmem>>, %arg3: memref<3x256x256xbf16, #tpu.memory_space<vmem>>, %arg4: memref<2x8x256xbf16, #tpu.memory_space<vmem>>, %arg5: memref<1x1x256xf32, #tpu.memory_space<vmem>>, %arg6: memref<1x1x256xf32, #tpu.memory_space<vmem>>) attributes {dimension_semantics = [#tpu.dimension_semantics<parallel>, #tpu.dimension_semantics<arbitrary>], iteration_bounds = array<i64: 1, 1>, scalar_prefetch = 0 : i64, scratch_operands = 0 : i64, tpu.core_type = #tpu.core_type<tc>, window_params = [{transform_indices = @transform_0, window_bounds = array<i64: 2, 2, 9, 256>}, {pipeline_mode = #tpu.pipeline_mode<synchronous>, transform_indices = @transform_1, window_bounds = array<i64: 3, 256, 256>}, {transform_indices = @transform_2, window_bounds = array<i64: 2, 8, 256>}, {transform_indices = @transform_3, window_bounds = array<i64: 1, 1, 256>}, {transform_indices = @transform_4, window_bounds = array<i64: 1, 1, 256>}]} {
    %c0_i32 = arith.constant 0 : i32
    %0 = arith.cmpi eq, %arg1, %c0_i32 : i32
    %1 = arith.extui %0 : i1 to i32
    %c0_i32_0 = arith.constant 0 : i32
    %2 = arith.cmpi ne, %1, %c0_i32_0 : i32
    scf.if %2 {
      %cst_69 = arith.constant 0.000000e+00 : f32
      %69 = vector.broadcast %cst_69 : f32 to vector<1x1x256xf32>
      %c0_70 = arith.constant 0 : index
      %c0_71 = arith.constant 0 : index
      %c0_72 = arith.constant 0 : index
      %70 = vector.load %arg5[%c0_70, %c0_71, %c0_72] : memref<1x1x256xf32, #tpu.memory_space<vmem>>, vector<1x1x256xf32>
      tpu.vector_store %arg5[%c0_70, %c0_71, %c0_72], %69 {strides = array<i32>} : memref<1x1x256xf32, #tpu.memory_space<vmem>>, vector<1x1x256xf32>,
      %cst_73 = arith.constant 0.000000e+00 : f32
      %71 = vector.broadcast %cst_73 : f32 to vector<1x1x256xf32>
      %c0_74 = arith.constant 0 : index
      %c0_75 = arith.constant 0 : index
      %c0_76 = arith.constant 0 : index
      %72 = vector.load %arg6[%c0_74, %c0_75, %c0_76] : memref<1x1x256xf32, #tpu.memory_space<vmem>>, vector<1x1x256xf32>
      tpu.vector_store %arg6[%c0_74, %c0_75, %c0_76], %71 {strides = array<i32>} : memref<1x1x256xf32, #tpu.memory_space<vmem>>, vector<1x1x256xf32>,
    } else {
    }
    %cst = arith.constant 0.000000e+00 : f32
    %3 = vector.broadcast %cst : f32 to vector<1x256xf32>
    %cst_1 = arith.constant 0.000000e+00 : f32
    %4 = vector.broadcast %cst_1 : f32 to vector<1x256xf32>
    %c0 = arith.constant 0 : index
    %c0_2 = arith.constant 0 : index
    %c0_3 = arith.constant 0 : index
    %c0_4 = arith.constant 0 : index
    %5 = vector.load %arg2[%c0, %c0_2, %c0_3, %c0_4] : memref<2x2x9x256xbf16, #tpu.memory_space<vmem>>, vector<1x1x8x256xbf16>
    %6 = vector.shape_cast %5 : vector<1x1x8x256xbf16> to vector<8x256xbf16>
    %c0_5 = arith.constant 0 : index
    %c0_6 = arith.constant 0 : index
    %c0_7 = arith.constant 0 : index
    %7 = vector.load %arg3[%c0_5, %c0_6, %c0_7] : memref<3x256x256xbf16, #tpu.memory_space<vmem>>, vector<1x256x256xbf16>
    %8 = vector.shape_cast %7 : vector<1x256x256xbf16> to vector<256x256xbf16>
    %cst_8 = arith.constant dense<0.000000e+00> : vector<8x256xf32>
    %9 = tpu.matmul %6, %8, %cst_8 {dimension_numbers = #tpu.dot_dimension_numbers<[1], [0], [0], [1], [0, 0, 1, 1], [], []>} : vector<8x256xbf16>, vector<256x256xbf16>, vector<8x256xf32> -> vector<8x256xf32>
    %c1 = arith.constant 1 : index
    %c0_9 = arith.constant 0 : index
    %c0_10 = arith.constant 0 : index
    %c0_11 = arith.constant 0 : index
    %10 = vector.load %arg2[%c1, %c0_9, %c0_10, %c0_11] : memref<2x2x9x256xbf16, #tpu.memory_space<vmem>>, vector<1x1x8x256xbf16>
    %11 = vector.shape_cast %10 : vector<1x1x8x256xbf16> to vector<8x256xbf16>
    %c1_12 = arith.constant 1 : index
    %c0_13 = arith.constant 0 : index
    %c0_14 = arith.constant 0 : index
    %12 = vector.load %arg3[%c1_12, %c0_13, %c0_14] : memref<3x256x256xbf16, #tpu.memory_space<vmem>>, vector<1x256x256xbf16>
    %13 = vector.shape_cast %12 : vector<1x256x256xbf16> to vector<256x256xbf16>
    %cst_15 = arith.constant dense<0.000000e+00> : vector<8x256xf32>
    %14 = tpu.matmul %11, %13, %cst_15 {dimension_numbers = #tpu.dot_dimension_numbers<[1], [0], [0], [1], [0, 0, 1, 1], [], []>} : vector<8x256xbf16>, vector<256x256xbf16>, vector<8x256xf32> -> vector<8x256xf32>
    %15 = arith.addf %9, %14 : vector<8x256xf32>
    %c0_16 = arith.constant 0 : index
    %c0_17 = arith.constant 0 : index
    %c1_18 = arith.constant 1 : index
    %c0_19 = arith.constant 0 : index
    %16 = vector.load %arg2[%c0_16, %c0_17, %c1_18, %c0_19] : memref<2x2x9x256xbf16, #tpu.memory_space<vmem>>, vector<1x1x8x256xbf16>
    %17 = vector.shape_cast %16 : vector<1x1x8x256xbf16> to vector<8x256xbf16>
    %c2 = arith.constant 2 : index
    %c0_20 = arith.constant 0 : index
    %c0_21 = arith.constant 0 : index
    %18 = vector.load %arg3[%c2, %c0_20, %c0_21] : memref<3x256x256xbf16, #tpu.memory_space<vmem>>, vector<1x256x256xbf16>
    %19 = vector.shape_cast %18 : vector<1x256x256xbf16> to vector<256x256xbf16>
    %cst_22 = arith.constant dense<0.000000e+00> : vector<8x256xf32>
    %20 = tpu.matmul %17, %19, %cst_22 {dimension_numbers = #tpu.dot_dimension_numbers<[1], [0], [0], [1], [0, 0, 1, 1], [], []>} : vector<8x256xbf16>, vector<256x256xbf16>, vector<8x256xf32> -> vector<8x256xf32>
    %21 = arith.addf %15, %20 : vector<8x256xf32>
    %22 = arith.truncf %21 : vector<8x256xf32> to vector<8x256xbf16>
    %c0_23 = arith.constant 0 : index
    %c0_24 = arith.constant 0 : index
    %c0_25 = arith.constant 0 : index
    %23 = vector.load %arg4[%c0_23, %c0_24, %c0_25] : memref<2x8x256xbf16, #tpu.memory_space<vmem>>, vector<1x8x256xbf16>
    %24 = vector.shape_cast %23 : vector<1x8x256xbf16> to vector<8x256xbf16>
    %25 = vector.shape_cast %22 : vector<8x256xbf16> to vector<1x8x256xbf16>
    tpu.vector_store %arg4[%c0_23, %c0_24, %c0_25], %25 {strides = array<i32>} : memref<2x8x256xbf16, #tpu.memory_space<vmem>>, vector<1x8x256xbf16>,
    %cst_26 = arith.constant dense<0.000000e+00> : vector<256xf32>
    %26 = vector.multi_reduction <add>, %21, %cst_26 [0] : vector<8x256xf32> to vector<256xf32>
    %27 = vector.shape_cast %26 : vector<256xf32> to vector<1x256xf32>
    %28 = arith.addf %3, %27 : vector<1x256xf32>
    %29 = arith.mulf %21, %21 : vector<8x256xf32>
    %cst_27 = arith.constant dense<0.000000e+00> : vector<256xf32>
    %30 = vector.multi_reduction <add>, %29, %cst_27 [0] : vector<8x256xf32> to vector<256xf32>
    %31 = vector.shape_cast %30 : vector<256xf32> to vector<1x256xf32>
    %32 = arith.addf %4, %31 : vector<1x256xf32>
    %c0_28 = arith.constant 0 : index
    %c1_29 = arith.constant 1 : index
    %c0_30 = arith.constant 0 : index
    %c0_31 = arith.constant 0 : index
    %33 = vector.load %arg2[%c0_28, %c1_29, %c0_30, %c0_31] : memref<2x2x9x256xbf16, #tpu.memory_space<vmem>>, vector<1x1x8x256xbf16>
    %34 = vector.shape_cast %33 : vector<1x1x8x256xbf16> to vector<8x256xbf16>
    %c0_32 = arith.constant 0 : index
    %c0_33 = arith.constant 0 : index
    %c0_34 = arith.constant 0 : index
    %35 = vector.load %arg3[%c0_32, %c0_33, %c0_34] : memref<3x256x256xbf16, #tpu.memory_space<vmem>>, vector<1x256x256xbf16>
    %36 = vector.shape_cast %35 : vector<1x256x256xbf16> to vector<256x256xbf16>
    %cst_35 = arith.constant dense<0.000000e+00> : vector<8x256xf32>
    %37 = tpu.matmul %34, %36, %cst_35 {dimension_numbers = #tpu.dot_dimension_numbers<[1], [0], [0], [1], [0, 0, 1, 1], [], []>} : vector<8x256xbf16>, vector<256x256xbf16>, vector<8x256xf32> -> vector<8x256xf32>
    %c1_36 = arith.constant 1 : index
    %c1_37 = arith.constant 1 : index
    %c0_38 = arith.constant 0 : index
    %c0_39 = arith.constant 0 : index
    %38 = vector.load %arg2[%c1_36, %c1_37, %c0_38, %c0_39] : memref<2x2x9x256xbf16, #tpu.memory_space<vmem>>, vector<1x1x8x256xbf16>
    %39 = vector.shape_cast %38 : vector<1x1x8x256xbf16> to vector<8x256xbf16>
    %c1_40 = arith.constant 1 : index
    %c0_41 = arith.constant 0 : index
    %c0_42 = arith.constant 0 : index
    %40 = vector.load %arg3[%c1_40, %c0_41, %c0_42] : memref<3x256x256xbf16, #tpu.memory_space<vmem>>, vector<1x256x256xbf16>
    %41 = vector.shape_cast %40 : vector<1x256x256xbf16> to vector<256x256xbf16>
    %cst_43 = arith.constant dense<0.000000e+00> : vector<8x256xf32>
    %42 = tpu.matmul %39, %41, %cst_43 {dimension_numbers = #tpu.dot_dimension_numbers<[1], [0], [0], [1], [0, 0, 1, 1], [], []>} : vector<8x256xbf16>, vector<256x256xbf16>, vector<8x256xf32> -> vector<8x256xf32>
    %43 = arith.addf %37, %42 : vector<8x256xf32>
    %c0_44 = arith.constant 0 : index
    %c1_45 = arith.constant 1 : index
    %c1_46 = arith.constant 1 : index
    %c0_47 = arith.constant 0 : index
    %44 = vector.load %arg2[%c0_44, %c1_45, %c1_46, %c0_47] : memref<2x2x9x256xbf16, #tpu.memory_space<vmem>>, vector<1x1x8x256xbf16>
    %45 = vector.shape_cast %44 : vector<1x1x8x256xbf16> to vector<8x256xbf16>
    %c2_48 = arith.constant 2 : index
    %c0_49 = arith.constant 0 : index
    %c0_50 = arith.constant 0 : index
    %46 = vector.load %arg3[%c2_48, %c0_49, %c0_50] : memref<3x256x256xbf16, #tpu.memory_space<vmem>>, vector<1x256x256xbf16>
    %47 = vector.shape_cast %46 : vector<1x256x256xbf16> to vector<256x256xbf16>
    %cst_51 = arith.constant dense<0.000000e+00> : vector<8x256xf32>
    %48 = tpu.matmul %45, %47, %cst_51 {dimension_numbers = #tpu.dot_dimension_numbers<[1], [0], [0], [1], [0, 0, 1, 1], [], []>} : vector<8x256xbf16>, vector<256x256xbf16>, vector<8x256xf32> -> vector<8x256xf32>
    %49 = arith.addf %43, %48 : vector<8x256xf32>
    %50 = arith.truncf %49 : vector<8x256xf32> to vector<8x256xbf16>
    %c1_52 = arith.constant 1 : index
    %c0_53 = arith.constant 0 : index
    %c0_54 = arith.constant 0 : index
    %51 = vector.load %arg4[%c1_52, %c0_53, %c0_54] : memref<2x8x256xbf16, #tpu.memory_space<vmem>>, vector<1x8x256xbf16>
    %52 = vector.shape_cast %51 : vector<1x8x256xbf16> to vector<8x256xbf16>
    %53 = vector.shape_cast %50 : vector<8x256xbf16> to vector<1x8x256xbf16>
    tpu.vector_store %arg4[%c1_52, %c0_53, %c0_54], %53 {strides = array<i32>} : memref<2x8x256xbf16, #tpu.memory_space<vmem>>, vector<1x8x256xbf16>,
    %cst_55 = arith.constant dense<0.000000e+00> : vector<256xf32>
    %54 = vector.multi_reduction <add>, %49, %cst_55 [0] : vector<8x256xf32> to vector<256xf32>
    %55 = vector.shape_cast %54 : vector<256xf32> to vector<1x256xf32>
    %56 = arith.addf %28, %55 : vector<1x256xf32>
    %57 = arith.mulf %49, %49 : vector<8x256xf32>
    %cst_56 = arith.constant dense<0.000000e+00> : vector<256xf32>
    %58 = vector.multi_reduction <add>, %57, %cst_56 [0] : vector<8x256xf32> to vector<256xf32>
    %59 = vector.shape_cast %58 : vector<256xf32> to vector<1x256xf32>
    %60 = arith.addf %32, %59 : vector<1x256xf32>
    %c0_57 = arith.constant 0 : index
    %c0_58 = arith.constant 0 : index
    %c0_59 = arith.constant 0 : index
    %61 = vector.load %arg5[%c0_57, %c0_58, %c0_59] : memref<1x1x256xf32, #tpu.memory_space<vmem>>, vector<1x1x256xf32>
    %62 = vector.shape_cast %56 : vector<1x256xf32> to vector<1x1x256xf32>
    %63 = arith.addf %61, %62 : vector<1x1x256xf32>
    %c0_60 = arith.constant 0 : index
    %c0_61 = arith.constant 0 : index
    %c0_62 = arith.constant 0 : index
    %64 = vector.load %arg5[%c0_60, %c0_61, %c0_62] : memref<1x1x256xf32, #tpu.memory_space<vmem>>, vector<1x1x256xf32>
    tpu.vector_store %arg5[%c0_60, %c0_61, %c0_62], %63 {strides = array<i32>} : memref<1x1x256xf32, #tpu.memory_space<vmem>>, vector<1x1x256xf32>,
    %c0_63 = arith.constant 0 : index
    %c0_64 = arith.constant 0 : index
    %c0_65 = arith.constant 0 : index
    %65 = vector.load %arg6[%c0_63, %c0_64, %c0_65] : memref<1x1x256xf32, #tpu.memory_space<vmem>>, vector<1x1x256xf32>
    %66 = vector.shape_cast %60 : vector<1x256xf32> to vector<1x1x256xf32>
    %67 = arith.addf %65, %66 : vector<1x1x256xf32>
    %c0_66 = arith.constant 0 : index
    %c0_67 = arith.constant 0 : index
    %c0_68 = arith.constant 0 : index
    %68 = vector.load %arg6[%c0_66, %c0_67, %c0_68] : memref<1x1x256xf32, #tpu.memory_space<vmem>>, vector<1x1x256xf32>
    tpu.vector_store %arg6[%c0_66, %c0_67, %c0_68], %67 {strides = array<i32>} : memref<1x1x256xf32, #tpu.memory_space<vmem>>, vector<1x1x256xf32>,
    return
  }
  func.func @transform_0(%arg0: i32, %arg1: i32) -> (i32, i32, i32, i32) {
    %c1_i32 = arith.constant 1 : i32
    %0 = arith.muli %arg0, %c1_i32 : i32
    %1 = arith.addi %0, %arg1 : i32
    %c0_i32 = arith.constant 0 : i32
    %c0_i32_0 = arith.constant 0 : i32
    %c0_i32_1 = arith.constant 0 : i32
    %c0_i32_2 = arith.constant 0 : i32
    return %c0_i32, %1, %c0_i32_0, %c0_i32_1 : i32, i32, i32, i32
  }
  func.func @transform_1(%arg0: i32, %arg1: i32) -> (i32, i32, i32) {
    %c0_i32 = arith.constant 0 : i32
    %c0_i32_0 = arith.constant 0 : i32
    %c0_i32_1 = arith.constant 0 : i32
    %c0_i32_2 = arith.constant 0 : i32
    return %c0_i32, %c0_i32_0, %c0_i32_1 : i32, i32, i32
  }
  func.func @transform_2(%arg0: i32, %arg1: i32) -> (i32, i32, i32) {
    %c1_i32 = arith.constant 1 : i32
    %0 = arith.muli %arg0, %c1_i32 : i32
    %1 = arith.addi %0, %arg1 : i32
    %c0_i32 = arith.constant 0 : i32
    %c0_i32_0 = arith.constant 0 : i32
    %c0_i32_1 = arith.constant 0 : i32
    return %1, %c0_i32, %c0_i32_0 : i32, i32, i32
  }
  func.func @transform_3(%arg0: i32, %arg1: i32) -> (i32, i32, i32) {
    %c0_i32 = arith.constant 0 : i32
    %c0_i32_0 = arith.constant 0 : i32
    %c0_i32_1 = arith.constant 0 : i32
    return %arg0, %c0_i32, %c0_i32_0 : i32, i32, i32
  }
  func.func @transform_4(%arg0: i32, %arg1: i32) -> (i32, i32, i32) {
    %c0_i32 = arith.constant 0 : i32
    %c0_i32_0 = arith.constant 0 : i32
    %c0_i32_1 = arith.constant 0 : i32
    return %arg0, %c0_i32, %c0_i32_0 : i32, i32, i32
  }
}

module attributes {stable_mosaic.version = 11 : i64} {
  func.func @bn_act_kernel(%arg0: i32, %arg1: memref<2x8x256xbf16, #tpu.memory_space<vmem>>, %arg2: memref<1x1x256xf32, #tpu.memory_space<vmem>>, %arg3: memref<1x1x256xf32, #tpu.memory_space<vmem>>, %arg4: memref<2x8x256xbf16, #tpu.memory_space<vmem>>) attributes {dimension_semantics = [#tpu.dimension_semantics<parallel>], iteration_bounds = array<i64: 1>, scalar_prefetch = 0 : i64, scratch_operands = 0 : i64, tpu.core_type = #tpu.core_type<tc>, window_params = [{transform_indices = @transform_0, window_bounds = array<i64: 2, 8, 256>}, {pipeline_mode = #tpu.pipeline_mode<synchronous>, transform_indices = @transform_1, window_bounds = array<i64: 1, 1, 256>}, {pipeline_mode = #tpu.pipeline_mode<synchronous>, transform_indices = @transform_2, window_bounds = array<i64: 1, 1, 256>}, {transform_indices = @transform_3, window_bounds = array<i64: 2, 8, 256>}]} {
    %c0 = arith.constant 0 : index
    %c0_0 = arith.constant 0 : index
    %c0_1 = arith.constant 0 : index
    %0 = vector.load %arg1[%c0, %c0_0, %c0_1] : memref<2x8x256xbf16, #tpu.memory_space<vmem>>, vector<2x8x256xbf16>
    %1 = arith.extf %0 : vector<2x8x256xbf16> to vector<2x8x256xf32>
    %c0_2 = arith.constant 0 : index
    %c0_3 = arith.constant 0 : index
    %c0_4 = arith.constant 0 : index
    %2 = vector.load %arg2[%c0_2, %c0_3, %c0_4] : memref<1x1x256xf32, #tpu.memory_space<vmem>>, vector<1x1x256xf32>
    %3 = vector.broadcast %2 : vector<1x1x256xf32> to vector<2x8x256xf32>
    %4 = arith.mulf %1, %3 : vector<2x8x256xf32>
    %c0_5 = arith.constant 0 : index
    %c0_6 = arith.constant 0 : index
    %c0_7 = arith.constant 0 : index
    %5 = vector.load %arg3[%c0_5, %c0_6, %c0_7] : memref<1x1x256xf32, #tpu.memory_space<vmem>>, vector<1x1x256xf32>
    %6 = vector.broadcast %5 : vector<1x1x256xf32> to vector<2x8x256xf32>
    %7 = arith.addf %4, %6 : vector<2x8x256xf32>
    %cst = arith.constant 0.000000e+00 : f32
    %8 = vector.broadcast %cst : f32 to vector<2x8x256xf32>
    %9 = arith.maximumf %7, %8 : vector<2x8x256xf32>
    %10 = arith.truncf %9 : vector<2x8x256xf32> to vector<2x8x256xbf16>
    %c0_8 = arith.constant 0 : index
    %c0_9 = arith.constant 0 : index
    %c0_10 = arith.constant 0 : index
    %11 = vector.load %arg4[%c0_8, %c0_9, %c0_10] : memref<2x8x256xbf16, #tpu.memory_space<vmem>>, vector<2x8x256xbf16>
    tpu.vector_store %arg4[%c0_8, %c0_9, %c0_10], %10 {strides = array<i32>} : memref<2x8x256xbf16, #tpu.memory_space<vmem>>, vector<2x8x256xbf16>,
    return
  }
  func.func @transform_0(%arg0: i32) -> (i32, i32, i32) {
    %c0_i32 = arith.constant 0 : i32
    %c0_i32_0 = arith.constant 0 : i32
    %c0_i32_1 = arith.constant 0 : i32
    return %arg0, %c0_i32, %c0_i32_0 : i32, i32, i32
  }
  func.func @transform_1(%arg0: i32) -> (i32, i32, i32) {
    %c0_i32 = arith.constant 0 : i32
    %c0_i32_0 = arith.constant 0 : i32
    %c0_i32_1 = arith.constant 0 : i32
    %c0_i32_2 = arith.constant 0 : i32
    return %c0_i32, %c0_i32_0, %c0_i32_1 : i32, i32, i32
  }
  func.func @transform_2(%arg0: i32) -> (i32, i32, i32) {
    %c0_i32 = arith.constant 0 : i32
    %c0_i32_0 = arith.constant 0 : i32
    %c0_i32_1 = arith.constant 0 : i32
    %c0_i32_2 = arith.constant 0 : i32
    return %c0_i32, %c0_i32_0, %c0_i32_1 : i32, i32, i32
  }
  func.func @transform_3(%arg0: i32) -> (i32, i32, i32) {
    %c0_i32 = arith.constant 0 : i32
    %c0_i32_0 = arith.constant 0 : i32
    %c0_i32_1 = arith.constant 0 : i32
    return %arg0, %c0_i32, %c0_i32_0 : i32, i32, i32
  }
}

module attributes {stable_mosaic.version = 11 : i64} {
  func.func @conv_stats_kernel(%arg0: i32, %arg1: i32, %arg2: memref<1x2x10x256xbf16, #tpu.memory_space<vmem>>, %arg3: memref<3x256x256xbf16, #tpu.memory_space<vmem>>, %arg4: memref<2x8x256xbf16, #tpu.memory_space<vmem>>, %arg5: memref<1x1x256xf32, #tpu.memory_space<vmem>>, %arg6: memref<1x1x256xf32, #tpu.memory_space<vmem>>) attributes {dimension_semantics = [#tpu.dimension_semantics<parallel>, #tpu.dimension_semantics<arbitrary>], iteration_bounds = array<i64: 1, 1>, scalar_prefetch = 0 : i64, scratch_operands = 0 : i64, tpu.core_type = #tpu.core_type<tc>, window_params = [{transform_indices = @transform_0, window_bounds = array<i64: 1, 2, 10, 256>}, {pipeline_mode = #tpu.pipeline_mode<synchronous>, transform_indices = @transform_1, window_bounds = array<i64: 3, 256, 256>}, {transform_indices = @transform_2, window_bounds = array<i64: 2, 8, 256>}, {transform_indices = @transform_3, window_bounds = array<i64: 1, 1, 256>}, {transform_indices = @transform_4, window_bounds = array<i64: 1, 1, 256>}]} {
    %c0_i32 = arith.constant 0 : i32
    %0 = arith.cmpi eq, %arg1, %c0_i32 : i32
    %1 = arith.extui %0 : i1 to i32
    %c0_i32_0 = arith.constant 0 : i32
    %2 = arith.cmpi ne, %1, %c0_i32_0 : i32
    scf.if %2 {
      %cst_69 = arith.constant 0.000000e+00 : f32
      %69 = vector.broadcast %cst_69 : f32 to vector<1x1x256xf32>
      %c0_70 = arith.constant 0 : index
      %c0_71 = arith.constant 0 : index
      %c0_72 = arith.constant 0 : index
      %70 = vector.load %arg5[%c0_70, %c0_71, %c0_72] : memref<1x1x256xf32, #tpu.memory_space<vmem>>, vector<1x1x256xf32>
      tpu.vector_store %arg5[%c0_70, %c0_71, %c0_72], %69 {strides = array<i32>} : memref<1x1x256xf32, #tpu.memory_space<vmem>>, vector<1x1x256xf32>,
      %cst_73 = arith.constant 0.000000e+00 : f32
      %71 = vector.broadcast %cst_73 : f32 to vector<1x1x256xf32>
      %c0_74 = arith.constant 0 : index
      %c0_75 = arith.constant 0 : index
      %c0_76 = arith.constant 0 : index
      %72 = vector.load %arg6[%c0_74, %c0_75, %c0_76] : memref<1x1x256xf32, #tpu.memory_space<vmem>>, vector<1x1x256xf32>
      tpu.vector_store %arg6[%c0_74, %c0_75, %c0_76], %71 {strides = array<i32>} : memref<1x1x256xf32, #tpu.memory_space<vmem>>, vector<1x1x256xf32>,
    } else {
    }
    %cst = arith.constant 0.000000e+00 : f32
    %3 = vector.broadcast %cst : f32 to vector<1x256xf32>
    %cst_1 = arith.constant 0.000000e+00 : f32
    %4 = vector.broadcast %cst_1 : f32 to vector<1x256xf32>
    %c0 = arith.constant 0 : index
    %c0_2 = arith.constant 0 : index
    %c0_3 = arith.constant 0 : index
    %c0_4 = arith.constant 0 : index
    %5 = vector.load %arg2[%c0, %c0_2, %c0_3, %c0_4] : memref<1x2x10x256xbf16, #tpu.memory_space<vmem>>, vector<1x1x8x256xbf16>
    %6 = vector.shape_cast %5 : vector<1x1x8x256xbf16> to vector<8x256xbf16>
    %c0_5 = arith.constant 0 : index
    %c0_6 = arith.constant 0 : index
    %c0_7 = arith.constant 0 : index
    %7 = vector.load %arg3[%c0_5, %c0_6, %c0_7] : memref<3x256x256xbf16, #tpu.memory_space<vmem>>, vector<1x256x256xbf16>
    %8 = vector.shape_cast %7 : vector<1x256x256xbf16> to vector<256x256xbf16>
    %cst_8 = arith.constant dense<0.000000e+00> : vector<8x256xf32>
    %9 = tpu.matmul %6, %8, %cst_8 {dimension_numbers = #tpu.dot_dimension_numbers<[1], [0], [0], [1], [0, 0, 1, 1], [], []>} : vector<8x256xbf16>, vector<256x256xbf16>, vector<8x256xf32> -> vector<8x256xf32>
    %c0_9 = arith.constant 0 : index
    %c0_10 = arith.constant 0 : index
    %c1 = arith.constant 1 : index
    %c0_11 = arith.constant 0 : index
    %10 = vector.load %arg2[%c0_9, %c0_10, %c1, %c0_11] : memref<1x2x10x256xbf16, #tpu.memory_space<vmem>>, vector<1x1x8x256xbf16>
    %11 = vector.shape_cast %10 : vector<1x1x8x256xbf16> to vector<8x256xbf16>
    %c1_12 = arith.constant 1 : index
    %c0_13 = arith.constant 0 : index
    %c0_14 = arith.constant 0 : index
    %12 = vector.load %arg3[%c1_12, %c0_13, %c0_14] : memref<3x256x256xbf16, #tpu.memory_space<vmem>>, vector<1x256x256xbf16>
    %13 = vector.shape_cast %12 : vector<1x256x256xbf16> to vector<256x256xbf16>
    %cst_15 = arith.constant dense<0.000000e+00> : vector<8x256xf32>
    %14 = tpu.matmul %11, %13, %cst_15 {dimension_numbers = #tpu.dot_dimension_numbers<[1], [0], [0], [1], [0, 0, 1, 1], [], []>} : vector<8x256xbf16>, vector<256x256xbf16>, vector<8x256xf32> -> vector<8x256xf32>
    %15 = arith.addf %9, %14 : vector<8x256xf32>
    %c0_16 = arith.constant 0 : index
    %c0_17 = arith.constant 0 : index
    %c2 = arith.constant 2 : index
    %c0_18 = arith.constant 0 : index
    %16 = vector.load %arg2[%c0_16, %c0_17, %c2, %c0_18] : memref<1x2x10x256xbf16, #tpu.memory_space<vmem>>, vector<1x1x8x256xbf16>
    %17 = vector.shape_cast %16 : vector<1x1x8x256xbf16> to vector<8x256xbf16>
    %c2_19 = arith.constant 2 : index
    %c0_20 = arith.constant 0 : index
    %c0_21 = arith.constant 0 : index
    %18 = vector.load %arg3[%c2_19, %c0_20, %c0_21] : memref<3x256x256xbf16, #tpu.memory_space<vmem>>, vector<1x256x256xbf16>
    %19 = vector.shape_cast %18 : vector<1x256x256xbf16> to vector<256x256xbf16>
    %cst_22 = arith.constant dense<0.000000e+00> : vector<8x256xf32>
    %20 = tpu.matmul %17, %19, %cst_22 {dimension_numbers = #tpu.dot_dimension_numbers<[1], [0], [0], [1], [0, 0, 1, 1], [], []>} : vector<8x256xbf16>, vector<256x256xbf16>, vector<8x256xf32> -> vector<8x256xf32>
    %21 = arith.addf %15, %20 : vector<8x256xf32>
    %22 = arith.truncf %21 : vector<8x256xf32> to vector<8x256xbf16>
    %c0_23 = arith.constant 0 : index
    %c0_24 = arith.constant 0 : index
    %c0_25 = arith.constant 0 : index
    %23 = vector.load %arg4[%c0_23, %c0_24, %c0_25] : memref<2x8x256xbf16, #tpu.memory_space<vmem>>, vector<1x8x256xbf16>
    %24 = vector.shape_cast %23 : vector<1x8x256xbf16> to vector<8x256xbf16>
    %25 = vector.shape_cast %22 : vector<8x256xbf16> to vector<1x8x256xbf16>
    tpu.vector_store %arg4[%c0_23, %c0_24, %c0_25], %25 {strides = array<i32>} : memref<2x8x256xbf16, #tpu.memory_space<vmem>>, vector<1x8x256xbf16>,
    %cst_26 = arith.constant dense<0.000000e+00> : vector<256xf32>
    %26 = vector.multi_reduction <add>, %21, %cst_26 [0] : vector<8x256xf32> to vector<256xf32>
    %27 = vector.shape_cast %26 : vector<256xf32> to vector<1x256xf32>
    %28 = arith.addf %3, %27 : vector<1x256xf32>
    %29 = arith.mulf %21, %21 : vector<8x256xf32>
    %cst_27 = arith.constant dense<0.000000e+00> : vector<256xf32>
    %30 = vector.multi_reduction <add>, %29, %cst_27 [0] : vector<8x256xf32> to vector<256xf32>
    %31 = vector.shape_cast %30 : vector<256xf32> to vector<1x256xf32>
    %32 = arith.addf %4, %31 : vector<1x256xf32>
    %c0_28 = arith.constant 0 : index
    %c1_29 = arith.constant 1 : index
    %c0_30 = arith.constant 0 : index
    %c0_31 = arith.constant 0 : index
    %33 = vector.load %arg2[%c0_28, %c1_29, %c0_30, %c0_31] : memref<1x2x10x256xbf16, #tpu.memory_space<vmem>>, vector<1x1x8x256xbf16>
    %34 = vector.shape_cast %33 : vector<1x1x8x256xbf16> to vector<8x256xbf16>
    %c0_32 = arith.constant 0 : index
    %c0_33 = arith.constant 0 : index
    %c0_34 = arith.constant 0 : index
    %35 = vector.load %arg3[%c0_32, %c0_33, %c0_34] : memref<3x256x256xbf16, #tpu.memory_space<vmem>>, vector<1x256x256xbf16>
    %36 = vector.shape_cast %35 : vector<1x256x256xbf16> to vector<256x256xbf16>
    %cst_35 = arith.constant dense<0.000000e+00> : vector<8x256xf32>
    %37 = tpu.matmul %34, %36, %cst_35 {dimension_numbers = #tpu.dot_dimension_numbers<[1], [0], [0], [1], [0, 0, 1, 1], [], []>} : vector<8x256xbf16>, vector<256x256xbf16>, vector<8x256xf32> -> vector<8x256xf32>
    %c0_36 = arith.constant 0 : index
    %c1_37 = arith.constant 1 : index
    %c1_38 = arith.constant 1 : index
    %c0_39 = arith.constant 0 : index
    %38 = vector.load %arg2[%c0_36, %c1_37, %c1_38, %c0_39] : memref<1x2x10x256xbf16, #tpu.memory_space<vmem>>, vector<1x1x8x256xbf16>
    %39 = vector.shape_cast %38 : vector<1x1x8x256xbf16> to vector<8x256xbf16>
    %c1_40 = arith.constant 1 : index
    %c0_41 = arith.constant 0 : index
    %c0_42 = arith.constant 0 : index
    %40 = vector.load %arg3[%c1_40, %c0_41, %c0_42] : memref<3x256x256xbf16, #tpu.memory_space<vmem>>, vector<1x256x256xbf16>
    %41 = vector.shape_cast %40 : vector<1x256x256xbf16> to vector<256x256xbf16>
    %cst_43 = arith.constant dense<0.000000e+00> : vector<8x256xf32>
    %42 = tpu.matmul %39, %41, %cst_43 {dimension_numbers = #tpu.dot_dimension_numbers<[1], [0], [0], [1], [0, 0, 1, 1], [], []>} : vector<8x256xbf16>, vector<256x256xbf16>, vector<8x256xf32> -> vector<8x256xf32>
    %43 = arith.addf %37, %42 : vector<8x256xf32>
    %c0_44 = arith.constant 0 : index
    %c1_45 = arith.constant 1 : index
    %c2_46 = arith.constant 2 : index
    %c0_47 = arith.constant 0 : index
    %44 = vector.load %arg2[%c0_44, %c1_45, %c2_46, %c0_47] : memref<1x2x10x256xbf16, #tpu.memory_space<vmem>>, vector<1x1x8x256xbf16>
    %45 = vector.shape_cast %44 : vector<1x1x8x256xbf16> to vector<8x256xbf16>
    %c2_48 = arith.constant 2 : index
    %c0_49 = arith.constant 0 : index
    %c0_50 = arith.constant 0 : index
    %46 = vector.load %arg3[%c2_48, %c0_49, %c0_50] : memref<3x256x256xbf16, #tpu.memory_space<vmem>>, vector<1x256x256xbf16>
    %47 = vector.shape_cast %46 : vector<1x256x256xbf16> to vector<256x256xbf16>
    %cst_51 = arith.constant dense<0.000000e+00> : vector<8x256xf32>
    %48 = tpu.matmul %45, %47, %cst_51 {dimension_numbers = #tpu.dot_dimension_numbers<[1], [0], [0], [1], [0, 0, 1, 1], [], []>} : vector<8x256xbf16>, vector<256x256xbf16>, vector<8x256xf32> -> vector<8x256xf32>
    %49 = arith.addf %43, %48 : vector<8x256xf32>
    %50 = arith.truncf %49 : vector<8x256xf32> to vector<8x256xbf16>
    %c1_52 = arith.constant 1 : index
    %c0_53 = arith.constant 0 : index
    %c0_54 = arith.constant 0 : index
    %51 = vector.load %arg4[%c1_52, %c0_53, %c0_54] : memref<2x8x256xbf16, #tpu.memory_space<vmem>>, vector<1x8x256xbf16>
    %52 = vector.shape_cast %51 : vector<1x8x256xbf16> to vector<8x256xbf16>
    %53 = vector.shape_cast %50 : vector<8x256xbf16> to vector<1x8x256xbf16>
    tpu.vector_store %arg4[%c1_52, %c0_53, %c0_54], %53 {strides = array<i32>} : memref<2x8x256xbf16, #tpu.memory_space<vmem>>, vector<1x8x256xbf16>,
    %cst_55 = arith.constant dense<0.000000e+00> : vector<256xf32>
    %54 = vector.multi_reduction <add>, %49, %cst_55 [0] : vector<8x256xf32> to vector<256xf32>
    %55 = vector.shape_cast %54 : vector<256xf32> to vector<1x256xf32>
    %56 = arith.addf %28, %55 : vector<1x256xf32>
    %57 = arith.mulf %49, %49 : vector<8x256xf32>
    %cst_56 = arith.constant dense<0.000000e+00> : vector<256xf32>
    %58 = vector.multi_reduction <add>, %57, %cst_56 [0] : vector<8x256xf32> to vector<256xf32>
    %59 = vector.shape_cast %58 : vector<256xf32> to vector<1x256xf32>
    %60 = arith.addf %32, %59 : vector<1x256xf32>
    %c0_57 = arith.constant 0 : index
    %c0_58 = arith.constant 0 : index
    %c0_59 = arith.constant 0 : index
    %61 = vector.load %arg5[%c0_57, %c0_58, %c0_59] : memref<1x1x256xf32, #tpu.memory_space<vmem>>, vector<1x1x256xf32>
    %62 = vector.shape_cast %56 : vector<1x256xf32> to vector<1x1x256xf32>
    %63 = arith.addf %61, %62 : vector<1x1x256xf32>
    %c0_60 = arith.constant 0 : index
    %c0_61 = arith.constant 0 : index
    %c0_62 = arith.constant 0 : index
    %64 = vector.load %arg5[%c0_60, %c0_61, %c0_62] : memref<1x1x256xf32, #tpu.memory_space<vmem>>, vector<1x1x256xf32>
    tpu.vector_store %arg5[%c0_60, %c0_61, %c0_62], %63 {strides = array<i32>} : memref<1x1x256xf32, #tpu.memory_space<vmem>>, vector<1x1x256xf32>,
    %c0_63 = arith.constant 0 : index
    %c0_64 = arith.constant 0 : index
    %c0_65 = arith.constant 0 : index
    %65 = vector.load %arg6[%c0_63, %c0_64, %c0_65] : memref<1x1x256xf32, #tpu.memory_space<vmem>>, vector<1x1x256xf32>
    %66 = vector.shape_cast %60 : vector<1x256xf32> to vector<1x1x256xf32>
    %67 = arith.addf %65, %66 : vector<1x1x256xf32>
    %c0_66 = arith.constant 0 : index
    %c0_67 = arith.constant 0 : index
    %c0_68 = arith.constant 0 : index
    %68 = vector.load %arg6[%c0_66, %c0_67, %c0_68] : memref<1x1x256xf32, #tpu.memory_space<vmem>>, vector<1x1x256xf32>
    tpu.vector_store %arg6[%c0_66, %c0_67, %c0_68], %67 {strides = array<i32>} : memref<1x1x256xf32, #tpu.memory_space<vmem>>, vector<1x1x256xf32>,
    return
  }
  func.func @transform_0(%arg0: i32, %arg1: i32) -> (i32, i32, i32, i32) {
    %c1_i32 = arith.constant 1 : i32
    %0 = arith.muli %arg0, %c1_i32 : i32
    %1 = arith.addi %0, %arg1 : i32
    %c0_i32 = arith.constant 0 : i32
    %c0_i32_0 = arith.constant 0 : i32
    %c0_i32_1 = arith.constant 0 : i32
    %c0_i32_2 = arith.constant 0 : i32
    return %c0_i32, %1, %c0_i32_0, %c0_i32_1 : i32, i32, i32, i32
  }
  func.func @transform_1(%arg0: i32, %arg1: i32) -> (i32, i32, i32) {
    %c0_i32 = arith.constant 0 : i32
    %c0_i32_0 = arith.constant 0 : i32
    %c0_i32_1 = arith.constant 0 : i32
    %c0_i32_2 = arith.constant 0 : i32
    return %c0_i32, %c0_i32_0, %c0_i32_1 : i32, i32, i32
  }
  func.func @transform_2(%arg0: i32, %arg1: i32) -> (i32, i32, i32) {
    %c1_i32 = arith.constant 1 : i32
    %0 = arith.muli %arg0, %c1_i32 : i32
    %1 = arith.addi %0, %arg1 : i32
    %c0_i32 = arith.constant 0 : i32
    %c0_i32_0 = arith.constant 0 : i32
    %c0_i32_1 = arith.constant 0 : i32
    return %1, %c0_i32, %c0_i32_0 : i32, i32, i32
  }
  func.func @transform_3(%arg0: i32, %arg1: i32) -> (i32, i32, i32) {
    %c0_i32 = arith.constant 0 : i32
    %c0_i32_0 = arith.constant 0 : i32
    %c0_i32_1 = arith.constant 0 : i32
    return %arg0, %c0_i32, %c0_i32_0 : i32, i32, i32
  }
  func.func @transform_4(%arg0: i32, %arg1: i32) -> (i32, i32, i32) {
    %c0_i32 = arith.constant 0 : i32
    %c0_i32_0 = arith.constant 0 : i32
    %c0_i32_1 = arith.constant 0 : i32
    return %arg0, %c0_i32, %c0_i32_0 : i32, i32, i32
  }
}

module attributes {stable_mosaic.version = 11 : i64} {
  func.func @bn_res_act_kernel(%arg0: i32, %arg1: memref<2x8x256xbf16, #tpu.memory_space<vmem>>, %arg2: memref<1x1x256xf32, #tpu.memory_space<vmem>>, %arg3: memref<1x1x256xf32, #tpu.memory_space<vmem>>, %arg4: memref<2x8x256xbf16, #tpu.memory_space<vmem>>, %arg5: memref<2x8x256xbf16, #tpu.memory_space<vmem>>) attributes {dimension_semantics = [#tpu.dimension_semantics<parallel>], iteration_bounds = array<i64: 1>, scalar_prefetch = 0 : i64, scratch_operands = 0 : i64, tpu.core_type = #tpu.core_type<tc>, window_params = [{transform_indices = @transform_0, window_bounds = array<i64: 2, 8, 256>}, {pipeline_mode = #tpu.pipeline_mode<synchronous>, transform_indices = @transform_1, window_bounds = array<i64: 1, 1, 256>}, {pipeline_mode = #tpu.pipeline_mode<synchronous>, transform_indices = @transform_2, window_bounds = array<i64: 1, 1, 256>}, {transform_indices = @transform_3, window_bounds = array<i64: 2, 8, 256>}, {transform_indices = @transform_4, window_bounds = array<i64: 2, 8, 256>}]} {
    %c0 = arith.constant 0 : index
    %c0_0 = arith.constant 0 : index
    %c0_1 = arith.constant 0 : index
    %0 = vector.load %arg1[%c0, %c0_0, %c0_1] : memref<2x8x256xbf16, #tpu.memory_space<vmem>>, vector<2x8x256xbf16>
    %1 = arith.extf %0 : vector<2x8x256xbf16> to vector<2x8x256xf32>
    %c0_2 = arith.constant 0 : index
    %c0_3 = arith.constant 0 : index
    %c0_4 = arith.constant 0 : index
    %2 = vector.load %arg2[%c0_2, %c0_3, %c0_4] : memref<1x1x256xf32, #tpu.memory_space<vmem>>, vector<1x1x256xf32>
    %3 = vector.broadcast %2 : vector<1x1x256xf32> to vector<2x8x256xf32>
    %4 = arith.mulf %1, %3 : vector<2x8x256xf32>
    %c0_5 = arith.constant 0 : index
    %c0_6 = arith.constant 0 : index
    %c0_7 = arith.constant 0 : index
    %5 = vector.load %arg3[%c0_5, %c0_6, %c0_7] : memref<1x1x256xf32, #tpu.memory_space<vmem>>, vector<1x1x256xf32>
    %6 = vector.broadcast %5 : vector<1x1x256xf32> to vector<2x8x256xf32>
    %7 = arith.addf %4, %6 : vector<2x8x256xf32>
    %c0_8 = arith.constant 0 : index
    %c0_9 = arith.constant 0 : index
    %c0_10 = arith.constant 0 : index
    %8 = vector.load %arg4[%c0_8, %c0_9, %c0_10] : memref<2x8x256xbf16, #tpu.memory_space<vmem>>, vector<2x8x256xbf16>
    %9 = arith.extf %8 : vector<2x8x256xbf16> to vector<2x8x256xf32>
    %10 = arith.addf %7, %9 : vector<2x8x256xf32>
    %cst = arith.constant 0.000000e+00 : f32
    %11 = vector.broadcast %cst : f32 to vector<2x8x256xf32>
    %12 = arith.maximumf %10, %11 : vector<2x8x256xf32>
    %13 = arith.truncf %12 : vector<2x8x256xf32> to vector<2x8x256xbf16>
    %c0_11 = arith.constant 0 : index
    %c0_12 = arith.constant 0 : index
    %c0_13 = arith.constant 0 : index
    %14 = vector.load %arg5[%c0_11, %c0_12, %c0_13] : memref<2x8x256xbf16, #tpu.memory_space<vmem>>, vector<2x8x256xbf16>
    tpu.vector_store %arg5[%c0_11, %c0_12, %c0_13], %13 {strides = array<i32>} : memref<2x8x256xbf16, #tpu.memory_space<vmem>>, vector<2x8x256xbf16>,
    return
  }
  func.func @transform_0(%arg0: i32) -> (i32, i32, i32) {
    %c0_i32 = arith.constant 0 : i32
    %c0_i32_0 = arith.constant 0 : i32
    %c0_i32_1 = arith.constant 0 : i32
    return %arg0, %c0_i32, %c0_i32_0 : i32, i32, i32
  }
  func.func @transform_1(%arg0: i32) -> (i32, i32, i32) {
    %c0_i32 = arith.constant 0 : i32
    %c0_i32_0 = arith.constant 0 : i32
    %c0_i32_1 = arith.constant 0 : i32
    %c0_i32_2 = arith.constant 0 : i32
    return %c0_i32, %c0_i32_0, %c0_i32_1 : i32, i32, i32
  }
  func.func @transform_2(%arg0: i32) -> (i32, i32, i32) {
    %c0_i32 = arith.constant 0 : i32
    %c0_i32_0 = arith.constant 0 : i32
    %c0_i32_1 = arith.constant 0 : i32
    %c0_i32_2 = arith.constant 0 : i32
    return %c0_i32, %c0_i32_0, %c0_i32_1 : i32, i32, i32
  }
  func.func @transform_3(%arg0: i32) -> (i32, i32, i32) {
    %c0_i32 = arith.constant 0 : i32
    %c0_i32_0 = arith.constant 0 : i32
    %c0_i32_1 = arith.constant 0 : i32
    return %arg0, %c0_i32, %c0_i32_0 : i32, i32, i32
  }
  func.func @transform_4(%arg0: i32) -> (i32, i32, i32) {
    %c0_i32 = arith.constant 0 : i32
    %c0_i32_0 = arith.constant 0 : i32
    %c0_i32_1 = arith.constant 0 : i32
    return %arg0, %c0_i32, %c0_i32_0 : i32, i32, i32
  }
}

module attributes {stable_mosaic.version = 11 : i64} {
  func.func @conv_stats_kernel(%arg0: i32, %arg1: i32, %arg2: memref<2x2x5x256xbf16, #tpu.memory_space<vmem>>, %arg3: memref<3x256x256xbf16, #tpu.memory_space<vmem>>, %arg4: memref<2x4x256xbf16, #tpu.memory_space<vmem>>, %arg5: memref<1x1x256xf32, #tpu.memory_space<vmem>>, %arg6: memref<1x1x256xf32, #tpu.memory_space<vmem>>) attributes {dimension_semantics = [#tpu.dimension_semantics<parallel>, #tpu.dimension_semantics<arbitrary>], iteration_bounds = array<i64: 1, 1>, scalar_prefetch = 0 : i64, scratch_operands = 0 : i64, tpu.core_type = #tpu.core_type<tc>, window_params = [{transform_indices = @transform_0, window_bounds = array<i64: 2, 2, 5, 256>}, {pipeline_mode = #tpu.pipeline_mode<synchronous>, transform_indices = @transform_1, window_bounds = array<i64: 3, 256, 256>}, {transform_indices = @transform_2, window_bounds = array<i64: 2, 4, 256>}, {transform_indices = @transform_3, window_bounds = array<i64: 1, 1, 256>}, {transform_indices = @transform_4, window_bounds = array<i64: 1, 1, 256>}]} {
    %c0_i32 = arith.constant 0 : i32
    %0 = arith.cmpi eq, %arg1, %c0_i32 : i32
    %1 = arith.extui %0 : i1 to i32
    %c0_i32_0 = arith.constant 0 : i32
    %2 = arith.cmpi ne, %1, %c0_i32_0 : i32
    scf.if %2 {
      %cst_69 = arith.constant 0.000000e+00 : f32
      %69 = vector.broadcast %cst_69 : f32 to vector<1x1x256xf32>
      %c0_70 = arith.constant 0 : index
      %c0_71 = arith.constant 0 : index
      %c0_72 = arith.constant 0 : index
      %70 = vector.load %arg5[%c0_70, %c0_71, %c0_72] : memref<1x1x256xf32, #tpu.memory_space<vmem>>, vector<1x1x256xf32>
      tpu.vector_store %arg5[%c0_70, %c0_71, %c0_72], %69 {strides = array<i32>} : memref<1x1x256xf32, #tpu.memory_space<vmem>>, vector<1x1x256xf32>,
      %cst_73 = arith.constant 0.000000e+00 : f32
      %71 = vector.broadcast %cst_73 : f32 to vector<1x1x256xf32>
      %c0_74 = arith.constant 0 : index
      %c0_75 = arith.constant 0 : index
      %c0_76 = arith.constant 0 : index
      %72 = vector.load %arg6[%c0_74, %c0_75, %c0_76] : memref<1x1x256xf32, #tpu.memory_space<vmem>>, vector<1x1x256xf32>
      tpu.vector_store %arg6[%c0_74, %c0_75, %c0_76], %71 {strides = array<i32>} : memref<1x1x256xf32, #tpu.memory_space<vmem>>, vector<1x1x256xf32>,
    } else {
    }
    %cst = arith.constant 0.000000e+00 : f32
    %3 = vector.broadcast %cst : f32 to vector<1x256xf32>
    %cst_1 = arith.constant 0.000000e+00 : f32
    %4 = vector.broadcast %cst_1 : f32 to vector<1x256xf32>
    %c0 = arith.constant 0 : index
    %c0_2 = arith.constant 0 : index
    %c0_3 = arith.constant 0 : index
    %c0_4 = arith.constant 0 : index
    %5 = vector.load %arg2[%c0, %c0_2, %c0_3, %c0_4] : memref<2x2x5x256xbf16, #tpu.memory_space<vmem>>, vector<1x1x4x256xbf16>
    %6 = vector.shape_cast %5 : vector<1x1x4x256xbf16> to vector<4x256xbf16>
    %c0_5 = arith.constant 0 : index
    %c0_6 = arith.constant 0 : index
    %c0_7 = arith.constant 0 : index
    %7 = vector.load %arg3[%c0_5, %c0_6, %c0_7] : memref<3x256x256xbf16, #tpu.memory_space<vmem>>, vector<1x256x256xbf16>
    %8 = vector.shape_cast %7 : vector<1x256x256xbf16> to vector<256x256xbf16>
    %cst_8 = arith.constant dense<0.000000e+00> : vector<4x256xf32>
    %9 = tpu.matmul %6, %8, %cst_8 {dimension_numbers = #tpu.dot_dimension_numbers<[1], [0], [0], [1], [0, 0, 1, 1], [], []>} : vector<4x256xbf16>, vector<256x256xbf16>, vector<4x256xf32> -> vector<4x256xf32>
    %c1 = arith.constant 1 : index
    %c0_9 = arith.constant 0 : index
    %c0_10 = arith.constant 0 : index
    %c0_11 = arith.constant 0 : index
    %10 = vector.load %arg2[%c1, %c0_9, %c0_10, %c0_11] : memref<2x2x5x256xbf16, #tpu.memory_space<vmem>>, vector<1x1x4x256xbf16>
    %11 = vector.shape_cast %10 : vector<1x1x4x256xbf16> to vector<4x256xbf16>
    %c1_12 = arith.constant 1 : index
    %c0_13 = arith.constant 0 : index
    %c0_14 = arith.constant 0 : index
    %12 = vector.load %arg3[%c1_12, %c0_13, %c0_14] : memref<3x256x256xbf16, #tpu.memory_space<vmem>>, vector<1x256x256xbf16>
    %13 = vector.shape_cast %12 : vector<1x256x256xbf16> to vector<256x256xbf16>
    %cst_15 = arith.constant dense<0.000000e+00> : vector<4x256xf32>
    %14 = tpu.matmul %11, %13, %cst_15 {dimension_numbers = #tpu.dot_dimension_numbers<[1], [0], [0], [1], [0, 0, 1, 1], [], []>} : vector<4x256xbf16>, vector<256x256xbf16>, vector<4x256xf32> -> vector<4x256xf32>
    %15 = arith.addf %9, %14 : vector<4x256xf32>
    %c0_16 = arith.constant 0 : index
    %c0_17 = arith.constant 0 : index
    %c1_18 = arith.constant 1 : index
    %c0_19 = arith.constant 0 : index
    %16 = vector.load %arg2[%c0_16, %c0_17, %c1_18, %c0_19] : memref<2x2x5x256xbf16, #tpu.memory_space<vmem>>, vector<1x1x4x256xbf16>
    %17 = vector.shape_cast %16 : vector<1x1x4x256xbf16> to vector<4x256xbf16>
    %c2 = arith.constant 2 : index
    %c0_20 = arith.constant 0 : index
    %c0_21 = arith.constant 0 : index
    %18 = vector.load %arg3[%c2, %c0_20, %c0_21] : memref<3x256x256xbf16, #tpu.memory_space<vmem>>, vector<1x256x256xbf16>
    %19 = vector.shape_cast %18 : vector<1x256x256xbf16> to vector<256x256xbf16>
    %cst_22 = arith.constant dense<0.000000e+00> : vector<4x256xf32>
    %20 = tpu.matmul %17, %19, %cst_22 {dimension_numbers = #tpu.dot_dimension_numbers<[1], [0], [0], [1], [0, 0, 1, 1], [], []>} : vector<4x256xbf16>, vector<256x256xbf16>, vector<4x256xf32> -> vector<4x256xf32>
    %21 = arith.addf %15, %20 : vector<4x256xf32>
    %22 = arith.truncf %21 : vector<4x256xf32> to vector<4x256xbf16>
    %c0_23 = arith.constant 0 : index
    %c0_24 = arith.constant 0 : index
    %c0_25 = arith.constant 0 : index
    %23 = vector.load %arg4[%c0_23, %c0_24, %c0_25] : memref<2x4x256xbf16, #tpu.memory_space<vmem>>, vector<1x4x256xbf16>
    %24 = vector.shape_cast %23 : vector<1x4x256xbf16> to vector<4x256xbf16>
    %25 = vector.shape_cast %22 : vector<4x256xbf16> to vector<1x4x256xbf16>
    tpu.vector_store %arg4[%c0_23, %c0_24, %c0_25], %25 {strides = array<i32>} : memref<2x4x256xbf16, #tpu.memory_space<vmem>>, vector<1x4x256xbf16>,
    %cst_26 = arith.constant dense<0.000000e+00> : vector<256xf32>
    %26 = vector.multi_reduction <add>, %21, %cst_26 [0] : vector<4x256xf32> to vector<256xf32>
    %27 = vector.shape_cast %26 : vector<256xf32> to vector<1x256xf32>
    %28 = arith.addf %3, %27 : vector<1x256xf32>
    %29 = arith.mulf %21, %21 : vector<4x256xf32>
    %cst_27 = arith.constant dense<0.000000e+00> : vector<256xf32>
    %30 = vector.multi_reduction <add>, %29, %cst_27 [0] : vector<4x256xf32> to vector<256xf32>
    %31 = vector.shape_cast %30 : vector<256xf32> to vector<1x256xf32>
    %32 = arith.addf %4, %31 : vector<1x256xf32>
    %c0_28 = arith.constant 0 : index
    %c1_29 = arith.constant 1 : index
    %c0_30 = arith.constant 0 : index
    %c0_31 = arith.constant 0 : index
    %33 = vector.load %arg2[%c0_28, %c1_29, %c0_30, %c0_31] : memref<2x2x5x256xbf16, #tpu.memory_space<vmem>>, vector<1x1x4x256xbf16>
    %34 = vector.shape_cast %33 : vector<1x1x4x256xbf16> to vector<4x256xbf16>
    %c0_32 = arith.constant 0 : index
    %c0_33 = arith.constant 0 : index
    %c0_34 = arith.constant 0 : index
    %35 = vector.load %arg3[%c0_32, %c0_33, %c0_34] : memref<3x256x256xbf16, #tpu.memory_space<vmem>>, vector<1x256x256xbf16>
    %36 = vector.shape_cast %35 : vector<1x256x256xbf16> to vector<256x256xbf16>
    %cst_35 = arith.constant dense<0.000000e+00> : vector<4x256xf32>
    %37 = tpu.matmul %34, %36, %cst_35 {dimension_numbers = #tpu.dot_dimension_numbers<[1], [0], [0], [1], [0, 0, 1, 1], [], []>} : vector<4x256xbf16>, vector<256x256xbf16>, vector<4x256xf32> -> vector<4x256xf32>
    %c1_36 = arith.constant 1 : index
    %c1_37 = arith.constant 1 : index
    %c0_38 = arith.constant 0 : index
    %c0_39 = arith.constant 0 : index
    %38 = vector.load %arg2[%c1_36, %c1_37, %c0_38, %c0_39] : memref<2x2x5x256xbf16, #tpu.memory_space<vmem>>, vector<1x1x4x256xbf16>
    %39 = vector.shape_cast %38 : vector<1x1x4x256xbf16> to vector<4x256xbf16>
    %c1_40 = arith.constant 1 : index
    %c0_41 = arith.constant 0 : index
    %c0_42 = arith.constant 0 : index
    %40 = vector.load %arg3[%c1_40, %c0_41, %c0_42] : memref<3x256x256xbf16, #tpu.memory_space<vmem>>, vector<1x256x256xbf16>
    %41 = vector.shape_cast %40 : vector<1x256x256xbf16> to vector<256x256xbf16>
    %cst_43 = arith.constant dense<0.000000e+00> : vector<4x256xf32>
    %42 = tpu.matmul %39, %41, %cst_43 {dimension_numbers = #tpu.dot_dimension_numbers<[1], [0], [0], [1], [0, 0, 1, 1], [], []>} : vector<4x256xbf16>, vector<256x256xbf16>, vector<4x256xf32> -> vector<4x256xf32>
    %43 = arith.addf %37, %42 : vector<4x256xf32>
    %c0_44 = arith.constant 0 : index
    %c1_45 = arith.constant 1 : index
    %c1_46 = arith.constant 1 : index
    %c0_47 = arith.constant 0 : index
    %44 = vector.load %arg2[%c0_44, %c1_45, %c1_46, %c0_47] : memref<2x2x5x256xbf16, #tpu.memory_space<vmem>>, vector<1x1x4x256xbf16>
    %45 = vector.shape_cast %44 : vector<1x1x4x256xbf16> to vector<4x256xbf16>
    %c2_48 = arith.constant 2 : index
    %c0_49 = arith.constant 0 : index
    %c0_50 = arith.constant 0 : index
    %46 = vector.load %arg3[%c2_48, %c0_49, %c0_50] : memref<3x256x256xbf16, #tpu.memory_space<vmem>>, vector<1x256x256xbf16>
    %47 = vector.shape_cast %46 : vector<1x256x256xbf16> to vector<256x256xbf16>
    %cst_51 = arith.constant dense<0.000000e+00> : vector<4x256xf32>
    %48 = tpu.matmul %45, %47, %cst_51 {dimension_numbers = #tpu.dot_dimension_numbers<[1], [0], [0], [1], [0, 0, 1, 1], [], []>} : vector<4x256xbf16>, vector<256x256xbf16>, vector<4x256xf32> -> vector<4x256xf32>
    %49 = arith.addf %43, %48 : vector<4x256xf32>
    %50 = arith.truncf %49 : vector<4x256xf32> to vector<4x256xbf16>
    %c1_52 = arith.constant 1 : index
    %c0_53 = arith.constant 0 : index
    %c0_54 = arith.constant 0 : index
    %51 = vector.load %arg4[%c1_52, %c0_53, %c0_54] : memref<2x4x256xbf16, #tpu.memory_space<vmem>>, vector<1x4x256xbf16>
    %52 = vector.shape_cast %51 : vector<1x4x256xbf16> to vector<4x256xbf16>
    %53 = vector.shape_cast %50 : vector<4x256xbf16> to vector<1x4x256xbf16>
    tpu.vector_store %arg4[%c1_52, %c0_53, %c0_54], %53 {strides = array<i32>} : memref<2x4x256xbf16, #tpu.memory_space<vmem>>, vector<1x4x256xbf16>,
    %cst_55 = arith.constant dense<0.000000e+00> : vector<256xf32>
    %54 = vector.multi_reduction <add>, %49, %cst_55 [0] : vector<4x256xf32> to vector<256xf32>
    %55 = vector.shape_cast %54 : vector<256xf32> to vector<1x256xf32>
    %56 = arith.addf %28, %55 : vector<1x256xf32>
    %57 = arith.mulf %49, %49 : vector<4x256xf32>
    %cst_56 = arith.constant dense<0.000000e+00> : vector<256xf32>
    %58 = vector.multi_reduction <add>, %57, %cst_56 [0] : vector<4x256xf32> to vector<256xf32>
    %59 = vector.shape_cast %58 : vector<256xf32> to vector<1x256xf32>
    %60 = arith.addf %32, %59 : vector<1x256xf32>
    %c0_57 = arith.constant 0 : index
    %c0_58 = arith.constant 0 : index
    %c0_59 = arith.constant 0 : index
    %61 = vector.load %arg5[%c0_57, %c0_58, %c0_59] : memref<1x1x256xf32, #tpu.memory_space<vmem>>, vector<1x1x256xf32>
    %62 = vector.shape_cast %56 : vector<1x256xf32> to vector<1x1x256xf32>
    %63 = arith.addf %61, %62 : vector<1x1x256xf32>
    %c0_60 = arith.constant 0 : index
    %c0_61 = arith.constant 0 : index
    %c0_62 = arith.constant 0 : index
    %64 = vector.load %arg5[%c0_60, %c0_61, %c0_62] : memref<1x1x256xf32, #tpu.memory_space<vmem>>, vector<1x1x256xf32>
    tpu.vector_store %arg5[%c0_60, %c0_61, %c0_62], %63 {strides = array<i32>} : memref<1x1x256xf32, #tpu.memory_space<vmem>>, vector<1x1x256xf32>,
    %c0_63 = arith.constant 0 : index
    %c0_64 = arith.constant 0 : index
    %c0_65 = arith.constant 0 : index
    %65 = vector.load %arg6[%c0_63, %c0_64, %c0_65] : memref<1x1x256xf32, #tpu.memory_space<vmem>>, vector<1x1x256xf32>
    %66 = vector.shape_cast %60 : vector<1x256xf32> to vector<1x1x256xf32>
    %67 = arith.addf %65, %66 : vector<1x1x256xf32>
    %c0_66 = arith.constant 0 : index
    %c0_67 = arith.constant 0 : index
    %c0_68 = arith.constant 0 : index
    %68 = vector.load %arg6[%c0_66, %c0_67, %c0_68] : memref<1x1x256xf32, #tpu.memory_space<vmem>>, vector<1x1x256xf32>
    tpu.vector_store %arg6[%c0_66, %c0_67, %c0_68], %67 {strides = array<i32>} : memref<1x1x256xf32, #tpu.memory_space<vmem>>, vector<1x1x256xf32>,
    return
  }
  func.func @transform_0(%arg0: i32, %arg1: i32) -> (i32, i32, i32, i32) {
    %c1_i32 = arith.constant 1 : i32
    %0 = arith.muli %arg0, %c1_i32 : i32
    %1 = arith.addi %0, %arg1 : i32
    %c0_i32 = arith.constant 0 : i32
    %c0_i32_0 = arith.constant 0 : i32
    %c0_i32_1 = arith.constant 0 : i32
    %c0_i32_2 = arith.constant 0 : i32
    return %c0_i32, %1, %c0_i32_0, %c0_i32_1 : i32, i32, i32, i32
  }
  func.func @transform_1(%arg0: i32, %arg1: i32) -> (i32, i32, i32) {
    %c0_i32 = arith.constant 0 : i32
    %c0_i32_0 = arith.constant 0 : i32
    %c0_i32_1 = arith.constant 0 : i32
    %c0_i32_2 = arith.constant 0 : i32
    return %c0_i32, %c0_i32_0, %c0_i32_1 : i32, i32, i32
  }
  func.func @transform_2(%arg0: i32, %arg1: i32) -> (i32, i32, i32) {
    %c1_i32 = arith.constant 1 : i32
    %0 = arith.muli %arg0, %c1_i32 : i32
    %1 = arith.addi %0, %arg1 : i32
    %c0_i32 = arith.constant 0 : i32
    %c0_i32_0 = arith.constant 0 : i32
    %c0_i32_1 = arith.constant 0 : i32
    return %1, %c0_i32, %c0_i32_0 : i32, i32, i32
  }
  func.func @transform_3(%arg0: i32, %arg1: i32) -> (i32, i32, i32) {
    %c0_i32 = arith.constant 0 : i32
    %c0_i32_0 = arith.constant 0 : i32
    %c0_i32_1 = arith.constant 0 : i32
    return %arg0, %c0_i32, %c0_i32_0 : i32, i32, i32
  }
  func.func @transform_4(%arg0: i32, %arg1: i32) -> (i32, i32, i32) {
    %c0_i32 = arith.constant 0 : i32
    %c0_i32_0 = arith.constant 0 : i32
    %c0_i32_1 = arith.constant 0 : i32
    return %arg0, %c0_i32, %c0_i32_0 : i32, i32, i32
  }
}

module attributes {stable_mosaic.version = 11 : i64} {
  func.func @conv_stats_kernel(%arg0: i32, %arg1: i32, %arg2: memref<1x2x6x256xbf16, #tpu.memory_space<vmem>>, %arg3: memref<3x256x256xbf16, #tpu.memory_space<vmem>>, %arg4: memref<2x4x256xbf16, #tpu.memory_space<vmem>>, %arg5: memref<1x1x256xf32, #tpu.memory_space<vmem>>, %arg6: memref<1x1x256xf32, #tpu.memory_space<vmem>>) attributes {dimension_semantics = [#tpu.dimension_semantics<parallel>, #tpu.dimension_semantics<arbitrary>], iteration_bounds = array<i64: 1, 1>, scalar_prefetch = 0 : i64, scratch_operands = 0 : i64, tpu.core_type = #tpu.core_type<tc>, window_params = [{transform_indices = @transform_0, window_bounds = array<i64: 1, 2, 6, 256>}, {pipeline_mode = #tpu.pipeline_mode<synchronous>, transform_indices = @transform_1, window_bounds = array<i64: 3, 256, 256>}, {transform_indices = @transform_2, window_bounds = array<i64: 2, 4, 256>}, {transform_indices = @transform_3, window_bounds = array<i64: 1, 1, 256>}, {transform_indices = @transform_4, window_bounds = array<i64: 1, 1, 256>}]} {
    %c0_i32 = arith.constant 0 : i32
    %0 = arith.cmpi eq, %arg1, %c0_i32 : i32
    %1 = arith.extui %0 : i1 to i32
    %c0_i32_0 = arith.constant 0 : i32
    %2 = arith.cmpi ne, %1, %c0_i32_0 : i32
    scf.if %2 {
      %cst_69 = arith.constant 0.000000e+00 : f32
      %69 = vector.broadcast %cst_69 : f32 to vector<1x1x256xf32>
      %c0_70 = arith.constant 0 : index
      %c0_71 = arith.constant 0 : index
      %c0_72 = arith.constant 0 : index
      %70 = vector.load %arg5[%c0_70, %c0_71, %c0_72] : memref<1x1x256xf32, #tpu.memory_space<vmem>>, vector<1x1x256xf32>
      tpu.vector_store %arg5[%c0_70, %c0_71, %c0_72], %69 {strides = array<i32>} : memref<1x1x256xf32, #tpu.memory_space<vmem>>, vector<1x1x256xf32>,
      %cst_73 = arith.constant 0.000000e+00 : f32
      %71 = vector.broadcast %cst_73 : f32 to vector<1x1x256xf32>
      %c0_74 = arith.constant 0 : index
      %c0_75 = arith.constant 0 : index
      %c0_76 = arith.constant 0 : index
      %72 = vector.load %arg6[%c0_74, %c0_75, %c0_76] : memref<1x1x256xf32, #tpu.memory_space<vmem>>, vector<1x1x256xf32>
      tpu.vector_store %arg6[%c0_74, %c0_75, %c0_76], %71 {strides = array<i32>} : memref<1x1x256xf32, #tpu.memory_space<vmem>>, vector<1x1x256xf32>,
    } else {
    }
    %cst = arith.constant 0.000000e+00 : f32
    %3 = vector.broadcast %cst : f32 to vector<1x256xf32>
    %cst_1 = arith.constant 0.000000e+00 : f32
    %4 = vector.broadcast %cst_1 : f32 to vector<1x256xf32>
    %c0 = arith.constant 0 : index
    %c0_2 = arith.constant 0 : index
    %c0_3 = arith.constant 0 : index
    %c0_4 = arith.constant 0 : index
    %5 = vector.load %arg2[%c0, %c0_2, %c0_3, %c0_4] : memref<1x2x6x256xbf16, #tpu.memory_space<vmem>>, vector<1x1x4x256xbf16>
    %6 = vector.shape_cast %5 : vector<1x1x4x256xbf16> to vector<4x256xbf16>
    %c0_5 = arith.constant 0 : index
    %c0_6 = arith.constant 0 : index
    %c0_7 = arith.constant 0 : index
    %7 = vector.load %arg3[%c0_5, %c0_6, %c0_7] : memref<3x256x256xbf16, #tpu.memory_space<vmem>>, vector<1x256x256xbf16>
    %8 = vector.shape_cast %7 : vector<1x256x256xbf16> to vector<256x256xbf16>
    %cst_8 = arith.constant dense<0.000000e+00> : vector<4x256xf32>
    %9 = tpu.matmul %6, %8, %cst_8 {dimension_numbers = #tpu.dot_dimension_numbers<[1], [0], [0], [1], [0, 0, 1, 1], [], []>} : vector<4x256xbf16>, vector<256x256xbf16>, vector<4x256xf32> -> vector<4x256xf32>
    %c0_9 = arith.constant 0 : index
    %c0_10 = arith.constant 0 : index
    %c1 = arith.constant 1 : index
    %c0_11 = arith.constant 0 : index
    %10 = vector.load %arg2[%c0_9, %c0_10, %c1, %c0_11] : memref<1x2x6x256xbf16, #tpu.memory_space<vmem>>, vector<1x1x4x256xbf16>
    %11 = vector.shape_cast %10 : vector<1x1x4x256xbf16> to vector<4x256xbf16>
    %c1_12 = arith.constant 1 : index
    %c0_13 = arith.constant 0 : index
    %c0_14 = arith.constant 0 : index
    %12 = vector.load %arg3[%c1_12, %c0_13, %c0_14] : memref<3x256x256xbf16, #tpu.memory_space<vmem>>, vector<1x256x256xbf16>
    %13 = vector.shape_cast %12 : vector<1x256x256xbf16> to vector<256x256xbf16>
    %cst_15 = arith.constant dense<0.000000e+00> : vector<4x256xf32>
    %14 = tpu.matmul %11, %13, %cst_15 {dimension_numbers = #tpu.dot_dimension_numbers<[1], [0], [0], [1], [0, 0, 1, 1], [], []>} : vector<4x256xbf16>, vector<256x256xbf16>, vector<4x256xf32> -> vector<4x256xf32>
    %15 = arith.addf %9, %14 : vector<4x256xf32>
    %c0_16 = arith.constant 0 : index
    %c0_17 = arith.constant 0 : index
    %c2 = arith.constant 2 : index
    %c0_18 = arith.constant 0 : index
    %16 = vector.load %arg2[%c0_16, %c0_17, %c2, %c0_18] : memref<1x2x6x256xbf16, #tpu.memory_space<vmem>>, vector<1x1x4x256xbf16>
    %17 = vector.shape_cast %16 : vector<1x1x4x256xbf16> to vector<4x256xbf16>
    %c2_19 = arith.constant 2 : index
    %c0_20 = arith.constant 0 : index
    %c0_21 = arith.constant 0 : index
    %18 = vector.load %arg3[%c2_19, %c0_20, %c0_21] : memref<3x256x256xbf16, #tpu.memory_space<vmem>>, vector<1x256x256xbf16>
    %19 = vector.shape_cast %18 : vector<1x256x256xbf16> to vector<256x256xbf16>
    %cst_22 = arith.constant dense<0.000000e+00> : vector<4x256xf32>
    %20 = tpu.matmul %17, %19, %cst_22 {dimension_numbers = #tpu.dot_dimension_numbers<[1], [0], [0], [1], [0, 0, 1, 1], [], []>} : vector<4x256xbf16>, vector<256x256xbf16>, vector<4x256xf32> -> vector<4x256xf32>
    %21 = arith.addf %15, %20 : vector<4x256xf32>
    %22 = arith.truncf %21 : vector<4x256xf32> to vector<4x256xbf16>
    %c0_23 = arith.constant 0 : index
    %c0_24 = arith.constant 0 : index
    %c0_25 = arith.constant 0 : index
    %23 = vector.load %arg4[%c0_23, %c0_24, %c0_25] : memref<2x4x256xbf16, #tpu.memory_space<vmem>>, vector<1x4x256xbf16>
    %24 = vector.shape_cast %23 : vector<1x4x256xbf16> to vector<4x256xbf16>
    %25 = vector.shape_cast %22 : vector<4x256xbf16> to vector<1x4x256xbf16>
    tpu.vector_store %arg4[%c0_23, %c0_24, %c0_25], %25 {strides = array<i32>} : memref<2x4x256xbf16, #tpu.memory_space<vmem>>, vector<1x4x256xbf16>,
    %cst_26 = arith.constant dense<0.000000e+00> : vector<256xf32>
    %26 = vector.multi_reduction <add>, %21, %cst_26 [0] : vector<4x256xf32> to vector<256xf32>
    %27 = vector.shape_cast %26 : vector<256xf32> to vector<1x256xf32>
    %28 = arith.addf %3, %27 : vector<1x256xf32>
    %29 = arith.mulf %21, %21 : vector<4x256xf32>
    %cst_27 = arith.constant dense<0.000000e+00> : vector<256xf32>
    %30 = vector.multi_reduction <add>, %29, %cst_27 [0] : vector<4x256xf32> to vector<256xf32>
    %31 = vector.shape_cast %30 : vector<256xf32> to vector<1x256xf32>
    %32 = arith.addf %4, %31 : vector<1x256xf32>
    %c0_28 = arith.constant 0 : index
    %c1_29 = arith.constant 1 : index
    %c0_30 = arith.constant 0 : index
    %c0_31 = arith.constant 0 : index
    %33 = vector.load %arg2[%c0_28, %c1_29, %c0_30, %c0_31] : memref<1x2x6x256xbf16, #tpu.memory_space<vmem>>, vector<1x1x4x256xbf16>
    %34 = vector.shape_cast %33 : vector<1x1x4x256xbf16> to vector<4x256xbf16>
    %c0_32 = arith.constant 0 : index
    %c0_33 = arith.constant 0 : index
    %c0_34 = arith.constant 0 : index
    %35 = vector.load %arg3[%c0_32, %c0_33, %c0_34] : memref<3x256x256xbf16, #tpu.memory_space<vmem>>, vector<1x256x256xbf16>
    %36 = vector.shape_cast %35 : vector<1x256x256xbf16> to vector<256x256xbf16>
    %cst_35 = arith.constant dense<0.000000e+00> : vector<4x256xf32>
    %37 = tpu.matmul %34, %36, %cst_35 {dimension_numbers = #tpu.dot_dimension_numbers<[1], [0], [0], [1], [0, 0, 1, 1], [], []>} : vector<4x256xbf16>, vector<256x256xbf16>, vector<4x256xf32> -> vector<4x256xf32>
    %c0_36 = arith.constant 0 : index
    %c1_37 = arith.constant 1 : index
    %c1_38 = arith.constant 1 : index
    %c0_39 = arith.constant 0 : index
    %38 = vector.load %arg2[%c0_36, %c1_37, %c1_38, %c0_39] : memref<1x2x6x256xbf16, #tpu.memory_space<vmem>>, vector<1x1x4x256xbf16>
    %39 = vector.shape_cast %38 : vector<1x1x4x256xbf16> to vector<4x256xbf16>
    %c1_40 = arith.constant 1 : index
    %c0_41 = arith.constant 0 : index
    %c0_42 = arith.constant 0 : index
    %40 = vector.load %arg3[%c1_40, %c0_41, %c0_42] : memref<3x256x256xbf16, #tpu.memory_space<vmem>>, vector<1x256x256xbf16>
    %41 = vector.shape_cast %40 : vector<1x256x256xbf16> to vector<256x256xbf16>
    %cst_43 = arith.constant dense<0.000000e+00> : vector<4x256xf32>
    %42 = tpu.matmul %39, %41, %cst_43 {dimension_numbers = #tpu.dot_dimension_numbers<[1], [0], [0], [1], [0, 0, 1, 1], [], []>} : vector<4x256xbf16>, vector<256x256xbf16>, vector<4x256xf32> -> vector<4x256xf32>
    %43 = arith.addf %37, %42 : vector<4x256xf32>
    %c0_44 = arith.constant 0 : index
    %c1_45 = arith.constant 1 : index
    %c2_46 = arith.constant 2 : index
    %c0_47 = arith.constant 0 : index
    %44 = vector.load %arg2[%c0_44, %c1_45, %c2_46, %c0_47] : memref<1x2x6x256xbf16, #tpu.memory_space<vmem>>, vector<1x1x4x256xbf16>
    %45 = vector.shape_cast %44 : vector<1x1x4x256xbf16> to vector<4x256xbf16>
    %c2_48 = arith.constant 2 : index
    %c0_49 = arith.constant 0 : index
    %c0_50 = arith.constant 0 : index
    %46 = vector.load %arg3[%c2_48, %c0_49, %c0_50] : memref<3x256x256xbf16, #tpu.memory_space<vmem>>, vector<1x256x256xbf16>
    %47 = vector.shape_cast %46 : vector<1x256x256xbf16> to vector<256x256xbf16>
    %cst_51 = arith.constant dense<0.000000e+00> : vector<4x256xf32>
    %48 = tpu.matmul %45, %47, %cst_51 {dimension_numbers = #tpu.dot_dimension_numbers<[1], [0], [0], [1], [0, 0, 1, 1], [], []>} : vector<4x256xbf16>, vector<256x256xbf16>, vector<4x256xf32> -> vector<4x256xf32>
    %49 = arith.addf %43, %48 : vector<4x256xf32>
    %50 = arith.truncf %49 : vector<4x256xf32> to vector<4x256xbf16>
    %c1_52 = arith.constant 1 : index
    %c0_53 = arith.constant 0 : index
    %c0_54 = arith.constant 0 : index
    %51 = vector.load %arg4[%c1_52, %c0_53, %c0_54] : memref<2x4x256xbf16, #tpu.memory_space<vmem>>, vector<1x4x256xbf16>
    %52 = vector.shape_cast %51 : vector<1x4x256xbf16> to vector<4x256xbf16>
    %53 = vector.shape_cast %50 : vector<4x256xbf16> to vector<1x4x256xbf16>
    tpu.vector_store %arg4[%c1_52, %c0_53, %c0_54], %53 {strides = array<i32>} : memref<2x4x256xbf16, #tpu.memory_space<vmem>>, vector<1x4x256xbf16>,
    %cst_55 = arith.constant dense<0.000000e+00> : vector<256xf32>
    %54 = vector.multi_reduction <add>, %49, %cst_55 [0] : vector<4x256xf32> to vector<256xf32>
    %55 = vector.shape_cast %54 : vector<256xf32> to vector<1x256xf32>
    %56 = arith.addf %28, %55 : vector<1x256xf32>
    %57 = arith.mulf %49, %49 : vector<4x256xf32>
    %cst_56 = arith.constant dense<0.000000e+00> : vector<256xf32>
    %58 = vector.multi_reduction <add>, %57, %cst_56 [0] : vector<4x256xf32> to vector<256xf32>
    %59 = vector.shape_cast %58 : vector<256xf32> to vector<1x256xf32>
    %60 = arith.addf %32, %59 : vector<1x256xf32>
    %c0_57 = arith.constant 0 : index
    %c0_58 = arith.constant 0 : index
    %c0_59 = arith.constant 0 : index
    %61 = vector.load %arg5[%c0_57, %c0_58, %c0_59] : memref<1x1x256xf32, #tpu.memory_space<vmem>>, vector<1x1x256xf32>
    %62 = vector.shape_cast %56 : vector<1x256xf32> to vector<1x1x256xf32>
    %63 = arith.addf %61, %62 : vector<1x1x256xf32>
    %c0_60 = arith.constant 0 : index
    %c0_61 = arith.constant 0 : index
    %c0_62 = arith.constant 0 : index
    %64 = vector.load %arg5[%c0_60, %c0_61, %c0_62] : memref<1x1x256xf32, #tpu.memory_space<vmem>>, vector<1x1x256xf32>
    tpu.vector_store %arg5[%c0_60, %c0_61, %c0_62], %63 {strides = array<i32>} : memref<1x1x256xf32, #tpu.memory_space<vmem>>, vector<1x1x256xf32>,
    %c0_63 = arith.constant 0 : index
    %c0_64 = arith.constant 0 : index
    %c0_65 = arith.constant 0 : index
    %65 = vector.load %arg6[%c0_63, %c0_64, %c0_65] : memref<1x1x256xf32, #tpu.memory_space<vmem>>, vector<1x1x256xf32>
    %66 = vector.shape_cast %60 : vector<1x256xf32> to vector<1x1x256xf32>
    %67 = arith.addf %65, %66 : vector<1x1x256xf32>
    %c0_66 = arith.constant 0 : index
    %c0_67 = arith.constant 0 : index
    %c0_68 = arith.constant 0 : index
    %68 = vector.load %arg6[%c0_66, %c0_67, %c0_68] : memref<1x1x256xf32, #tpu.memory_space<vmem>>, vector<1x1x256xf32>
    tpu.vector_store %arg6[%c0_66, %c0_67, %c0_68], %67 {strides = array<i32>} : memref<1x1x256xf32, #tpu.memory_space<vmem>>, vector<1x1x256xf32>,
    return
  }
  func.func @transform_0(%arg0: i32, %arg1: i32) -> (i32, i32, i32, i32) {
    %c1_i32 = arith.constant 1 : i32
    %0 = arith.muli %arg0, %c1_i32 : i32
    %1 = arith.addi %0, %arg1 : i32
    %c0_i32 = arith.constant 0 : i32
    %c0_i32_0 = arith.constant 0 : i32
    %c0_i32_1 = arith.constant 0 : i32
    %c0_i32_2 = arith.constant 0 : i32
    return %c0_i32, %1, %c0_i32_0, %c0_i32_1 : i32, i32, i32, i32
  }
  func.func @transform_1(%arg0: i32, %arg1: i32) -> (i32, i32, i32) {
    %c0_i32 = arith.constant 0 : i32
    %c0_i32_0 = arith.constant 0 : i32
    %c0_i32_1 = arith.constant 0 : i32
    %c0_i32_2 = arith.constant 0 : i32
    return %c0_i32, %c0_i32_0, %c0_i32_1 : i32, i32, i32
  }
  func.func @transform_2(%arg0: i32, %arg1: i32) -> (i32, i32, i32) {
    %c1_i32 = arith.constant 1 : i32
    %0 = arith.muli %arg0, %c1_i32 : i32
    %1 = arith.addi %0, %arg1 : i32
    %c0_i32 = arith.constant 0 : i32
    %c0_i32_0 = arith.constant 0 : i32
    %c0_i32_1 = arith.constant 0 : i32
    return %1, %c0_i32, %c0_i32_0 : i32, i32, i32
  }
  func.func @transform_3(%arg0: i32, %arg1: i32) -> (i32, i32, i32) {
    %c0_i32 = arith.constant 0 : i32
    %c0_i32_0 = arith.constant 0 : i32
    %c0_i32_1 = arith.constant 0 : i32
    return %arg0, %c0_i32, %c0_i32_0 : i32, i32, i32
  }
  func.func @transform_4(%arg0: i32, %arg1: i32) -> (i32, i32, i32) {
    %c0_i32 = arith.constant 0 : i32
    %c0_i32_0 = arith.constant 0 : i32
    %c0_i32_1 = arith.constant 0 : i32
    return %arg0, %c0_i32, %c0_i32_0 : i32, i32, i32
  }
}

module attributes {stable_mosaic.version = 11 : i64} {
  func.func @bn_act_kernel(%arg0: i32, %arg1: memref<2x4x256xbf16, #tpu.memory_space<vmem>>, %arg2: memref<1x1x256xf32, #tpu.memory_space<vmem>>, %arg3: memref<1x1x256xf32, #tpu.memory_space<vmem>>, %arg4: memref<2x4x256xbf16, #tpu.memory_space<vmem>>) attributes {dimension_semantics = [#tpu.dimension_semantics<parallel>], iteration_bounds = array<i64: 1>, scalar_prefetch = 0 : i64, scratch_operands = 0 : i64, tpu.core_type = #tpu.core_type<tc>, window_params = [{transform_indices = @transform_0, window_bounds = array<i64: 2, 4, 256>}, {pipeline_mode = #tpu.pipeline_mode<synchronous>, transform_indices = @transform_1, window_bounds = array<i64: 1, 1, 256>}, {pipeline_mode = #tpu.pipeline_mode<synchronous>, transform_indices = @transform_2, window_bounds = array<i64: 1, 1, 256>}, {transform_indices = @transform_3, window_bounds = array<i64: 2, 4, 256>}]} {
    %c0 = arith.constant 0 : index
    %c0_0 = arith.constant 0 : index
    %c0_1 = arith.constant 0 : index
    %0 = vector.load %arg1[%c0, %c0_0, %c0_1] : memref<2x4x256xbf16, #tpu.memory_space<vmem>>, vector<2x4x256xbf16>
    %1 = arith.extf %0 : vector<2x4x256xbf16> to vector<2x4x256xf32>
    %c0_2 = arith.constant 0 : index
    %c0_3 = arith.constant 0 : index
    %c0_4 = arith.constant 0 : index
    %2 = vector.load %arg2[%c0_2, %c0_3, %c0_4] : memref<1x1x256xf32, #tpu.memory_space<vmem>>, vector<1x1x256xf32>
    %3 = vector.broadcast %2 : vector<1x1x256xf32> to vector<2x4x256xf32>
    %4 = arith.mulf %1, %3 : vector<2x4x256xf32>
    %c0_5 = arith.constant 0 : index
    %c0_6 = arith.constant 0 : index
    %c0_7 = arith.constant 0 : index
    %5 = vector.load %arg3[%c0_5, %c0_6, %c0_7] : memref<1x1x256xf32, #tpu.memory_space<vmem>>, vector<1x1x256xf32>
    %6 = vector.broadcast %5 : vector<1x1x256xf32> to vector<2x4x256xf32>
    %7 = arith.addf %4, %6 : vector<2x4x256xf32>
    %cst = arith.constant 0.000000e+00 : f32
    %8 = vector.broadcast %cst : f32 to vector<2x4x256xf32>
    %9 = arith.maximumf %7, %8 : vector<2x4x256xf32>
    %10 = arith.truncf %9 : vector<2x4x256xf32> to vector<2x4x256xbf16>
    %c0_8 = arith.constant 0 : index
    %c0_9 = arith.constant 0 : index
    %c0_10 = arith.constant 0 : index
    %11 = vector.load %arg4[%c0_8, %c0_9, %c0_10] : memref<2x4x256xbf16, #tpu.memory_space<vmem>>, vector<2x4x256xbf16>
    tpu.vector_store %arg4[%c0_8, %c0_9, %c0_10], %10 {strides = array<i32>} : memref<2x4x256xbf16, #tpu.memory_space<vmem>>, vector<2x4x256xbf16>,
    return
  }
  func.func @transform_0(%arg0: i32) -> (i32, i32, i32) {
    %c0_i32 = arith.constant 0 : i32
    %c0_i32_0 = arith.constant 0 : i32
    %c0_i32_1 = arith.constant 0 : i32
    return %arg0, %c0_i32, %c0_i32_0 : i32, i32, i32
  }
  func.func @transform_1(%arg0: i32) -> (i32, i32, i32) {
    %c0_i32 = arith.constant 0 : i32
    %c0_i32_0 = arith.constant 0 : i32
    %c0_i32_1 = arith.constant 0 : i32
    %c0_i32_2 = arith.constant 0 : i32
    return %c0_i32, %c0_i32_0, %c0_i32_1 : i32, i32, i32
  }
  func.func @transform_2(%arg0: i32) -> (i32, i32, i32) {
    %c0_i32 = arith.constant 0 : i32
    %c0_i32_0 = arith.constant 0 : i32
    %c0_i32_1 = arith.constant 0 : i32
    %c0_i32_2 = arith.constant 0 : i32
    return %c0_i32, %c0_i32_0, %c0_i32_1 : i32, i32, i32
  }
  func.func @transform_3(%arg0: i32) -> (i32, i32, i32) {
    %c0_i32 = arith.constant 0 : i32
    %c0_i32_0 = arith.constant 0 : i32
    %c0_i32_1 = arith.constant 0 : i32
    return %arg0, %c0_i32, %c0_i32_0 : i32, i32, i32
  }
}

module attributes {stable_mosaic.version = 11 : i64} {
  func.func @bn_res_act_kernel(%arg0: i32, %arg1: memref<2x4x256xbf16, #tpu.memory_space<vmem>>, %arg2: memref<1x1x256xf32, #tpu.memory_space<vmem>>, %arg3: memref<1x1x256xf32, #tpu.memory_space<vmem>>, %arg4: memref<2x4x256xbf16, #tpu.memory_space<vmem>>, %arg5: memref<2x4x256xbf16, #tpu.memory_space<vmem>>) attributes {dimension_semantics = [#tpu.dimension_semantics<parallel>], iteration_bounds = array<i64: 1>, scalar_prefetch = 0 : i64, scratch_operands = 0 : i64, tpu.core_type = #tpu.core_type<tc>, window_params = [{transform_indices = @transform_0, window_bounds = array<i64: 2, 4, 256>}, {pipeline_mode = #tpu.pipeline_mode<synchronous>, transform_indices = @transform_1, window_bounds = array<i64: 1, 1, 256>}, {pipeline_mode = #tpu.pipeline_mode<synchronous>, transform_indices = @transform_2, window_bounds = array<i64: 1, 1, 256>}, {transform_indices = @transform_3, window_bounds = array<i64: 2, 4, 256>}, {transform_indices = @transform_4, window_bounds = array<i64: 2, 4, 256>}]} {
    %c0 = arith.constant 0 : index
    %c0_0 = arith.constant 0 : index
    %c0_1 = arith.constant 0 : index
    %0 = vector.load %arg1[%c0, %c0_0, %c0_1] : memref<2x4x256xbf16, #tpu.memory_space<vmem>>, vector<2x4x256xbf16>
    %1 = arith.extf %0 : vector<2x4x256xbf16> to vector<2x4x256xf32>
    %c0_2 = arith.constant 0 : index
    %c0_3 = arith.constant 0 : index
    %c0_4 = arith.constant 0 : index
    %2 = vector.load %arg2[%c0_2, %c0_3, %c0_4] : memref<1x1x256xf32, #tpu.memory_space<vmem>>, vector<1x1x256xf32>
    %3 = vector.broadcast %2 : vector<1x1x256xf32> to vector<2x4x256xf32>
    %4 = arith.mulf %1, %3 : vector<2x4x256xf32>
    %c0_5 = arith.constant 0 : index
    %c0_6 = arith.constant 0 : index
    %c0_7 = arith.constant 0 : index
    %5 = vector.load %arg3[%c0_5, %c0_6, %c0_7] : memref<1x1x256xf32, #tpu.memory_space<vmem>>, vector<1x1x256xf32>
    %6 = vector.broadcast %5 : vector<1x1x256xf32> to vector<2x4x256xf32>
    %7 = arith.addf %4, %6 : vector<2x4x256xf32>
    %c0_8 = arith.constant 0 : index
    %c0_9 = arith.constant 0 : index
    %c0_10 = arith.constant 0 : index
    %8 = vector.load %arg4[%c0_8, %c0_9, %c0_10] : memref<2x4x256xbf16, #tpu.memory_space<vmem>>, vector<2x4x256xbf16>
    %9 = arith.extf %8 : vector<2x4x256xbf16> to vector<2x4x256xf32>
    %10 = arith.addf %7, %9 : vector<2x4x256xf32>
    %cst = arith.constant 0.000000e+00 : f32
    %11 = vector.broadcast %cst : f32 to vector<2x4x256xf32>
    %12 = arith.maximumf %10, %11 : vector<2x4x256xf32>
    %13 = arith.truncf %12 : vector<2x4x256xf32> to vector<2x4x256xbf16>
    %c0_11 = arith.constant 0 : index
    %c0_12 = arith.constant 0 : index
    %c0_13 = arith.constant 0 : index
    %14 = vector.load %arg5[%c0_11, %c0_12, %c0_13] : memref<2x4x256xbf16, #tpu.memory_space<vmem>>, vector<2x4x256xbf16>
    tpu.vector_store %arg5[%c0_11, %c0_12, %c0_13], %13 {strides = array<i32>} : memref<2x4x256xbf16, #tpu.memory_space<vmem>>, vector<2x4x256xbf16>,
    return
  }
  func.func @transform_0(%arg0: i32) -> (i32, i32, i32) {
    %c0_i32 = arith.constant 0 : i32
    %c0_i32_0 = arith.constant 0 : i32
    %c0_i32_1 = arith.constant 0 : i32
    return %arg0, %c0_i32, %c0_i32_0 : i32, i32, i32
  }
  func.func @transform_1(%arg0: i32) -> (i32, i32, i32) {
    %c0_i32 = arith.constant 0 : i32
    %c0_i32_0 = arith.constant 0 : i32
    %c0_i32_1 = arith.constant 0 : i32
    %c0_i32_2 = arith.constant 0 : i32
    return %c0_i32, %c0_i32_0, %c0_i32_1 : i32, i32, i32
  }
  func.func @transform_2(%arg0: i32) -> (i32, i32, i32) {
    %c0_i32 = arith.constant 0 : i32
    %c0_i32_0 = arith.constant 0 : i32
    %c0_i32_1 = arith.constant 0 : i32
    %c0_i32_2 = arith.constant 0 : i32
    return %c0_i32, %c0_i32_0, %c0_i32_1 : i32, i32, i32
  }
  func.func @transform_3(%arg0: i32) -> (i32, i32, i32) {
    %c0_i32 = arith.constant 0 : i32
    %c0_i32_0 = arith.constant 0 : i32
    %c0_i32_1 = arith.constant 0 : i32
    return %arg0, %c0_i32, %c0_i32_0 : i32, i32, i32
  }
  func.func @transform_4(%arg0: i32) -> (i32, i32, i32) {
    %c0_i32 = arith.constant 0 : i32
    %c0_i32_0 = arith.constant 0 : i32
    %c0_i32_1 = arith.constant 0 : i32
    return %arg0, %c0_i32, %c0_i32_0 : i32, i32, i32
  }
}

module attributes {stable_mosaic.version = 11 : i64} {
  func.func @head_kernel(%arg0: memref<2x4x256xbf16, #tpu.memory_space<vmem>>, %arg1: memref<256x10xf32, #tpu.memory_space<vmem>>, %arg2: memref<1x10xf32, #tpu.memory_space<vmem>>, %arg3: memref<2x10xf32, #tpu.memory_space<vmem>>) attributes {dimension_semantics = [], scalar_prefetch = 0 : i64, scratch_operands = 0 : i64, tpu.core_type = #tpu.core_type<tc>} {
    %c0 = arith.constant 0 : index
    %c0_0 = arith.constant 0 : index
    %c0_1 = arith.constant 0 : index
    %0 = vector.load %arg0[%c0, %c0_0, %c0_1] : memref<2x4x256xbf16, #tpu.memory_space<vmem>>, vector<2x4x256xbf16>
    %1 = arith.extf %0 : vector<2x4x256xbf16> to vector<2x4x256xf32>
    %cst = arith.constant dense<0.000000e+00> : vector<2x256xf32>
    %2 = vector.multi_reduction <add>, %1, %cst [1] : vector<2x4x256xf32> to vector<2x256xf32>
    %c0_2 = arith.constant 0 : index
    %c0_3 = arith.constant 0 : index
    %3 = vector.load %arg1[%c0_2, %c0_3] : memref<256x10xf32, #tpu.memory_space<vmem>>, vector<256x10xf32>
    %cst_4 = arith.constant dense<0.000000e+00> : vector<2x10xf32>
    %4 = tpu.matmul %2, %3, %cst_4 {dimension_numbers = #tpu.dot_dimension_numbers<[1], [0], [0], [1], [0, 0, 1, 1], [], []>} : vector<2x256xf32>, vector<256x10xf32>, vector<2x10xf32> -> vector<2x10xf32>
    %c0_5 = arith.constant 0 : index
    %c0_6 = arith.constant 0 : index
    %5 = vector.load %arg2[%c0_5, %c0_6] : memref<1x10xf32, #tpu.memory_space<vmem>>, vector<1x10xf32>
    %6 = vector.broadcast %5 : vector<1x10xf32> to vector<2x10xf32>
    %7 = arith.addf %4, %6 : vector<2x10xf32>
    %c0_7 = arith.constant 0 : index
    %c0_8 = arith.constant 0 : index
    %8 = vector.load %arg3[%c0_7, %c0_8] : memref<2x10xf32, #tpu.memory_space<vmem>>, vector<2x10xf32>
    tpu.vector_store %arg3[%c0_7, %c0_8], %7 {strides = array<i32>} : memref<2x10xf32, #tpu.memory_space<vmem>>, vector<2x10xf32>,
    return
  }
}

</mosaic_0001>

<llo_original>
// kernel: tile.82
$region0: #{tile.82}
  #allocation0 [shape = 's32[1]{0}', space=sflag, size = 0x4, scoped, tag = 'scoped memory for tile.82']
  %s0 = inlined_call_operand.vmem [shape: f32[16], index: 0, kind: input, shape index: {}]
  %s1 = inlined_call_operand.vmem [shape: f32[16,16], index: 1, kind: output, shape index: {}]
  // Predicated region
  $region2: #{tile.82} parent=0 // pred_check
    _
  $region3: #{tile.82} parent=0 // pred_check_branch
    %3 = sbr.rel (0) target = $region5
  $region4: #{tile.82} parent=0 // pred_region
    _
  $region5: #{tile.82} parent=0 // pred_fallthru
    _
  %v4 = vld [vmem:[%s0] ss:$0 sm:$0xff]
  %5 = vst [vmem:[%s1] sm:$0xff] %v4
  %s6 = scalar_lea.vmem %s1, 8
  %7 = vst [vmem:[%s6] sm:$0xff] %v4

// kernel: tile.83
$region0: #{tile.83}
  %s0 = inlined_call_operand.vmem [shape: f32[16,16], index: 0, kind: input, shape index: {}]
  %s1 = inlined_call_operand.vmem [shape: f32[1,1,256], index: 1, kind: output, shape index: {}]
  $region1: #{tile.83} parent=0
    #allocation0 [shape = 'u8[8192]{0}', space=vmem, size = 0x2000, scoped, tag = 'scoped mem for output reshape']
    %s2 = smov 3
    %v3 = vld [vmem:[%s0] ss:$8 sm:%s2]
    %vm4 = vcmask 130048
    %5 = vst.msk [vmem:[#allocation0] ss:$8 sm:$0x3] %vm4, %v3
    %s6 = scalar_lea.vmem %s0, 7
    %s7 = smov 3
    %v8 = vld [vmem:[%s6] ss:$8 sm:%s7]
    %9 = vrot.lane.b32.xlu0 %v8, 112
    %v10 = vpop.permute.xlu0 %9
    %vm11 = vcmask 1048448
    %12 = vst.msk [vmem:[#allocation0] ss:$8 sm:$0x3] %vm11, %v10
    %s13 = scalar_lea.vmem %s0, 6
    %s14 = smov 3
    %v15 = vld [vmem:[%s13] ss:$8 sm:%s14]
    %16 = vrot.lane.b32.xlu0 %v15, 96
    %v17 = vpop.permute.xlu0 %16
    %vm18 = vcmask 917248
    %19 = vst.msk [vmem:[#allocation0] ss:$8 sm:$0x3] %vm18, %v17
    %s20 = scalar_lea.vmem %s0, 5
    %s21 = smov 3
    %v22 = vld [vmem:[%s20] ss:$8 sm:%s21]
    %23 = vrot.lane.b32.xlu0 %v22, 80
    %v24 = vpop.permute.xlu0 %23
    %vm25 = vcmask 786048
    %26 = vst.msk [vmem:[#allocation0] ss:$8 sm:$0x3] %vm25, %v24
    %s27 = scalar_lea.vmem %s0, 4
    %s28 = smov 3
    %v29 = vld [vmem:[%s27] ss:$8 sm:%s28]
    %30 = vrot.lane.b32.xlu0 %v29, 64
    %v31 = vpop.permute.xlu0 %30
    %vm32 = vcmask 654848
    %33 = vst.msk [vmem:[#allocation0] ss:$8 sm:$0x3] %vm32, %v31
    %s34 = scalar_lea.vmem %s0, 3
    %s35 = smov 3
    %v36 = vld [vmem:[%s34] ss:$8 sm:%s35]
    %37 = vrot.lane.b32.xlu0 %v36, 48
    %v38 = vpop.permute.xlu0 %37
    %vm39 = vcmask 523648
    %40 = vst.msk [vmem:[#allocation0] ss:$8 sm:$0x3] %vm39, %v38
    %s41 = scalar_lea.vmem %s0, 2
    %s42 = smov 3
    %v43 = vld [vmem:[%s41] ss:$8 sm:%s42]
    %44 = vrot.lane.b32.xlu0 %v43, 32
    %v45 = vpop.permute.xlu0 %44
    %vm46 = vcmask 392448
    %47 = vst.msk [vmem:[#allocation0] ss:$8 sm:$0x3] %vm46, %v45
    %s48 = scalar_lea.vmem %s0, 1
    %s49 = smov 3
    %v50 = vld [vmem:[%s48] ss:$8 sm:%s49]
    %51 = vrot.lane.b32.xlu0 %v50, 16
    %v52 = vpop.permute.xlu0 %51
    %vm53 = vcmask 261248
    %54 = vst.msk [vmem:[#allocation0] ss:$8 sm:$0x3] %vm53, %v52
    %s56 = sshll.u32 1, 1
    %s57 = ssub.s32 %s56, 1
    %v59 = vld [vmem:[#allocation0] sm:%s57]
    %s60 = sshll.u32 1, 1
    %s61 = ssub.s32 %s60, 1
    %62 = vst [vmem:[%s1] sm:%s61] %v59
    %s63 = scalar_lea.vmem [#allocation0], 8
    %v64 = vld [vmem:[%s63] sm:%s57]
    %s65 = sshll.u32 1, 1
    %s66 = ssub.s32 %s65, 1
    %s67 = scalar_lea.vmem %s1, 1
    %68 = vst [vmem:[%s67] sm:%s66] %v64

// kernel: _lambda_.16
$region0: #{_lambda_.16}
  #allocation0 [shape = 'u32[]', space=smem, size = 0x4, offset = 0x4, fixed_abs, tag = 'smem constant byte address 0x4 - core index']
  #allocation1 [shape = 'u32[144,128]{1,0:T(1,128)}', space=vmem, size = 0x12000, scoped, tag = 'internal scratch']
  %s0 = inlined_call_operand.vmem [shape: bf16[2,16,256], index: 0, kind: input, shape index: {}, may-alias: {0,3}]
  %s1 = inlined_call_operand.vmem [shape: f32[1,1,256], index: 1, kind: input, shape index: {}]
  %s2 = inlined_call_operand.vmem [shape: f32[1,1,256], index: 2, kind: input, shape index: {}]
  %s3 = inlined_call_operand.vmem [shape: bf16[2,16,256], index: 3, kind: output, shape index: {}, may-alias: {0,3}]
  %s4 = sld [smem:[#allocation0]]
  $region22: #{_lambda_.16} parent=0
    _
  %s6 = ssub.s32 1, %s4
  %s7 = scalar_select 0, %s6, %s4
  // Predicated region
  $region2: #{_lambda_.16} parent=0 // pred_check
    _
  $region3: #{_lambda_.16} parent=0 // pred_check_branch
    %9 = sbr.rel (0) target = $region5
  $region4: #{_lambda_.16} parent=0 // pred_region
    _
  $region5: #{_lambda_.16} parent=0 // pred_fallthru
    _
  // Predicated region
  $region6: #{_lambda_.16} parent=0 // pred_check
    _
  $region7: #{_lambda_.16} parent=0 // pred_check_branch
    %11 = sbr.rel (0) target = $region9
  $region8: #{_lambda_.16} parent=0 // pred_region
    _
  $region9: #{_lambda_.16} parent=0 // pred_fallthru
    _
  // Predicated region
  $region10: #{_lambda_.16} parent=0 // pred_check
    _
  $region11: #{_lambda_.16} parent=0 // pred_check_branch
    %13 = sbr.rel (0) target = $region13
  $region12: #{_lambda_.16} parent=0 // pred_region
    _
  $region13: #{_lambda_.16} parent=0 // pred_fallthru
    _
  %v14 = vld [vmem:[%s0] sm:$0xff]
  %v15 = vld [vmem:[%s0 + $0x8] sm:$0xff]
  %v16 = vld [vmem:[%s0 + $0x10] sm:$0xff]
  %v17 = vld [vmem:[%s0 + $0x18] sm:$0xff]
  %v18 = vunpack.c.l.bf16 %v14
  %v19 = vunpack.c.h.bf16 %v14
  %v20 = vunpack.c.l.bf16 %v15
  %v21 = vunpack.c.h.bf16 %v15
  %v22 = vunpack.c.l.bf16 %v16
  %v23 = vunpack.c.h.bf16 %v16
  %v24 = vunpack.c.l.bf16 %v17
  %v25 = vunpack.c.h.bf16 %v17
  %v26 = vld [vmem:[%s1] sm:$0x3]
  %v28 = vlaneseq
  %v29 = vshrl.u32 %v28, 7
  %v30 = vsub.s32 0, %v29
  %v31 = vrot.slane %v26, %v30
  %v32 = vlaneseq
  %v33 = vshrl.u32 %v32, 7
  %v34 = vsub.s32 1, %v33
  %v35 = vrot.slane %v26, %v34
  %v38 = vmul.f32 %v18, %v31
  %v39 = vmul.f32 %v19, %v35
  %v40 = vmul.f32 %v20, %v31
  %v41 = vmul.f32 %v21, %v35
  %v42 = vmul.f32 %v22, %v31
  %v43 = vmul.f32 %v23, %v35
  %v44 = vmul.f32 %v24, %v31
  %v45 = vmul.f32 %v25, %v35
  %v46 = vld [vmem:[%s2] sm:$0x3]
  %v48 = vlaneseq
  %v49 = vshrl.u32 %v48, 7
  %v50 = vsub.s32 0, %v49
  %v51 = vrot.slane %v46, %v50
  %v52 = vlaneseq
  %v53 = vshrl.u32 %v52, 7
  %v54 = vsub.s32 1, %v53
  %v55 = vrot.slane %v46, %v54
  %v58 = vadd.f32 %v38, %v51
  %v59 = vadd.f32 %v39, %v55
  %v60 = vadd.f32 %v40, %v51
  %v61 = vadd.f32 %v41, %v55
  %v62 = vadd.f32 %v42, %v51
  %v63 = vadd.f32 %v43, %v55
  %v64 = vadd.f32 %v44, %v51
  %v65 = vadd.f32 %v45, %v55
  %v66 = vmax.f32 %v58, 0.0
  %v67 = vmax.f32 %v59, 0.0
  %v68 = vmax.f32 %v60, 0.0
  %v69 = vmax.f32 %v61, 0.0
  %v70 = vmax.f32 %v62, 0.0
  %v71 = vmax.f32 %v63, 0.0
  %v72 = vmax.f32 %v64, 0.0
  %v73 = vmax.f32 %v65, 0.0
  %v74 = vpack.c.bf16 %v68, %v66
  %v75 = vpack.c.bf16 %v69, %v67
  %v76 = vpack.c.bf16 %v72, %v70
  %v77 = vpack.c.bf16 %v73, %v71
  %v82 = vunpack.c.l.b16 %v74
  %v83 = vunpack.c.l.b16 %v75
  %v84 = vunpack.c.h.b16 %v74
  %v85 = vunpack.c.h.b16 %v75
  %v86 = vunpack.c.l.b16 %v76
  %v87 = vunpack.c.l.b16 %v77
  %v88 = vunpack.c.h.b16 %v76
  %v89 = vunpack.c.h.b16 %v77
  %v90 = vpack.c.b16 %v83, %v82
  %v91 = vpack.c.b16 %v85, %v84
  %v92 = vpack.c.b16 %v87, %v86
  %v93 = vpack.c.b16 %v89, %v88
  %98 = vst [vmem:[%s3] sm:$0xff] %v90
  %99 = vst [vmem:[%s3 + $0x8] sm:$0xff] %v91
  %100 = vst [vmem:[%s3 + $0x10] sm:$0xff] %v92
  %101 = vst [vmem:[%s3 + $0x18] sm:$0xff] %v93
  // Predicated region
  $region14: #{_lambda_.16} parent=0 // pred_check
    _
  $region15: #{_lambda_.16} parent=0 // pred_check_branch
    %103 = sbr.rel (0) target = $region17
  $region16: #{_lambda_.16} parent=0 // pred_region
    _
  $region17: #{_lambda_.16} parent=0 // pred_fallthru
    _
  // Predicated region
  $region18: #{_lambda_.16} parent=0 // pred_check
    _
  $region19: #{_lambda_.16} parent=0 // pred_check_branch
    %105 = sbr.rel (0) target = $region21
  $region20: #{_lambda_.16} parent=0 // pred_region
    _
  $region21: #{_lambda_.16} parent=0 // pred_fallthru
    _

// kernel: _lambda_.20
$region0: #{_lambda_.20}
  #allocation0 [shape = 'u32[]', space=smem, size = 0x4, offset = 0x4, fixed_abs, tag = 'smem constant byte address 0x4 - core index']
  #allocation1 [shape = 'u32[144,128]{1,0:T(1,128)}', space=vmem, size = 0x12000, scoped, tag = 'internal scratch']
  %s0 = inlined_call_operand.vmem [shape: bf16[2,16,256], index: 0, kind: input, shape index: {}, may-alias: {0,4}]
  %s1 = inlined_call_operand.vmem [shape: f32[1,1,256], index: 1, kind: input, shape index: {}]
  %s2 = inlined_call_operand.vmem [shape: f32[1,1,256], index: 2, kind: input, shape index: {}]
  %s3 = inlined_call_operand.vmem [shape: bf16[2,16,256], index: 3, kind: input, shape index: {}]
  %s4 = inlined_call_operand.vmem [shape: bf16[2,16,256], index: 4, kind: output, shape index: {}, may-alias: {0,4}]
  %s5 = sld [smem:[#allocation0]]
  $region26: #{_lambda_.20} parent=0
    _
  %s7 = ssub.s32 1, %s5
  %s8 = scalar_select 0, %s7, %s5
  // Predicated region
  $region2: #{_lambda_.20} parent=0 // pred_check
    _
  $region3: #{_lambda_.20} parent=0 // pred_check_branch
    %10 = sbr.rel (0) target = $region5
  $region4: #{_lambda_.20} parent=0 // pred_region
    _
  $region5: #{_lambda_.20} parent=0 // pred_fallthru
    _
  // Predicated region
  $region6: #{_lambda_.20} parent=0 // pred_check
    _
  $region7: #{_lambda_.20} parent=0 // pred_check_branch
    %12 = sbr.rel (0) target = $region9
  $region8: #{_lambda_.20} parent=0 // pred_region
    _
  $region9: #{_lambda_.20} parent=0 // pred_fallthru
    _
  // Predicated region
  $region10: #{_lambda_.20} parent=0 // pred_check
    _
  $region11: #{_lambda_.20} parent=0 // pred_check_branch
    %14 = sbr.rel (0) target = $region13
  $region12: #{_lambda_.20} parent=0 // pred_region
    _
  $region13: #{_lambda_.20} parent=0 // pred_fallthru
    _
  // Predicated region
  $region14: #{_lambda_.20} parent=0 // pred_check
    _
  $region15: #{_lambda_.20} parent=0 // pred_check_branch
    %16 = sbr.rel (0) target = $region17
  $region16: #{_lambda_.20} parent=0 // pred_region
    _
  $region17: #{_lambda_.20} parent=0 // pred_fallthru
    _
  %v17 = vld [vmem:[%s0] sm:$0xff]
  %v18 = vld [vmem:[%s0 + $0x8] sm:$0xff]
  %v19 = vld [vmem:[%s0 + $0x10] sm:$0xff]
  %v20 = vld [vmem:[%s0 + $0x18] sm:$0xff]
  %v21 = vunpack.c.l.bf16 %v17
  %v22 = vunpack.c.h.bf16 %v17
  %v23 = vunpack.c.l.bf16 %v18
  %v24 = vunpack.c.h.bf16 %v18
  %v25 = vunpack.c.l.bf16 %v19
  %v26 = vunpack.c.h.bf16 %v19
  %v27 = vunpack.c.l.bf16 %v20
  %v28 = vunpack.c.h.bf16 %v20
  %v29 = vld [vmem:[%s1] sm:$0x3]
  %v31 = vlaneseq
  %v32 = vshrl.u32 %v31, 7
  %v33 = vsub.s32 0, %v32
  %v34 = vrot.slane %v29, %v33
  %v35 = vlaneseq
  %v36 = vshrl.u32 %v35, 7
  %v37 = vsub.s32 1, %v36
  %v38 = vrot.slane %v29, %v37
  %v41 = vmul.f32 %v21, %v34
  %v42 = vmul.f32 %v22, %v38
  %v43 = vmul.f32 %v23, %v34
  %v44 = vmul.f32 %v24, %v38
  %v45 = vmul.f32 %v25, %v34
  %v46 = vmul.f32 %v26, %v38
  %v47 = vmul.f32 %v27, %v34
  %v48 = vmul.f32 %v28, %v38
  %v49 = vld [vmem:[%s2] sm:$0x3]
  %v51 = vlaneseq
  %v52 = vshrl.u32 %v51, 7
  %v53 = vsub.s32 0, %v52
  %v54 = vrot.slane %v49, %v53
  %v55 = vlaneseq
  %v56 = vshrl.u32 %v55, 7
  %v57 = vsub.s32 1, %v56
  %v58 = vrot.slane %v49, %v57
  %v61 = vadd.f32 %v41, %v54
  %v62 = vadd.f32 %v42, %v58
  %v63 = vadd.f32 %v43, %v54
  %v64 = vadd.f32 %v44, %v58
  %v65 = vadd.f32 %v45, %v54
  %v66 = vadd.f32 %v46, %v58
  %v67 = vadd.f32 %v47, %v54
  %v68 = vadd.f32 %v48, %v58
  %v69 = vld [vmem:[%s3] sm:$0xff]
  %v70 = vld [vmem:[%s3 + $0x8] sm:$0xff]
  %v71 = vld [vmem:[%s3 + $0x10] sm:$0xff]
  %v72 = vld [vmem:[%s3 + $0x18] sm:$0xff]
  %v73 = vunpack.c.l.bf16 %v69
  %v74 = vunpack.c.h.bf16 %v69
  %v75 = vunpack.c.l.bf16 %v70
  %v76 = vunpack.c.h.bf16 %v70
  %v77 = vunpack.c.l.bf16 %v71
  %v78 = vunpack.c.h.bf16 %v71
  %v79 = vunpack.c.l.bf16 %v72
  %v80 = vunpack.c.h.bf16 %v72
  %v81 = vadd.f32 %v61, %v73
  %v82 = vadd.f32 %v62, %v74
  %v83 = vadd.f32 %v63, %v75
  %v84 = vadd.f32 %v64, %v76
  %v85 = vadd.f32 %v65, %v77
  %v86 = vadd.f32 %v66, %v78
  %v87 = vadd.f32 %v67, %v79
  %v88 = vadd.f32 %v68, %v80
  %v89 = vmax.f32 %v81, 0.0
  %v90 = vmax.f32 %v82, 0.0
  %v91 = vmax.f32 %v83, 0.0
  %v92 = vmax.f32 %v84, 0.0
  %v93 = vmax.f32 %v85, 0.0
  %v94 = vmax.f32 %v86, 0.0
  %v95 = vmax.f32 %v87, 0.0
  %v96 = vmax.f32 %v88, 0.0
  %v97 = vpack.c.bf16 %v91, %v89
  %v98 = vpack.c.bf16 %v92, %v90
  %v99 = vpack.c.bf16 %v95, %v93
  %v100 = vpack.c.bf16 %v96, %v94
  %v105 = vunpack.c.l.b16 %v97
  %v106 = vunpack.c.l.b16 %v98
  %v107 = vunpack.c.h.b16 %v97
  %v108 = vunpack.c.h.b16 %v98
  %v109 = vunpack.c.l.b16 %v99
  %v110 = vunpack.c.l.b16 %v100
  %v111 = vunpack.c.h.b16 %v99
  %v112 = vunpack.c.h.b16 %v100
  %v113 = vpack.c.b16 %v106, %v105
  %v114 = vpack.c.b16 %v108, %v107
  %v115 = vpack.c.b16 %v110, %v109
  %v116 = vpack.c.b16 %v112, %v111
  %121 = vst [vmem:[%s4] sm:$0xff] %v113
  %122 = vst [vmem:[%s4 + $0x8] sm:$0xff] %v114
  %123 = vst [vmem:[%s4 + $0x10] sm:$0xff] %v115
  %124 = vst [vmem:[%s4 + $0x18] sm:$0xff] %v116
  // Predicated region
  $region18: #{_lambda_.20} parent=0 // pred_check
    _
  $region19: #{_lambda_.20} parent=0 // pred_check_branch
    %126 = sbr.rel (0) target = $region21
  $region20: #{_lambda_.20} parent=0 // pred_region
    _
  $region21: #{_lambda_.20} parent=0 // pred_fallthru
    _
  // Predicated region
  $region22: #{_lambda_.20} parent=0 // pred_check
    _
  $region23: #{_lambda_.20} parent=0 // pred_check_branch
    %128 = sbr.rel (0) target = $region25
  $region24: #{_lambda_.20} parent=0 // pred_region
    _
  $region25: #{_lambda_.20} parent=0 // pred_fallthru
    _

// kernel: _lambda_.15
$region0: #{_lambda_.15}
  #allocation0 [shape = 'u32[]', space=smem, size = 0x4, offset = 0x4, fixed_abs, tag = 'smem constant byte address 0x4 - core index']
  #allocation1 [shape = 'u32[144,128]{1,0:T(1,128)}', space=vmem, size = 0x12000, scoped, tag = 'internal scratch']
  %s0 = inlined_call_operand.vmem [shape: bf16[1,2,18,48], index: 0, kind: input, shape index: {}]
  %s1 = inlined_call_operand.hbm [shape: bf16[3,48,256], index: 1, kind: input, shape index: {}]
  %s2 = inlined_call_operand.vmem [shape: bf16[2,16,256], index: 2, kind: output, shape index: {0}]
  %s3 = inlined_call_operand.vmem [shape: f32[1,1,256], index: 3, kind: output, shape index: {1}]
  %s4 = inlined_call_operand.vmem [shape: f32[1,1,256], index: 4, kind: output, shape index: {2}]
  %5 = xla_tuple %s2, %s3, %s4
  %s6 = sld [smem:[#allocation0]]
  $region42: #{_lambda_.15} parent=0
    _
  %s8 = ssub.s32 1, %s6
  %s9 = scalar_select 0, %s8, %s6
  $region1: #{_lambda_.15} parent=0
    #allocation2 [shape = 'u8[73728]{0}', space=vmem, size = 0x12000, scoped, tag = 'input window, operand 1, single buffered']
    #allocation3 [shape = 's32[1]{0}', space=sflag, size = 0x4, scoped, tag = 'scoped memory for _lambda_.15']
    %10 = vsyncpa [#allocation3], 0
    // Predicated region
    $region2: #{_lambda_.15} parent=1 // pred_check
      _
    $region3: #{_lambda_.15} parent=1 // pred_check_branch
      %12 = sbr.rel (0) target = $region5
    $region4: #{_lambda_.15} parent=1 // pred_region
      %s13 = sadd.s32 0, 0
      %s14 = smul.u32 2, %s13
      %p15 = scmp.lt.s32.totalorder %s14, 1
      %s16 = scalar_select %p15, %s14, 1
      %s17 = smul.addr %s16, 3
      %s18 = smul.addr %s17, 4
      %s19 = scalar_lea.vmem %s0, %s18
      %s20 = sadd.s32 0, 0
      %s21 = smul.u32 2, %s20
    $region5: #{_lambda_.15} parent=1 // pred_fallthru
      _
    // Predicated region
    $region6: #{_lambda_.15} parent=1 // pred_check
      _
    $region7: #{_lambda_.15} parent=1 // pred_check_branch
      %23 = sbr.rel (0) target = $region9
    $region8: #{_lambda_.15} parent=1 // pred_region
      %s25 = ssub.s32 2304, 2304
      %26 = vsyncadd [#allocation3], %s25
      %s27 = sshll.u32 [#allocation2], 4
      %s28 = int_to_ptr.vmem [resolvable:$true] %s27
      %33 = dma.hbm_to_vmem [thread:$0]  %s1, 2304, %s28, [#allocation3], 128, 128, 8
    $region9: #{_lambda_.15} parent=1 // pred_fallthru
      _
    // Predicated region
    $region10: #{_lambda_.15} parent=1 // pred_check
      _
    $region11: #{_lambda_.15} parent=1 // pred_check_branch
      %35 = sbr.rel (0) target = $region13
    $region12: #{_lambda_.15} parent=1 // pred_region
      %36 = dma.done [#allocation3], 2304
    $region13: #{_lambda_.15} parent=1 // pred_fallthru
      _
    %s37 = sadd.s32 0, 0
    %s38 = smul.u32 2, %s37
    %p39 = scmp.lt.s32.totalorder %s38, 1
    %s40 = scalar_select %p39, %s38, 1
    %s41 = smul.addr %s40, 3
    %s42 = smul.addr %s41, 4
    %s43 = scalar_lea.vmem %s0, %s42
    %s44 = sadd.s32 0, 0
    %s45 = smul.u32 2, %s44
    %p46 = scmp.lt.s32.totalorder %s45, 1
    %s47 = scalar_select %p46, %s45, 1
    %s48 = smul.addr %s47, 4
    %s49 = smul.addr %s48, 4
    %s50 = scalar_lea.vmem %s2, %s49
    %s51 = sadd.s32 0, 0
    %s52 = smul.u32 2, %s51
    %p53 = scmp.lt.s32.totalorder %s52, 1
    %s54 = scalar_select %p53, %s52, 1
    %s55 = smul.addr %s54, 3
    %s56 = smul.addr %s55, 4
    %s57 = scalar_lea.vmem %s0, %s56
    %s58 = sadd.s32 0, 0
    %s59 = smul.u32 2, %s58
    %s60 = sadd.s32 0, 0
    %s61 = smul.u32 2, %s60
    %p62 = scmp.lt.s32.totalorder %s61, 1
    %s63 = scalar_select %p62, %s61, 1
    %s64 = smul.addr %s63, 4
    %s65 = smul.addr %s64, 4
    %s66 = scalar_lea.vmem %s2, %s65
    %s67 = sadd.s32 0, 0
    %s68 = smul.u32 2, %s67
    %p70 = scmp.eq.s32.totalorder 0, 0
    // Predicated region
    $region14: #{_lambda_.15} parent=1 // pred_check
      %p71 = pneg %p70
    $region15: #{_lambda_.15} parent=1 // pred_check_branch
      %73 = sbr.rel (%p71) target = $region17
    $region16: #{_lambda_.15} parent=1 // pred_region
      %v74 = vlaneseq
      %vm75 = vcmp.ge.s32.totalorder %v74, 0
      %vm76 = vcmp.lt.s32.totalorder %v74, 256
      %vm77 = vmand %vm75, %vm76
      %78 = vst.msk [vmem:[%s3] sm:$0x3] %vm77, 0.0
      %79 = vst.msk [vmem:[%s4] sm:$0x3] %vm77, 0.0
    $region17: #{_lambda_.15} parent=1 // pred_fallthru
      _
    %v80 = vld [vmem:[%s57] sm:$0xf]
    %v81 = vld [vmem:[%s57 + $0x4] sm:$0xf]
    %v82 = vld [vmem:[#allocation2] sm:$0xff]
    %v83 = vld [vmem:[#allocation2 + $0x8] sm:$0xff]
    %v84 = vld [vmem:[#allocation2 + $0x10] sm:$0xff]
    %v85 = vld [vmem:[#allocation2 + $0x18] sm:$0xff]
    %v86 = vld [vmem:[#allocation2 + $0x20] sm:$0xff]
    %v87 = vld [vmem:[#allocation2 + $0x28] sm:$0xff]
    %v88 = vld [vmem:[%s57 + $0x8] sm:$0x1]
    %s89 = scalar_lea.vmem [#allocation2], 48
    %v90 = vld [vmem:[%s89] sm:$0xff]
    %v91 = vld [vmem:[%s89 + $0x8] sm:$0xff]
    %v92 = vld [vmem:[%s89 + $0x10] sm:$0xff]
    %v93 = vld [vmem:[%s89 + $0x18] sm:$0xff]
    %v94 = vld [vmem:[%s89 + $0x20] sm:$0xff]
    %v95 = vld [vmem:[%s89 + $0x28] sm:$0xff]
    %v99 = vunpack.c.l.b16 %v80
    %v100 = vunpack.c.l.b16 %v81
    %v101 = vunpack.c.l.b16 %v88
    %v102 = vpack.c.b16 %v100, %v99
    %v103 = vpack.c.b16 %v101, %v101
    %vm104 = vsmask.f32 7424
    %v106 = vshrl.u32 %v102, 16
    %v108 = vshll.u32 %v102, 16
    %v110 = vrot.slane %v108, 1
    %v111 = vor.u32 %v106, %v110
    %v113 = vshll.u32 %v103, 16
    %v115 = vrot.slane %v113, 1
    %v116 = vsel %vm104, %v111, %v115
    %v123 = vunpack.c.l.b16 %v90
    %v124 = vunpack.c.h.b16 %v90
    %v125 = vunpack.c.l.b16 %v91
    %v126 = vunpack.c.h.b16 %v91
    %v127 = vunpack.c.l.b16 %v92
    %v128 = vunpack.c.h.b16 %v92
    %v129 = vunpack.c.l.b16 %v93
    %v130 = vunpack.c.h.b16 %v93
    %v131 = vunpack.c.l.b16 %v94
    %v132 = vunpack.c.h.b16 %v94
    %v133 = vunpack.c.l.b16 %v95
    %v134 = vunpack.c.h.b16 %v95
    %v135 = vpack.c.b16 %v125, %v123
    %v136 = vpack.c.b16 %v126, %v124
    %v137 = vpack.c.b16 %v129, %v127
    %v138 = vpack.c.b16 %v130, %v128
    %v139 = vpack.c.b16 %v133, %v131
    %v140 = vpack.c.b16 %v134, %v132
    %vm147 = vcmask 392192
    %v149 = vsel %vm147, %v116, 0
    %151 = vmatprep.subr.bf16.mxu0 0
    %152 = vmatpush1.bf16.msra.mxu0 0
    %153 = vmatprep.subr.bf16.mxu0 0
    %154 = vmatpush1.bf16.msra.mxu0 0
    %155 = vmatprep.subr.bf16.mxu0 0
    %156 = vmatpush1.bf16.msra.mxu0 0
    %157 = vmatprep.subr.bf16.mxu0 0
    %158 = vmatpush1.bf16.msra.mxu0 0
    %159 = vmatprep.subr.bf16.mxu0 0
    %160 = vmatpush1.bf16.msra.mxu0 0
    %161 = vmatprep.subr.bf16.mxu0 %v140
    %162 = vmatpush1.bf16.msra.mxu0 %v139
    %163 = vmatprep.subr.bf16.mxu0 %v138
    %164 = vmatpush1.bf16.msra.mxu0 %v137
    %165 = vmatprep.subr.bf16.mxu0 %v136
    %166 = vmatpush1.bf16.msra.mxu0 %v135
    %167 = vmatprep.subr.bf16.mxu0 0
    %168 = vmatpush2.bf16.msra.mxu0 0
    %169 = vmatprep.subr.bf16.mxu0 0
    %170 = vmatpush2.bf16.msra.mxu0 0
    %171 = vmatprep.subr.bf16.mxu0 0
    %172 = vmatpush2.bf16.msra.mxu0 0
    %173 = vmatprep.subr.bf16.mxu0 0
    %174 = vmatpush2.bf16.msra.mxu0 0
    %175 = vmatprep.subr.bf16.mxu0 0
    %176 = vmatpush2.bf16.msra.mxu0 0
    %177 = vmatprep.subr.bf16.mxu0 0
    %178 = vmatpush2.bf16.msra.mxu0 0
    %179 = vmatprep.subr.bf16.mxu0 0
    %180 = vmatpush2.bf16.msra.mxu0 0
    %181 = vmatprep.subr.bf16.mxu0 0
    %182 = vmatpush2.bf16.msra.mxu0 0
    %183 = vmatprep.mubr.bf16.mxu0 0
    %184 = vmatmul.mubr.bf16.gmra.mxu0 %v149
    %v185 = vpop.f32.mrf.mxu0
    %v186 = vadd.f32 0.0, %v185
    %v187 = vpop.f32.mrf.mxu0
    %v188 = vadd.f32 0.0, %v187
    %v189 = vpop.f32.mrf.mxu0
    %v190 = vadd.f32 0.0, %v189
    %v191 = vpop.f32.mrf.mxu0
    %v192 = vadd.f32 0.0, %v191
    %193 = vdwg.mxu0
    %v200 = vunpack.c.l.b16 %v82
    %v201 = vunpack.c.h.b16 %v82
    %v202 = vunpack.c.l.b16 %v83
    %v203 = vunpack.c.h.b16 %v83
    %v204 = vunpack.c.l.b16 %v84
    %v205 = vunpack.c.h.b16 %v84
    %v206 = vunpack.c.l.b16 %v85
    %v207 = vunpack.c.h.b16 %v85
    %v208 = vunpack.c.l.b16 %v86
    %v209 = vunpack.c.h.b16 %v86
    %v210 = vunpack.c.l.b16 %v87
    %v211 = vunpack.c.h.b16 %v87
    %v212 = vpack.c.b16 %v202, %v200
    %v213 = vpack.c.b16 %v203, %v201
    %v214 = vpack.c.b16 %v206, %v204
    %v215 = vpack.c.b16 %v207, %v205
    %v216 = vpack.c.b16 %v210, %v208
    %v217 = vpack.c.b16 %v211, %v209
    %v224 = vsel %vm147, %v102, 0
    %226 = vmatprep.subr.bf16.mxu0 0
    %227 = vmatpush1.bf16.msra.mxu0 0
    %228 = vmatprep.subr.bf16.mxu0 0
    %229 = vmatpush1.bf16.msra.mxu0 0
    %230 = vmatprep.subr.bf16.mxu0 0
    %231 = vmatpush1.bf16.msra.mxu0 0
    %232 = vmatprep.subr.bf16.mxu0 0
    %233 = vmatpush1.bf16.msra.mxu0 0
    %234 = vmatprep.subr.bf16.mxu0 0
    %235 = vmatpush1.bf16.msra.mxu0 0
    %236 = vmatprep.subr.bf16.mxu0 %v217
    %237 = vmatpush1.bf16.msra.mxu0 %v216
    %238 = vmatprep.subr.bf16.mxu0 %v215
    %239 = vmatpush1.bf16.msra.mxu0 %v214
    %240 = vmatprep.subr.bf16.mxu0 %v213
    %241 = vmatpush1.bf16.msra.mxu0 %v212
    %242 = vmatprep.subr.bf16.mxu0 0
    %243 = vmatpush2.bf16.msra.mxu0 0
    %244 = vmatprep.subr.bf16.mxu0 0
    %245 = vmatpush2.bf16.msra.mxu0 0
    %246 = vmatprep.subr.bf16.mxu0 0
    %247 = vmatpush2.bf16.msra.mxu0 0
    %248 = vmatprep.subr.bf16.mxu0 0
    %249 = vmatpush2.bf16.msra.mxu0 0
    %250 = vmatprep.subr.bf16.mxu0 0
    %251 = vmatpush2.bf16.msra.mxu0 0
    %252 = vmatprep.subr.bf16.mxu0 0
    %253 = vmatpush2.bf16.msra.mxu0 0
    %254 = vmatprep.subr.bf16.mxu0 0
    %255 = vmatpush2.bf16.msra.mxu0 0
    %256 = vmatprep.subr.bf16.mxu0 0
    %257 = vmatpush2.bf16.msra.mxu0 0
    %258 = vmatprep.mubr.bf16.mxu0 0
    %259 = vmatmul.mubr.bf16.gmra.mxu0 %v224
    %v260 = vpop.f32.mrf.mxu0
    %v261 = vadd.f32 %v186, %v260
    %v262 = vpop.f32.mrf.mxu0
    %v263 = vadd.f32 %v188, %v262
    %v264 = vpop.f32.mrf.mxu0
    %v265 = vadd.f32 %v190, %v264
    %v266 = vpop.f32.mrf.mxu0
    %v267 = vadd.f32 %v192, %v266
    %268 = vdwg.mxu0
    %v269 = vld [vmem:[%s57] sm:$0xe]
    %s270 = scalar_lea.vmem [#allocation2], 96
    %v271 = vld [vmem:[%s270] sm:$0xff]
    %v272 = vld [vmem:[%s270 + $0x8] sm:$0xff]
    %v273 = vld [vmem:[%s270 + $0x10] sm:$0xff]
    %v274 = vld [vmem:[%s270 + $0x18] sm:$0xff]
    %v275 = vld [vmem:[%s270 + $0x20] sm:$0xff]
    %v276 = vld [vmem:[%s270 + $0x28] sm:$0xff]
    %v278 = vunpack.c.l.b16 %v269
    %v279 = vpack.c.b16 %v100, %v278
    %vm280 = vcmask 1046528
    %v281 = vrot.slane %v279, 1
    %v282 = vrot.slane %v103, 1
    %v283 = vsel %vm280, %v281, %v282
    %v290 = vunpack.c.l.b16 %v271
    %v291 = vunpack.c.h.b16 %v271
    %v292 = vunpack.c.l.b16 %v272
    %v293 = vunpack.c.h.b16 %v272
    %v294 = vunpack.c.l.b16 %v273
    %v295 = vunpack.c.h.b16 %v273
    %v296 = vunpack.c.l.b16 %v274
    %v297 = vunpack.c.h.b16 %v274
    %v298 = vunpack.c.l.b16 %v275
    %v299 = vunpack.c.h.b16 %v275
    %v300 = vunpack.c.l.b16 %v276
    %v301 = vunpack.c.h.b16 %v276
    %v302 = vpack.c.b16 %v292, %v290
    %v303 = vpack.c.b16 %v293, %v291
    %v304 = vpack.c.b16 %v296, %v294
    %v305 = vpack.c.b16 %v297, %v295
    %v306 = vpack.c.b16 %v300, %v298
    %v307 = vpack.c.b16 %v301, %v299
    %v315 = vsel %vm147, %v283, 0
    %317 = vmatprep.subr.bf16.mxu0 0
    %318 = vmatpush1.bf16.msra.mxu0 0
    %319 = vmatprep.subr.bf16.mxu0 0
    %320 = vmatpush1.bf16.msra.mxu0 0
    %321 = vmatprep.subr.bf16.mxu0 0
    %322 = vmatpush1.bf16.msra.mxu0 0
    %323 = vmatprep.subr.bf16.mxu0 0
    %324 = vmatpush1.bf16.msra.mxu0 0
    %325 = vmatprep.subr.bf16.mxu0 0
    %326 = vmatpush1.bf16.msra.mxu0 0
    %327 = vmatprep.subr.bf16.mxu0 %v307
    %328 = vmatpush1.bf16.msra.mxu0 %v306
    %329 = vmatprep.subr.bf16.mxu0 %v305
    %330 = vmatpush1.bf16.msra.mxu0 %v304
    %331 = vmatprep.subr.bf16.mxu0 %v303
    %332 = vmatpush1.bf16.msra.mxu0 %v302
    %333 = vmatprep.subr.bf16.mxu0 0
    %334 = vmatpush2.bf16.msra.mxu0 0
    %335 = vmatprep.subr.bf16.mxu0 0
    %336 = vmatpush2.bf16.msra.mxu0 0
    %337 = vmatprep.subr.bf16.mxu0 0
    %338 = vmatpush2.bf16.msra.mxu0 0
    %339 = vmatprep.subr.bf16.mxu0 0
    %340 = vmatpush2.bf16.msra.mxu0 0
    %341 = vmatprep.subr.bf16.mxu0 0
    %342 = vmatpush2.bf16.msra.mxu0 0
    %343 = vmatprep.subr.bf16.mxu0 0
    %344 = vmatpush2.bf16.msra.mxu0 0
    %345 = vmatprep.subr.bf16.mxu0 0
    %346 = vmatpush2.bf16.msra.mxu0 0
    %347 = vmatprep.subr.bf16.mxu0 0
    %348 = vmatpush2.bf16.msra.mxu0 0
    %349 = vmatprep.mubr.bf16.mxu0 0
    %350 = vmatmul.mubr.bf16.gmra.mxu0 %v315
    %v351 = vpop.f32.mrf.mxu0
    %v352 = vadd.f32 0.0, %v351
    %v353 = vpop.f32.mrf.mxu0
    %v354 = vadd.f32 0.0, %v353
    %v355 = vpop.f32.mrf.mxu0
    %v356 = vadd.f32 0.0, %v355
    %v357 = vpop.f32.mrf.mxu0
    %v358 = vadd.f32 0.0, %v357
    %359 = vdwg.mxu0
    %v360 = vadd.f32 %v261, %v352
    %v361 = vadd.f32 %v263, %v354
    %v362 = vadd.f32 %v265, %v356
    %v363 = vadd.f32 %v267, %v358
    %v364 = vpack.c.bf16 %v362, %v360
    %v365 = vpack.c.bf16 %v363, %v361
    %v368 = vunpack.c.l.b16 %v364
    %v369 = vunpack.c.l.b16 %v365
    %v370 = vunpack.c.h.b16 %v364
    %v371 = vunpack.c.h.b16 %v365
    %v372 = vpack.c.b16 %v369, %v368
    %v373 = vpack.c.b16 %v371, %v370
    %376 = vst [vmem:[%s66] sm:$0xff] %v372
    %377 = vst [vmem:[%s66 + $0x8] sm:$0xff] %v373
    %v378 = vadd.f32 %v360, %v362
    %v379 = vrot.slane %v378, 4
    %v380 = vadd.f32 %v378, %v379
    %v381 = vrot.slane %v380, 2
    %v382 = vadd.f32 %v380, %v381
    %v383 = vrot.slane %v382, 1
    %v384 = vadd.f32 %v382, %v383
    %v385 = vadd.f32 %v361, %v363
    %v386 = vrot.slane %v385, 4
    %v387 = vadd.f32 %v385, %v386
    %v388 = vrot.slane %v387, 2
    %v389 = vadd.f32 %v387, %v388
    %v390 = vrot.slane %v389, 1
    %v391 = vadd.f32 %v389, %v390
    %v392 = vadd.f32 %v384, 0.0
    %v393 = vadd.f32 %v391, 0.0
    %v394 = vmul.f32 %v360, %v360
    %v395 = vmul.f32 %v361, %v361
    %v396 = vmul.f32 %v362, %v362
    %v397 = vmul.f32 %v363, %v363
    %v398 = vadd.f32 %v394, %v396
    %v399 = vrot.slane %v398, 4
    %v400 = vadd.f32 %v398, %v399
    %v401 = vrot.slane %v400, 2
    %v402 = vadd.f32 %v400, %v401
    %v403 = vrot.slane %v402, 1
    %v404 = vadd.f32 %v402, %v403
    %v405 = vadd.f32 %v395, %v397
    %v406 = vrot.slane %v405, 4
    %v407 = vadd.f32 %v405, %v406
    %v408 = vrot.slane %v407, 2
    %v409 = vadd.f32 %v407, %v408
    %v410 = vrot.slane %v409, 1
    %v411 = vadd.f32 %v409, %v410
    %v412 = vadd.f32 %v404, 0.0
    %v413 = vadd.f32 %v411, 0.0
    %s414 = scalar_lea.vmem %s57, 12
    %v415 = vld [vmem:[%s414] sm:$0xf]
    %v416 = vld [vmem:[%s414 + $0x4] sm:$0xf]
    %v417 = vld [vmem:[#allocation2] sm:$0xff]
    %v418 = vld [vmem:[#allocation2 + $0x8] sm:$0xff]
    %v419 = vld [vmem:[#allocation2 + $0x10] sm:$0xff]
    %v420 = vld [vmem:[#allocation2 + $0x18] sm:$0xff]
    %v421 = vld [vmem:[#allocation2 + $0x20] sm:$0xff]
    %v422 = vld [vmem:[#allocation2 + $0x28] sm:$0xff]
    %v423 = vld [vmem:[%s414 + $0x8] sm:$0x1]
    %v424 = vld [vmem:[%s89] sm:$0xff]
    %v425 = vld [vmem:[%s89 + $0x8] sm:$0xff]
    %v426 = vld [vmem:[%s89 + $0x10] sm:$0xff]
    %v427 = vld [vmem:[%s89 + $0x18] sm:$0xff]
    %v428 = vld [vmem:[%s89 + $0x20] sm:$0xff]
    %v429 = vld [vmem:[%s89 + $0x28] sm:$0xff]
    %v433 = vunpack.c.l.b16 %v415
    %v434 = vunpack.c.l.b16 %v416
    %v435 = vunpack.c.l.b16 %v423
    %v436 = vpack.c.b16 %v434, %v433
    %v437 = vpack.c.b16 %v435, %v435
    %v439 = vshrl.u32 %v436, 16
    %v441 = vshll.u32 %v436, 16
    %v443 = vrot.slane %v441, 1
    %v444 = vor.u32 %v439, %v443
    %v446 = vshll.u32 %v437, 16
    %v448 = vrot.slane %v446, 1
    %v449 = vsel %vm104, %v444, %v448
    %v456 = vunpack.c.l.b16 %v424
    %v457 = vunpack.c.h.b16 %v424
    %v458 = vunpack.c.l.b16 %v425
    %v459 = vunpack.c.h.b16 %v425
    %v460 = vunpack.c.l.b16 %v426
    %v461 = vunpack.c.h.b16 %v426
    %v462 = vunpack.c.l.b16 %v427
    %v463 = vunpack.c.h.b16 %v427
    %v464 = vunpack.c.l.b16 %v428
    %v465 = vunpack.c.h.b16 %v428
    %v466 = vunpack.c.l.b16 %v429
    %v467 = vunpack.c.h.b16 %v429
    %v468 = vpack.c.b16 %v458, %v456
    %v469 = vpack.c.b16 %v459, %v457
    %v470 = vpack.c.b16 %v462, %v460
    %v471 = vpack.c.b16 %v463, %v461
    %v472 = vpack.c.b16 %v466, %v464
    %v473 = vpack.c.b16 %v467, %v465
    %v481 = vsel %vm147, %v449, 0
    %483 = vmatprep.subr.bf16.mxu0 0
    %484 = vmatpush1.bf16.msra.mxu0 0
    %485 = vmatprep.subr.bf16.mxu0 0
    %486 = vmatpush1.bf16.msra.mxu0 0
    %487 = vmatprep.subr.bf16.mxu0 0
    %488 = vmatpush1.bf16.msra.mxu0 0
    %489 = vmatprep.subr.bf16.mxu0 0
    %490 = vmatpush1.bf16.msra.mxu0 0
    %491 = vmatprep.subr.bf16.mxu0 0
    %492 = vmatpush1.bf16.msra.mxu0 0
    %493 = vmatprep.subr.bf16.mxu0 %v473
    %494 = vmatpush1.bf16.msra.mxu0 %v472
    %495 = vmatprep.subr.bf16.mxu0 %v471
    %496 = vmatpush1.bf16.msra.mxu0 %v470
    %497 = vmatprep.subr.bf16.mxu0 %v469
    %498 = vmatpush1.bf16.msra.mxu0 %v468
    %499 = vmatprep.subr.bf16.mxu0 0
    %500 = vmatpush2.bf16.msra.mxu0 0
    %501 = vmatprep.subr.bf16.mxu0 0
    %502 = vmatpush2.bf16.msra.mxu0 0
    %503 = vmatprep.subr.bf16.mxu0 0
    %504 = vmatpush2.bf16.msra.mxu0 0
    %505 = vmatprep.subr.bf16.mxu0 0
    %506 = vmatpush2.bf16.msra.mxu0 0
    %507 = vmatprep.subr.bf16.mxu0 0
    %508 = vmatpush2.bf16.msra.mxu0 0
    %509 = vmatprep.subr.bf16.mxu0 0
    %510 = vmatpush2.bf16.msra.mxu0 0
    %511 = vmatprep.subr.bf16.mxu0 0
    %512 = vmatpush2.bf16.msra.mxu0 0
    %513 = vmatprep.subr.bf16.mxu0 0
    %514 = vmatpush2.bf16.msra.mxu0 0
    %515 = vmatprep.mubr.bf16.mxu0 0
    %516 = vmatmul.mubr.bf16.gmra.mxu0 %v481
    %v517 = vpop.f32.mrf.mxu0
    %v518 = vadd.f32 0.0, %v517
    %v519 = vpop.f32.mrf.mxu0
    %v520 = vadd.f32 0.0, %v519
    %v521 = vpop.f32.mrf.mxu0
    %v522 = vadd.f32 0.0, %v521
    %v523 = vpop.f32.mrf.mxu0
    %v524 = vadd.f32 0.0, %v523
    %525 = vdwg.mxu0
    %v532 = vunpack.c.l.b16 %v417
    %v533 = vunpack.c.h.b16 %v417
    %v534 = vunpack.c.l.b16 %v418
    %v535 = vunpack.c.h.b16 %v418
    %v536 = vunpack.c.l.b16 %v419
    %v537 = vunpack.c.h.b16 %v419
    %v538 = vunpack.c.l.b16 %v420
    %v539 = vunpack.c.h.b16 %v420
    %v540 = vunpack.c.l.b16 %v421
    %v541 = vunpack.c.h.b16 %v421
    %v542 = vunpack.c.l.b16 %v422
    %v543 = vunpack.c.h.b16 %v422
    %v544 = vpack.c.b16 %v534, %v532
    %v545 = vpack.c.b16 %v535, %v533
    %v546 = vpack.c.b16 %v538, %v536
    %v547 = vpack.c.b16 %v539, %v537
    %v548 = vpack.c.b16 %v542, %v540
    %v549 = vpack.c.b16 %v543, %v541
    %v556 = vsel %vm147, %v436, 0
    %558 = vmatprep.subr.bf16.mxu0 0
    %559 = vmatpush1.bf16.msra.mxu0 0
    %560 = vmatprep.subr.bf16.mxu0 0
    %561 = vmatpush1.bf16.msra.mxu0 0
    %562 = vmatprep.subr.bf16.mxu0 0
    %563 = vmatpush1.bf16.msra.mxu0 0
    %564 = vmatprep.subr.bf16.mxu0 0
    %565 = vmatpush1.bf16.msra.mxu0 0
    %566 = vmatprep.subr.bf16.mxu0 0
    %567 = vmatpush1.bf16.msra.mxu0 0
    %568 = vmatprep.subr.bf16.mxu0 %v549
    %569 = vmatpush1.bf16.msra.mxu0 %v548
    %570 = vmatprep.subr.bf16.mxu0 %v547
    %571 = vmatpush1.bf16.msra.mxu0 %v546
    %572 = vmatprep.subr.bf16.mxu0 %v545
    %573 = vmatpush1.bf16.msra.mxu0 %v544
    %574 = vmatprep.subr.bf16.mxu0 0
    %575 = vmatpush2.bf16.msra.mxu0 0
    %576 = vmatprep.subr.bf16.mxu0 0
    %577 = vmatpush2.bf16.msra.mxu0 0
    %578 = vmatprep.subr.bf16.mxu0 0
    %579 = vmatpush2.bf16.msra.mxu0 0
    %580 = vmatprep.subr.bf16.mxu0 0
    %581 = vmatpush2.bf16.msra.mxu0 0
    %582 = vmatprep.subr.bf16.mxu0 0
    %583 = vmatpush2.bf16.msra.mxu0 0
    %584 = vmatprep.subr.bf16.mxu0 0
    %585 = vmatpush2.bf16.msra.mxu0 0
    %586 = vmatprep.subr.bf16.mxu0 0
    %587 = vmatpush2.bf16.msra.mxu0 0
    %588 = vmatprep.subr.bf16.mxu0 0
    %589 = vmatpush2.bf16.msra.mxu0 0
    %590 = vmatprep.mubr.bf16.mxu0 0
    %591 = vmatmul.mubr.bf16.gmra.mxu0 %v556
    %v592 = vpop.f32.mrf.mxu0
    %v593 = vadd.f32 %v518, %v592
    %v594 = vpop.f32.mrf.mxu0
    %v595 = vadd.f32 %v520, %v594
    %v596 = vpop.f32.mrf.mxu0
    %v597 = vadd.f32 %v522, %v596
    %v598 = vpop.f32.mrf.mxu0
    %v599 = vadd.f32 %v524, %v598
    %600 = vdwg.mxu0
    %v601 = vld [vmem:[%s414] sm:$0xe]
    %v602 = vld [vmem:[%s270] sm:$0xff]
    %v603 = vld [vmem:[%s270 + $0x8] sm:$0xff]
    %v604 = vld [vmem:[%s270 + $0x10] sm:$0xff]
    %v605 = vld [vmem:[%s270 + $0x18] sm:$0xff]
    %v606 = vld [vmem:[%s270 + $0x20] sm:$0xff]
    %v607 = vld [vmem:[%s270 + $0x28] sm:$0xff]
    %v609 = vunpack.c.l.b16 %v601
    %v610 = vpack.c.b16 %v434, %v609
    %v611 = vrot.slane %v610, 1
    %v612 = vrot.slane %v437, 1
    %v613 = vsel %vm280, %v611, %v612
    %v620 = vunpack.c.l.b16 %v602
    %v621 = vunpack.c.h.b16 %v602
    %v622 = vunpack.c.l.b16 %v603
    %v623 = vunpack.c.h.b16 %v603
    %v624 = vunpack.c.l.b16 %v604
    %v625 = vunpack.c.h.b16 %v604
    %v626 = vunpack.c.l.b16 %v605
    %v627 = vunpack.c.h.b16 %v605
    %v628 = vunpack.c.l.b16 %v606
    %v629 = vunpack.c.h.b16 %v606
    %v630 = vunpack.c.l.b16 %v607
    %v631 = vunpack.c.h.b16 %v607
    %v632 = vpack.c.b16 %v622, %v620
    %v633 = vpack.c.b16 %v623, %v621
    %v634 = vpack.c.b16 %v626, %v624
    %v635 = vpack.c.b16 %v627, %v625
    %v636 = vpack.c.b16 %v630, %v628
    %v637 = vpack.c.b16 %v631, %v629
    %v645 = vsel %vm147, %v613, 0
    %647 = vmatprep.subr.bf16.mxu0 0
    %648 = vmatpush1.bf16.msra.mxu0 0
    %649 = vmatprep.subr.bf16.mxu0 0
    %650 = vmatpush1.bf16.msra.mxu0 0
    %651 = vmatprep.subr.bf16.mxu0 0
    %652 = vmatpush1.bf16.msra.mxu0 0
    %653 = vmatprep.subr.bf16.mxu0 0
    %654 = vmatpush1.bf16.msra.mxu0 0
    %655 = vmatprep.subr.bf16.mxu0 0
    %656 = vmatpush1.bf16.msra.mxu0 0
    %657 = vmatprep.subr.bf16.mxu0 %v637
    %658 = vmatpush1.bf16.msra.mxu0 %v636
    %659 = vmatprep.subr.bf16.mxu0 %v635
    %660 = vmatpush1.bf16.msra.mxu0 %v634
    %661 = vmatprep.subr.bf16.mxu0 %v633
    %662 = vmatpush1.bf16.msra.mxu0 %v632
    %663 = vmatprep.subr.bf16.mxu0 0
    %664 = vmatpush2.bf16.msra.mxu0 0
    %665 = vmatprep.subr.bf16.mxu0 0
    %666 = vmatpush2.bf16.msra.mxu0 0
    %667 = vmatprep.subr.bf16.mxu0 0
    %668 = vmatpush2.bf16.msra.mxu0 0
    %669 = vmatprep.subr.bf16.mxu0 0
    %670 = vmatpush2.bf16.msra.mxu0 0
    %671 = vmatprep.subr.bf16.mxu0 0
    %672 = vmatpush2.bf16.msra.mxu0 0
    %673 = vmatprep.subr.bf16.mxu0 0
    %674 = vmatpush2.bf16.msra.mxu0 0
    %675 = vmatprep.subr.bf16.mxu0 0
    %676 = vmatpush2.bf16.msra.mxu0 0
    %677 = vmatprep.subr.bf16.mxu0 0
    %678 = vmatpush2.bf16.msra.mxu0 0
    %679 = vmatprep.mubr.bf16.mxu0 0
    %680 = vmatmul.mubr.bf16.gmra.mxu0 %v645
    %v681 = vpop.f32.mrf.mxu0
    %v682 = vadd.f32 0.0, %v681
    %v683 = vpop.f32.mrf.mxu0
    %v684 = vadd.f32 0.0, %v683
    %v685 = vpop.f32.mrf.mxu0
    %v686 = vadd.f32 0.0, %v685
    %v687 = vpop.f32.mrf.mxu0
    %v688 = vadd.f32 0.0, %v687
    %689 = vdwg.mxu0
    %v690 = vadd.f32 %v593, %v682
    %v691 = vadd.f32 %v595, %v684
    %v692 = vadd.f32 %v597, %v686
    %v693 = vadd.f32 %v599, %v688
    %v694 = vpack.c.bf16 %v692, %v690
    %v695 = vpack.c.bf16 %v693, %v691
    %v698 = vunpack.c.l.b16 %v694
    %v699 = vunpack.c.l.b16 %v695
    %v700 = vunpack.c.h.b16 %v694
    %v701 = vunpack.c.h.b16 %v695
    %v702 = vpack.c.b16 %v699, %v698
    %v703 = vpack.c.b16 %v701, %v700
    %s706 = scalar_lea.vmem %s66, 16
    %707 = vst [vmem:[%s706] sm:$0xff] %v702
    %708 = vst [vmem:[%s706 + $0x8] sm:$0xff] %v703
    %v709 = vadd.f32 %v690, %v692
    %v710 = vrot.slane %v709, 4
    %v711 = vadd.f32 %v709, %v710
    %v712 = vrot.slane %v711, 2
    %v713 = vadd.f32 %v711, %v712
    %v714 = vrot.slane %v713, 1
    %v715 = vadd.f32 %v713, %v714
    %v716 = vadd.f32 %v691, %v693
    %v717 = vrot.slane %v716, 4
    %v718 = vadd.f32 %v716, %v717
    %v719 = vrot.slane %v718, 2
    %v720 = vadd.f32 %v718, %v719
    %v721 = vrot.slane %v720, 1
    %v722 = vadd.f32 %v720, %v721
    %v723 = vadd.f32 %v392, %v715
    %v724 = vadd.f32 %v393, %v722
    %v725 = vmul.f32 %v690, %v690
    %v726 = vmul.f32 %v691, %v691
    %v727 = vmul.f32 %v692, %v692
    %v728 = vmul.f32 %v693, %v693
    %v729 = vadd.f32 %v725, %v727
    %v730 = vrot.slane %v729, 4
    %v731 = vadd.f32 %v729, %v730
    %v732 = vrot.slane %v731, 2
    %v733 = vadd.f32 %v731, %v732
    %v734 = vrot.slane %v733, 1
    %v735 = vadd.f32 %v733, %v734
    %v736 = vadd.f32 %v726, %v728
    %v737 = vrot.slane %v736, 4
    %v738 = vadd.f32 %v736, %v737
    %v739 = vrot.slane %v738, 2
    %v740 = vadd.f32 %v738, %v739
    %v741 = vrot.slane %v740, 1
    %v742 = vadd.f32 %v740, %v741
    %v743 = vadd.f32 %v412, %v735
    %v744 = vadd.f32 %v413, %v742
    %v745 = vld [vmem:[%s3] sm:$0x3]
    %v748 = vcombine.low %v723, %v724
    %v750 = vunpack.c.l.s4 1966171168
    %v751 = vunpack.c.0.s8 %v750
    %v752 = vlaneseq
    %v753 = vshrl.u32 %v752, 7
    %v754 = vsub.s32 %v751, %v753
    %v755 = vrot.slane %v748, %v754
    %v757 = vunpack.c.l.s4 1966171168
    %v758 = vunpack.c.0.s8 %v757
    %v759 = vlaneseq
    %v760 = vshrl.u32 %v759, 7
    %v761 = vsub.s32 %v758, %v760
    %v762 = vrot.slane %v755, %v761
    %v764 = vadd.f32 %v745, %v762
    %v765 = vlaneseq
    %vm766 = vcmp.ge.s32.totalorder %v765, 0
    %vm767 = vcmp.lt.s32.totalorder %v765, 256
    %vm768 = vmand %vm766, %vm767
    %769 = vst.msk [vmem:[%s3] sm:$0x3] %vm768, %v764
    %v770 = vld [vmem:[%s4] sm:$0x3]
    %v773 = vcombine.low %v743, %v744
    %v775 = vunpack.c.l.s4 1966171168
    %v776 = vunpack.c.0.s8 %v775
    %v777 = vlaneseq
    %v778 = vshrl.u32 %v777, 7
    %v779 = vsub.s32 %v776, %v778
    %v780 = vrot.slane %v773, %v779
    %v782 = vunpack.c.l.s4 1966171168
    %v783 = vunpack.c.0.s8 %v782
    %v784 = vlaneseq
    %v785 = vshrl.u32 %v784, 7
    %v786 = vsub.s32 %v783, %v785
    %v787 = vrot.slane %v780, %v786
    %v789 = vadd.f32 %v770, %v787
    %790 = vst.msk [vmem:[%s4] sm:$0x3] %vm768, %v789
    %s791 = sadd.s32 0, 0
    %s792 = smul.u32 2, %s791
    %p793 = scmp.lt.s32.totalorder %s792, 1
    %s794 = scalar_select %p793, %s792, 1
    %s795 = smul.addr %s794, 4
    %s796 = smul.addr %s795, 4
    %s797 = scalar_lea.vmem %s2, %s796
    // Predicated region
    $region18: #{_lambda_.15} parent=1 // pred_check
      _
    $region19: #{_lambda_.15} parent=1 // pred_check_branch
      %799 = sbr.rel (0) target = $region21
    $region20: #{_lambda_.15} parent=1 // pred_region
      %s800 = sadd.s32 0, 0
      %s801 = smul.u32 2, %s800
    $region21: #{_lambda_.15} parent=1 // pred_fallthru
      _
    // Predicated region
    $region22: #{_lambda_.15} parent=1 // pred_check
      _
    $region23: #{_lambda_.15} parent=1 // pred_check_branch
      %803 = sbr.rel (0) target = $region25
    $region24: #{_lambda_.15} parent=1 // pred_region
      _
    $region25: #{_lambda_.15} parent=1 // pred_fallthru
      _
    // Predicated region
    $region26: #{_lambda_.15} parent=1 // pred_check
      _
    $region27: #{_lambda_.15} parent=1 // pred_check_branch
      %805 = sbr.rel (0) target = $region29
    $region28: #{_lambda_.15} parent=1 // pred_region
      _
    $region29: #{_lambda_.15} parent=1 // pred_fallthru
      _
    // Predicated region
    $region30: #{_lambda_.15} parent=1 // pred_check
      _
    $region31: #{_lambda_.15} parent=1 // pred_check_branch
      %807 = sbr.rel (0) target = $region33
    $region32: #{_lambda_.15} parent=1 // pred_region
      %s808 = sadd.s32 0, 0
      %s809 = smul.u32 2, %s808
      %p810 = scmp.lt.s32.totalorder %s809, 1
      %s811 = scalar_select %p810, %s809, 1
      %s812 = smul.addr %s811, 4
      %s813 = smul.addr %s812, 4
      %s814 = scalar_lea.vmem %s2, %s813
    $region33: #{_lambda_.15} parent=1 // pred_fallthru
      _
    // Predicated region
    $region34: #{_lambda_.15} parent=1 // pred_check
      _
    $region35: #{_lambda_.15} parent=1 // pred_check_branch
      %816 = sbr.rel (0) target = $region37
    $region36: #{_lambda_.15} parent=1 // pred_region
      _
    $region37: #{_lambda_.15} parent=1 // pred_fallthru
      _
    // Predicated region
    $region38: #{_lambda_.15} parent=1 // pred_check
      _
    $region39: #{_lambda_.15} parent=1 // pred_check_branch
      %818 = sbr.rel (0) target = $region41
    $region40: #{_lambda_.15} parent=1 // pred_region
      _
    $region41: #{_lambda_.15} parent=1 // pred_fallthru
      _
    %819 = vsyncpa [#allocation3], 1

// kernel: tile.112
$region0: #{tile.112}
  #allocation0 [shape = 's32[1]{0}', space=sflag, size = 0x4, scoped, tag = 'scoped memory for tile.112']
  %s0 = inlined_call_operand.vmem [shape: f32[32], index: 0, kind: input, shape index: {}]
  %s1 = inlined_call_operand.vmem [shape: f32[8,32], index: 1, kind: output, shape index: {}]
  // Predicated region
  $region2: #{tile.112} parent=0 // pred_check
    _
  $region3: #{tile.112} parent=0 // pred_check_branch
    %3 = sbr.rel (0) target = $region5
  $region4: #{tile.112} parent=0 // pred_region
    _
  $region5: #{tile.112} parent=0 // pred_fallthru
    _
  %v4 = vld [vmem:[%s0] ss:$0 sm:$0xff]
  %5 = vst [vmem:[%s1] sm:$0xff] %v4

// kernel: tile.113
$region0: #{tile.113}
  %s0 = inlined_call_operand.vmem [shape: f32[8,32], index: 0, kind: input, shape index: {}]
  %s1 = inlined_call_operand.vmem [shape: f32[1,1,256], index: 1, kind: output, shape index: {}]
  $region1: #{tile.113} parent=0
    #allocation0 [shape = 'u8[8192]{0}', space=vmem, size = 0x2000, scoped, tag = 'scoped mem for output reshape']
    %s2 = smov 3
    %v3 = vld [vmem:[%s0] ss:$4 sm:%s2]
    %vm4 = vcmask 261120
    %5 = vst.msk [vmem:[#allocation0] ss:$8 sm:$0x3] %vm4, %v3
    %s6 = scalar_lea.vmem %s0, 3
    %s7 = smov 3
    %v8 = vld [vmem:[%s6] ss:$4 sm:%s7]
    %9 = vrot.lane.b32.xlu0 %v8, 96
    %v10 = vpop.permute.xlu0 %9
    %vm11 = vcmask 1048320
    %12 = vst.msk [vmem:[#allocation0] ss:$8 sm:$0x3] %vm11, %v10
    %s13 = scalar_lea.vmem %s0, 2
    %s14 = smov 3
    %v15 = vld [vmem:[%s13] ss:$4 sm:%s14]
    %16 = vrot.lane.b32.xlu0 %v15, 64
    %v17 = vpop.permute.xlu0 %16
    %vm18 = vcmask 785920
    %19 = vst.msk [vmem:[#allocation0] ss:$8 sm:$0x3] %vm18, %v17
    %s20 = scalar_lea.vmem %s0, 1
    %s21 = smov 3
    %v22 = vld [vmem:[%s20] ss:$4 sm:%s21]
    %23 = vrot.lane.b32.xlu0 %v22, 32
    %v24 = vpop.permute.xlu0 %23
    %vm25 = vcmask 523520
    %26 = vst.msk [vmem:[#allocation0] ss:$8 sm:$0x3] %vm25, %v24
    %s28 = sshll.u32 1, 1
    %s29 = ssub.s32 %s28, 1
    %v31 = vld [vmem:[#allocation0] sm:%s29]
    %s32 = sshll.u32 1, 1
    %s33 = ssub.s32 %s32, 1
    %34 = vst [vmem:[%s1] sm:%s33] %v31
    %s35 = scalar_lea.vmem [#allocation0], 8
    %v36 = vld [vmem:[%s35] sm:%s29]
    %s37 = sshll.u32 1, 1
    %s38 = ssub.s32 %s37, 1
    %s39 = scalar_lea.vmem %s1, 1
    %40 = vst [vmem:[%s39] sm:%s38] %v36

// kernel: _lambda_.22
$region0: #{_lambda_.22}
  #allocation0 [shape = 'u32[]', space=smem, size = 0x4, offset = 0x4, fixed_abs, tag = 'smem constant byte address 0x4 - core index']
  #allocation1 [shape = 'u32[144,128]{1,0:T(1,128)}', space=vmem, size = 0x12000, scoped, tag = 'internal scratch']
  %s0 = inlined_call_operand.vmem [shape: bf16[2,8,256], index: 0, kind: input, shape index: {}, may-alias: {0,3}]
  %s1 = inlined_call_operand.vmem [shape: f32[1,1,256], index: 1, kind: input, shape index: {}]
  %s2 = inlined_call_operand.vmem [shape: f32[1,1,256], index: 2, kind: input, shape index: {}]
  %s3 = inlined_call_operand.vmem [shape: bf16[2,8,256], index: 3, kind: output, shape index: {}, may-alias: {0,3}]
  %s4 = sld [smem:[#allocation0]]
  $region22: #{_lambda_.22} parent=0
    _
  %s6 = ssub.s32 1, %s4
  %s7 = scalar_select 0, %s6, %s4
  // Predicated region
  $region2: #{_lambda_.22} parent=0 // pred_check
    _
  $region3: #{_lambda_.22} parent=0 // pred_check_branch
    %9 = sbr.rel (0) target = $region5
  $region4: #{_lambda_.22} parent=0 // pred_region
    _
  $region5: #{_lambda_.22} parent=0 // pred_fallthru
    _
  // Predicated region
  $region6: #{_lambda_.22} parent=0 // pred_check
    _
  $region7: #{_lambda_.22} parent=0 // pred_check_branch
    %11 = sbr.rel (0) target = $region9
  $region8: #{_lambda_.22} parent=0 // pred_region
    _
  $region9: #{_lambda_.22} parent=0 // pred_fallthru
    _
  // Predicated region
  $region10: #{_lambda_.22} parent=0 // pred_check
    _
  $region11: #{_lambda_.22} parent=0 // pred_check_branch
    %13 = sbr.rel (0) target = $region13
  $region12: #{_lambda_.22} parent=0 // pred_region
    _
  $region13: #{_lambda_.22} parent=0 // pred_fallthru
    _
  %v14 = vld [vmem:[%s0] sm:$0xff]
  %v15 = vld [vmem:[%s0 + $0x8] sm:$0xff]
  %v16 = vunpack.c.l.bf16 %v14
  %v17 = vunpack.c.h.bf16 %v14
  %v18 = vunpack.c.l.bf16 %v15
  %v19 = vunpack.c.h.bf16 %v15
  %v20 = vld [vmem:[%s1] sm:$0x3]
  %v22 = vlaneseq
  %v23 = vshrl.u32 %v22, 7
  %v24 = vsub.s32 0, %v23
  %v25 = vrot.slane %v20, %v24
  %v26 = vlaneseq
  %v27 = vshrl.u32 %v26, 7
  %v28 = vsub.s32 1, %v27
  %v29 = vrot.slane %v20, %v28
  %v32 = vmul.f32 %v16, %v25
  %v33 = vmul.f32 %v17, %v29
  %v34 = vmul.f32 %v18, %v25
  %v35 = vmul.f32 %v19, %v29
  %v36 = vld [vmem:[%s2] sm:$0x3]
  %v38 = vlaneseq
  %v39 = vshrl.u32 %v38, 7
  %v40 = vsub.s32 0, %v39
  %v41 = vrot.slane %v36, %v40
  %v42 = vlaneseq
  %v43 = vshrl.u32 %v42, 7
  %v44 = vsub.s32 1, %v43
  %v45 = vrot.slane %v36, %v44
  %v48 = vadd.f32 %v32, %v41
  %v49 = vadd.f32 %v33, %v45
  %v50 = vadd.f32 %v34, %v41
  %v51 = vadd.f32 %v35, %v45
  %v52 = vmax.f32 %v48, 0.0
  %v53 = vmax.f32 %v49, 0.0
  %v54 = vmax.f32 %v50, 0.0
  %v55 = vmax.f32 %v51, 0.0
  %v56 = vpack.c.bf16 %v52, %v52
  %v57 = vpack.c.bf16 %v53, %v53
  %v58 = vpack.c.bf16 %v54, %v54
  %v59 = vpack.c.bf16 %v55, %v55
  %v64 = vunpack.c.l.b16 %v56
  %v65 = vunpack.c.l.b16 %v57
  %v66 = vunpack.c.l.b16 %v58
  %v67 = vunpack.c.l.b16 %v59
  %v68 = vpack.c.b16 %v65, %v64
  %v69 = vpack.c.b16 %v67, %v66
  %72 = vst [vmem:[%s3] sm:$0xff] %v68
  %73 = vst [vmem:[%s3 + $0x8] sm:$0xff] %v69
  // Predicated region
  $region14: #{_lambda_.22} parent=0 // pred_check
    _
  $region15: #{_lambda_.22} parent=0 // pred_check_branch
    %75 = sbr.rel (0) target = $region17
  $region16: #{_lambda_.22} parent=0 // pred_region
    _
  $region17: #{_lambda_.22} parent=0 // pred_fallthru
    _
  // Predicated region
  $region18: #{_lambda_.22} parent=0 // pred_check
    _
  $region19: #{_lambda_.22} parent=0 // pred_check_branch
    %77 = sbr.rel (0) target = $region21
  $region20: #{_lambda_.22} parent=0 // pred_region
    _
  $region21: #{_lambda_.22} parent=0 // pred_fallthru
    _

// kernel: _lambda_.17
$region0: #{_lambda_.17}
  #allocation0 [shape = 'u32[]', space=smem, size = 0x4, offset = 0x4, fixed_abs, tag = 'smem constant byte address 0x4 - core index']
  #allocation1 [shape = 'u32[144,128]{1,0:T(1,128)}', space=vmem, size = 0x12000, scoped, tag = 'internal scratch']
  %s0 = inlined_call_operand.vmem [shape: bf16[1,2,18,256], index: 0, kind: input, shape index: {}]
  %s1 = inlined_call_operand.vmem [shape: bf16[3,256,256], index: 1, kind: input, shape index: {}]
  %s2 = inlined_call_operand.vmem [shape: bf16[2,16,256], index: 2, kind: output, shape index: {0}]
  %s3 = inlined_call_operand.vmem [shape: f32[1,1,256], index: 3, kind: output, shape index: {1}]
  %s4 = inlined_call_operand.vmem [shape: f32[1,1,256], index: 4, kind: output, shape index: {2}]
  %5 = xla_tuple %s2, %s3, %s4
  %s6 = sld [smem:[#allocation0]]
  $region38: #{_lambda_.17} parent=0
    _
  %s8 = ssub.s32 1, %s6
  %s9 = scalar_select 0, %s8, %s6
  // Predicated region
  $region2: #{_lambda_.17} parent=0 // pred_check
    _
  $region3: #{_lambda_.17} parent=0 // pred_check_branch
    %11 = sbr.rel (0) target = $region5
  $region4: #{_lambda_.17} parent=0 // pred_region
    %s12 = sadd.s32 0, 0
    %s13 = smul.u32 2, %s12
    %p14 = scmp.lt.s32.totalorder %s13, 1
    %s15 = scalar_select %p14, %s13, 1
    %s16 = smul.addr %s15, 6
    %s17 = smul.addr %s16, 4
    %s18 = scalar_lea.vmem %s0, %s17
    %s19 = sadd.s32 0, 0
    %s20 = smul.u32 2, %s19
  $region5: #{_lambda_.17} parent=0 // pred_fallthru
    _
  // Predicated region
  $region6: #{_lambda_.17} parent=0 // pred_check
    _
  $region7: #{_lambda_.17} parent=0 // pred_check_branch
    %22 = sbr.rel (0) target = $region9
  $region8: #{_lambda_.17} parent=0 // pred_region
    _
  $region9: #{_lambda_.17} parent=0 // pred_fallthru
    _
  %s23 = sadd.s32 0, 0
  %s24 = smul.u32 2, %s23
  %p25 = scmp.lt.s32.totalorder %s24, 1
  %s26 = scalar_select %p25, %s24, 1
  %s27 = smul.addr %s26, 6
  %s28 = smul.addr %s27, 4
  %s29 = scalar_lea.vmem %s0, %s28
  %s30 = sadd.s32 0, 0
  %s31 = smul.u32 2, %s30
  %p32 = scmp.lt.s32.totalorder %s31, 1
  %s33 = scalar_select %p32, %s31, 1
  %s34 = smul.addr %s33, 4
  %s35 = smul.addr %s34, 4
  %s36 = scalar_lea.vmem %s2, %s35
  %s37 = sadd.s32 0, 0
  %s38 = smul.u32 2, %s37
  %p39 = scmp.lt.s32.totalorder %s38, 1
  %s40 = scalar_select %p39, %s38, 1
  %s41 = smul.addr %s40, 6
  %s42 = smul.addr %s41, 4
  %s43 = scalar_lea.vmem %s0, %s42
  %s44 = sadd.s32 0, 0
  %s45 = smul.u32 2, %s44
  %s46 = sadd.s32 0, 0
  %s47 = smul.u32 2, %s46
  %p48 = scmp.lt.s32.totalorder %s47, 1
  %s49 = scalar_select %p48, %s47, 1
  %s50 = smul.addr %s49, 4
  %s51 = smul.addr %s50, 4
  %s52 = scalar_lea.vmem %s2, %s51
  %s53 = sadd.s32 0, 0
  %s54 = smul.u32 2, %s53
  %p55 = scmp.eq.s32.totalorder 0, 0
  // Predicated region
  $region10: #{_lambda_.17} parent=0 // pred_check
    %p56 = pneg %p55
  $region11: #{_lambda_.17} parent=0 // pred_check_branch
    %58 = sbr.rel (%p56) target = $region13
  $region12: #{_lambda_.17} parent=0 // pred_region
    %v59 = vlaneseq
    %vm60 = vcmp.ge.s32.totalorder %v59, 0
    %vm61 = vcmp.lt.s32.totalorder %v59, 256
    %vm62 = vmand %vm60, %vm61
    %63 = vst.msk [vmem:[%s3] sm:$0x3] %vm62, 0.0
    %64 = vst.msk [vmem:[%s4] sm:$0x3] %vm62, 0.0
  $region13: #{_lambda_.17} parent=0 // pred_fallthru
    _
  %v65 = vld [vmem:[%s43] sm:$0xff]
  %v66 = vld [vmem:[%s43 + $0x8] sm:$0xff]
  %v67 = vld [vmem:[%s1] sm:$0xff]
  %v68 = vld [vmem:[%s1 + $0x8] sm:$0xff]
  %v69 = vld [vmem:[%s1 + $0x10] sm:$0xff]
  %v70 = vld [vmem:[%s1 + $0x18] sm:$0xff]
  %v71 = vld [vmem:[%s1 + $0x20] sm:$0xff]
  %v72 = vld [vmem:[%s1 + $0x28] sm:$0xff]
  %v73 = vld [vmem:[%s1 + $0x30] sm:$0xff]
  %v74 = vld [vmem:[%s1 + $0x38] sm:$0xff]
  %v75 = vld [vmem:[%s1 + $0x40] sm:$0xff]
  %v76 = vld [vmem:[%s1 + $0x48] sm:$0xff]
  %v77 = vld [vmem:[%s1 + $0x50] sm:$0xff]
  %v78 = vld [vmem:[%s1 + $0x58] sm:$0xff]
  %v79 = vld [vmem:[%s1 + $0x60] sm:$0xff]
  %v80 = vld [vmem:[%s1 + $0x68] sm:$0xff]
  %v81 = vld [vmem:[%s1 + $0x70] sm:$0xff]
  %v82 = vld [vmem:[%s1 + $0x78] sm:$0xff]
  %v83 = vld [vmem:[%s1 + $0x80] sm:$0xff]
  %v84 = vld [vmem:[%s1 + $0x88] sm:$0xff]
  %v85 = vld [vmem:[%s1 + $0x90] sm:$0xff]
  %v86 = vld [vmem:[%s1 + $0x98] sm:$0xff]
  %v87 = vld [vmem:[%s1 + $0xa0] sm:$0xff]
  %v88 = vld [vmem:[%s1 + $0xa8] sm:$0xff]
  %v89 = vld [vmem:[%s1 + $0xb0] sm:$0xff]
  %v90 = vld [vmem:[%s1 + $0xb8] sm:$0xff]
  %v91 = vld [vmem:[%s1 + $0xc0] sm:$0xff]
  %v92 = vld [vmem:[%s1 + $0xc8] sm:$0xff]
  %v93 = vld [vmem:[%s1 + $0xd0] sm:$0xff]
  %v94 = vld [vmem:[%s1 + $0xd8] sm:$0xff]
  %v95 = vld [vmem:[%s1 + $0xe0] sm:$0xff]
  %v96 = vld [vmem:[%s1 + $0xe8] sm:$0xff]
  %v97 = vld [vmem:[%s1 + $0xf0] sm:$0xff]
  %v98 = vld [vmem:[%s1 + $0xf8] sm:$0xff]
  %v99 = vld [vmem:[%s43 + $0x10] sm:$0x11]
  %s100 = scalar_lea.vmem %s1, 256
  %v101 = vld [vmem:[%s100] sm:$0xff]
  %v102 = vld [vmem:[%s100 + $0x8] sm:$0xff]
  %v103 = vld [vmem:[%s100 + $0x10] sm:$0xff]
  %v104 = vld [vmem:[%s100 + $0x18] sm:$0xff]
  %v105 = vld [vmem:[%s100 + $0x20] sm:$0xff]
  %v106 = vld [vmem:[%s100 + $0x28] sm:$0xff]
  %v107 = vld [vmem:[%s100 + $0x30] sm:$0xff]
  %v108 = vld [vmem:[%s100 + $0x38] sm:$0xff]
  %v109 = vld [vmem:[%s100 + $0x40] sm:$0xff]
  %v110 = vld [vmem:[%s100 + $0x48] sm:$0xff]
  %v111 = vld [vmem:[%s100 + $0x50] sm:$0xff]
  %v112 = vld [vmem:[%s100 + $0x58] sm:$0xff]
  %v113 = vld [vmem:[%s100 + $0x60] sm:$0xff]
  %v114 = vld [vmem:[%s100 + $0x68] sm:$0xff]
  %v115 = vld [vmem:[%s100 + $0x70] sm:$0xff]
  %v116 = vld [vmem:[%s100 + $0x78] sm:$0xff]
  %v117 = vld [vmem:[%s100 + $0x80] sm:$0xff]
  %v118 = vld [vmem:[%s100 + $0x88] sm:$0xff]
  %v119 = vld [vmem:[%s100 + $0x90] sm:$0xff]
  %v120 = vld [vmem:[%s100 + $0x98] sm:$0xff]
  %v121 = vld [vmem:[%s100 + $0xa0] sm:$0xff]
  %v122 = vld [vmem:[%s100 + $0xa8] sm:$0xff]
  %v123 = vld [vmem:[%s100 + $0xb0] sm:$0xff]
  %v124 = vld [vmem:[%s100 + $0xb8] sm:$0xff]
  %v125 = vld [vmem:[%s100 + $0xc0] sm:$0xff]
  %v126 = vld [vmem:[%s100 + $0xc8] sm:$0xff]
  %v127 = vld [vmem:[%s100 + $0xd0] sm:$0xff]
  %v128 = vld [vmem:[%s100 + $0xd8] sm:$0xff]
  %v129 = vld [vmem:[%s100 + $0xe0] sm:$0xff]
  %v130 = vld [vmem:[%s100 + $0xe8] sm:$0xff]
  %v131 = vld [vmem:[%s100 + $0xf0] sm:$0xff]
  %v132 = vld [vmem:[%s100 + $0xf8] sm:$0xff]
  %v136 = vunpack.c.l.b16 %v65
  %v137 = vunpack.c.h.b16 %v65
  %v138 = vunpack.c.l.b16 %v66
  %v139 = vunpack.c.h.b16 %v66
  %v140 = vunpack.c.l.b16 %v99
  %v141 = vunpack.c.h.b16 %v99
  %v142 = vpack.c.b16 %v138, %v136
  %v143 = vpack.c.b16 %v139, %v137
  %v144 = vpack.c.b16 %v140, %v140
  %v145 = vpack.c.b16 %v141, %v141
  %vm146 = vsmask.f32 7424
  %v148 = vshrl.u32 %v142, 16
  %v150 = vshll.u32 %v142, 16
  %v152 = vrot.slane %v150, 1
  %v153 = vor.u32 %v148, %v152
  %v155 = vshll.u32 %v144, 16
  %v157 = vrot.slane %v155, 1
  %v158 = vsel %vm146, %v153, %v157
  %v160 = vshrl.u32 %v143, 16
  %v162 = vshll.u32 %v143, 16
  %v164 = vrot.slane %v162, 1
  %v165 = vor.u32 %v160, %v164
  %v167 = vshll.u32 %v145, 16
  %v169 = vrot.slane %v167, 1
  %v170 = vsel %vm146, %v165, %v169
  %v205 = vunpack.c.l.b16 %v101
  %v206 = vunpack.c.h.b16 %v101
  %v207 = vunpack.c.l.b16 %v102
  %v208 = vunpack.c.h.b16 %v102
  %v209 = vunpack.c.l.b16 %v103
  %v210 = vunpack.c.h.b16 %v103
  %v211 = vunpack.c.l.b16 %v104
  %v212 = vunpack.c.h.b16 %v104
  %v213 = vunpack.c.l.b16 %v105
  %v214 = vunpack.c.h.b16 %v105
  %v215 = vunpack.c.l.b16 %v106
  %v216 = vunpack.c.h.b16 %v106
  %v217 = vunpack.c.l.b16 %v107
  %v218 = vunpack.c.h.b16 %v107
  %v219 = vunpack.c.l.b16 %v108
  %v220 = vunpack.c.h.b16 %v108
  %v221 = vunpack.c.l.b16 %v109
  %v222 = vunpack.c.h.b16 %v109
  %v223 = vunpack.c.l.b16 %v110
  %v224 = vunpack.c.h.b16 %v110
  %v225 = vunpack.c.l.b16 %v111
  %v226 = vunpack.c.h.b16 %v111
  %v227 = vunpack.c.l.b16 %v112
  %v228 = vunpack.c.h.b16 %v112
  %v229 = vunpack.c.l.b16 %v113
  %v230 = vunpack.c.h.b16 %v113
  %v231 = vunpack.c.l.b16 %v114
  %v232 = vunpack.c.h.b16 %v114
  %v233 = vunpack.c.l.b16 %v115
  %v234 = vunpack.c.h.b16 %v115
  %v235 = vunpack.c.l.b16 %v116
  %v236 = vunpack.c.h.b16 %v116
  %v237 = vunpack.c.l.b16 %v117
  %v238 = vunpack.c.h.b16 %v117
  %v239 = vunpack.c.l.b16 %v118
  %v240 = vunpack.c.h.b16 %v118
  %v241 = vunpack.c.l.b16 %v119
  %v242 = vunpack.c.h.b16 %v119
  %v243 = vunpack.c.l.b16 %v120
  %v244 = vunpack.c.h.b16 %v120
  %v245 = vunpack.c.l.b16 %v121
  %v246 = vunpack.c.h.b16 %v121
  %v247 = vunpack.c.l.b16 %v122
  %v248 = vunpack.c.h.b16 %v122
  %v249 = vunpack.c.l.b16 %v123
  %v250 = vunpack.c.h.b16 %v123
  %v251 = vunpack.c.l.b16 %v124
  %v252 = vunpack.c.h.b16 %v124
  %v253 = vunpack.c.l.b16 %v125
  %v254 = vunpack.c.h.b16 %v125
  %v255 = vunpack.c.l.b16 %v126
  %v256 = vunpack.c.h.b16 %v126
  %v257 = vunpack.c.l.b16 %v127
  %v258 = vunpack.c.h.b16 %v127
  %v259 = vunpack.c.l.b16 %v128
  %v260 = vunpack.c.h.b16 %v128
  %v261 = vunpack.c.l.b16 %v129
  %v262 = vunpack.c.h.b16 %v129
  %v263 = vunpack.c.l.b16 %v130
  %v264 = vunpack.c.h.b16 %v130
  %v265 = vunpack.c.l.b16 %v131
  %v266 = vunpack.c.h.b16 %v131
  %v267 = vunpack.c.l.b16 %v132
  %v268 = vunpack.c.h.b16 %v132
  %v269 = vpack.c.b16 %v207, %v205
  %v270 = vpack.c.b16 %v208, %v206
  %v271 = vpack.c.b16 %v211, %v209
  %v272 = vpack.c.b16 %v212, %v210
  %v273 = vpack.c.b16 %v215, %v213
  %v274 = vpack.c.b16 %v216, %v214
  %v275 = vpack.c.b16 %v219, %v217
  %v276 = vpack.c.b16 %v220, %v218
  %v277 = vpack.c.b16 %v223, %v221
  %v278 = vpack.c.b16 %v224, %v222
  %v279 = vpack.c.b16 %v227, %v225
  %v280 = vpack.c.b16 %v228, %v226
  %v281 = vpack.c.b16 %v231, %v229
  %v282 = vpack.c.b16 %v232, %v230
  %v283 = vpack.c.b16 %v235, %v233
  %v284 = vpack.c.b16 %v236, %v234
  %v285 = vpack.c.b16 %v239, %v237
  %v286 = vpack.c.b16 %v240, %v238
  %v287 = vpack.c.b16 %v243, %v241
  %v288 = vpack.c.b16 %v244, %v242
  %v289 = vpack.c.b16 %v247, %v245
  %v290 = vpack.c.b16 %v248, %v246
  %v291 = vpack.c.b16 %v251, %v249
  %v292 = vpack.c.b16 %v252, %v250
  %v293 = vpack.c.b16 %v255, %v253
  %v294 = vpack.c.b16 %v256, %v254
  %v295 = vpack.c.b16 %v259, %v257
  %v296 = vpack.c.b16 %v260, %v258
  %v297 = vpack.c.b16 %v263, %v261
  %v298 = vpack.c.b16 %v264, %v262
  %v299 = vpack.c.b16 %v267, %v265
  %v300 = vpack.c.b16 %v268, %v266
  %333 = vmatprep.subr.bf16.mxu0 %v284
  %334 = vmatpush1.bf16.msra.mxu0 %v283
  %335 = vmatprep.subr.bf16.mxu0 %v282
  %336 = vmatpush1.bf16.msra.mxu0 %v281
  %337 = vmatprep.subr.bf16.mxu0 %v280
  %338 = vmatpush1.bf16.msra.mxu0 %v279
  %339 = vmatprep.subr.bf16.mxu0 %v278
  %340 = vmatpush1.bf16.msra.mxu0 %v277
  %341 = vmatprep.subr.bf16.mxu0 %v276
  %342 = vmatpush1.bf16.msra.mxu0 %v275
  %343 = vmatprep.subr.bf16.mxu0 %v274
  %344 = vmatpush1.bf16.msra.mxu0 %v273
  %345 = vmatprep.subr.bf16.mxu0 %v272
  %346 = vmatpush1.bf16.msra.mxu0 %v271
  %347 = vmatprep.subr.bf16.mxu0 %v270
  %348 = vmatpush1.bf16.msra.mxu0 %v269
  %349 = vmatprep.subr.bf16.mxu0 %v300
  %350 = vmatpush2.bf16.msra.mxu0 %v299
  %351 = vmatprep.subr.bf16.mxu0 %v298
  %352 = vmatpush2.bf16.msra.mxu0 %v297
  %353 = vmatprep.subr.bf16.mxu0 %v296
  %354 = vmatpush2.bf16.msra.mxu0 %v295
  %355 = vmatprep.subr.bf16.mxu0 %v294
  %356 = vmatpush2.bf16.msra.mxu0 %v293
  %357 = vmatprep.subr.bf16.mxu0 %v292
  %358 = vmatpush2.bf16.msra.mxu0 %v291
  %359 = vmatprep.subr.bf16.mxu0 %v290
  %360 = vmatpush2.bf16.msra.mxu0 %v289
  %361 = vmatprep.subr.bf16.mxu0 %v288
  %362 = vmatpush2.bf16.msra.mxu0 %v287
  %363 = vmatprep.subr.bf16.mxu0 %v286
  %364 = vmatpush2.bf16.msra.mxu0 %v285
  %365 = vmatprep.mubr.bf16.mxu0 %v170
  %366 = vmatmul.mubr.bf16.gmra.mxu0 %v158
  %v367 = vpop.f32.mrf.mxu0
  %v368 = vadd.f32 0.0, %v367
  %v369 = vpop.f32.mrf.mxu0
  %v370 = vadd.f32 0.0, %v369
  %v371 = vpop.f32.mrf.mxu0
  %v372 = vadd.f32 0.0, %v371
  %v373 = vpop.f32.mrf.mxu0
  %v374 = vadd.f32 0.0, %v373
  %375 = vdwg.mxu0
  %v410 = vunpack.c.l.b16 %v67
  %v411 = vunpack.c.h.b16 %v67
  %v412 = vunpack.c.l.b16 %v68
  %v413 = vunpack.c.h.b16 %v68
  %v414 = vunpack.c.l.b16 %v69
  %v415 = vunpack.c.h.b16 %v69
  %v416 = vunpack.c.l.b16 %v70
  %v417 = vunpack.c.h.b16 %v70
  %v418 = vunpack.c.l.b16 %v71
  %v419 = vunpack.c.h.b16 %v71
  %v420 = vunpack.c.l.b16 %v72
  %v421 = vunpack.c.h.b16 %v72
  %v422 = vunpack.c.l.b16 %v73
  %v423 = vunpack.c.h.b16 %v73
  %v424 = vunpack.c.l.b16 %v74
  %v425 = vunpack.c.h.b16 %v74
  %v426 = vunpack.c.l.b16 %v75
  %v427 = vunpack.c.h.b16 %v75
  %v428 = vunpack.c.l.b16 %v76
  %v429 = vunpack.c.h.b16 %v76
  %v430 = vunpack.c.l.b16 %v77
  %v431 = vunpack.c.h.b16 %v77
  %v432 = vunpack.c.l.b16 %v78
  %v433 = vunpack.c.h.b16 %v78
  %v434 = vunpack.c.l.b16 %v79
  %v435 = vunpack.c.h.b16 %v79
  %v436 = vunpack.c.l.b16 %v80
  %v437 = vunpack.c.h.b16 %v80
  %v438 = vunpack.c.l.b16 %v81
  %v439 = vunpack.c.h.b16 %v81
  %v440 = vunpack.c.l.b16 %v82
  %v441 = vunpack.c.h.b16 %v82
  %v442 = vunpack.c.l.b16 %v83
  %v443 = vunpack.c.h.b16 %v83
  %v444 = vunpack.c.l.b16 %v84
  %v445 = vunpack.c.h.b16 %v84
  %v446 = vunpack.c.l.b16 %v85
  %v447 = vunpack.c.h.b16 %v85
  %v448 = vunpack.c.l.b16 %v86
  %v449 = vunpack.c.h.b16 %v86
  %v450 = vunpack.c.l.b16 %v87
  %v451 = vunpack.c.h.b16 %v87
  %v452 = vunpack.c.l.b16 %v88
  %v453 = vunpack.c.h.b16 %v88
  %v454 = vunpack.c.l.b16 %v89
  %v455 = vunpack.c.h.b16 %v89
  %v456 = vunpack.c.l.b16 %v90
  %v457 = vunpack.c.h.b16 %v90
  %v458 = vunpack.c.l.b16 %v91
  %v459 = vunpack.c.h.b16 %v91
  %v460 = vunpack.c.l.b16 %v92
  %v461 = vunpack.c.h.b16 %v92
  %v462 = vunpack.c.l.b16 %v93
  %v463 = vunpack.c.h.b16 %v93
  %v464 = vunpack.c.l.b16 %v94
  %v465 = vunpack.c.h.b16 %v94
  %v466 = vunpack.c.l.b16 %v95
  %v467 = vunpack.c.h.b16 %v95
  %v468 = vunpack.c.l.b16 %v96
  %v469 = vunpack.c.h.b16 %v96
  %v470 = vunpack.c.l.b16 %v97
  %v471 = vunpack.c.h.b16 %v97
  %v472 = vunpack.c.l.b16 %v98
  %v473 = vunpack.c.h.b16 %v98
  %v474 = vpack.c.b16 %v412, %v410
  %v475 = vpack.c.b16 %v413, %v411
  %v476 = vpack.c.b16 %v416, %v414
  %v477 = vpack.c.b16 %v417, %v415
  %v478 = vpack.c.b16 %v420, %v418
  %v479 = vpack.c.b16 %v421, %v419
  %v480 = vpack.c.b16 %v424, %v422
  %v481 = vpack.c.b16 %v425, %v423
  %v482 = vpack.c.b16 %v428, %v426
  %v483 = vpack.c.b16 %v429, %v427
  %v484 = vpack.c.b16 %v432, %v430
  %v485 = vpack.c.b16 %v433, %v431
  %v486 = vpack.c.b16 %v436, %v434
  %v487 = vpack.c.b16 %v437, %v435
  %v488 = vpack.c.b16 %v440, %v438
  %v489 = vpack.c.b16 %v441, %v439
  %v490 = vpack.c.b16 %v444, %v442
  %v491 = vpack.c.b16 %v445, %v443
  %v492 = vpack.c.b16 %v448, %v446
  %v493 = vpack.c.b16 %v449, %v447
  %v494 = vpack.c.b16 %v452, %v450
  %v495 = vpack.c.b16 %v453, %v451
  %v496 = vpack.c.b16 %v456, %v454
  %v497 = vpack.c.b16 %v457, %v455
  %v498 = vpack.c.b16 %v460, %v458
  %v499 = vpack.c.b16 %v461, %v459
  %v500 = vpack.c.b16 %v464, %v462
  %v501 = vpack.c.b16 %v465, %v463
  %v502 = vpack.c.b16 %v468, %v466
  %v503 = vpack.c.b16 %v469, %v467
  %v504 = vpack.c.b16 %v472, %v470
  %v505 = vpack.c.b16 %v473, %v471
  %538 = vmatprep.subr.bf16.mxu0 %v489
  %539 = vmatpush1.bf16.msra.mxu0 %v488
  %540 = vmatprep.subr.bf16.mxu0 %v487
  %541 = vmatpush1.bf16.msra.mxu0 %v486
  %542 = vmatprep.subr.bf16.mxu0 %v485
  %543 = vmatpush1.bf16.msra.mxu0 %v484
  %544 = vmatprep.subr.bf16.mxu0 %v483
  %545 = vmatpush1.bf16.msra.mxu0 %v482
  %546 = vmatprep.subr.bf16.mxu0 %v481
  %547 = vmatpush1.bf16.msra.mxu0 %v480
  %548 = vmatprep.subr.bf16.mxu0 %v479
  %549 = vmatpush1.bf16.msra.mxu0 %v478
  %550 = vmatprep.subr.bf16.mxu0 %v477
  %551 = vmatpush1.bf16.msra.mxu0 %v476
  %552 = vmatprep.subr.bf16.mxu0 %v475
  %553 = vmatpush1.bf16.msra.mxu0 %v474
  %554 = vmatprep.subr.bf16.mxu0 %v505
  %555 = vmatpush2.bf16.msra.mxu0 %v504
  %556 = vmatprep.subr.bf16.mxu0 %v503
  %557 = vmatpush2.bf16.msra.mxu0 %v502
  %558 = vmatprep.subr.bf16.mxu0 %v501
  %559 = vmatpush2.bf16.msra.mxu0 %v500
  %560 = vmatprep.subr.bf16.mxu0 %v499
  %561 = vmatpush2.bf16.msra.mxu0 %v498
  %562 = vmatprep.subr.bf16.mxu0 %v497
  %563 = vmatpush2.bf16.msra.mxu0 %v496
  %564 = vmatprep.subr.bf16.mxu0 %v495
  %565 = vmatpush2.bf16.msra.mxu0 %v494
  %566 = vmatprep.subr.bf16.mxu0 %v493
  %567 = vmatpush2.bf16.msra.mxu0 %v492
  %568 = vmatprep.subr.bf16.mxu0 %v491
  %569 = vmatpush2.bf16.msra.mxu0 %v490
  %570 = vmatprep.mubr.bf16.mxu0 %v143
  %571 = vmatmul.mubr.bf16.gmra.mxu0 %v142
  %v572 = vpop.f32.mrf.mxu0
  %v573 = vadd.f32 %v368, %v572
  %v574 = vpop.f32.mrf.mxu0
  %v575 = vadd.f32 %v370, %v574
  %v576 = vpop.f32.mrf.mxu0
  %v577 = vadd.f32 %v372, %v576
  %v578 = vpop.f32.mrf.mxu0
  %v579 = vadd.f32 %v374, %v578
  %580 = vdwg.mxu0
  %v581 = vld [vmem:[%s43] sm:$0xee]
  %s582 = scalar_lea.vmem %s1, 512
  %v583 = vld [vmem:[%s582] sm:$0xff]
  %v584 = vld [vmem:[%s582 + $0x8] sm:$0xff]
  %v585 = vld [vmem:[%s582 + $0x10] sm:$0xff]
  %v586 = vld [vmem:[%s582 + $0x18] sm:$0xff]
  %v587 = vld [vmem:[%s582 + $0x20] sm:$0xff]
  %v588 = vld [vmem:[%s582 + $0x28] sm:$0xff]
  %v589 = vld [vmem:[%s582 + $0x30] sm:$0xff]
  %v590 = vld [vmem:[%s582 + $0x38] sm:$0xff]
  %v591 = vld [vmem:[%s582 + $0x40] sm:$0xff]
  %v592 = vld [vmem:[%s582 + $0x48] sm:$0xff]
  %v593 = vld [vmem:[%s582 + $0x50] sm:$0xff]
  %v594 = vld [vmem:[%s582 + $0x58] sm:$0xff]
  %v595 = vld [vmem:[%s582 + $0x60] sm:$0xff]
  %v596 = vld [vmem:[%s582 + $0x68] sm:$0xff]
  %v597 = vld [vmem:[%s582 + $0x70] sm:$0xff]
  %v598 = vld [vmem:[%s582 + $0x78] sm:$0xff]
  %v599 = vld [vmem:[%s582 + $0x80] sm:$0xff]
  %v600 = vld [vmem:[%s582 + $0x88] sm:$0xff]
  %v601 = vld [vmem:[%s582 + $0x90] sm:$0xff]
  %v602 = vld [vmem:[%s582 + $0x98] sm:$0xff]
  %v603 = vld [vmem:[%s582 + $0xa0] sm:$0xff]
  %v604 = vld [vmem:[%s582 + $0xa8] sm:$0xff]
  %v605 = vld [vmem:[%s582 + $0xb0] sm:$0xff]
  %v606 = vld [vmem:[%s582 + $0xb8] sm:$0xff]
  %v607 = vld [vmem:[%s582 + $0xc0] sm:$0xff]
  %v608 = vld [vmem:[%s582 + $0xc8] sm:$0xff]
  %v609 = vld [vmem:[%s582 + $0xd0] sm:$0xff]
  %v610 = vld [vmem:[%s582 + $0xd8] sm:$0xff]
  %v611 = vld [vmem:[%s582 + $0xe0] sm:$0xff]
  %v612 = vld [vmem:[%s582 + $0xe8] sm:$0xff]
  %v613 = vld [vmem:[%s582 + $0xf0] sm:$0xff]
  %v614 = vld [vmem:[%s582 + $0xf8] sm:$0xff]
  %v616 = vunpack.c.l.b16 %v581
  %v617 = vunpack.c.h.b16 %v581
  %v618 = vpack.c.b16 %v138, %v616
  %v619 = vpack.c.b16 %v139, %v617
  %vm620 = vcmask 1046528
  %v621 = vrot.slane %v618, 1
  %v622 = vrot.slane %v144, 1
  %v623 = vsel %vm620, %v621, %v622
  %v624 = vrot.slane %v619, 1
  %v625 = vrot.slane %v145, 1
  %v626 = vsel %vm620, %v624, %v625
  %v661 = vunpack.c.l.b16 %v583
  %v662 = vunpack.c.h.b16 %v583
  %v663 = vunpack.c.l.b16 %v584
  %v664 = vunpack.c.h.b16 %v584
  %v665 = vunpack.c.l.b16 %v585
  %v666 = vunpack.c.h.b16 %v585
  %v667 = vunpack.c.l.b16 %v586
  %v668 = vunpack.c.h.b16 %v586
  %v669 = vunpack.c.l.b16 %v587
  %v670 = vunpack.c.h.b16 %v587
  %v671 = vunpack.c.l.b16 %v588
  %v672 = vunpack.c.h.b16 %v588
  %v673 = vunpack.c.l.b16 %v589
  %v674 = vunpack.c.h.b16 %v589
  %v675 = vunpack.c.l.b16 %v590
  %v676 = vunpack.c.h.b16 %v590
  %v677 = vunpack.c.l.b16 %v591
  %v678 = vunpack.c.h.b16 %v591
  %v679 = vunpack.c.l.b16 %v592
  %v680 = vunpack.c.h.b16 %v592
  %v681 = vunpack.c.l.b16 %v593
  %v682 = vunpack.c.h.b16 %v593
  %v683 = vunpack.c.l.b16 %v594
  %v684 = vunpack.c.h.b16 %v594
  %v685 = vunpack.c.l.b16 %v595
  %v686 = vunpack.c.h.b16 %v595
  %v687 = vunpack.c.l.b16 %v596
  %v688 = vunpack.c.h.b16 %v596
  %v689 = vunpack.c.l.b16 %v597
  %v690 = vunpack.c.h.b16 %v597
  %v691 = vunpack.c.l.b16 %v598
  %v692 = vunpack.c.h.b16 %v598
  %v693 = vunpack.c.l.b16 %v599
  %v694 = vunpack.c.h.b16 %v599
  %v695 = vunpack.c.l.b16 %v600
  %v696 = vunpack.c.h.b16 %v600
  %v697 = vunpack.c.l.b16 %v601
  %v698 = vunpack.c.h.b16 %v601
  %v699 = vunpack.c.l.b16 %v602
  %v700 = vunpack.c.h.b16 %v602
  %v701 = vunpack.c.l.b16 %v603
  %v702 = vunpack.c.h.b16 %v603
  %v703 = vunpack.c.l.b16 %v604
  %v704 = vunpack.c.h.b16 %v604
  %v705 = vunpack.c.l.b16 %v605
  %v706 = vunpack.c.h.b16 %v605
  %v707 = vunpack.c.l.b16 %v606
  %v708 = vunpack.c.h.b16 %v606
  %v709 = vunpack.c.l.b16 %v607
  %v710 = vunpack.c.h.b16 %v607
  %v711 = vunpack.c.l.b16 %v608
  %v712 = vunpack.c.h.b16 %v608
  %v713 = vunpack.c.l.b16 %v609
  %v714 = vunpack.c.h.b16 %v609
  %v715 = vunpack.c.l.b16 %v610
  %v716 = vunpack.c.h.b16 %v610
  %v717 = vunpack.c.l.b16 %v611
  %v718 = vunpack.c.h.b16 %v611
  %v719 = vunpack.c.l.b16 %v612
  %v720 = vunpack.c.h.b16 %v612
  %v721 = vunpack.c.l.b16 %v613
  %v722 = vunpack.c.h.b16 %v613
  %v723 = vunpack.c.l.b16 %v614
  %v724 = vunpack.c.h.b16 %v614
  %v725 = vpack.c.b16 %v663, %v661
  %v726 = vpack.c.b16 %v664, %v662
  %v727 = vpack.c.b16 %v667, %v665
  %v728 = vpack.c.b16 %v668, %v666
  %v729 = vpack.c.b16 %v671, %v669
  %v730 = vpack.c.b16 %v672, %v670
  %v731 = vpack.c.b16 %v675, %v673
  %v732 = vpack.c.b16 %v676, %v674
  %v733 = vpack.c.b16 %v679, %v677
  %v734 = vpack.c.b16 %v680, %v678
  %v735 = vpack.c.b16 %v683, %v681
  %v736 = vpack.c.b16 %v684, %v682
  %v737 = vpack.c.b16 %v687, %v685
  %v738 = vpack.c.b16 %v688, %v686
  %v739 = vpack.c.b16 %v691, %v689
  %v740 = vpack.c.b16 %v692, %v690
  %v741 = vpack.c.b16 %v695, %v693
  %v742 = vpack.c.b16 %v696, %v694
  %v743 = vpack.c.b16 %v699, %v697
  %v744 = vpack.c.b16 %v700, %v698
  %v745 = vpack.c.b16 %v703, %v701
  %v746 = vpack.c.b16 %v704, %v702
  %v747 = vpack.c.b16 %v707, %v705
  %v748 = vpack.c.b16 %v708, %v706
  %v749 = vpack.c.b16 %v711, %v709
  %v750 = vpack.c.b16 %v712, %v710
  %v751 = vpack.c.b16 %v715, %v713
  %v752 = vpack.c.b16 %v716, %v714
  %v753 = vpack.c.b16 %v719, %v717
  %v754 = vpack.c.b16 %v720, %v718
  %v755 = vpack.c.b16 %v723, %v721
  %v756 = vpack.c.b16 %v724, %v722
  %789 = vmatprep.subr.bf16.mxu0 %v740
  %790 = vmatpush1.bf16.msra.mxu0 %v739
  %791 = vmatprep.subr.bf16.mxu0 %v738
  %792 = vmatpush1.bf16.msra.mxu0 %v737
  %793 = vmatprep.subr.bf16.mxu0 %v736
  %794 = vmatpush1.bf16.msra.mxu0 %v735
  %795 = vmatprep.subr.bf16.mxu0 %v734
  %796 = vmatpush1.bf16.msra.mxu0 %v733
  %797 = vmatprep.subr.bf16.mxu0 %v732
  %798 = vmatpush1.bf16.msra.mxu0 %v731
  %799 = vmatprep.subr.bf16.mxu0 %v730
  %800 = vmatpush1.bf16.msra.mxu0 %v729
  %801 = vmatprep.subr.bf16.mxu0 %v728
  %802 = vmatpush1.bf16.msra.mxu0 %v727
  %803 = vmatprep.subr.bf16.mxu0 %v726
  %804 = vmatpush1.bf16.msra.mxu0 %v725
  %805 = vmatprep.subr.bf16.mxu0 %v756
  %806 = vmatpush2.bf16.msra.mxu0 %v755
  %807 = vmatprep.subr.bf16.mxu0 %v754
  %808 = vmatpush2.bf16.msra.mxu0 %v753
  %809 = vmatprep.subr.bf16.mxu0 %v752
  %810 = vmatpush2.bf16.msra.mxu0 %v751
  %811 = vmatprep.subr.bf16.mxu0 %v750
  %812 = vmatpush2.bf16.msra.mxu0 %v749
  %813 = vmatprep.subr.bf16.mxu0 %v748
  %814 = vmatpush2.bf16.msra.mxu0 %v747
  %815 = vmatprep.subr.bf16.mxu0 %v746
  %816 = vmatpush2.bf16.msra.mxu0 %v745
  %817 = vmatprep.subr.bf16.mxu0 %v744
  %818 = vmatpush2.bf16.msra.mxu0 %v743
  %819 = vmatprep.subr.bf16.mxu0 %v742
  %820 = vmatpush2.bf16.msra.mxu0 %v741
  %821 = vmatprep.mubr.bf16.mxu0 %v626
  %822 = vmatmul.mubr.bf16.gmra.mxu0 %v623
  %v823 = vpop.f32.mrf.mxu0
  %v824 = vadd.f32 0.0, %v823
  %v825 = vpop.f32.mrf.mxu0
  %v826 = vadd.f32 0.0, %v825
  %v827 = vpop.f32.mrf.mxu0
  %v828 = vadd.f32 0.0, %v827
  %v829 = vpop.f32.mrf.mxu0
  %v830 = vadd.f32 0.0, %v829
  %831 = vdwg.mxu0
  %v832 = vadd.f32 %v573, %v824
  %v833 = vadd.f32 %v575, %v826
  %v834 = vadd.f32 %v577, %v828
  %v835 = vadd.f32 %v579, %v830
  %v836 = vpack.c.bf16 %v834, %v832
  %v837 = vpack.c.bf16 %v835, %v833
  %v840 = vunpack.c.l.b16 %v836
  %v841 = vunpack.c.l.b16 %v837
  %v842 = vunpack.c.h.b16 %v836
  %v843 = vunpack.c.h.b16 %v837
  %v844 = vpack.c.b16 %v841, %v840
  %v845 = vpack.c.b16 %v843, %v842
  %848 = vst [vmem:[%s52] sm:$0xff] %v844
  %849 = vst [vmem:[%s52 + $0x8] sm:$0xff] %v845
  %v850 = vadd.f32 %v832, %v834
  %v851 = vrot.slane %v850, 4
  %v852 = vadd.f32 %v850, %v851
  %v853 = vrot.slane %v852, 2
  %v854 = vadd.f32 %v852, %v853
  %v855 = vrot.slane %v854, 1
  %v856 = vadd.f32 %v854, %v855
  %v857 = vadd.f32 %v833, %v835
  %v858 = vrot.slane %v857, 4
  %v859 = vadd.f32 %v857, %v858
  %v860 = vrot.slane %v859, 2
  %v861 = vadd.f32 %v859, %v860
  %v862 = vrot.slane %v861, 1
  %v863 = vadd.f32 %v861, %v862
  %v864 = vadd.f32 %v856, 0.0
  %v865 = vadd.f32 %v863, 0.0
  %v866 = vmul.f32 %v832, %v832
  %v867 = vmul.f32 %v833, %v833
  %v868 = vmul.f32 %v834, %v834
  %v869 = vmul.f32 %v835, %v835
  %v870 = vadd.f32 %v866, %v868
  %v871 = vrot.slane %v870, 4
  %v872 = vadd.f32 %v870, %v871
  %v873 = vrot.slane %v872, 2
  %v874 = vadd.f32 %v872, %v873
  %v875 = vrot.slane %v874, 1
  %v876 = vadd.f32 %v874, %v875
  %v877 = vadd.f32 %v867, %v869
  %v878 = vrot.slane %v877, 4
  %v879 = vadd.f32 %v877, %v878
  %v880 = vrot.slane %v879, 2
  %v881 = vadd.f32 %v879, %v880
  %v882 = vrot.slane %v881, 1
  %v883 = vadd.f32 %v881, %v882
  %v884 = vadd.f32 %v876, 0.0
  %v885 = vadd.f32 %v883, 0.0
  %s886 = scalar_lea.vmem %s43, 24
  %v887 = vld [vmem:[%s886] sm:$0xff]
  %v888 = vld [vmem:[%s886 + $0x8] sm:$0xff]
  %v889 = vld [vmem:[%s1] sm:$0xff]
  %v890 = vld [vmem:[%s1 + $0x8] sm:$0xff]
  %v891 = vld [vmem:[%s1 + $0x10] sm:$0xff]
  %v892 = vld [vmem:[%s1 + $0x18] sm:$0xff]
  %v893 = vld [vmem:[%s1 + $0x20] sm:$0xff]
  %v894 = vld [vmem:[%s1 + $0x28] sm:$0xff]
  %v895 = vld [vmem:[%s1 + $0x30] sm:$0xff]
  %v896 = vld [vmem:[%s1 + $0x38] sm:$0xff]
  %v897 = vld [vmem:[%s1 + $0x40] sm:$0xff]
  %v898 = vld [vmem:[%s1 + $0x48] sm:$0xff]
  %v899 = vld [vmem:[%s1 + $0x50] sm:$0xff]
  %v900 = vld [vmem:[%s1 + $0x58] sm:$0xff]
  %v901 = vld [vmem:[%s1 + $0x60] sm:$0xff]
  %v902 = vld [vmem:[%s1 + $0x68] sm:$0xff]
  %v903 = vld [vmem:[%s1 + $0x70] sm:$0xff]
  %v904 = vld [vmem:[%s1 + $0x78] sm:$0xff]
  %v905 = vld [vmem:[%s1 + $0x80] sm:$0xff]
  %v906 = vld [vmem:[%s1 + $0x88] sm:$0xff]
  %v907 = vld [vmem:[%s1 + $0x90] sm:$0xff]
  %v908 = vld [vmem:[%s1 + $0x98] sm:$0xff]
  %v909 = vld [vmem:[%s1 + $0xa0] sm:$0xff]
  %v910 = vld [vmem:[%s1 + $0xa8] sm:$0xff]
  %v911 = vld [vmem:[%s1 + $0xb0] sm:$0xff]
  %v912 = vld [vmem:[%s1 + $0xb8] sm:$0xff]
  %v913 = vld [vmem:[%s1 + $0xc0] sm:$0xff]
  %v914 = vld [vmem:[%s1 + $0xc8] sm:$0xff]
  %v915 = vld [vmem:[%s1 + $0xd0] sm:$0xff]
  %v916 = vld [vmem:[%s1 + $0xd8] sm:$0xff]
  %v917 = vld [vmem:[%s1 + $0xe0] sm:$0xff]
  %v918 = vld [vmem:[%s1 + $0xe8] sm:$0xff]
  %v919 = vld [vmem:[%s1 + $0xf0] sm:$0xff]
  %v920 = vld [vmem:[%s1 + $0xf8] sm:$0xff]
  %v921 = vld [vmem:[%s886 + $0x10] sm:$0x11]
  %v922 = vld [vmem:[%s100] sm:$0xff]
  %v923 = vld [vmem:[%s100 + $0x8] sm:$0xff]
  %v924 = vld [vmem:[%s100 + $0x10] sm:$0xff]
  %v925 = vld [vmem:[%s100 + $0x18] sm:$0xff]
  %v926 = vld [vmem:[%s100 + $0x20] sm:$0xff]
  %v927 = vld [vmem:[%s100 + $0x28] sm:$0xff]
  %v928 = vld [vmem:[%s100 + $0x30] sm:$0xff]
  %v929 = vld [vmem:[%s100 + $0x38] sm:$0xff]
  %v930 = vld [vmem:[%s100 + $0x40] sm:$0xff]
  %v931 = vld [vmem:[%s100 + $0x48] sm:$0xff]
  %v932 = vld [vmem:[%s100 + $0x50] sm:$0xff]
  %v933 = vld [vmem:[%s100 + $0x58] sm:$0xff]
  %v934 = vld [vmem:[%s100 + $0x60] sm:$0xff]
  %v935 = vld [vmem:[%s100 + $0x68] sm:$0xff]
  %v936 = vld [vmem:[%s100 + $0x70] sm:$0xff]
  %v937 = vld [vmem:[%s100 + $0x78] sm:$0xff]
  %v938 = vld [vmem:[%s100 + $0x80] sm:$0xff]
  %v939 = vld [vmem:[%s100 + $0x88] sm:$0xff]
  %v940 = vld [vmem:[%s100 + $0x90] sm:$0xff]
  %v941 = vld [vmem:[%s100 + $0x98] sm:$0xff]
  %v942 = vld [vmem:[%s100 + $0xa0] sm:$0xff]
  %v943 = vld [vmem:[%s100 + $0xa8] sm:$0xff]
  %v944 = vld [vmem:[%s100 + $0xb0] sm:$0xff]
  %v945 = vld [vmem:[%s100 + $0xb8] sm:$0xff]
  %v946 = vld [vmem:[%s100 + $0xc0] sm:$0xff]
  %v947 = vld [vmem:[%s100 + $0xc8] sm:$0xff]
  %v948 = vld [vmem:[%s100 + $0xd0] sm:$0xff]
  %v949 = vld [vmem:[%s100 + $0xd8] sm:$0xff]
  %v950 = vld [vmem:[%s100 + $0xe0] sm:$0xff]
  %v951 = vld [vmem:[%s100 + $0xe8] sm:$0xff]
  %v952 = vld [vmem:[%s100 + $0xf0] sm:$0xff]
  %v953 = vld [vmem:[%s100 + $0xf8] sm:$0xff]
  %v957 = vunpack.c.l.b16 %v887
  %v958 = vunpack.c.h.b16 %v887
  %v959 = vunpack.c.l.b16 %v888
  %v960 = vunpack.c.h.b16 %v888
  %v961 = vunpack.c.l.b16 %v921
  %v962 = vunpack.c.h.b16 %v921
  %v963 = vpack.c.b16 %v959, %v957
  %v964 = vpack.c.b16 %v960, %v958
  %v965 = vpack.c.b16 %v961, %v961
  %v966 = vpack.c.b16 %v962, %v962
  %v968 = vshrl.u32 %v963, 16
  %v970 = vshll.u32 %v963, 16
  %v972 = vrot.slane %v970, 1
  %v973 = vor.u32 %v968, %v972
  %v975 = vshll.u32 %v965, 16
  %v977 = vrot.slane %v975, 1
  %v978 = vsel %vm146, %v973, %v977
  %v980 = vshrl.u32 %v964, 16
  %v982 = vshll.u32 %v964, 16
  %v984 = vrot.slane %v982, 1
  %v985 = vor.u32 %v980, %v984
  %v987 = vshll.u32 %v966, 16
  %v989 = vrot.slane %v987, 1
  %v990 = vsel %vm146, %v985, %v989
  %v1025 = vunpack.c.l.b16 %v922
  %v1026 = vunpack.c.h.b16 %v922
  %v1027 = vunpack.c.l.b16 %v923
  %v1028 = vunpack.c.h.b16 %v923
  %v1029 = vunpack.c.l.b16 %v924
  %v1030 = vunpack.c.h.b16 %v924
  %v1031 = vunpack.c.l.b16 %v925
  %v1032 = vunpack.c.h.b16 %v925
  %v1033 = vunpack.c.l.b16 %v926
  %v1034 = vunpack.c.h.b16 %v926
  %v1035 = vunpack.c.l.b16 %v927
  %v1036 = vunpack.c.h.b16 %v927
  %v1037 = vunpack.c.l.b16 %v928
  %v1038 = vunpack.c.h.b16 %v928
  %v1039 = vunpack.c.l.b16 %v929
  %v1040 = vunpack.c.h.b16 %v929
  %v1041 = vunpack.c.l.b16 %v930
  %v1042 = vunpack.c.h.b16 %v930
  %v1043 = vunpack.c.l.b16 %v931
  %v1044 = vunpack.c.h.b16 %v931
  %v1045 = vunpack.c.l.b16 %v932
  %v1046 = vunpack.c.h.b16 %v932
  %v1047 = vunpack.c.l.b16 %v933
  %v1048 = vunpack.c.h.b16 %v933
  %v1049 = vunpack.c.l.b16 %v934
  %v1050 = vunpack.c.h.b16 %v934
  %v1051 = vunpack.c.l.b16 %v935
  %v1052 = vunpack.c.h.b16 %v935
  %v1053 = vunpack.c.l.b16 %v936
  %v1054 = vunpack.c.h.b16 %v936
  %v1055 = vunpack.c.l.b16 %v937
  %v1056 = vunpack.c.h.b16 %v937
  %v1057 = vunpack.c.l.b16 %v938
  %v1058 = vunpack.c.h.b16 %v938
  %v1059 = vunpack.c.l.b16 %v939
  %v1060 = vunpack.c.h.b16 %v939
  %v1061 = vunpack.c.l.b16 %v940
  %v1062 = vunpack.c.h.b16 %v940
  %v1063 = vunpack.c.l.b16 %v941
  %v1064 = vunpack.c.h.b16 %v941
  %v1065 = vunpack.c.l.b16 %v942
  %v1066 = vunpack.c.h.b16 %v942
  %v1067 = vunpack.c.l.b16 %v943
  %v1068 = vunpack.c.h.b16 %v943
  %v1069 = vunpack.c.l.b16 %v944
  %v1070 = vunpack.c.h.b16 %v944
  %v1071 = vunpack.c.l.b16 %v945
  %v1072 = vunpack.c.h.b16 %v945
  %v1073 = vunpack.c.l.b16 %v946
  %v1074 = vunpack.c.h.b16 %v946
  %v1075 = vunpack.c.l.b16 %v947
  %v1076 = vunpack.c.h.b16 %v947
  %v1077 = vunpack.c.l.b16 %v948
  %v1078 = vunpack.c.h.b16 %v948
  %v1079 = vunpack.c.l.b16 %v949
  %v1080 = vunpack.c.h.b16 %v949
  %v1081 = vunpack.c.l.b16 %v950
  %v1082 = vunpack.c.h.b16 %v950
  %v1083 = vunpack.c.l.b16 %v951
  %v1084 = vunpack.c.h.b16 %v951
  %v1085 = vunpack.c.l.b16 %v952
  %v1086 = vunpack.c.h.b16 %v952
  %v1087 = vunpack.c.l.b16 %v953
  %v1088 = vunpack.c.h.b16 %v953
  %v1089 = vpack.c.b16 %v1027, %v1025
  %v1090 = vpack.c.b16 %v1028, %v1026
  %v1091 = vpack.c.b16 %v1031, %v1029
  %v1092 = vpack.c.b16 %v1032, %v1030
  %v1093 = vpack.c.b16 %v1035, %v1033
  %v1094 = vpack.c.b16 %v1036, %v1034
  %v1095 = vpack.c.b16 %v1039, %v1037
  %v1096 = vpack.c.b16 %v1040, %v1038
  %v1097 = vpack.c.b16 %v1043, %v1041
  %v1098 = vpack.c.b16 %v1044, %v1042
  %v1099 = vpack.c.b16 %v1047, %v1045
  %v1100 = vpack.c.b16 %v1048, %v1046
  %v1101 = vpack.c.b16 %v1051, %v1049
  %v1102 = vpack.c.b16 %v1052, %v1050
  %v1103 = vpack.c.b16 %v1055, %v1053
  %v1104 = vpack.c.b16 %v1056, %v1054
  %v1105 = vpack.c.b16 %v1059, %v1057
  %v1106 = vpack.c.b16 %v1060, %v1058
  %v1107 = vpack.c.b16 %v1063, %v1061
  %v1108 = vpack.c.b16 %v1064, %v1062
  %v1109 = vpack.c.b16 %v1067, %v1065
  %v1110 = vpack.c.b16 %v1068, %v1066
  %v1111 = vpack.c.b16 %v1071, %v1069
  %v1112 = vpack.c.b16 %v1072, %v1070
  %v1113 = vpack.c.b16 %v1075, %v1073
  %v1114 = vpack.c.b16 %v1076, %v1074
  %v1115 = vpack.c.b16 %v1079, %v1077
  %v1116 = vpack.c.b16 %v1080, %v1078
  %v1117 = vpack.c.b16 %v1083, %v1081
  %v1118 = vpack.c.b16 %v1084, %v1082
  %v1119 = vpack.c.b16 %v1087, %v1085
  %v1120 = vpack.c.b16 %v1088, %v1086
  %1153 = vmatprep.subr.bf16.mxu0 %v1104
  %1154 = vmatpush1.bf16.msra.mxu0 %v1103
  %1155 = vmatprep.subr.bf16.mxu0 %v1102
  %1156 = vmatpush1.bf16.msra.mxu0 %v1101
  %1157 = vmatprep.subr.bf16.mxu0 %v1100
  %1158 = vmatpush1.bf16.msra.mxu0 %v1099
  %1159 = vmatprep.subr.bf16.mxu0 %v1098
  %1160 = vmatpush1.bf16.msra.mxu0 %v1097
  %1161 = vmatprep.subr.bf16.mxu0 %v1096
  %1162 = vmatpush1.bf16.msra.mxu0 %v1095
  %1163 = vmatprep.subr.bf16.mxu0 %v1094
  %1164 = vmatpush1.bf16.msra.mxu0 %v1093
  %1165 = vmatprep.subr.bf16.mxu0 %v1092
  %1166 = vmatpush1.bf16.msra.mxu0 %v1091
  %1167 = vmatprep.subr.bf16.mxu0 %v1090
  %1168 = vmatpush1.bf16.msra.mxu0 %v1089
  %1169 = vmatprep.subr.bf16.mxu0 %v1120
  %1170 = vmatpush2.bf16.msra.mxu0 %v1119
  %1171 = vmatprep.subr.bf16.mxu0 %v1118
  %1172 = vmatpush2.bf16.msra.mxu0 %v1117
  %1173 = vmatprep.subr.bf16.mxu0 %v1116
  %1174 = vmatpush2.bf16.msra.mxu0 %v1115
  %1175 = vmatprep.subr.bf16.mxu0 %v1114
  %1176 = vmatpush2.bf16.msra.mxu0 %v1113
  %1177 = vmatprep.subr.bf16.mxu0 %v1112
  %1178 = vmatpush2.bf16.msra.mxu0 %v1111
  %1179 = vmatprep.subr.bf16.mxu0 %v1110
  %1180 = vmatpush2.bf16.msra.mxu0 %v1109
  %1181 = vmatprep.subr.bf16.mxu0 %v1108
  %1182 = vmatpush2.bf16.msra.mxu0 %v1107
  %1183 = vmatprep.subr.bf16.mxu0 %v1106
  %1184 = vmatpush2.bf16.msra.mxu0 %v1105
  %1185 = vmatprep.mubr.bf16.mxu0 %v990
  %1186 = vmatmul.mubr.bf16.gmra.mxu0 %v978
  %v1187 = vpop.f32.mrf.mxu0
  %v1188 = vadd.f32 0.0, %v1187
  %v1189 = vpop.f32.mrf.mxu0
  %v1190 = vadd.f32 0.0, %v1189
  %v1191 = vpop.f32.mrf.mxu0
  %v1192 = vadd.f32 0.0, %v1191
  %v1193 = vpop.f32.mrf.mxu0
  %v1194 = vadd.f32 0.0, %v1193
  %1195 = vdwg.mxu0
  %v1230 = vunpack.c.l.b16 %v889
  %v1231 = vunpack.c.h.b16 %v889
  %v1232 = vunpack.c.l.b16 %v890
  %v1233 = vunpack.c.h.b16 %v890
  %v1234 = vunpack.c.l.b16 %v891
  %v1235 = vunpack.c.h.b16 %v891
  %v1236 = vunpack.c.l.b16 %v892
  %v1237 = vunpack.c.h.b16 %v892
  %v1238 = vunpack.c.l.b16 %v893
  %v1239 = vunpack.c.h.b16 %v893
  %v1240 = vunpack.c.l.b16 %v894
  %v1241 = vunpack.c.h.b16 %v894
  %v1242 = vunpack.c.l.b16 %v895
  %v1243 = vunpack.c.h.b16 %v895
  %v1244 = vunpack.c.l.b16 %v896
  %v1245 = vunpack.c.h.b16 %v896
  %v1246 = vunpack.c.l.b16 %v897
  %v1247 = vunpack.c.h.b16 %v897
  %v1248 = vunpack.c.l.b16 %v898
  %v1249 = vunpack.c.h.b16 %v898
  %v1250 = vunpack.c.l.b16 %v899
  %v1251 = vunpack.c.h.b16 %v899
  %v1252 = vunpack.c.l.b16 %v900
  %v1253 = vunpack.c.h.b16 %v900
  %v1254 = vunpack.c.l.b16 %v901
  %v1255 = vunpack.c.h.b16 %v901
  %v1256 = vunpack.c.l.b16 %v902
  %v1257 = vunpack.c.h.b16 %v902
  %v1258 = vunpack.c.l.b16 %v903
  %v1259 = vunpack.c.h.b16 %v903
  %v1260 = vunpack.c.l.b16 %v904
  %v1261 = vunpack.c.h.b16 %v904
  %v1262 = vunpack.c.l.b16 %v905
  %v1263 = vunpack.c.h.b16 %v905
  %v1264 = vunpack.c.l.b16 %v906
  %v1265 = vunpack.c.h.b16 %v906
  %v1266 = vunpack.c.l.b16 %v907
  %v1267 = vunpack.c.h.b16 %v907
  %v1268 = vunpack.c.l.b16 %v908
  %v1269 = vunpack.c.h.b16 %v908
  %v1270 = vunpack.c.l.b16 %v909
  %v1271 = vunpack.c.h.b16 %v909
  %v1272 = vunpack.c.l.b16 %v910
  %v1273 = vunpack.c.h.b16 %v910
  %v1274 = vunpack.c.l.b16 %v911
  %v1275 = vunpack.c.h.b16 %v911
  %v1276 = vunpack.c.l.b16 %v912
  %v1277 = vunpack.c.h.b16 %v912
  %v1278 = vunpack.c.l.b16 %v913
  %v1279 = vunpack.c.h.b16 %v913
  %v1280 = vunpack.c.l.b16 %v914
  %v1281 = vunpack.c.h.b16 %v914
  %v1282 = vunpack.c.l.b16 %v915
  %v1283 = vunpack.c.h.b16 %v915
  %v1284 = vunpack.c.l.b16 %v916
  %v1285 = vunpack.c.h.b16 %v916
  %v1286 = vunpack.c.l.b16 %v917
  %v1287 = vunpack.c.h.b16 %v917
  %v1288 = vunpack.c.l.b16 %v918
  %v1289 = vunpack.c.h.b16 %v918
  %v1290 = vunpack.c.l.b16 %v919
  %v1291 = vunpack.c.h.b16 %v919
  %v1292 = vunpack.c.l.b16 %v920
  %v1293 = vunpack.c.h.b16 %v920
  %v1294 = vpack.c.b16 %v1232, %v1230
  %v1295 = vpack.c.b16 %v1233, %v1231
  %v1296 = vpack.c.b16 %v1236, %v1234
  %v1297 = vpack.c.b16 %v1237, %v1235
  %v1298 = vpack.c.b16 %v1240, %v1238
  %v1299 = vpack.c.b16 %v1241, %v1239
  %v1300 = vpack.c.b16 %v1244, %v1242
  %v1301 = vpack.c.b16 %v1245, %v1243
  %v1302 = vpack.c.b16 %v1248, %v1246
  %v1303 = vpack.c.b16 %v1249, %v1247
  %v1304 = vpack.c.b16 %v1252, %v1250
  %v1305 = vpack.c.b16 %v1253, %v1251
  %v1306 = vpack.c.b16 %v1256, %v1254
  %v1307 = vpack.c.b16 %v1257, %v1255
  %v1308 = vpack.c.b16 %v1260, %v1258
  %v1309 = vpack.c.b16 %v1261, %v1259
  %v1310 = vpack.c.b16 %v1264, %v1262
  %v1311 = vpack.c.b16 %v1265, %v1263
  %v1312 = vpack.c.b16 %v1268, %v1266
  %v1313 = vpack.c.b16 %v1269, %v1267
  %v1314 = vpack.c.b16 %v1272, %v1270
  %v1315 = vpack.c.b16 %v1273, %v1271
  %v1316 = vpack.c.b16 %v1276, %v1274
  %v1317 = vpack.c.b16 %v1277, %v1275
  %v1318 = vpack.c.b16 %v1280, %v1278
  %v1319 = vpack.c.b16 %v1281, %v1279
  %v1320 = vpack.c.b16 %v1284, %v1282
  %v1321 = vpack.c.b16 %v1285, %v1283
  %v1322 = vpack.c.b16 %v1288, %v1286
  %v1323 = vpack.c.b16 %v1289, %v1287
  %v1324 = vpack.c.b16 %v1292, %v1290
  %v1325 = vpack.c.b16 %v1293, %v1291
  %1358 = vmatprep.subr.bf16.mxu0 %v1309
  %1359 = vmatpush1.bf16.msra.mxu0 %v1308
  %1360 = vmatprep.subr.bf16.mxu0 %v1307
  %1361 = vmatpush1.bf16.msra.mxu0 %v1306
  %1362 = vmatprep.subr.bf16.mxu0 %v1305
  %1363 = vmatpush1.bf16.msra.mxu0 %v1304
  %1364 = vmatprep.subr.bf16.mxu0 %v1303
  %1365 = vmatpush1.bf16.msra.mxu0 %v1302
  %1366 = vmatprep.subr.bf16.mxu0 %v1301
  %1367 = vmatpush1.bf16.msra.mxu0 %v1300
  %1368 = vmatprep.subr.bf16.mxu0 %v1299
  %1369 = vmatpush1.bf16.msra.mxu0 %v1298
  %1370 = vmatprep.subr.bf16.mxu0 %v1297
  %1371 = vmatpush1.bf16.msra.mxu0 %v1296
  %1372 = vmatprep.subr.bf16.mxu0 %v1295
  %1373 = vmatpush1.bf16.msra.mxu0 %v1294
  %1374 = vmatprep.subr.bf16.mxu0 %v1325
  %1375 = vmatpush2.bf16.msra.mxu0 %v1324
  %1376 = vmatprep.subr.bf16.mxu0 %v1323
  %1377 = vmatpush2.bf16.msra.mxu0 %v1322
  %1378 = vmatprep.subr.bf16.mxu0 %v1321
  %1379 = vmatpush2.bf16.msra.mxu0 %v1320
  %1380 = vmatprep.subr.bf16.mxu0 %v1319
  %1381 = vmatpush2.bf16.msra.mxu0 %v1318
  %1382 = vmatprep.subr.bf16.mxu0 %v1317
  %1383 = vmatpush2.bf16.msra.mxu0 %v1316
  %1384 = vmatprep.subr.bf16.mxu0 %v1315
  %1385 = vmatpush2.bf16.msra.mxu0 %v1314
  %1386 = vmatprep.subr.bf16.mxu0 %v1313
  %1387 = vmatpush2.bf16.msra.mxu0 %v1312
  %1388 = vmatprep.subr.bf16.mxu0 %v1311
  %1389 = vmatpush2.bf16.msra.mxu0 %v1310
  %1390 = vmatprep.mubr.bf16.mxu0 %v964
  %1391 = vmatmul.mubr.bf16.gmra.mxu0 %v963
  %v1392 = vpop.f32.mrf.mxu0
  %v1393 = vadd.f32 %v1188, %v1392
  %v1394 = vpop.f32.mrf.mxu0
  %v1395 = vadd.f32 %v1190, %v1394
  %v1396 = vpop.f32.mrf.mxu0
  %v1397 = vadd.f32 %v1192, %v1396
  %v1398 = vpop.f32.mrf.mxu0
  %v1399 = vadd.f32 %v1194, %v1398
  %1400 = vdwg.mxu0
  %v1401 = vld [vmem:[%s886] sm:$0xee]
  %v1402 = vld [vmem:[%s582] sm:$0xff]
  %v1403 = vld [vmem:[%s582 + $0x8] sm:$0xff]
  %v1404 = vld [vmem:[%s582 + $0x10] sm:$0xff]
  %v1405 = vld [vmem:[%s582 + $0x18] sm:$0xff]
  %v1406 = vld [vmem:[%s582 + $0x20] sm:$0xff]
  %v1407 = vld [vmem:[%s582 + $0x28] sm:$0xff]
  %v1408 = vld [vmem:[%s582 + $0x30] sm:$0xff]
  %v1409 = vld [vmem:[%s582 + $0x38] sm:$0xff]
  %v1410 = vld [vmem:[%s582 + $0x40] sm:$0xff]
  %v1411 = vld [vmem:[%s582 + $0x48] sm:$0xff]
  %v1412 = vld [vmem:[%s582 + $0x50] sm:$0xff]
  %v1413 = vld [vmem:[%s582 + $0x58] sm:$0xff]
  %v1414 = vld [vmem:[%s582 + $0x60] sm:$0xff]
  %v1415 = vld [vmem:[%s582 + $0x68] sm:$0xff]
  %v1416 = vld [vmem:[%s582 + $0x70] sm:$0xff]
  %v1417 = vld [vmem:[%s582 + $0x78] sm:$0xff]
  %v1418 = vld [vmem:[%s582 + $0x80] sm:$0xff]
  %v1419 = vld [vmem:[%s582 + $0x88] sm:$0xff]
  %v1420 = vld [vmem:[%s582 + $0x90] sm:$0xff]
  %v1421 = vld [vmem:[%s582 + $0x98] sm:$0xff]
  %v1422 = vld [vmem:[%s582 + $0xa0] sm:$0xff]
  %v1423 = vld [vmem:[%s582 + $0xa8] sm:$0xff]
  %v1424 = vld [vmem:[%s582 + $0xb0] sm:$0xff]
  %v1425 = vld [vmem:[%s582 + $0xb8] sm:$0xff]
  %v1426 = vld [vmem:[%s582 + $0xc0] sm:$0xff]
  %v1427 = vld [vmem:[%s582 + $0xc8] sm:$0xff]
  %v1428 = vld [vmem:[%s582 + $0xd0] sm:$0xff]
  %v1429 = vld [vmem:[%s582 + $0xd8] sm:$0xff]
  %v1430 = vld [vmem:[%s582 + $0xe0] sm:$0xff]
  %v1431 = vld [vmem:[%s582 + $0xe8] sm:$0xff]
  %v1432 = vld [vmem:[%s582 + $0xf0] sm:$0xff]
  %v1433 = vld [vmem:[%s582 + $0xf8] sm:$0xff]
  %v1435 = vunpack.c.l.b16 %v1401
  %v1436 = vunpack.c.h.b16 %v1401
  %v1437 = vpack.c.b16 %v959, %v1435
  %v1438 = vpack.c.b16 %v960, %v1436
  %v1439 = vrot.slane %v1437, 1
  %v1440 = vrot.slane %v965, 1
  %v1441 = vsel %vm620, %v1439, %v1440
  %v1442 = vrot.slane %v1438, 1
  %v1443 = vrot.slane %v966, 1
  %v1444 = vsel %vm620, %v1442, %v1443
  %v1479 = vunpack.c.l.b16 %v1402
  %v1480 = vunpack.c.h.b16 %v1402
  %v1481 = vunpack.c.l.b16 %v1403
  %v1482 = vunpack.c.h.b16 %v1403
  %v1483 = vunpack.c.l.b16 %v1404
  %v1484 = vunpack.c.h.b16 %v1404
  %v1485 = vunpack.c.l.b16 %v1405
  %v1486 = vunpack.c.h.b16 %v1405
  %v1487 = vunpack.c.l.b16 %v1406
  %v1488 = vunpack.c.h.b16 %v1406
  %v1489 = vunpack.c.l.b16 %v1407
  %v1490 = vunpack.c.h.b16 %v1407
  %v1491 = vunpack.c.l.b16 %v1408
  %v1492 = vunpack.c.h.b16 %v1408
  %v1493 = vunpack.c.l.b16 %v1409
  %v1494 = vunpack.c.h.b16 %v1409
  %v1495 = vunpack.c.l.b16 %v1410
  %v1496 = vunpack.c.h.b16 %v1410
  %v1497 = vunpack.c.l.b16 %v1411
  %v1498 = vunpack.c.h.b16 %v1411
  %v1499 = vunpack.c.l.b16 %v1412
  %v1500 = vunpack.c.h.b16 %v1412
  %v1501 = vunpack.c.l.b16 %v1413
  %v1502 = vunpack.c.h.b16 %v1413
  %v1503 = vunpack.c.l.b16 %v1414
  %v1504 = vunpack.c.h.b16 %v1414
  %v1505 = vunpack.c.l.b16 %v1415
  %v1506 = vunpack.c.h.b16 %v1415
  %v1507 = vunpack.c.l.b16 %v1416
  %v1508 = vunpack.c.h.b16 %v1416
  %v1509 = vunpack.c.l.b16 %v1417
  %v1510 = vunpack.c.h.b16 %v1417
  %v1511 = vunpack.c.l.b16 %v1418
  %v1512 = vunpack.c.h.b16 %v1418
  %v1513 = vunpack.c.l.b16 %v1419
  %v1514 = vunpack.c.h.b16 %v1419
  %v1515 = vunpack.c.l.b16 %v1420
  %v1516 = vunpack.c.h.b16 %v1420
  %v1517 = vunpack.c.l.b16 %v1421
  %v1518 = vunpack.c.h.b16 %v1421
  %v1519 = vunpack.c.l.b16 %v1422
  %v1520 = vunpack.c.h.b16 %v1422
  %v1521 = vunpack.c.l.b16 %v1423
  %v1522 = vunpack.c.h.b16 %v1423
  %v1523 = vunpack.c.l.b16 %v1424
  %v1524 = vunpack.c.h.b16 %v1424
  %v1525 = vunpack.c.l.b16 %v1425
  %v1526 = vunpack.c.h.b16 %v1425
  %v1527 = vunpack.c.l.b16 %v1426
  %v1528 = vunpack.c.h.b16 %v1426
  %v1529 = vunpack.c.l.b16 %v1427
  %v1530 = vunpack.c.h.b16 %v1427
  %v1531 = vunpack.c.l.b16 %v1428
  %v1532 = vunpack.c.h.b16 %v1428
  %v1533 = vunpack.c.l.b16 %v1429
  %v1534 = vunpack.c.h.b16 %v1429
  %v1535 = vunpack.c.l.b16 %v1430
  %v1536 = vunpack.c.h.b16 %v1430
  %v1537 = vunpack.c.l.b16 %v1431
  %v1538 = vunpack.c.h.b16 %v1431
  %v1539 = vunpack.c.l.b16 %v1432
  %v1540 = vunpack.c.h.b16 %v1432
  %v1541 = vunpack.c.l.b16 %v1433
  %v1542 = vunpack.c.h.b16 %v1433
  %v1543 = vpack.c.b16 %v1481, %v1479
  %v1544 = vpack.c.b16 %v1482, %v1480
  %v1545 = vpack.c.b16 %v1485, %v1483
  %v1546 = vpack.c.b16 %v1486, %v1484
  %v1547 = vpack.c.b16 %v1489, %v1487
  %v1548 = vpack.c.b16 %v1490, %v1488
  %v1549 = vpack.c.b16 %v1493, %v1491
  %v1550 = vpack.c.b16 %v1494, %v1492
  %v1551 = vpack.c.b16 %v1497, %v1495
  %v1552 = vpack.c.b16 %v1498, %v1496
  %v1553 = vpack.c.b16 %v1501, %v1499
  %v1554 = vpack.c.b16 %v1502, %v1500
  %v1555 = vpack.c.b16 %v1505, %v1503
  %v1556 = vpack.c.b16 %v1506, %v1504
  %v1557 = vpack.c.b16 %v1509, %v1507
  %v1558 = vpack.c.b16 %v1510, %v1508
  %v1559 = vpack.c.b16 %v1513, %v1511
  %v1560 = vpack.c.b16 %v1514, %v1512
  %v1561 = vpack.c.b16 %v1517, %v1515
  %v1562 = vpack.c.b16 %v1518, %v1516
  %v1563 = vpack.c.b16 %v1521, %v1519
  %v1564 = vpack.c.b16 %v1522, %v1520
  %v1565 = vpack.c.b16 %v1525, %v1523
  %v1566 = vpack.c.b16 %v1526, %v1524
  %v1567 = vpack.c.b16 %v1529, %v1527
  %v1568 = vpack.c.b16 %v1530, %v1528
  %v1569 = vpack.c.b16 %v1533, %v1531
  %v1570 = vpack.c.b16 %v1534, %v1532
  %v1571 = vpack.c.b16 %v1537, %v1535
  %v1572 = vpack.c.b16 %v1538, %v1536
  %v1573 = vpack.c.b16 %v1541, %v1539
  %v1574 = vpack.c.b16 %v1542, %v1540
  %1607 = vmatprep.subr.bf16.mxu0 %v1558
  %1608 = vmatpush1.bf16.msra.mxu0 %v1557
  %1609 = vmatprep.subr.bf16.mxu0 %v1556
  %1610 = vmatpush1.bf16.msra.mxu0 %v1555
  %1611 = vmatprep.subr.bf16.mxu0 %v1554
  %1612 = vmatpush1.bf16.msra.mxu0 %v1553
  %1613 = vmatprep.subr.bf16.mxu0 %v1552
  %1614 = vmatpush1.bf16.msra.mxu0 %v1551
  %1615 = vmatprep.subr.bf16.mxu0 %v1550
  %1616 = vmatpush1.bf16.msra.mxu0 %v1549
  %1617 = vmatprep.subr.bf16.mxu0 %v1548
  %1618 = vmatpush1.bf16.msra.mxu0 %v1547
  %1619 = vmatprep.subr.bf16.mxu0 %v1546
  %1620 = vmatpush1.bf16.msra.mxu0 %v1545
  %1621 = vmatprep.subr.bf16.mxu0 %v1544
  %1622 = vmatpush1.bf16.msra.mxu0 %v1543
  %1623 = vmatprep.subr.bf16.mxu0 %v1574
  %1624 = vmatpush2.bf16.msra.mxu0 %v1573
  %1625 = vmatprep.subr.bf16.mxu0 %v1572
  %1626 = vmatpush2.bf16.msra.mxu0 %v1571
  %1627 = vmatprep.subr.bf16.mxu0 %v1570
  %1628 = vmatpush2.bf16.msra.mxu0 %v1569
  %1629 = vmatprep.subr.bf16.mxu0 %v1568
  %1630 = vmatpush2.bf16.msra.mxu0 %v1567
  %1631 = vmatprep.subr.bf16.mxu0 %v1566
  %1632 = vmatpush2.bf16.msra.mxu0 %v1565
  %1633 = vmatprep.subr.bf16.mxu0 %v1564
  %1634 = vmatpush2.bf16.msra.mxu0 %v1563
  %1635 = vmatprep.subr.bf16.mxu0 %v1562
  %1636 = vmatpush2.bf16.msra.mxu0 %v1561
  %1637 = vmatprep.subr.bf16.mxu0 %v1560
  %1638 = vmatpush2.bf16.msra.mxu0 %v1559
  %1639 = vmatprep.mubr.bf16.mxu0 %v1444
  %1640 = vmatmul.mubr.bf16.gmra.mxu0 %v1441
  %v1641 = vpop.f32.mrf.mxu0
  %v1642 = vadd.f32 0.0, %v1641
  %v1643 = vpop.f32.mrf.mxu0
  %v1644 = vadd.f32 0.0, %v1643
  %v1645 = vpop.f32.mrf.mxu0
  %v1646 = vadd.f32 0.0, %v1645
  %v1647 = vpop.f32.mrf.mxu0
  %v1648 = vadd.f32 0.0, %v1647
  %1649 = vdwg.mxu0
  %v1650 = vadd.f32 %v1393, %v1642
  %v1651 = vadd.f32 %v1395, %v1644
  %v1652 = vadd.f32 %v1397, %v1646
  %v1653 = vadd.f32 %v1399, %v1648
  %v1654 = vpack.c.bf16 %v1652, %v1650
  %v1655 = vpack.c.bf16 %v1653, %v1651
  %v1658 = vunpack.c.l.b16 %v1654
  %v1659 = vunpack.c.l.b16 %v1655
  %v1660 = vunpack.c.h.b16 %v1654
  %v1661 = vunpack.c.h.b16 %v1655
  %v1662 = vpack.c.b16 %v1659, %v1658
  %v1663 = vpack.c.b16 %v1661, %v1660
  %s1666 = scalar_lea.vmem %s52, 16
  %1667 = vst [vmem:[%s1666] sm:$0xff] %v1662
  %1668 = vst [vmem:[%s1666 + $0x8] sm:$0xff] %v1663
  %v1669 = vadd.f32 %v1650, %v1652
  %v1670 = vrot.slane %v1669, 4
  %v1671 = vadd.f32 %v1669, %v1670
  %v1672 = vrot.slane %v1671, 2
  %v1673 = vadd.f32 %v1671, %v1672
  %v1674 = vrot.slane %v1673, 1
  %v1675 = vadd.f32 %v1673, %v1674
  %v1676 = vadd.f32 %v1651, %v1653
  %v1677 = vrot.slane %v1676, 4
  %v1678 = vadd.f32 %v1676, %v1677
  %v1679 = vrot.slane %v1678, 2
  %v1680 = vadd.f32 %v1678, %v1679
  %v1681 = vrot.slane %v1680, 1
  %v1682 = vadd.f32 %v1680, %v1681
  %v1683 = vadd.f32 %v864, %v1675
  %v1684 = vadd.f32 %v865, %v1682
  %v1685 = vmul.f32 %v1650, %v1650
  %v1686 = vmul.f32 %v1651, %v1651
  %v1687 = vmul.f32 %v1652, %v1652
  %v1688 = vmul.f32 %v1653, %v1653
  %v1689 = vadd.f32 %v1685, %v1687
  %v1690 = vrot.slane %v1689, 4
  %v1691 = vadd.f32 %v1689, %v1690
  %v1692 = vrot.slane %v1691, 2
  %v1693 = vadd.f32 %v1691, %v1692
  %v1694 = vrot.slane %v1693, 1
  %v1695 = vadd.f32 %v1693, %v1694
  %v1696 = vadd.f32 %v1686, %v1688
  %v1697 = vrot.slane %v1696, 4
  %v1698 = vadd.f32 %v1696, %v1697
  %v1699 = vrot.slane %v1698, 2
  %v1700 = vadd.f32 %v1698, %v1699
  %v1701 = vrot.slane %v1700, 1
  %v1702 = vadd.f32 %v1700, %v1701
  %v1703 = vadd.f32 %v884, %v1695
  %v1704 = vadd.f32 %v885, %v1702
  %v1705 = vld [vmem:[%s3] sm:$0x3]
  %v1708 = vcombine.low %v1683, %v1684
  %v1710 = vunpack.c.l.s4 1966171168
  %v1711 = vunpack.c.0.s8 %v1710
  %v1712 = vlaneseq
  %v1713 = vshrl.u32 %v1712, 7
  %v1714 = vsub.s32 %v1711, %v1713
  %v1715 = vrot.slane %v1708, %v1714
  %v1717 = vunpack.c.l.s4 1966171168
  %v1718 = vunpack.c.0.s8 %v1717
  %v1719 = vlaneseq
  %v1720 = vshrl.u32 %v1719, 7
  %v1721 = vsub.s32 %v1718, %v1720
  %v1722 = vrot.slane %v1715, %v1721
  %v1724 = vadd.f32 %v1705, %v1722
  %v1725 = vlaneseq
  %vm1726 = vcmp.ge.s32.totalorder %v1725, 0
  %vm1727 = vcmp.lt.s32.totalorder %v1725, 256
  %vm1728 = vmand %vm1726, %vm1727
  %1729 = vst.msk [vmem:[%s3] sm:$0x3] %vm1728, %v1724
  %v1730 = vld [vmem:[%s4] sm:$0x3]
  %v1733 = vcombine.low %v1703, %v1704
  %v1735 = vunpack.c.l.s4 1966171168
  %v1736 = vunpack.c.0.s8 %v1735
  %v1737 = vlaneseq
  %v1738 = vshrl.u32 %v1737, 7
  %v1739 = vsub.s32 %v1736, %v1738
  %v1740 = vrot.slane %v1733, %v1739
  %v1742 = vunpack.c.l.s4 1966171168
  %v1743 = vunpack.c.0.s8 %v1742
  %v1744 = vlaneseq
  %v1745 = vshrl.u32 %v1744, 7
  %v1746 = vsub.s32 %v1743, %v1745
  %v1747 = vrot.slane %v1740, %v1746
  %v1749 = vadd.f32 %v1730, %v1747
  %1750 = vst.msk [vmem:[%s4] sm:$0x3] %vm1728, %v1749
  %s1751 = sadd.s32 0, 0
  %s1752 = smul.u32 2, %s1751
  %p1753 = scmp.lt.s32.totalorder %s1752, 1
  %s1754 = scalar_select %p1753, %s1752, 1
  %s1755 = smul.addr %s1754, 4
  %s1756 = smul.addr %s1755, 4
  %s1757 = scalar_lea.vmem %s2, %s1756
  // Predicated region
  $region14: #{_lambda_.17} parent=0 // pred_check
    _
  $region15: #{_lambda_.17} parent=0 // pred_check_branch
    %1759 = sbr.rel (0) target = $region17
  $region16: #{_lambda_.17} parent=0 // pred_region
    %s1760 = sadd.s32 0, 0
    %s1761 = smul.u32 2, %s1760
  $region17: #{_lambda_.17} parent=0 // pred_fallthru
    _
  // Predicated region
  $region18: #{_lambda_.17} parent=0 // pred_check
    _
  $region19: #{_lambda_.17} parent=0 // pred_check_branch
    %1763 = sbr.rel (0) target = $region21
  $region20: #{_lambda_.17} parent=0 // pred_region
    _
  $region21: #{_lambda_.17} parent=0 // pred_fallthru
    _
  // Predicated region
  $region22: #{_lambda_.17} parent=0 // pred_check
    _
  $region23: #{_lambda_.17} parent=0 // pred_check_branch
    %1765 = sbr.rel (0) target = $region25
  $region24: #{_lambda_.17} parent=0 // pred_region
    _
  $region25: #{_lambda_.17} parent=0 // pred_fallthru
    _
  // Predicated region
  $region26: #{_lambda_.17} parent=0 // pred_check
    _
  $region27: #{_lambda_.17} parent=0 // pred_check_branch
    %1767 = sbr.rel (0) target = $region29
  $region28: #{_lambda_.17} parent=0 // pred_region
    %s1768 = sadd.s32 0, 0
    %s1769 = smul.u32 2, %s1768
    %p1770 = scmp.lt.s32.totalorder %s1769, 1
    %s1771 = scalar_select %p1770, %s1769, 1
    %s1772 = smul.addr %s1771, 4
    %s1773 = smul.addr %s1772, 4
    %s1774 = scalar_lea.vmem %s2, %s1773
  $region29: #{_lambda_.17} parent=0 // pred_fallthru
    _
  // Predicated region
  $region30: #{_lambda_.17} parent=0 // pred_check
    _
  $region31: #{_lambda_.17} parent=0 // pred_check_branch
    %1776 = sbr.rel (0) target = $region33
  $region32: #{_lambda_.17} parent=0 // pred_region
    _
  $region33: #{_lambda_.17} parent=0 // pred_fallthru
    _
  // Predicated region
  $region34: #{_lambda_.17} parent=0 // pred_check
    _
  $region35: #{_lambda_.17} parent=0 // pred_check_branch
    %1778 = sbr.rel (0) target = $region37
  $region36: #{_lambda_.17} parent=0 // pred_region
    _
  $region37: #{_lambda_.17} parent=0 // pred_fallthru
    _

// kernel: _lambda_.21
$region0: #{_lambda_.21}
  #allocation0 [shape = 'u32[]', space=smem, size = 0x4, offset = 0x4, fixed_abs, tag = 'smem constant byte address 0x4 - core index']
  #allocation1 [shape = 'u32[144,128]{1,0:T(1,128)}', space=vmem, size = 0x12000, scoped, tag = 'internal scratch']
  %s0 = inlined_call_operand.vmem [shape: bf16[2,2,9,256], index: 0, kind: input, shape index: {}]
  %s1 = inlined_call_operand.vmem [shape: bf16[3,256,256], index: 1, kind: input, shape index: {}]
  %s2 = inlined_call_operand.vmem [shape: bf16[2,8,256], index: 2, kind: output, shape index: {0}]
  %s3 = inlined_call_operand.vmem [shape: f32[1,1,256], index: 3, kind: output, shape index: {1}]
  %s4 = inlined_call_operand.vmem [shape: f32[1,1,256], index: 4, kind: output, shape index: {2}]
  %5 = xla_tuple %s2, %s3, %s4
  %s6 = sld [smem:[#allocation0]]
  $region38: #{_lambda_.21} parent=0
    _
  %s8 = ssub.s32 1, %s6
  %s9 = scalar_select 0, %s8, %s6
  // Predicated region
  $region2: #{_lambda_.21} parent=0 // pred_check
    _
  $region3: #{_lambda_.21} parent=0 // pred_check_branch
    %11 = sbr.rel (0) target = $region5
  $region4: #{_lambda_.21} parent=0 // pred_region
    %s12 = sadd.s32 0, 0
    %s13 = smul.u32 2, %s12
    %p14 = scmp.lt.s32.totalorder %s13, 1
    %s15 = scalar_select %p14, %s13, 1
    %s16 = smul.addr %s15, 4
    %s17 = smul.addr %s16, 4
    %s18 = scalar_lea.vmem %s0, %s17
    %s19 = sadd.s32 0, 0
    %s20 = smul.u32 2, %s19
  $region5: #{_lambda_.21} parent=0 // pred_fallthru
    _
  // Predicated region
  $region6: #{_lambda_.21} parent=0 // pred_check
    _
  $region7: #{_lambda_.21} parent=0 // pred_check_branch
    %22 = sbr.rel (0) target = $region9
  $region8: #{_lambda_.21} parent=0 // pred_region
    _
  $region9: #{_lambda_.21} parent=0 // pred_fallthru
    _
  %s23 = sadd.s32 0, 0
  %s24 = smul.u32 2, %s23
  %p25 = scmp.lt.s32.totalorder %s24, 1
  %s26 = scalar_select %p25, %s24, 1
  %s27 = smul.addr %s26, 4
  %s28 = smul.addr %s27, 4
  %s29 = scalar_lea.vmem %s0, %s28
  %s30 = sadd.s32 0, 0
  %s31 = smul.u32 2, %s30
  %p32 = scmp.lt.s32.totalorder %s31, 1
  %s33 = scalar_select %p32, %s31, 1
  %s34 = smul.addr %s33, 2
  %s35 = smul.addr %s34, 4
  %s36 = scalar_lea.vmem %s2, %s35
  %s37 = sadd.s32 0, 0
  %s38 = smul.u32 2, %s37
  %p39 = scmp.lt.s32.totalorder %s38, 1
  %s40 = scalar_select %p39, %s38, 1
  %s41 = smul.addr %s40, 4
  %s42 = smul.addr %s41, 4
  %s43 = scalar_lea.vmem %s0, %s42
  %s44 = sadd.s32 0, 0
  %s45 = smul.u32 2, %s44
  %s46 = sadd.s32 0, 0
  %s47 = smul.u32 2, %s46
  %p48 = scmp.lt.s32.totalorder %s47, 1
  %s49 = scalar_select %p48, %s47, 1
  %s50 = smul.addr %s49, 2
  %s51 = smul.addr %s50, 4
  %s52 = scalar_lea.vmem %s2, %s51
  %s53 = sadd.s32 0, 0
  %s54 = smul.u32 2, %s53
  %p55 = scmp.eq.s32.totalorder 0, 0
  // Predicated region
  $region10: #{_lambda_.21} parent=0 // pred_check
    %p56 = pneg %p55
  $region11: #{_lambda_.21} parent=0 // pred_check_branch
    %58 = sbr.rel (%p56) target = $region13
  $region12: #{_lambda_.21} parent=0 // pred_region
    %v59 = vlaneseq
    %vm60 = vcmp.ge.s32.totalorder %v59, 0
    %vm61 = vcmp.lt.s32.totalorder %v59, 256
    %vm62 = vmand %vm60, %vm61
    %63 = vst.msk [vmem:[%s3] sm:$0x3] %vm62, 0.0
    %64 = vst.msk [vmem:[%s4] sm:$0x3] %vm62, 0.0
  $region13: #{_lambda_.21} parent=0 // pred_fallthru
    _
  %v65 = vld [vmem:[%s43] sm:$0xff]
  %v66 = vld [vmem:[%s1] sm:$0xff]
  %v67 = vld [vmem:[%s1 + $0x8] sm:$0xff]
  %v68 = vld [vmem:[%s1 + $0x10] sm:$0xff]
  %v69 = vld [vmem:[%s1 + $0x18] sm:$0xff]
  %v70 = vld [vmem:[%s1 + $0x20] sm:$0xff]
  %v71 = vld [vmem:[%s1 + $0x28] sm:$0xff]
  %v72 = vld [vmem:[%s1 + $0x30] sm:$0xff]
  %v73 = vld [vmem:[%s1 + $0x38] sm:$0xff]
  %v74 = vld [vmem:[%s1 + $0x40] sm:$0xff]
  %v75 = vld [vmem:[%s1 + $0x48] sm:$0xff]
  %v76 = vld [vmem:[%s1 + $0x50] sm:$0xff]
  %v77 = vld [vmem:[%s1 + $0x58] sm:$0xff]
  %v78 = vld [vmem:[%s1 + $0x60] sm:$0xff]
  %v79 = vld [vmem:[%s1 + $0x68] sm:$0xff]
  %v80 = vld [vmem:[%s1 + $0x70] sm:$0xff]
  %v81 = vld [vmem:[%s1 + $0x78] sm:$0xff]
  %v82 = vld [vmem:[%s1 + $0x80] sm:$0xff]
  %v83 = vld [vmem:[%s1 + $0x88] sm:$0xff]
  %v84 = vld [vmem:[%s1 + $0x90] sm:$0xff]
  %v85 = vld [vmem:[%s1 + $0x98] sm:$0xff]
  %v86 = vld [vmem:[%s1 + $0xa0] sm:$0xff]
  %v87 = vld [vmem:[%s1 + $0xa8] sm:$0xff]
  %v88 = vld [vmem:[%s1 + $0xb0] sm:$0xff]
  %v89 = vld [vmem:[%s1 + $0xb8] sm:$0xff]
  %v90 = vld [vmem:[%s1 + $0xc0] sm:$0xff]
  %v91 = vld [vmem:[%s1 + $0xc8] sm:$0xff]
  %v92 = vld [vmem:[%s1 + $0xd0] sm:$0xff]
  %v93 = vld [vmem:[%s1 + $0xd8] sm:$0xff]
  %v94 = vld [vmem:[%s1 + $0xe0] sm:$0xff]
  %v95 = vld [vmem:[%s1 + $0xe8] sm:$0xff]
  %v96 = vld [vmem:[%s1 + $0xf0] sm:$0xff]
  %v97 = vld [vmem:[%s1 + $0xf8] sm:$0xff]
  %s98 = scalar_lea.vmem %s43, 32
  %v99 = vld [vmem:[%s98] sm:$0xff]
  %s100 = scalar_lea.vmem %s1, 256
  %v101 = vld [vmem:[%s100] sm:$0xff]
  %v102 = vld [vmem:[%s100 + $0x8] sm:$0xff]
  %v103 = vld [vmem:[%s100 + $0x10] sm:$0xff]
  %v104 = vld [vmem:[%s100 + $0x18] sm:$0xff]
  %v105 = vld [vmem:[%s100 + $0x20] sm:$0xff]
  %v106 = vld [vmem:[%s100 + $0x28] sm:$0xff]
  %v107 = vld [vmem:[%s100 + $0x30] sm:$0xff]
  %v108 = vld [vmem:[%s100 + $0x38] sm:$0xff]
  %v109 = vld [vmem:[%s100 + $0x40] sm:$0xff]
  %v110 = vld [vmem:[%s100 + $0x48] sm:$0xff]
  %v111 = vld [vmem:[%s100 + $0x50] sm:$0xff]
  %v112 = vld [vmem:[%s100 + $0x58] sm:$0xff]
  %v113 = vld [vmem:[%s100 + $0x60] sm:$0xff]
  %v114 = vld [vmem:[%s100 + $0x68] sm:$0xff]
  %v115 = vld [vmem:[%s100 + $0x70] sm:$0xff]
  %v116 = vld [vmem:[%s100 + $0x78] sm:$0xff]
  %v117 = vld [vmem:[%s100 + $0x80] sm:$0xff]
  %v118 = vld [vmem:[%s100 + $0x88] sm:$0xff]
  %v119 = vld [vmem:[%s100 + $0x90] sm:$0xff]
  %v120 = vld [vmem:[%s100 + $0x98] sm:$0xff]
  %v121 = vld [vmem:[%s100 + $0xa0] sm:$0xff]
  %v122 = vld [vmem:[%s100 + $0xa8] sm:$0xff]
  %v123 = vld [vmem:[%s100 + $0xb0] sm:$0xff]
  %v124 = vld [vmem:[%s100 + $0xb8] sm:$0xff]
  %v125 = vld [vmem:[%s100 + $0xc0] sm:$0xff]
  %v126 = vld [vmem:[%s100 + $0xc8] sm:$0xff]
  %v127 = vld [vmem:[%s100 + $0xd0] sm:$0xff]
  %v128 = vld [vmem:[%s100 + $0xd8] sm:$0xff]
  %v129 = vld [vmem:[%s100 + $0xe0] sm:$0xff]
  %v130 = vld [vmem:[%s100 + $0xe8] sm:$0xff]
  %v131 = vld [vmem:[%s100 + $0xf0] sm:$0xff]
  %v132 = vld [vmem:[%s100 + $0xf8] sm:$0xff]
  %v134 = vunpack.c.l.b16 %v99
  %v135 = vunpack.c.h.b16 %v99
  %v136 = vpack.c.b16 %v134, %v134
  %v137 = vpack.c.b16 %v135, %v135
  %v172 = vunpack.c.l.b16 %v101
  %v173 = vunpack.c.h.b16 %v101
  %v174 = vunpack.c.l.b16 %v102
  %v175 = vunpack.c.h.b16 %v102
  %v176 = vunpack.c.l.b16 %v103
  %v177 = vunpack.c.h.b16 %v103
  %v178 = vunpack.c.l.b16 %v104
  %v179 = vunpack.c.h.b16 %v104
  %v180 = vunpack.c.l.b16 %v105
  %v181 = vunpack.c.h.b16 %v105
  %v182 = vunpack.c.l.b16 %v106
  %v183 = vunpack.c.h.b16 %v106
  %v184 = vunpack.c.l.b16 %v107
  %v185 = vunpack.c.h.b16 %v107
  %v186 = vunpack.c.l.b16 %v108
  %v187 = vunpack.c.h.b16 %v108
  %v188 = vunpack.c.l.b16 %v109
  %v189 = vunpack.c.h.b16 %v109
  %v190 = vunpack.c.l.b16 %v110
  %v191 = vunpack.c.h.b16 %v110
  %v192 = vunpack.c.l.b16 %v111
  %v193 = vunpack.c.h.b16 %v111
  %v194 = vunpack.c.l.b16 %v112
  %v195 = vunpack.c.h.b16 %v112
  %v196 = vunpack.c.l.b16 %v113
  %v197 = vunpack.c.h.b16 %v113
  %v198 = vunpack.c.l.b16 %v114
  %v199 = vunpack.c.h.b16 %v114
  %v200 = vunpack.c.l.b16 %v115
  %v201 = vunpack.c.h.b16 %v115
  %v202 = vunpack.c.l.b16 %v116
  %v203 = vunpack.c.h.b16 %v116
  %v204 = vunpack.c.l.b16 %v117
  %v205 = vunpack.c.h.b16 %v117
  %v206 = vunpack.c.l.b16 %v118
  %v207 = vunpack.c.h.b16 %v118
  %v208 = vunpack.c.l.b16 %v119
  %v209 = vunpack.c.h.b16 %v119
  %v210 = vunpack.c.l.b16 %v120
  %v211 = vunpack.c.h.b16 %v120
  %v212 = vunpack.c.l.b16 %v121
  %v213 = vunpack.c.h.b16 %v121
  %v214 = vunpack.c.l.b16 %v122
  %v215 = vunpack.c.h.b16 %v122
  %v216 = vunpack.c.l.b16 %v123
  %v217 = vunpack.c.h.b16 %v123
  %v218 = vunpack.c.l.b16 %v124
  %v219 = vunpack.c.h.b16 %v124
  %v220 = vunpack.c.l.b16 %v125
  %v221 = vunpack.c.h.b16 %v125
  %v222 = vunpack.c.l.b16 %v126
  %v223 = vunpack.c.h.b16 %v126
  %v224 = vunpack.c.l.b16 %v127
  %v225 = vunpack.c.h.b16 %v127
  %v226 = vunpack.c.l.b16 %v128
  %v227 = vunpack.c.h.b16 %v128
  %v228 = vunpack.c.l.b16 %v129
  %v229 = vunpack.c.h.b16 %v129
  %v230 = vunpack.c.l.b16 %v130
  %v231 = vunpack.c.h.b16 %v130
  %v232 = vunpack.c.l.b16 %v131
  %v233 = vunpack.c.h.b16 %v131
  %v234 = vunpack.c.l.b16 %v132
  %v235 = vunpack.c.h.b16 %v132
  %v236 = vpack.c.b16 %v174, %v172
  %v237 = vpack.c.b16 %v175, %v173
  %v238 = vpack.c.b16 %v178, %v176
  %v239 = vpack.c.b16 %v179, %v177
  %v240 = vpack.c.b16 %v182, %v180
  %v241 = vpack.c.b16 %v183, %v181
  %v242 = vpack.c.b16 %v186, %v184
  %v243 = vpack.c.b16 %v187, %v185
  %v244 = vpack.c.b16 %v190, %v188
  %v245 = vpack.c.b16 %v191, %v189
  %v246 = vpack.c.b16 %v194, %v192
  %v247 = vpack.c.b16 %v195, %v193
  %v248 = vpack.c.b16 %v198, %v196
  %v249 = vpack.c.b16 %v199, %v197
  %v250 = vpack.c.b16 %v202, %v200
  %v251 = vpack.c.b16 %v203, %v201
  %v252 = vpack.c.b16 %v206, %v204
  %v253 = vpack.c.b16 %v207, %v205
  %v254 = vpack.c.b16 %v210, %v208
  %v255 = vpack.c.b16 %v211, %v209
  %v256 = vpack.c.b16 %v214, %v212
  %v257 = vpack.c.b16 %v215, %v213
  %v258 = vpack.c.b16 %v218, %v216
  %v259 = vpack.c.b16 %v219, %v217
  %v260 = vpack.c.b16 %v222, %v220
  %v261 = vpack.c.b16 %v223, %v221
  %v262 = vpack.c.b16 %v226, %v224
  %v263 = vpack.c.b16 %v227, %v225
  %v264 = vpack.c.b16 %v230, %v228
  %v265 = vpack.c.b16 %v231, %v229
  %v266 = vpack.c.b16 %v234, %v232
  %v267 = vpack.c.b16 %v235, %v233
  %300 = vmatprep.subr.bf16.mxu0 %v251
  %301 = vmatpush1.bf16.msra.mxu0 %v250
  %302 = vmatprep.subr.bf16.mxu0 %v249
  %303 = vmatpush1.bf16.msra.mxu0 %v248
  %304 = vmatprep.subr.bf16.mxu0 %v247
  %305 = vmatpush1.bf16.msra.mxu0 %v246
  %306 = vmatprep.subr.bf16.mxu0 %v245
  %307 = vmatpush1.bf16.msra.mxu0 %v244
  %308 = vmatprep.subr.bf16.mxu0 %v243
  %309 = vmatpush1.bf16.msra.mxu0 %v242
  %310 = vmatprep.subr.bf16.mxu0 %v241
  %311 = vmatpush1.bf16.msra.mxu0 %v240
  %312 = vmatprep.subr.bf16.mxu0 %v239
  %313 = vmatpush1.bf16.msra.mxu0 %v238
  %314 = vmatprep.subr.bf16.mxu0 %v237
  %315 = vmatpush1.bf16.msra.mxu0 %v236
  %316 = vmatprep.subr.bf16.mxu0 %v267
  %317 = vmatpush2.bf16.msra.mxu0 %v266
  %318 = vmatprep.subr.bf16.mxu0 %v265
  %319 = vmatpush2.bf16.msra.mxu0 %v264
  %320 = vmatprep.subr.bf16.mxu0 %v263
  %321 = vmatpush2.bf16.msra.mxu0 %v262
  %322 = vmatprep.subr.bf16.mxu0 %v261
  %323 = vmatpush2.bf16.msra.mxu0 %v260
  %324 = vmatprep.subr.bf16.mxu0 %v259
  %325 = vmatpush2.bf16.msra.mxu0 %v258
  %326 = vmatprep.subr.bf16.mxu0 %v257
  %327 = vmatpush2.bf16.msra.mxu0 %v256
  %328 = vmatprep.subr.bf16.mxu0 %v255
  %329 = vmatpush2.bf16.msra.mxu0 %v254
  %330 = vmatprep.subr.bf16.mxu0 %v253
  %331 = vmatpush2.bf16.msra.mxu0 %v252
  %332 = vmatprep.mubr.bf16.mxu0 %v137
  %333 = vmatmul.mubr.bf16.gmra.mxu0 %v136
  %v334 = vpop.f32.mrf.mxu0
  %v335 = vadd.f32 0.0, %v334
  %v336 = vpop.f32.mrf.mxu0
  %v337 = vadd.f32 0.0, %v336
  %v338 = vpop.f32.mrf.mxu0
  %v339 = vpop.f32.mrf.mxu0
  %340 = vdwg.mxu0
  %v342 = vunpack.c.l.b16 %v65
  %v343 = vunpack.c.h.b16 %v65
  %v344 = vpack.c.b16 %v342, %v342
  %v345 = vpack.c.b16 %v343, %v343
  %v380 = vunpack.c.l.b16 %v66
  %v381 = vunpack.c.h.b16 %v66
  %v382 = vunpack.c.l.b16 %v67
  %v383 = vunpack.c.h.b16 %v67
  %v384 = vunpack.c.l.b16 %v68
  %v385 = vunpack.c.h.b16 %v68
  %v386 = vunpack.c.l.b16 %v69
  %v387 = vunpack.c.h.b16 %v69
  %v388 = vunpack.c.l.b16 %v70
  %v389 = vunpack.c.h.b16 %v70
  %v390 = vunpack.c.l.b16 %v71
  %v391 = vunpack.c.h.b16 %v71
  %v392 = vunpack.c.l.b16 %v72
  %v393 = vunpack.c.h.b16 %v72
  %v394 = vunpack.c.l.b16 %v73
  %v395 = vunpack.c.h.b16 %v73
  %v396 = vunpack.c.l.b16 %v74
  %v397 = vunpack.c.h.b16 %v74
  %v398 = vunpack.c.l.b16 %v75
  %v399 = vunpack.c.h.b16 %v75
  %v400 = vunpack.c.l.b16 %v76
  %v401 = vunpack.c.h.b16 %v76
  %v402 = vunpack.c.l.b16 %v77
  %v403 = vunpack.c.h.b16 %v77
  %v404 = vunpack.c.l.b16 %v78
  %v405 = vunpack.c.h.b16 %v78
  %v406 = vunpack.c.l.b16 %v79
  %v407 = vunpack.c.h.b16 %v79
  %v408 = vunpack.c.l.b16 %v80
  %v409 = vunpack.c.h.b16 %v80
  %v410 = vunpack.c.l.b16 %v81
  %v411 = vunpack.c.h.b16 %v81
  %v412 = vunpack.c.l.b16 %v82
  %v413 = vunpack.c.h.b16 %v82
  %v414 = vunpack.c.l.b16 %v83
  %v415 = vunpack.c.h.b16 %v83
  %v416 = vunpack.c.l.b16 %v84
  %v417 = vunpack.c.h.b16 %v84
  %v418 = vunpack.c.l.b16 %v85
  %v419 = vunpack.c.h.b16 %v85
  %v420 = vunpack.c.l.b16 %v86
  %v421 = vunpack.c.h.b16 %v86
  %v422 = vunpack.c.l.b16 %v87
  %v423 = vunpack.c.h.b16 %v87
  %v424 = vunpack.c.l.b16 %v88
  %v425 = vunpack.c.h.b16 %v88
  %v426 = vunpack.c.l.b16 %v89
  %v427 = vunpack.c.h.b16 %v89
  %v428 = vunpack.c.l.b16 %v90
  %v429 = vunpack.c.h.b16 %v90
  %v430 = vunpack.c.l.b16 %v91
  %v431 = vunpack.c.h.b16 %v91
  %v432 = vunpack.c.l.b16 %v92
  %v433 = vunpack.c.h.b16 %v92
  %v434 = vunpack.c.l.b16 %v93
  %v435 = vunpack.c.h.b16 %v93
  %v436 = vunpack.c.l.b16 %v94
  %v437 = vunpack.c.h.b16 %v94
  %v438 = vunpack.c.l.b16 %v95
  %v439 = vunpack.c.h.b16 %v95
  %v440 = vunpack.c.l.b16 %v96
  %v441 = vunpack.c.h.b16 %v96
  %v442 = vunpack.c.l.b16 %v97
  %v443 = vunpack.c.h.b16 %v97
  %v444 = vpack.c.b16 %v382, %v380
  %v445 = vpack.c.b16 %v383, %v381
  %v446 = vpack.c.b16 %v386, %v384
  %v447 = vpack.c.b16 %v387, %v385
  %v448 = vpack.c.b16 %v390, %v388
  %v449 = vpack.c.b16 %v391, %v389
  %v450 = vpack.c.b16 %v394, %v392
  %v451 = vpack.c.b16 %v395, %v393
  %v452 = vpack.c.b16 %v398, %v396
  %v453 = vpack.c.b16 %v399, %v397
  %v454 = vpack.c.b16 %v402, %v400
  %v455 = vpack.c.b16 %v403, %v401
  %v456 = vpack.c.b16 %v406, %v404
  %v457 = vpack.c.b16 %v407, %v405
  %v458 = vpack.c.b16 %v410, %v408
  %v459 = vpack.c.b16 %v411, %v409
  %v460 = vpack.c.b16 %v414, %v412
  %v461 = vpack.c.b16 %v415, %v413
  %v462 = vpack.c.b16 %v418, %v416
  %v463 = vpack.c.b16 %v419, %v417
  %v464 = vpack.c.b16 %v422, %v420
  %v465 = vpack.c.b16 %v423, %v421
  %v466 = vpack.c.b16 %v426, %v424
  %v467 = vpack.c.b16 %v427, %v425
  %v468 = vpack.c.b16 %v430, %v428
  %v469 = vpack.c.b16 %v431, %v429
  %v470 = vpack.c.b16 %v434, %v432
  %v471 = vpack.c.b16 %v435, %v433
  %v472 = vpack.c.b16 %v438, %v436
  %v473 = vpack.c.b16 %v439, %v437
  %v474 = vpack.c.b16 %v442, %v440
  %v475 = vpack.c.b16 %v443, %v441
  %508 = vmatprep.subr.bf16.mxu0 %v459
  %509 = vmatpush1.bf16.msra.mxu0 %v458
  %510 = vmatprep.subr.bf16.mxu0 %v457
  %511 = vmatpush1.bf16.msra.mxu0 %v456
  %512 = vmatprep.subr.bf16.mxu0 %v455
  %513 = vmatpush1.bf16.msra.mxu0 %v454
  %514 = vmatprep.subr.bf16.mxu0 %v453
  %515 = vmatpush1.bf16.msra.mxu0 %v452
  %516 = vmatprep.subr.bf16.mxu0 %v451
  %517 = vmatpush1.bf16.msra.mxu0 %v450
  %518 = vmatprep.subr.bf16.mxu0 %v449
  %519 = vmatpush1.bf16.msra.mxu0 %v448
  %520 = vmatprep.subr.bf16.mxu0 %v447
  %521 = vmatpush1.bf16.msra.mxu0 %v446
  %522 = vmatprep.subr.bf16.mxu0 %v445
  %523 = vmatpush1.bf16.msra.mxu0 %v444
  %524 = vmatprep.subr.bf16.mxu0 %v475
  %525 = vmatpush2.bf16.msra.mxu0 %v474
  %526 = vmatprep.subr.bf16.mxu0 %v473
  %527 = vmatpush2.bf16.msra.mxu0 %v472
  %528 = vmatprep.subr.bf16.mxu0 %v471
  %529 = vmatpush2.bf16.msra.mxu0 %v470
  %530 = vmatprep.subr.bf16.mxu0 %v469
  %531 = vmatpush2.bf16.msra.mxu0 %v468
  %532 = vmatprep.subr.bf16.mxu0 %v467
  %533 = vmatpush2.bf16.msra.mxu0 %v466
  %534 = vmatprep.subr.bf16.mxu0 %v465
  %535 = vmatpush2.bf16.msra.mxu0 %v464
  %536 = vmatprep.subr.bf16.mxu0 %v463
  %537 = vmatpush2.bf16.msra.mxu0 %v462
  %538 = vmatprep.subr.bf16.mxu0 %v461
  %539 = vmatpush2.bf16.msra.mxu0 %v460
  %540 = vmatprep.mubr.bf16.mxu0 %v345
  %541 = vmatmul.mubr.bf16.gmra.mxu0 %v344
  %v542 = vpop.f32.mrf.mxu0
  %v543 = vadd.f32 %v335, %v542
  %v544 = vpop.f32.mrf.mxu0
  %v545 = vadd.f32 %v337, %v544
  %v546 = vpop.f32.mrf.mxu0
  %v547 = vpop.f32.mrf.mxu0
  %548 = vdwg.mxu0
  %v549 = vld [vmem:[%s43] sm:$0xff]
  %v550 = vld [vmem:[%s43 + $0x8] sm:$0x11]
  %s551 = scalar_lea.vmem %s1, 512
  %v552 = vld [vmem:[%s551] sm:$0xff]
  %v553 = vld [vmem:[%s551 + $0x8] sm:$0xff]
  %v554 = vld [vmem:[%s551 + $0x10] sm:$0xff]
  %v555 = vld [vmem:[%s551 + $0x18] sm:$0xff]
  %v556 = vld [vmem:[%s551 + $0x20] sm:$0xff]
  %v557 = vld [vmem:[%s551 + $0x28] sm:$0xff]
  %v558 = vld [vmem:[%s551 + $0x30] sm:$0xff]
  %v559 = vld [vmem:[%s551 + $0x38] sm:$0xff]
  %v560 = vld [vmem:[%s551 + $0x40] sm:$0xff]
  %v561 = vld [vmem:[%s551 + $0x48] sm:$0xff]
  %v562 = vld [vmem:[%s551 + $0x50] sm:$0xff]
  %v563 = vld [vmem:[%s551 + $0x58] sm:$0xff]
  %v564 = vld [vmem:[%s551 + $0x60] sm:$0xff]
  %v565 = vld [vmem:[%s551 + $0x68] sm:$0xff]
  %v566 = vld [vmem:[%s551 + $0x70] sm:$0xff]
  %v567 = vld [vmem:[%s551 + $0x78] sm:$0xff]
  %v568 = vld [vmem:[%s551 + $0x80] sm:$0xff]
  %v569 = vld [vmem:[%s551 + $0x88] sm:$0xff]
  %v570 = vld [vmem:[%s551 + $0x90] sm:$0xff]
  %v571 = vld [vmem:[%s551 + $0x98] sm:$0xff]
  %v572 = vld [vmem:[%s551 + $0xa0] sm:$0xff]
  %v573 = vld [vmem:[%s551 + $0xa8] sm:$0xff]
  %v574 = vld [vmem:[%s551 + $0xb0] sm:$0xff]
  %v575 = vld [vmem:[%s551 + $0xb8] sm:$0xff]
  %v576 = vld [vmem:[%s551 + $0xc0] sm:$0xff]
  %v577 = vld [vmem:[%s551 + $0xc8] sm:$0xff]
  %v578 = vld [vmem:[%s551 + $0xd0] sm:$0xff]
  %v579 = vld [vmem:[%s551 + $0xd8] sm:$0xff]
  %v580 = vld [vmem:[%s551 + $0xe0] sm:$0xff]
  %v581 = vld [vmem:[%s551 + $0xe8] sm:$0xff]
  %v582 = vld [vmem:[%s551 + $0xf0] sm:$0xff]
  %v583 = vld [vmem:[%s551 + $0xf8] sm:$0xff]
  %v586 = vunpack.c.l.b16 %v549
  %v587 = vunpack.c.h.b16 %v549
  %v588 = vunpack.c.l.b16 %v550
  %v589 = vunpack.c.h.b16 %v550
  %v590 = vpack.c.b16 %v588, %v586
  %v591 = vpack.c.b16 %v589, %v587
  %v593 = vshrl.u32 %v590, 16
  %v595 = vshll.u32 %v590, 16
  %v597 = vrot.slane %v595, 1
  %v598 = vor.u32 %v593, %v597
  %v600 = vshrl.u32 %v591, 16
  %v602 = vshll.u32 %v591, 16
  %v604 = vrot.slane %v602, 1
  %v605 = vor.u32 %v600, %v604
  %v640 = vunpack.c.l.b16 %v552
  %v641 = vunpack.c.h.b16 %v552
  %v642 = vunpack.c.l.b16 %v553
  %v643 = vunpack.c.h.b16 %v553
  %v644 = vunpack.c.l.b16 %v554
  %v645 = vunpack.c.h.b16 %v554
  %v646 = vunpack.c.l.b16 %v555
  %v647 = vunpack.c.h.b16 %v555
  %v648 = vunpack.c.l.b16 %v556
  %v649 = vunpack.c.h.b16 %v556
  %v650 = vunpack.c.l.b16 %v557
  %v651 = vunpack.c.h.b16 %v557
  %v652 = vunpack.c.l.b16 %v558
  %v653 = vunpack.c.h.b16 %v558
  %v654 = vunpack.c.l.b16 %v559
  %v655 = vunpack.c.h.b16 %v559
  %v656 = vunpack.c.l.b16 %v560
  %v657 = vunpack.c.h.b16 %v560
  %v658 = vunpack.c.l.b16 %v561
  %v659 = vunpack.c.h.b16 %v561
  %v660 = vunpack.c.l.b16 %v562
  %v661 = vunpack.c.h.b16 %v562
  %v662 = vunpack.c.l.b16 %v563
  %v663 = vunpack.c.h.b16 %v563
  %v664 = vunpack.c.l.b16 %v564
  %v665 = vunpack.c.h.b16 %v564
  %v666 = vunpack.c.l.b16 %v565
  %v667 = vunpack.c.h.b16 %v565
  %v668 = vunpack.c.l.b16 %v566
  %v669 = vunpack.c.h.b16 %v566
  %v670 = vunpack.c.l.b16 %v567
  %v671 = vunpack.c.h.b16 %v567
  %v672 = vunpack.c.l.b16 %v568
  %v673 = vunpack.c.h.b16 %v568
  %v674 = vunpack.c.l.b16 %v569
  %v675 = vunpack.c.h.b16 %v569
  %v676 = vunpack.c.l.b16 %v570
  %v677 = vunpack.c.h.b16 %v570
  %v678 = vunpack.c.l.b16 %v571
  %v679 = vunpack.c.h.b16 %v571
  %v680 = vunpack.c.l.b16 %v572
  %v681 = vunpack.c.h.b16 %v572
  %v682 = vunpack.c.l.b16 %v573
  %v683 = vunpack.c.h.b16 %v573
  %v684 = vunpack.c.l.b16 %v574
  %v685 = vunpack.c.h.b16 %v574
  %v686 = vunpack.c.l.b16 %v575
  %v687 = vunpack.c.h.b16 %v575
  %v688 = vunpack.c.l.b16 %v576
  %v689 = vunpack.c.h.b16 %v576
  %v690 = vunpack.c.l.b16 %v577
  %v691 = vunpack.c.h.b16 %v577
  %v692 = vunpack.c.l.b16 %v578
  %v693 = vunpack.c.h.b16 %v578
  %v694 = vunpack.c.l.b16 %v579
  %v695 = vunpack.c.h.b16 %v579
  %v696 = vunpack.c.l.b16 %v580
  %v697 = vunpack.c.h.b16 %v580
  %v698 = vunpack.c.l.b16 %v581
  %v699 = vunpack.c.h.b16 %v581
  %v700 = vunpack.c.l.b16 %v582
  %v701 = vunpack.c.h.b16 %v582
  %v702 = vunpack.c.l.b16 %v583
  %v703 = vunpack.c.h.b16 %v583
  %v704 = vpack.c.b16 %v642, %v640
  %v705 = vpack.c.b16 %v643, %v641
  %v706 = vpack.c.b16 %v646, %v644
  %v707 = vpack.c.b16 %v647, %v645
  %v708 = vpack.c.b16 %v650, %v648
  %v709 = vpack.c.b16 %v651, %v649
  %v710 = vpack.c.b16 %v654, %v652
  %v711 = vpack.c.b16 %v655, %v653
  %v712 = vpack.c.b16 %v658, %v656
  %v713 = vpack.c.b16 %v659, %v657
  %v714 = vpack.c.b16 %v662, %v660
  %v715 = vpack.c.b16 %v663, %v661
  %v716 = vpack.c.b16 %v666, %v664
  %v717 = vpack.c.b16 %v667, %v665
  %v718 = vpack.c.b16 %v670, %v668
  %v719 = vpack.c.b16 %v671, %v669
  %v720 = vpack.c.b16 %v674, %v672
  %v721 = vpack.c.b16 %v675, %v673
  %v722 = vpack.c.b16 %v678, %v676
  %v723 = vpack.c.b16 %v679, %v677
  %v724 = vpack.c.b16 %v682, %v680
  %v725 = vpack.c.b16 %v683, %v681
  %v726 = vpack.c.b16 %v686, %v684
  %v727 = vpack.c.b16 %v687, %v685
  %v728 = vpack.c.b16 %v690, %v688
  %v729 = vpack.c.b16 %v691, %v689
  %v730 = vpack.c.b16 %v694, %v692
  %v731 = vpack.c.b16 %v695, %v693
  %v732 = vpack.c.b16 %v698, %v696
  %v733 = vpack.c.b16 %v699, %v697
  %v734 = vpack.c.b16 %v702, %v700
  %v735 = vpack.c.b16 %v703, %v701
  %768 = vmatprep.subr.bf16.mxu0 %v719
  %769 = vmatpush1.bf16.msra.mxu0 %v718
  %770 = vmatprep.subr.bf16.mxu0 %v717
  %771 = vmatpush1.bf16.msra.mxu0 %v716
  %772 = vmatprep.subr.bf16.mxu0 %v715
  %773 = vmatpush1.bf16.msra.mxu0 %v714
  %774 = vmatprep.subr.bf16.mxu0 %v713
  %775 = vmatpush1.bf16.msra.mxu0 %v712
  %776 = vmatprep.subr.bf16.mxu0 %v711
  %777 = vmatpush1.bf16.msra.mxu0 %v710
  %778 = vmatprep.subr.bf16.mxu0 %v709
  %779 = vmatpush1.bf16.msra.mxu0 %v708
  %780 = vmatprep.subr.bf16.mxu0 %v707
  %781 = vmatpush1.bf16.msra.mxu0 %v706
  %782 = vmatprep.subr.bf16.mxu0 %v705
  %783 = vmatpush1.bf16.msra.mxu0 %v704
  %784 = vmatprep.subr.bf16.mxu0 %v735
  %785 = vmatpush2.bf16.msra.mxu0 %v734
  %786 = vmatprep.subr.bf16.mxu0 %v733
  %787 = vmatpush2.bf16.msra.mxu0 %v732
  %788 = vmatprep.subr.bf16.mxu0 %v731
  %789 = vmatpush2.bf16.msra.mxu0 %v730
  %790 = vmatprep.subr.bf16.mxu0 %v729
  %791 = vmatpush2.bf16.msra.mxu0 %v728
  %792 = vmatprep.subr.bf16.mxu0 %v727
  %793 = vmatpush2.bf16.msra.mxu0 %v726
  %794 = vmatprep.subr.bf16.mxu0 %v725
  %795 = vmatpush2.bf16.msra.mxu0 %v724
  %796 = vmatprep.subr.bf16.mxu0 %v723
  %797 = vmatpush2.bf16.msra.mxu0 %v722
  %798 = vmatprep.subr.bf16.mxu0 %v721
  %799 = vmatpush2.bf16.msra.mxu0 %v720
  %800 = vmatprep.mubr.bf16.mxu0 %v605
  %801 = vmatmul.mubr.bf16.gmra.mxu0 %v598
  %v802 = vpop.f32.mrf.mxu0
  %v803 = vadd.f32 0.0, %v802
  %v804 = vpop.f32.mrf.mxu0
  %v805 = vadd.f32 0.0, %v804
  %v806 = vpop.f32.mrf.mxu0
  %v807 = vpop.f32.mrf.mxu0
  %808 = vdwg.mxu0
  %v809 = vadd.f32 %v543, %v803
  %v810 = vadd.f32 %v545, %v805
  %v811 = vpack.c.bf16 %v809, %v809
  %v812 = vpack.c.bf16 %v810, %v810
  %v815 = vunpack.c.l.b16 %v811
  %v816 = vunpack.c.l.b16 %v812
  %v817 = vpack.c.b16 %v816, %v815
  %819 = vst [vmem:[%s52] sm:$0xff] %v817
  %v820 = vrot.slane %v809, 4
  %v821 = vadd.f32 %v809, %v820
  %v822 = vrot.slane %v821, 2
  %v823 = vadd.f32 %v821, %v822
  %v824 = vrot.slane %v823, 1
  %v825 = vadd.f32 %v823, %v824
  %v826 = vrot.slane %v810, 4
  %v827 = vadd.f32 %v810, %v826
  %v828 = vrot.slane %v827, 2
  %v829 = vadd.f32 %v827, %v828
  %v830 = vrot.slane %v829, 1
  %v831 = vadd.f32 %v829, %v830
  %v832 = vadd.f32 %v825, 0.0
  %v833 = vadd.f32 %v831, 0.0
  %v834 = vmul.f32 %v809, %v809
  %v835 = vmul.f32 %v810, %v810
  %v836 = vrot.slane %v834, 4
  %v837 = vadd.f32 %v834, %v836
  %v838 = vrot.slane %v837, 2
  %v839 = vadd.f32 %v837, %v838
  %v840 = vrot.slane %v839, 1
  %v841 = vadd.f32 %v839, %v840
  %v842 = vrot.slane %v835, 4
  %v843 = vadd.f32 %v835, %v842
  %v844 = vrot.slane %v843, 2
  %v845 = vadd.f32 %v843, %v844
  %v846 = vrot.slane %v845, 1
  %v847 = vadd.f32 %v845, %v846
  %v848 = vadd.f32 %v841, 0.0
  %v849 = vadd.f32 %v847, 0.0
  %s850 = scalar_lea.vmem %s43, 16
  %v851 = vld [vmem:[%s850] sm:$0xff]
  %v852 = vld [vmem:[%s1] sm:$0xff]
  %v853 = vld [vmem:[%s1 + $0x8] sm:$0xff]
  %v854 = vld [vmem:[%s1 + $0x10] sm:$0xff]
  %v855 = vld [vmem:[%s1 + $0x18] sm:$0xff]
  %v856 = vld [vmem:[%s1 + $0x20] sm:$0xff]
  %v857 = vld [vmem:[%s1 + $0x28] sm:$0xff]
  %v858 = vld [vmem:[%s1 + $0x30] sm:$0xff]
  %v859 = vld [vmem:[%s1 + $0x38] sm:$0xff]
  %v860 = vld [vmem:[%s1 + $0x40] sm:$0xff]
  %v861 = vld [vmem:[%s1 + $0x48] sm:$0xff]
  %v862 = vld [vmem:[%s1 + $0x50] sm:$0xff]
  %v863 = vld [vmem:[%s1 + $0x58] sm:$0xff]
  %v864 = vld [vmem:[%s1 + $0x60] sm:$0xff]
  %v865 = vld [vmem:[%s1 + $0x68] sm:$0xff]
  %v866 = vld [vmem:[%s1 + $0x70] sm:$0xff]
  %v867 = vld [vmem:[%s1 + $0x78] sm:$0xff]
  %v868 = vld [vmem:[%s1 + $0x80] sm:$0xff]
  %v869 = vld [vmem:[%s1 + $0x88] sm:$0xff]
  %v870 = vld [vmem:[%s1 + $0x90] sm:$0xff]
  %v871 = vld [vmem:[%s1 + $0x98] sm:$0xff]
  %v872 = vld [vmem:[%s1 + $0xa0] sm:$0xff]
  %v873 = vld [vmem:[%s1 + $0xa8] sm:$0xff]
  %v874 = vld [vmem:[%s1 + $0xb0] sm:$0xff]
  %v875 = vld [vmem:[%s1 + $0xb8] sm:$0xff]
  %v876 = vld [vmem:[%s1 + $0xc0] sm:$0xff]
  %v877 = vld [vmem:[%s1 + $0xc8] sm:$0xff]
  %v878 = vld [vmem:[%s1 + $0xd0] sm:$0xff]
  %v879 = vld [vmem:[%s1 + $0xd8] sm:$0xff]
  %v880 = vld [vmem:[%s1 + $0xe0] sm:$0xff]
  %v881 = vld [vmem:[%s1 + $0xe8] sm:$0xff]
  %v882 = vld [vmem:[%s1 + $0xf0] sm:$0xff]
  %v883 = vld [vmem:[%s1 + $0xf8] sm:$0xff]
  %s884 = scalar_lea.vmem %s43, 48
  %v885 = vld [vmem:[%s884] sm:$0xff]
  %v886 = vld [vmem:[%s100] sm:$0xff]
  %v887 = vld [vmem:[%s100 + $0x8] sm:$0xff]
  %v888 = vld [vmem:[%s100 + $0x10] sm:$0xff]
  %v889 = vld [vmem:[%s100 + $0x18] sm:$0xff]
  %v890 = vld [vmem:[%s100 + $0x20] sm:$0xff]
  %v891 = vld [vmem:[%s100 + $0x28] sm:$0xff]
  %v892 = vld [vmem:[%s100 + $0x30] sm:$0xff]
  %v893 = vld [vmem:[%s100 + $0x38] sm:$0xff]
  %v894 = vld [vmem:[%s100 + $0x40] sm:$0xff]
  %v895 = vld [vmem:[%s100 + $0x48] sm:$0xff]
  %v896 = vld [vmem:[%s100 + $0x50] sm:$0xff]
  %v897 = vld [vmem:[%s100 + $0x58] sm:$0xff]
  %v898 = vld [vmem:[%s100 + $0x60] sm:$0xff]
  %v899 = vld [vmem:[%s100 + $0x68] sm:$0xff]
  %v900 = vld [vmem:[%s100 + $0x70] sm:$0xff]
  %v901 = vld [vmem:[%s100 + $0x78] sm:$0xff]
  %v902 = vld [vmem:[%s100 + $0x80] sm:$0xff]
  %v903 = vld [vmem:[%s100 + $0x88] sm:$0xff]
  %v904 = vld [vmem:[%s100 + $0x90] sm:$0xff]
  %v905 = vld [vmem:[%s100 + $0x98] sm:$0xff]
  %v906 = vld [vmem:[%s100 + $0xa0] sm:$0xff]
  %v907 = vld [vmem:[%s100 + $0xa8] sm:$0xff]
  %v908 = vld [vmem:[%s100 + $0xb0] sm:$0xff]
  %v909 = vld [vmem:[%s100 + $0xb8] sm:$0xff]
  %v910 = vld [vmem:[%s100 + $0xc0] sm:$0xff]
  %v911 = vld [vmem:[%s100 + $0xc8] sm:$0xff]
  %v912 = vld [vmem:[%s100 + $0xd0] sm:$0xff]
  %v913 = vld [vmem:[%s100 + $0xd8] sm:$0xff]
  %v914 = vld [vmem:[%s100 + $0xe0] sm:$0xff]
  %v915 = vld [vmem:[%s100 + $0xe8] sm:$0xff]
  %v916 = vld [vmem:[%s100 + $0xf0] sm:$0xff]
  %v917 = vld [vmem:[%s100 + $0xf8] sm:$0xff]
  %v919 = vunpack.c.l.b16 %v885
  %v920 = vunpack.c.h.b16 %v885
  %v921 = vpack.c.b16 %v919, %v919
  %v922 = vpack.c.b16 %v920, %v920
  %v957 = vunpack.c.l.b16 %v886
  %v958 = vunpack.c.h.b16 %v886
  %v959 = vunpack.c.l.b16 %v887
  %v960 = vunpack.c.h.b16 %v887
  %v961 = vunpack.c.l.b16 %v888
  %v962 = vunpack.c.h.b16 %v888
  %v963 = vunpack.c.l.b16 %v889
  %v964 = vunpack.c.h.b16 %v889
  %v965 = vunpack.c.l.b16 %v890
  %v966 = vunpack.c.h.b16 %v890
  %v967 = vunpack.c.l.b16 %v891
  %v968 = vunpack.c.h.b16 %v891
  %v969 = vunpack.c.l.b16 %v892
  %v970 = vunpack.c.h.b16 %v892
  %v971 = vunpack.c.l.b16 %v893
  %v972 = vunpack.c.h.b16 %v893
  %v973 = vunpack.c.l.b16 %v894
  %v974 = vunpack.c.h.b16 %v894
  %v975 = vunpack.c.l.b16 %v895
  %v976 = vunpack.c.h.b16 %v895
  %v977 = vunpack.c.l.b16 %v896
  %v978 = vunpack.c.h.b16 %v896
  %v979 = vunpack.c.l.b16 %v897
  %v980 = vunpack.c.h.b16 %v897
  %v981 = vunpack.c.l.b16 %v898
  %v982 = vunpack.c.h.b16 %v898
  %v983 = vunpack.c.l.b16 %v899
  %v984 = vunpack.c.h.b16 %v899
  %v985 = vunpack.c.l.b16 %v900
  %v986 = vunpack.c.h.b16 %v900
  %v987 = vunpack.c.l.b16 %v901
  %v988 = vunpack.c.h.b16 %v901
  %v989 = vunpack.c.l.b16 %v902
  %v990 = vunpack.c.h.b16 %v902
  %v991 = vunpack.c.l.b16 %v903
  %v992 = vunpack.c.h.b16 %v903
  %v993 = vunpack.c.l.b16 %v904
  %v994 = vunpack.c.h.b16 %v904
  %v995 = vunpack.c.l.b16 %v905
  %v996 = vunpack.c.h.b16 %v905
  %v997 = vunpack.c.l.b16 %v906
  %v998 = vunpack.c.h.b16 %v906
  %v999 = vunpack.c.l.b16 %v907
  %v1000 = vunpack.c.h.b16 %v907
  %v1001 = vunpack.c.l.b16 %v908
  %v1002 = vunpack.c.h.b16 %v908
  %v1003 = vunpack.c.l.b16 %v909
  %v1004 = vunpack.c.h.b16 %v909
  %v1005 = vunpack.c.l.b16 %v910
  %v1006 = vunpack.c.h.b16 %v910
  %v1007 = vunpack.c.l.b16 %v911
  %v1008 = vunpack.c.h.b16 %v911
  %v1009 = vunpack.c.l.b16 %v912
  %v1010 = vunpack.c.h.b16 %v912
  %v1011 = vunpack.c.l.b16 %v913
  %v1012 = vunpack.c.h.b16 %v913
  %v1013 = vunpack.c.l.b16 %v914
  %v1014 = vunpack.c.h.b16 %v914
  %v1015 = vunpack.c.l.b16 %v915
  %v1016 = vunpack.c.h.b16 %v915
  %v1017 = vunpack.c.l.b16 %v916
  %v1018 = vunpack.c.h.b16 %v916
  %v1019 = vunpack.c.l.b16 %v917
  %v1020 = vunpack.c.h.b16 %v917
  %v1021 = vpack.c.b16 %v959, %v957
  %v1022 = vpack.c.b16 %v960, %v958
  %v1023 = vpack.c.b16 %v963, %v961
  %v1024 = vpack.c.b16 %v964, %v962
  %v1025 = vpack.c.b16 %v967, %v965
  %v1026 = vpack.c.b16 %v968, %v966
  %v1027 = vpack.c.b16 %v971, %v969
  %v1028 = vpack.c.b16 %v972, %v970
  %v1029 = vpack.c.b16 %v975, %v973
  %v1030 = vpack.c.b16 %v976, %v974
  %v1031 = vpack.c.b16 %v979, %v977
  %v1032 = vpack.c.b16 %v980, %v978
  %v1033 = vpack.c.b16 %v983, %v981
  %v1034 = vpack.c.b16 %v984, %v982
  %v1035 = vpack.c.b16 %v987, %v985
  %v1036 = vpack.c.b16 %v988, %v986
  %v1037 = vpack.c.b16 %v991, %v989
  %v1038 = vpack.c.b16 %v992, %v990
  %v1039 = vpack.c.b16 %v995, %v993
  %v1040 = vpack.c.b16 %v996, %v994
  %v1041 = vpack.c.b16 %v999, %v997
  %v1042 = vpack.c.b16 %v1000, %v998
  %v1043 = vpack.c.b16 %v1003, %v1001
  %v1044 = vpack.c.b16 %v1004, %v1002
  %v1045 = vpack.c.b16 %v1007, %v1005
  %v1046 = vpack.c.b16 %v1008, %v1006
  %v1047 = vpack.c.b16 %v1011, %v1009
  %v1048 = vpack.c.b16 %v1012, %v1010
  %v1049 = vpack.c.b16 %v1015, %v1013
  %v1050 = vpack.c.b16 %v1016, %v1014
  %v1051 = vpack.c.b16 %v1019, %v1017
  %v1052 = vpack.c.b16 %v1020, %v1018
  %1085 = vmatprep.subr.bf16.mxu0 %v1036
  %1086 = vmatpush1.bf16.msra.mxu0 %v1035
  %1087 = vmatprep.subr.bf16.mxu0 %v1034
  %1088 = vmatpush1.bf16.msra.mxu0 %v1033
  %1089 = vmatprep.subr.bf16.mxu0 %v1032
  %1090 = vmatpush1.bf16.msra.mxu0 %v1031
  %1091 = vmatprep.subr.bf16.mxu0 %v1030
  %1092 = vmatpush1.bf16.msra.mxu0 %v1029
  %1093 = vmatprep.subr.bf16.mxu0 %v1028
  %1094 = vmatpush1.bf16.msra.mxu0 %v1027
  %1095 = vmatprep.subr.bf16.mxu0 %v1026
  %1096 = vmatpush1.bf16.msra.mxu0 %v1025
  %1097 = vmatprep.subr.bf16.mxu0 %v1024
  %1098 = vmatpush1.bf16.msra.mxu0 %v1023
  %1099 = vmatprep.subr.bf16.mxu0 %v1022
  %1100 = vmatpush1.bf16.msra.mxu0 %v1021
  %1101 = vmatprep.subr.bf16.mxu0 %v1052
  %1102 = vmatpush2.bf16.msra.mxu0 %v1051
  %1103 = vmatprep.subr.bf16.mxu0 %v1050
  %1104 = vmatpush2.bf16.msra.mxu0 %v1049
  %1105 = vmatprep.subr.bf16.mxu0 %v1048
  %1106 = vmatpush2.bf16.msra.mxu0 %v1047
  %1107 = vmatprep.subr.bf16.mxu0 %v1046
  %1108 = vmatpush2.bf16.msra.mxu0 %v1045
  %1109 = vmatprep.subr.bf16.mxu0 %v1044
  %1110 = vmatpush2.bf16.msra.mxu0 %v1043
  %1111 = vmatprep.subr.bf16.mxu0 %v1042
  %1112 = vmatpush2.bf16.msra.mxu0 %v1041
  %1113 = vmatprep.subr.bf16.mxu0 %v1040
  %1114 = vmatpush2.bf16.msra.mxu0 %v1039
  %1115 = vmatprep.subr.bf16.mxu0 %v1038
  %1116 = vmatpush2.bf16.msra.mxu0 %v1037
  %1117 = vmatprep.mubr.bf16.mxu0 %v922
  %1118 = vmatmul.mubr.bf16.gmra.mxu0 %v921
  %v1119 = vpop.f32.mrf.mxu0
  %v1120 = vadd.f32 0.0, %v1119
  %v1121 = vpop.f32.mrf.mxu0
  %v1122 = vadd.f32 0.0, %v1121
  %v1123 = vpop.f32.mrf.mxu0
  %v1124 = vpop.f32.mrf.mxu0
  %1125 = vdwg.mxu0
  %v1127 = vunpack.c.l.b16 %v851
  %v1128 = vunpack.c.h.b16 %v851
  %v1129 = vpack.c.b16 %v1127, %v1127
  %v1130 = vpack.c.b16 %v1128, %v1128
  %v1165 = vunpack.c.l.b16 %v852
  %v1166 = vunpack.c.h.b16 %v852
  %v1167 = vunpack.c.l.b16 %v853
  %v1168 = vunpack.c.h.b16 %v853
  %v1169 = vunpack.c.l.b16 %v854
  %v1170 = vunpack.c.h.b16 %v854
  %v1171 = vunpack.c.l.b16 %v855
  %v1172 = vunpack.c.h.b16 %v855
  %v1173 = vunpack.c.l.b16 %v856
  %v1174 = vunpack.c.h.b16 %v856
  %v1175 = vunpack.c.l.b16 %v857
  %v1176 = vunpack.c.h.b16 %v857
  %v1177 = vunpack.c.l.b16 %v858
  %v1178 = vunpack.c.h.b16 %v858
  %v1179 = vunpack.c.l.b16 %v859
  %v1180 = vunpack.c.h.b16 %v859
  %v1181 = vunpack.c.l.b16 %v860
  %v1182 = vunpack.c.h.b16 %v860
  %v1183 = vunpack.c.l.b16 %v861
  %v1184 = vunpack.c.h.b16 %v861
  %v1185 = vunpack.c.l.b16 %v862
  %v1186 = vunpack.c.h.b16 %v862
  %v1187 = vunpack.c.l.b16 %v863
  %v1188 = vunpack.c.h.b16 %v863
  %v1189 = vunpack.c.l.b16 %v864
  %v1190 = vunpack.c.h.b16 %v864
  %v1191 = vunpack.c.l.b16 %v865
  %v1192 = vunpack.c.h.b16 %v865
  %v1193 = vunpack.c.l.b16 %v866
  %v1194 = vunpack.c.h.b16 %v866
  %v1195 = vunpack.c.l.b16 %v867
  %v1196 = vunpack.c.h.b16 %v867
  %v1197 = vunpack.c.l.b16 %v868
  %v1198 = vunpack.c.h.b16 %v868
  %v1199 = vunpack.c.l.b16 %v869
  %v1200 = vunpack.c.h.b16 %v869
  %v1201 = vunpack.c.l.b16 %v870
  %v1202 = vunpack.c.h.b16 %v870
  %v1203 = vunpack.c.l.b16 %v871
  %v1204 = vunpack.c.h.b16 %v871
  %v1205 = vunpack.c.l.b16 %v872
  %v1206 = vunpack.c.h.b16 %v872
  %v1207 = vunpack.c.l.b16 %v873
  %v1208 = vunpack.c.h.b16 %v873
  %v1209 = vunpack.c.l.b16 %v874
  %v1210 = vunpack.c.h.b16 %v874
  %v1211 = vunpack.c.l.b16 %v875
  %v1212 = vunpack.c.h.b16 %v875
  %v1213 = vunpack.c.l.b16 %v876
  %v1214 = vunpack.c.h.b16 %v876
  %v1215 = vunpack.c.l.b16 %v877
  %v1216 = vunpack.c.h.b16 %v877
  %v1217 = vunpack.c.l.b16 %v878
  %v1218 = vunpack.c.h.b16 %v878
  %v1219 = vunpack.c.l.b16 %v879
  %v1220 = vunpack.c.h.b16 %v879
  %v1221 = vunpack.c.l.b16 %v880
  %v1222 = vunpack.c.h.b16 %v880
  %v1223 = vunpack.c.l.b16 %v881
  %v1224 = vunpack.c.h.b16 %v881
  %v1225 = vunpack.c.l.b16 %v882
  %v1226 = vunpack.c.h.b16 %v882
  %v1227 = vunpack.c.l.b16 %v883
  %v1228 = vunpack.c.h.b16 %v883
  %v1229 = vpack.c.b16 %v1167, %v1165
  %v1230 = vpack.c.b16 %v1168, %v1166
  %v1231 = vpack.c.b16 %v1171, %v1169
  %v1232 = vpack.c.b16 %v1172, %v1170
  %v1233 = vpack.c.b16 %v1175, %v1173
  %v1234 = vpack.c.b16 %v1176, %v1174
  %v1235 = vpack.c.b16 %v1179, %v1177
  %v1236 = vpack.c.b16 %v1180, %v1178
  %v1237 = vpack.c.b16 %v1183, %v1181
  %v1238 = vpack.c.b16 %v1184, %v1182
  %v1239 = vpack.c.b16 %v1187, %v1185
  %v1240 = vpack.c.b16 %v1188, %v1186
  %v1241 = vpack.c.b16 %v1191, %v1189
  %v1242 = vpack.c.b16 %v1192, %v1190
  %v1243 = vpack.c.b16 %v1195, %v1193
  %v1244 = vpack.c.b16 %v1196, %v1194
  %v1245 = vpack.c.b16 %v1199, %v1197
  %v1246 = vpack.c.b16 %v1200, %v1198
  %v1247 = vpack.c.b16 %v1203, %v1201
  %v1248 = vpack.c.b16 %v1204, %v1202
  %v1249 = vpack.c.b16 %v1207, %v1205
  %v1250 = vpack.c.b16 %v1208, %v1206
  %v1251 = vpack.c.b16 %v1211, %v1209
  %v1252 = vpack.c.b16 %v1212, %v1210
  %v1253 = vpack.c.b16 %v1215, %v1213
  %v1254 = vpack.c.b16 %v1216, %v1214
  %v1255 = vpack.c.b16 %v1219, %v1217
  %v1256 = vpack.c.b16 %v1220, %v1218
  %v1257 = vpack.c.b16 %v1223, %v1221
  %v1258 = vpack.c.b16 %v1224, %v1222
  %v1259 = vpack.c.b16 %v1227, %v1225
  %v1260 = vpack.c.b16 %v1228, %v1226
  %1293 = vmatprep.subr.bf16.mxu0 %v1244
  %1294 = vmatpush1.bf16.msra.mxu0 %v1243
  %1295 = vmatprep.subr.bf16.mxu0 %v1242
  %1296 = vmatpush1.bf16.msra.mxu0 %v1241
  %1297 = vmatprep.subr.bf16.mxu0 %v1240
  %1298 = vmatpush1.bf16.msra.mxu0 %v1239
  %1299 = vmatprep.subr.bf16.mxu0 %v1238
  %1300 = vmatpush1.bf16.msra.mxu0 %v1237
  %1301 = vmatprep.subr.bf16.mxu0 %v1236
  %1302 = vmatpush1.bf16.msra.mxu0 %v1235
  %1303 = vmatprep.subr.bf16.mxu0 %v1234
  %1304 = vmatpush1.bf16.msra.mxu0 %v1233
  %1305 = vmatprep.subr.bf16.mxu0 %v1232
  %1306 = vmatpush1.bf16.msra.mxu0 %v1231
  %1307 = vmatprep.subr.bf16.mxu0 %v1230
  %1308 = vmatpush1.bf16.msra.mxu0 %v1229
  %1309 = vmatprep.subr.bf16.mxu0 %v1260
  %1310 = vmatpush2.bf16.msra.mxu0 %v1259
  %1311 = vmatprep.subr.bf16.mxu0 %v1258
  %1312 = vmatpush2.bf16.msra.mxu0 %v1257
  %1313 = vmatprep.subr.bf16.mxu0 %v1256
  %1314 = vmatpush2.bf16.msra.mxu0 %v1255
  %1315 = vmatprep.subr.bf16.mxu0 %v1254
  %1316 = vmatpush2.bf16.msra.mxu0 %v1253
  %1317 = vmatprep.subr.bf16.mxu0 %v1252
  %1318 = vmatpush2.bf16.msra.mxu0 %v1251
  %1319 = vmatprep.subr.bf16.mxu0 %v1250
  %1320 = vmatpush2.bf16.msra.mxu0 %v1249
  %1321 = vmatprep.subr.bf16.mxu0 %v1248
  %1322 = vmatpush2.bf16.msra.mxu0 %v1247
  %1323 = vmatprep.subr.bf16.mxu0 %v1246
  %1324 = vmatpush2.bf16.msra.mxu0 %v1245
  %1325 = vmatprep.mubr.bf16.mxu0 %v1130
  %1326 = vmatmul.mubr.bf16.gmra.mxu0 %v1129
  %v1327 = vpop.f32.mrf.mxu0
  %v1328 = vadd.f32 %v1120, %v1327
  %v1329 = vpop.f32.mrf.mxu0
  %v1330 = vadd.f32 %v1122, %v1329
  %v1331 = vpop.f32.mrf.mxu0
  %v1332 = vpop.f32.mrf.mxu0
  %1333 = vdwg.mxu0
  %v1334 = vld [vmem:[%s850] sm:$0xff]
  %v1335 = vld [vmem:[%s850 + $0x8] sm:$0x11]
  %v1336 = vld [vmem:[%s551] sm:$0xff]
  %v1337 = vld [vmem:[%s551 + $0x8] sm:$0xff]
  %v1338 = vld [vmem:[%s551 + $0x10] sm:$0xff]
  %v1339 = vld [vmem:[%s551 + $0x18] sm:$0xff]
  %v1340 = vld [vmem:[%s551 + $0x20] sm:$0xff]
  %v1341 = vld [vmem:[%s551 + $0x28] sm:$0xff]
  %v1342 = vld [vmem:[%s551 + $0x30] sm:$0xff]
  %v1343 = vld [vmem:[%s551 + $0x38] sm:$0xff]
  %v1344 = vld [vmem:[%s551 + $0x40] sm:$0xff]
  %v1345 = vld [vmem:[%s551 + $0x48] sm:$0xff]
  %v1346 = vld [vmem:[%s551 + $0x50] sm:$0xff]
  %v1347 = vld [vmem:[%s551 + $0x58] sm:$0xff]
  %v1348 = vld [vmem:[%s551 + $0x60] sm:$0xff]
  %v1349 = vld [vmem:[%s551 + $0x68] sm:$0xff]
  %v1350 = vld [vmem:[%s551 + $0x70] sm:$0xff]
  %v1351 = vld [vmem:[%s551 + $0x78] sm:$0xff]
  %v1352 = vld [vmem:[%s551 + $0x80] sm:$0xff]
  %v1353 = vld [vmem:[%s551 + $0x88] sm:$0xff]
  %v1354 = vld [vmem:[%s551 + $0x90] sm:$0xff]
  %v1355 = vld [vmem:[%s551 + $0x98] sm:$0xff]
  %v1356 = vld [vmem:[%s551 + $0xa0] sm:$0xff]
  %v1357 = vld [vmem:[%s551 + $0xa8] sm:$0xff]
  %v1358 = vld [vmem:[%s551 + $0xb0] sm:$0xff]
  %v1359 = vld [vmem:[%s551 + $0xb8] sm:$0xff]
  %v1360 = vld [vmem:[%s551 + $0xc0] sm:$0xff]
  %v1361 = vld [vmem:[%s551 + $0xc8] sm:$0xff]
  %v1362 = vld [vmem:[%s551 + $0xd0] sm:$0xff]
  %v1363 = vld [vmem:[%s551 + $0xd8] sm:$0xff]
  %v1364 = vld [vmem:[%s551 + $0xe0] sm:$0xff]
  %v1365 = vld [vmem:[%s551 + $0xe8] sm:$0xff]
  %v1366 = vld [vmem:[%s551 + $0xf0] sm:$0xff]
  %v1367 = vld [vmem:[%s551 + $0xf8] sm:$0xff]
  %v1370 = vunpack.c.l.b16 %v1334
  %v1371 = vunpack.c.h.b16 %v1334
  %v1372 = vunpack.c.l.b16 %v1335
  %v1373 = vunpack.c.h.b16 %v1335
  %v1374 = vpack.c.b16 %v1372, %v1370
  %v1375 = vpack.c.b16 %v1373, %v1371
  %v1377 = vshrl.u32 %v1374, 16
  %v1379 = vshll.u32 %v1374, 16
  %v1381 = vrot.slane %v1379, 1
  %v1382 = vor.u32 %v1377, %v1381
  %v1384 = vshrl.u32 %v1375, 16
  %v1386 = vshll.u32 %v1375, 16
  %v1388 = vrot.slane %v1386, 1
  %v1389 = vor.u32 %v1384, %v1388
  %v1424 = vunpack.c.l.b16 %v1336
  %v1425 = vunpack.c.h.b16 %v1336
  %v1426 = vunpack.c.l.b16 %v1337
  %v1427 = vunpack.c.h.b16 %v1337
  %v1428 = vunpack.c.l.b16 %v1338
  %v1429 = vunpack.c.h.b16 %v1338
  %v1430 = vunpack.c.l.b16 %v1339
  %v1431 = vunpack.c.h.b16 %v1339
  %v1432 = vunpack.c.l.b16 %v1340
  %v1433 = vunpack.c.h.b16 %v1340
  %v1434 = vunpack.c.l.b16 %v1341
  %v1435 = vunpack.c.h.b16 %v1341
  %v1436 = vunpack.c.l.b16 %v1342
  %v1437 = vunpack.c.h.b16 %v1342
  %v1438 = vunpack.c.l.b16 %v1343
  %v1439 = vunpack.c.h.b16 %v1343
  %v1440 = vunpack.c.l.b16 %v1344
  %v1441 = vunpack.c.h.b16 %v1344
  %v1442 = vunpack.c.l.b16 %v1345
  %v1443 = vunpack.c.h.b16 %v1345
  %v1444 = vunpack.c.l.b16 %v1346
  %v1445 = vunpack.c.h.b16 %v1346
  %v1446 = vunpack.c.l.b16 %v1347
  %v1447 = vunpack.c.h.b16 %v1347
  %v1448 = vunpack.c.l.b16 %v1348
  %v1449 = vunpack.c.h.b16 %v1348
  %v1450 = vunpack.c.l.b16 %v1349
  %v1451 = vunpack.c.h.b16 %v1349
  %v1452 = vunpack.c.l.b16 %v1350
  %v1453 = vunpack.c.h.b16 %v1350
  %v1454 = vunpack.c.l.b16 %v1351
  %v1455 = vunpack.c.h.b16 %v1351
  %v1456 = vunpack.c.l.b16 %v1352
  %v1457 = vunpack.c.h.b16 %v1352
  %v1458 = vunpack.c.l.b16 %v1353
  %v1459 = vunpack.c.h.b16 %v1353
  %v1460 = vunpack.c.l.b16 %v1354
  %v1461 = vunpack.c.h.b16 %v1354
  %v1462 = vunpack.c.l.b16 %v1355
  %v1463 = vunpack.c.h.b16 %v1355
  %v1464 = vunpack.c.l.b16 %v1356
  %v1465 = vunpack.c.h.b16 %v1356
  %v1466 = vunpack.c.l.b16 %v1357
  %v1467 = vunpack.c.h.b16 %v1357
  %v1468 = vunpack.c.l.b16 %v1358
  %v1469 = vunpack.c.h.b16 %v1358
  %v1470 = vunpack.c.l.b16 %v1359
  %v1471 = vunpack.c.h.b16 %v1359
  %v1472 = vunpack.c.l.b16 %v1360
  %v1473 = vunpack.c.h.b16 %v1360
  %v1474 = vunpack.c.l.b16 %v1361
  %v1475 = vunpack.c.h.b16 %v1361
  %v1476 = vunpack.c.l.b16 %v1362
  %v1477 = vunpack.c.h.b16 %v1362
  %v1478 = vunpack.c.l.b16 %v1363
  %v1479 = vunpack.c.h.b16 %v1363
  %v1480 = vunpack.c.l.b16 %v1364
  %v1481 = vunpack.c.h.b16 %v1364
  %v1482 = vunpack.c.l.b16 %v1365
  %v1483 = vunpack.c.h.b16 %v1365
  %v1484 = vunpack.c.l.b16 %v1366
  %v1485 = vunpack.c.h.b16 %v1366
  %v1486 = vunpack.c.l.b16 %v1367
  %v1487 = vunpack.c.h.b16 %v1367
  %v1488 = vpack.c.b16 %v1426, %v1424
  %v1489 = vpack.c.b16 %v1427, %v1425
  %v1490 = vpack.c.b16 %v1430, %v1428
  %v1491 = vpack.c.b16 %v1431, %v1429
  %v1492 = vpack.c.b16 %v1434, %v1432
  %v1493 = vpack.c.b16 %v1435, %v1433
  %v1494 = vpack.c.b16 %v1438, %v1436
  %v1495 = vpack.c.b16 %v1439, %v1437
  %v1496 = vpack.c.b16 %v1442, %v1440
  %v1497 = vpack.c.b16 %v1443, %v1441
  %v1498 = vpack.c.b16 %v1446, %v1444
  %v1499 = vpack.c.b16 %v1447, %v1445
  %v1500 = vpack.c.b16 %v1450, %v1448
  %v1501 = vpack.c.b16 %v1451, %v1449
  %v1502 = vpack.c.b16 %v1454, %v1452
  %v1503 = vpack.c.b16 %v1455, %v1453
  %v1504 = vpack.c.b16 %v1458, %v1456
  %v1505 = vpack.c.b16 %v1459, %v1457
  %v1506 = vpack.c.b16 %v1462, %v1460
  %v1507 = vpack.c.b16 %v1463, %v1461
  %v1508 = vpack.c.b16 %v1466, %v1464
  %v1509 = vpack.c.b16 %v1467, %v1465
  %v1510 = vpack.c.b16 %v1470, %v1468
  %v1511 = vpack.c.b16 %v1471, %v1469
  %v1512 = vpack.c.b16 %v1474, %v1472
  %v1513 = vpack.c.b16 %v1475, %v1473
  %v1514 = vpack.c.b16 %v1478, %v1476
  %v1515 = vpack.c.b16 %v1479, %v1477
  %v1516 = vpack.c.b16 %v1482, %v1480
  %v1517 = vpack.c.b16 %v1483, %v1481
  %v1518 = vpack.c.b16 %v1486, %v1484
  %v1519 = vpack.c.b16 %v1487, %v1485
  %1552 = vmatprep.subr.bf16.mxu0 %v1503
  %1553 = vmatpush1.bf16.msra.mxu0 %v1502
  %1554 = vmatprep.subr.bf16.mxu0 %v1501
  %1555 = vmatpush1.bf16.msra.mxu0 %v1500
  %1556 = vmatprep.subr.bf16.mxu0 %v1499
  %1557 = vmatpush1.bf16.msra.mxu0 %v1498
  %1558 = vmatprep.subr.bf16.mxu0 %v1497
  %1559 = vmatpush1.bf16.msra.mxu0 %v1496
  %1560 = vmatprep.subr.bf16.mxu0 %v1495
  %1561 = vmatpush1.bf16.msra.mxu0 %v1494
  %1562 = vmatprep.subr.bf16.mxu0 %v1493
  %1563 = vmatpush1.bf16.msra.mxu0 %v1492
  %1564 = vmatprep.subr.bf16.mxu0 %v1491
  %1565 = vmatpush1.bf16.msra.mxu0 %v1490
  %1566 = vmatprep.subr.bf16.mxu0 %v1489
  %1567 = vmatpush1.bf16.msra.mxu0 %v1488
  %1568 = vmatprep.subr.bf16.mxu0 %v1519
  %1569 = vmatpush2.bf16.msra.mxu0 %v1518
  %1570 = vmatprep.subr.bf16.mxu0 %v1517
  %1571 = vmatpush2.bf16.msra.mxu0 %v1516
  %1572 = vmatprep.subr.bf16.mxu0 %v1515
  %1573 = vmatpush2.bf16.msra.mxu0 %v1514
  %1574 = vmatprep.subr.bf16.mxu0 %v1513
  %1575 = vmatpush2.bf16.msra.mxu0 %v1512
  %1576 = vmatprep.subr.bf16.mxu0 %v1511
  %1577 = vmatpush2.bf16.msra.mxu0 %v1510
  %1578 = vmatprep.subr.bf16.mxu0 %v1509
  %1579 = vmatpush2.bf16.msra.mxu0 %v1508
  %1580 = vmatprep.subr.bf16.mxu0 %v1507
  %1581 = vmatpush2.bf16.msra.mxu0 %v1506
  %1582 = vmatprep.subr.bf16.mxu0 %v1505
  %1583 = vmatpush2.bf16.msra.mxu0 %v1504
  %1584 = vmatprep.mubr.bf16.mxu0 %v1389
  %1585 = vmatmul.mubr.bf16.gmra.mxu0 %v1382
  %v1586 = vpop.f32.mrf.mxu0
  %v1587 = vadd.f32 0.0, %v1586
  %v1588 = vpop.f32.mrf.mxu0
  %v1589 = vadd.f32 0.0, %v1588
  %v1590 = vpop.f32.mrf.mxu0
  %v1591 = vpop.f32.mrf.mxu0
  %1592 = vdwg.mxu0
  %v1593 = vadd.f32 %v1328, %v1587
  %v1594 = vadd.f32 %v1330, %v1589
  %v1595 = vpack.c.bf16 %v1593, %v1593
  %v1596 = vpack.c.bf16 %v1594, %v1594
  %v1599 = vunpack.c.l.b16 %v1595
  %v1600 = vunpack.c.l.b16 %v1596
  %v1601 = vpack.c.b16 %v1600, %v1599
  %s1603 = scalar_lea.vmem %s52, 8
  %1604 = vst [vmem:[%s1603] sm:$0xff] %v1601
  %v1605 = vrot.slane %v1593, 4
  %v1606 = vadd.f32 %v1593, %v1605
  %v1607 = vrot.slane %v1606, 2
  %v1608 = vadd.f32 %v1606, %v1607
  %v1609 = vrot.slane %v1608, 1
  %v1610 = vadd.f32 %v1608, %v1609
  %v1611 = vrot.slane %v1594, 4
  %v1612 = vadd.f32 %v1594, %v1611
  %v1613 = vrot.slane %v1612, 2
  %v1614 = vadd.f32 %v1612, %v1613
  %v1615 = vrot.slane %v1614, 1
  %v1616 = vadd.f32 %v1614, %v1615
  %v1617 = vadd.f32 %v832, %v1610
  %v1618 = vadd.f32 %v833, %v1616
  %v1619 = vmul.f32 %v1593, %v1593
  %v1620 = vmul.f32 %v1594, %v1594
  %v1621 = vrot.slane %v1619, 4
  %v1622 = vadd.f32 %v1619, %v1621
  %v1623 = vrot.slane %v1622, 2
  %v1624 = vadd.f32 %v1622, %v1623
  %v1625 = vrot.slane %v1624, 1
  %v1626 = vadd.f32 %v1624, %v1625
  %v1627 = vrot.slane %v1620, 4
  %v1628 = vadd.f32 %v1620, %v1627
  %v1629 = vrot.slane %v1628, 2
  %v1630 = vadd.f32 %v1628, %v1629
  %v1631 = vrot.slane %v1630, 1
  %v1632 = vadd.f32 %v1630, %v1631
  %v1633 = vadd.f32 %v848, %v1626
  %v1634 = vadd.f32 %v849, %v1632
  %v1635 = vld [vmem:[%s3] sm:$0x3]
  %v1638 = vcombine.low %v1617, %v1618
  %v1640 = vunpack.c.l.s4 1966171168
  %v1641 = vunpack.c.0.s8 %v1640
  %v1642 = vlaneseq
  %v1643 = vshrl.u32 %v1642, 7
  %v1644 = vsub.s32 %v1641, %v1643
  %v1645 = vrot.slane %v1638, %v1644
  %v1647 = vunpack.c.l.s4 1966171168
  %v1648 = vunpack.c.0.s8 %v1647
  %v1649 = vlaneseq
  %v1650 = vshrl.u32 %v1649, 7
  %v1651 = vsub.s32 %v1648, %v1650
  %v1652 = vrot.slane %v1645, %v1651
  %v1654 = vadd.f32 %v1635, %v1652
  %v1655 = vlaneseq
  %vm1656 = vcmp.ge.s32.totalorder %v1655, 0
  %vm1657 = vcmp.lt.s32.totalorder %v1655, 256
  %vm1658 = vmand %vm1656, %vm1657
  %1659 = vst.msk [vmem:[%s3] sm:$0x3] %vm1658, %v1654
  %v1660 = vld [vmem:[%s4] sm:$0x3]
  %v1663 = vcombine.low %v1633, %v1634
  %v1665 = vunpack.c.l.s4 1966171168
  %v1666 = vunpack.c.0.s8 %v1665
  %v1667 = vlaneseq
  %v1668 = vshrl.u32 %v1667, 7
  %v1669 = vsub.s32 %v1666, %v1668
  %v1670 = vrot.slane %v1663, %v1669
  %v1672 = vunpack.c.l.s4 1966171168
  %v1673 = vunpack.c.0.s8 %v1672
  %v1674 = vlaneseq
  %v1675 = vshrl.u32 %v1674, 7
  %v1676 = vsub.s32 %v1673, %v1675
  %v1677 = vrot.slane %v1670, %v1676
  %v1679 = vadd.f32 %v1660, %v1677
  %1680 = vst.msk [vmem:[%s4] sm:$0x3] %vm1658, %v1679
  %s1681 = sadd.s32 0, 0
  %s1682 = smul.u32 2, %s1681
  %p1683 = scmp.lt.s32.totalorder %s1682, 1
  %s1684 = scalar_select %p1683, %s1682, 1
  %s1685 = smul.addr %s1684, 2
  %s1686 = smul.addr %s1685, 4
  %s1687 = scalar_lea.vmem %s2, %s1686
  // Predicated region
  $region14: #{_lambda_.21} parent=0 // pred_check
    _
  $region15: #{_lambda_.21} parent=0 // pred_check_branch
    %1689 = sbr.rel (0) target = $region17
  $region16: #{_lambda_.21} parent=0 // pred_region
    %s1690 = sadd.s32 0, 0
    %s1691 = smul.u32 2, %s1690
  $region17: #{_lambda_.21} parent=0 // pred_fallthru
    _
  // Predicated region
  $region18: #{_lambda_.21} parent=0 // pred_check
    _
  $region19: #{_lambda_.21} parent=0 // pred_check_branch
    %1693 = sbr.rel (0) target = $region21
  $region20: #{_lambda_.21} parent=0 // pred_region
    _
  $region21: #{_lambda_.21} parent=0 // pred_fallthru
    _
  // Predicated region
  $region22: #{_lambda_.21} parent=0 // pred_check
    _
  $region23: #{_lambda_.21} parent=0 // pred_check_branch
    %1695 = sbr.rel (0) target = $region25
  $region24: #{_lambda_.21} parent=0 // pred_region
    _
  $region25: #{_lambda_.21} parent=0 // pred_fallthru
    _
  // Predicated region
  $region26: #{_lambda_.21} parent=0 // pred_check
    _
  $region27: #{_lambda_.21} parent=0 // pred_check_branch
    %1697 = sbr.rel (0) target = $region29
  $region28: #{_lambda_.21} parent=0 // pred_region
    %s1698 = sadd.s32 0, 0
    %s1699 = smul.u32 2, %s1698
    %p1700 = scmp.lt.s32.totalorder %s1699, 1
    %s1701 = scalar_select %p1700, %s1699, 1
    %s1702 = smul.addr %s1701, 2
    %s1703 = smul.addr %s1702, 4
    %s1704 = scalar_lea.vmem %s2, %s1703
  $region29: #{_lambda_.21} parent=0 // pred_fallthru
    _
  // Predicated region
  $region30: #{_lambda_.21} parent=0 // pred_check
    _
  $region31: #{_lambda_.21} parent=0 // pred_check_branch
    %1706 = sbr.rel (0) target = $region33
  $region32: #{_lambda_.21} parent=0 // pred_region
    _
  $region33: #{_lambda_.21} parent=0 // pred_fallthru
    _
  // Predicated region
  $region34: #{_lambda_.21} parent=0 // pred_check
    _
  $region35: #{_lambda_.21} parent=0 // pred_check_branch
    %1708 = sbr.rel (0) target = $region37
  $region36: #{_lambda_.21} parent=0 // pred_region
    _
  $region37: #{_lambda_.21} parent=0 // pred_fallthru
    _

// kernel: _lambda_.24
$region0: #{_lambda_.24}
  #allocation0 [shape = 'u32[]', space=smem, size = 0x4, offset = 0x4, fixed_abs, tag = 'smem constant byte address 0x4 - core index']
  #allocation1 [shape = 'u32[144,128]{1,0:T(1,128)}', space=vmem, size = 0x12000, scoped, tag = 'internal scratch']
  %s0 = inlined_call_operand.vmem [shape: bf16[2,8,256], index: 0, kind: input, shape index: {}, may-alias: {0,4}]
  %s1 = inlined_call_operand.vmem [shape: f32[1,1,256], index: 1, kind: input, shape index: {}]
  %s2 = inlined_call_operand.vmem [shape: f32[1,1,256], index: 2, kind: input, shape index: {}]
  %s3 = inlined_call_operand.vmem [shape: bf16[2,8,256], index: 3, kind: input, shape index: {}]
  %s4 = inlined_call_operand.vmem [shape: bf16[2,8,256], index: 4, kind: output, shape index: {}, may-alias: {0,4}]
  %s5 = sld [smem:[#allocation0]]
  $region26: #{_lambda_.24} parent=0
    _
  %s7 = ssub.s32 1, %s5
  %s8 = scalar_select 0, %s7, %s5
  // Predicated region
  $region2: #{_lambda_.24} parent=0 // pred_check
    _
  $region3: #{_lambda_.24} parent=0 // pred_check_branch
    %10 = sbr.rel (0) target = $region5
  $region4: #{_lambda_.24} parent=0 // pred_region
    _
  $region5: #{_lambda_.24} parent=0 // pred_fallthru
    _
  // Predicated region
  $region6: #{_lambda_.24} parent=0 // pred_check
    _
  $region7: #{_lambda_.24} parent=0 // pred_check_branch
    %12 = sbr.rel (0) target = $region9
  $region8: #{_lambda_.24} parent=0 // pred_region
    _
  $region9: #{_lambda_.24} parent=0 // pred_fallthru
    _
  // Predicated region
  $region10: #{_lambda_.24} parent=0 // pred_check
    _
  $region11: #{_lambda_.24} parent=0 // pred_check_branch
    %14 = sbr.rel (0) target = $region13
  $region12: #{_lambda_.24} parent=0 // pred_region
    _
  $region13: #{_lambda_.24} parent=0 // pred_fallthru
    _
  // Predicated region
  $region14: #{_lambda_.24} parent=0 // pred_check
    _
  $region15: #{_lambda_.24} parent=0 // pred_check_branch
    %16 = sbr.rel (0) target = $region17
  $region16: #{_lambda_.24} parent=0 // pred_region
    _
  $region17: #{_lambda_.24} parent=0 // pred_fallthru
    _
  %v17 = vld [vmem:[%s0] sm:$0xff]
  %v18 = vld [vmem:[%s0 + $0x8] sm:$0xff]
  %v19 = vunpack.c.l.bf16 %v17
  %v20 = vunpack.c.h.bf16 %v17
  %v21 = vunpack.c.l.bf16 %v18
  %v22 = vunpack.c.h.bf16 %v18
  %v23 = vld [vmem:[%s1] sm:$0x3]
  %v25 = vlaneseq
  %v26 = vshrl.u32 %v25, 7
  %v27 = vsub.s32 0, %v26
  %v28 = vrot.slane %v23, %v27
  %v29 = vlaneseq
  %v30 = vshrl.u32 %v29, 7
  %v31 = vsub.s32 1, %v30
  %v32 = vrot.slane %v23, %v31
  %v35 = vmul.f32 %v19, %v28
  %v36 = vmul.f32 %v20, %v32
  %v37 = vmul.f32 %v21, %v28
  %v38 = vmul.f32 %v22, %v32
  %v39 = vld [vmem:[%s2] sm:$0x3]
  %v41 = vlaneseq
  %v42 = vshrl.u32 %v41, 7
  %v43 = vsub.s32 0, %v42
  %v44 = vrot.slane %v39, %v43
  %v45 = vlaneseq
  %v46 = vshrl.u32 %v45, 7
  %v47 = vsub.s32 1, %v46
  %v48 = vrot.slane %v39, %v47
  %v51 = vadd.f32 %v35, %v44
  %v52 = vadd.f32 %v36, %v48
  %v53 = vadd.f32 %v37, %v44
  %v54 = vadd.f32 %v38, %v48
  %v55 = vld [vmem:[%s3] sm:$0xff]
  %v56 = vld [vmem:[%s3 + $0x8] sm:$0xff]
  %v57 = vunpack.c.l.bf16 %v55
  %v58 = vunpack.c.h.bf16 %v55
  %v59 = vunpack.c.l.bf16 %v56
  %v60 = vunpack.c.h.bf16 %v56
  %v61 = vadd.f32 %v51, %v57
  %v62 = vadd.f32 %v52, %v58
  %v63 = vadd.f32 %v53, %v59
  %v64 = vadd.f32 %v54, %v60
  %v65 = vmax.f32 %v61, 0.0
  %v66 = vmax.f32 %v62, 0.0
  %v67 = vmax.f32 %v63, 0.0
  %v68 = vmax.f32 %v64, 0.0
  %v69 = vpack.c.bf16 %v65, %v65
  %v70 = vpack.c.bf16 %v66, %v66
  %v71 = vpack.c.bf16 %v67, %v67
  %v72 = vpack.c.bf16 %v68, %v68
  %v77 = vunpack.c.l.b16 %v69
  %v78 = vunpack.c.l.b16 %v70
  %v79 = vunpack.c.l.b16 %v71
  %v80 = vunpack.c.l.b16 %v72
  %v81 = vpack.c.b16 %v78, %v77
  %v82 = vpack.c.b16 %v80, %v79
  %85 = vst [vmem:[%s4] sm:$0xff] %v81
  %86 = vst [vmem:[%s4 + $0x8] sm:$0xff] %v82
  // Predicated region
  $region18: #{_lambda_.24} parent=0 // pred_check
    _
  $region19: #{_lambda_.24} parent=0 // pred_check_branch
    %88 = sbr.rel (0) target = $region21
  $region20: #{_lambda_.24} parent=0 // pred_region
    _
  $region21: #{_lambda_.24} parent=0 // pred_fallthru
    _
  // Predicated region
  $region22: #{_lambda_.24} parent=0 // pred_check
    _
  $region23: #{_lambda_.24} parent=0 // pred_check_branch
    %90 = sbr.rel (0) target = $region25
  $region24: #{_lambda_.24} parent=0 // pred_region
    _
  $region25: #{_lambda_.24} parent=0 // pred_fallthru
    _

// kernel: _lambda_.23
$region0: #{_lambda_.23}
  #allocation0 [shape = 'u32[]', space=smem, size = 0x4, offset = 0x4, fixed_abs, tag = 'smem constant byte address 0x4 - core index']
  #allocation1 [shape = 'u32[144,128]{1,0:T(1,128)}', space=vmem, size = 0x12000, scoped, tag = 'internal scratch']
  %s0 = inlined_call_operand.vmem [shape: bf16[1,2,10,256], index: 0, kind: input, shape index: {}]
  %s1 = inlined_call_operand.vmem [shape: bf16[3,256,256], index: 1, kind: input, shape index: {}]
  %s2 = inlined_call_operand.vmem [shape: bf16[2,8,256], index: 2, kind: output, shape index: {0}]
  %s3 = inlined_call_operand.vmem [shape: f32[1,1,256], index: 3, kind: output, shape index: {1}]
  %s4 = inlined_call_operand.vmem [shape: f32[1,1,256], index: 4, kind: output, shape index: {2}]
  %5 = xla_tuple %s2, %s3, %s4
  %s6 = sld [smem:[#allocation0]]
  $region38: #{_lambda_.23} parent=0
    _
  %s8 = ssub.s32 1, %s6
  %s9 = scalar_select 0, %s8, %s6
  // Predicated region
  $region2: #{_lambda_.23} parent=0 // pred_check
    _
  $region3: #{_lambda_.23} parent=0 // pred_check_branch
    %11 = sbr.rel (0) target = $region5
  $region4: #{_lambda_.23} parent=0 // pred_region
    %s12 = sadd.s32 0, 0
    %s13 = smul.u32 2, %s12
    %p14 = scmp.lt.s32.totalorder %s13, 1
    %s15 = scalar_select %p14, %s13, 1
    %s16 = smul.addr %s15, 4
    %s17 = smul.addr %s16, 4
    %s18 = scalar_lea.vmem %s0, %s17
    %s19 = sadd.s32 0, 0
    %s20 = smul.u32 2, %s19
  $region5: #{_lambda_.23} parent=0 // pred_fallthru
    _
  // Predicated region
  $region6: #{_lambda_.23} parent=0 // pred_check
    _
  $region7: #{_lambda_.23} parent=0 // pred_check_branch
    %22 = sbr.rel (0) target = $region9
  $region8: #{_lambda_.23} parent=0 // pred_region
    _
  $region9: #{_lambda_.23} parent=0 // pred_fallthru
    _
  %s23 = sadd.s32 0, 0
  %s24 = smul.u32 2, %s23
  %p25 = scmp.lt.s32.totalorder %s24, 1
  %s26 = scalar_select %p25, %s24, 1
  %s27 = smul.addr %s26, 4
  %s28 = smul.addr %s27, 4
  %s29 = scalar_lea.vmem %s0, %s28
  %s30 = sadd.s32 0, 0
  %s31 = smul.u32 2, %s30
  %p32 = scmp.lt.s32.totalorder %s31, 1
  %s33 = scalar_select %p32, %s31, 1
  %s34 = smul.addr %s33, 2
  %s35 = smul.addr %s34, 4
  %s36 = scalar_lea.vmem %s2, %s35
  %s37 = sadd.s32 0, 0
  %s38 = smul.u32 2, %s37
  %p39 = scmp.lt.s32.totalorder %s38, 1
  %s40 = scalar_select %p39, %s38, 1
  %s41 = smul.addr %s40, 4
  %s42 = smul.addr %s41, 4
  %s43 = scalar_lea.vmem %s0, %s42
  %s44 = sadd.s32 0, 0
  %s45 = smul.u32 2, %s44
  %s46 = sadd.s32 0, 0
  %s47 = smul.u32 2, %s46
  %p48 = scmp.lt.s32.totalorder %s47, 1
  %s49 = scalar_select %p48, %s47, 1
  %s50 = smul.addr %s49, 2
  %s51 = smul.addr %s50, 4
  %s52 = scalar_lea.vmem %s2, %s51
  %s53 = sadd.s32 0, 0
  %s54 = smul.u32 2, %s53
  %p55 = scmp.eq.s32.totalorder 0, 0
  // Predicated region
  $region10: #{_lambda_.23} parent=0 // pred_check
    %p56 = pneg %p55
  $region11: #{_lambda_.23} parent=0 // pred_check_branch
    %58 = sbr.rel (%p56) target = $region13
  $region12: #{_lambda_.23} parent=0 // pred_region
    %v59 = vlaneseq
    %vm60 = vcmp.ge.s32.totalorder %v59, 0
    %vm61 = vcmp.lt.s32.totalorder %v59, 256
    %vm62 = vmand %vm60, %vm61
    %63 = vst.msk [vmem:[%s3] sm:$0x3] %vm62, 0.0
    %64 = vst.msk [vmem:[%s4] sm:$0x3] %vm62, 0.0
  $region13: #{_lambda_.23} parent=0 // pred_fallthru
    _
  %v65 = vld [vmem:[%s43] sm:$0xff]
  %v66 = vld [vmem:[%s1] sm:$0xff]
  %v67 = vld [vmem:[%s1 + $0x8] sm:$0xff]
  %v68 = vld [vmem:[%s1 + $0x10] sm:$0xff]
  %v69 = vld [vmem:[%s1 + $0x18] sm:$0xff]
  %v70 = vld [vmem:[%s1 + $0x20] sm:$0xff]
  %v71 = vld [vmem:[%s1 + $0x28] sm:$0xff]
  %v72 = vld [vmem:[%s1 + $0x30] sm:$0xff]
  %v73 = vld [vmem:[%s1 + $0x38] sm:$0xff]
  %v74 = vld [vmem:[%s1 + $0x40] sm:$0xff]
  %v75 = vld [vmem:[%s1 + $0x48] sm:$0xff]
  %v76 = vld [vmem:[%s1 + $0x50] sm:$0xff]
  %v77 = vld [vmem:[%s1 + $0x58] sm:$0xff]
  %v78 = vld [vmem:[%s1 + $0x60] sm:$0xff]
  %v79 = vld [vmem:[%s1 + $0x68] sm:$0xff]
  %v80 = vld [vmem:[%s1 + $0x70] sm:$0xff]
  %v81 = vld [vmem:[%s1 + $0x78] sm:$0xff]
  %v82 = vld [vmem:[%s1 + $0x80] sm:$0xff]
  %v83 = vld [vmem:[%s1 + $0x88] sm:$0xff]
  %v84 = vld [vmem:[%s1 + $0x90] sm:$0xff]
  %v85 = vld [vmem:[%s1 + $0x98] sm:$0xff]
  %v86 = vld [vmem:[%s1 + $0xa0] sm:$0xff]
  %v87 = vld [vmem:[%s1 + $0xa8] sm:$0xff]
  %v88 = vld [vmem:[%s1 + $0xb0] sm:$0xff]
  %v89 = vld [vmem:[%s1 + $0xb8] sm:$0xff]
  %v90 = vld [vmem:[%s1 + $0xc0] sm:$0xff]
  %v91 = vld [vmem:[%s1 + $0xc8] sm:$0xff]
  %v92 = vld [vmem:[%s1 + $0xd0] sm:$0xff]
  %v93 = vld [vmem:[%s1 + $0xd8] sm:$0xff]
  %v94 = vld [vmem:[%s1 + $0xe0] sm:$0xff]
  %v95 = vld [vmem:[%s1 + $0xe8] sm:$0xff]
  %v96 = vld [vmem:[%s1 + $0xf0] sm:$0xff]
  %v97 = vld [vmem:[%s1 + $0xf8] sm:$0xff]
  %v98 = vld [vmem:[%s43 + $0x8] sm:$0x11]
  %s99 = scalar_lea.vmem %s1, 256
  %v100 = vld [vmem:[%s99] sm:$0xff]
  %v101 = vld [vmem:[%s99 + $0x8] sm:$0xff]
  %v102 = vld [vmem:[%s99 + $0x10] sm:$0xff]
  %v103 = vld [vmem:[%s99 + $0x18] sm:$0xff]
  %v104 = vld [vmem:[%s99 + $0x20] sm:$0xff]
  %v105 = vld [vmem:[%s99 + $0x28] sm:$0xff]
  %v106 = vld [vmem:[%s99 + $0x30] sm:$0xff]
  %v107 = vld [vmem:[%s99 + $0x38] sm:$0xff]
  %v108 = vld [vmem:[%s99 + $0x40] sm:$0xff]
  %v109 = vld [vmem:[%s99 + $0x48] sm:$0xff]
  %v110 = vld [vmem:[%s99 + $0x50] sm:$0xff]
  %v111 = vld [vmem:[%s99 + $0x58] sm:$0xff]
  %v112 = vld [vmem:[%s99 + $0x60] sm:$0xff]
  %v113 = vld [vmem:[%s99 + $0x68] sm:$0xff]
  %v114 = vld [vmem:[%s99 + $0x70] sm:$0xff]
  %v115 = vld [vmem:[%s99 + $0x78] sm:$0xff]
  %v116 = vld [vmem:[%s99 + $0x80] sm:$0xff]
  %v117 = vld [vmem:[%s99 + $0x88] sm:$0xff]
  %v118 = vld [vmem:[%s99 + $0x90] sm:$0xff]
  %v119 = vld [vmem:[%s99 + $0x98] sm:$0xff]
  %v120 = vld [vmem:[%s99 + $0xa0] sm:$0xff]
  %v121 = vld [vmem:[%s99 + $0xa8] sm:$0xff]
  %v122 = vld [vmem:[%s99 + $0xb0] sm:$0xff]
  %v123 = vld [vmem:[%s99 + $0xb8] sm:$0xff]
  %v124 = vld [vmem:[%s99 + $0xc0] sm:$0xff]
  %v125 = vld [vmem:[%s99 + $0xc8] sm:$0xff]
  %v126 = vld [vmem:[%s99 + $0xd0] sm:$0xff]
  %v127 = vld [vmem:[%s99 + $0xd8] sm:$0xff]
  %v128 = vld [vmem:[%s99 + $0xe0] sm:$0xff]
  %v129 = vld [vmem:[%s99 + $0xe8] sm:$0xff]
  %v130 = vld [vmem:[%s99 + $0xf0] sm:$0xff]
  %v131 = vld [vmem:[%s99 + $0xf8] sm:$0xff]
  %v134 = vunpack.c.l.b16 %v65
  %v135 = vunpack.c.h.b16 %v65
  %v136 = vunpack.c.l.b16 %v98
  %v137 = vunpack.c.h.b16 %v98
  %v138 = vpack.c.b16 %v136, %v134
  %v139 = vpack.c.b16 %v137, %v135
  %v141 = vshrl.u32 %v138, 16
  %v143 = vshll.u32 %v138, 16
  %v145 = vrot.slane %v143, 1
  %v146 = vor.u32 %v141, %v145
  %v148 = vshrl.u32 %v139, 16
  %v150 = vshll.u32 %v139, 16
  %v152 = vrot.slane %v150, 1
  %v153 = vor.u32 %v148, %v152
  %v188 = vunpack.c.l.b16 %v100
  %v189 = vunpack.c.h.b16 %v100
  %v190 = vunpack.c.l.b16 %v101
  %v191 = vunpack.c.h.b16 %v101
  %v192 = vunpack.c.l.b16 %v102
  %v193 = vunpack.c.h.b16 %v102
  %v194 = vunpack.c.l.b16 %v103
  %v195 = vunpack.c.h.b16 %v103
  %v196 = vunpack.c.l.b16 %v104
  %v197 = vunpack.c.h.b16 %v104
  %v198 = vunpack.c.l.b16 %v105
  %v199 = vunpack.c.h.b16 %v105
  %v200 = vunpack.c.l.b16 %v106
  %v201 = vunpack.c.h.b16 %v106
  %v202 = vunpack.c.l.b16 %v107
  %v203 = vunpack.c.h.b16 %v107
  %v204 = vunpack.c.l.b16 %v108
  %v205 = vunpack.c.h.b16 %v108
  %v206 = vunpack.c.l.b16 %v109
  %v207 = vunpack.c.h.b16 %v109
  %v208 = vunpack.c.l.b16 %v110
  %v209 = vunpack.c.h.b16 %v110
  %v210 = vunpack.c.l.b16 %v111
  %v211 = vunpack.c.h.b16 %v111
  %v212 = vunpack.c.l.b16 %v112
  %v213 = vunpack.c.h.b16 %v112
  %v214 = vunpack.c.l.b16 %v113
  %v215 = vunpack.c.h.b16 %v113
  %v216 = vunpack.c.l.b16 %v114
  %v217 = vunpack.c.h.b16 %v114
  %v218 = vunpack.c.l.b16 %v115
  %v219 = vunpack.c.h.b16 %v115
  %v220 = vunpack.c.l.b16 %v116
  %v221 = vunpack.c.h.b16 %v116
  %v222 = vunpack.c.l.b16 %v117
  %v223 = vunpack.c.h.b16 %v117
  %v224 = vunpack.c.l.b16 %v118
  %v225 = vunpack.c.h.b16 %v118
  %v226 = vunpack.c.l.b16 %v119
  %v227 = vunpack.c.h.b16 %v119
  %v228 = vunpack.c.l.b16 %v120
  %v229 = vunpack.c.h.b16 %v120
  %v230 = vunpack.c.l.b16 %v121
  %v231 = vunpack.c.h.b16 %v121
  %v232 = vunpack.c.l.b16 %v122
  %v233 = vunpack.c.h.b16 %v122
  %v234 = vunpack.c.l.b16 %v123
  %v235 = vunpack.c.h.b16 %v123
  %v236 = vunpack.c.l.b16 %v124
  %v237 = vunpack.c.h.b16 %v124
  %v238 = vunpack.c.l.b16 %v125
  %v239 = vunpack.c.h.b16 %v125
  %v240 = vunpack.c.l.b16 %v126
  %v241 = vunpack.c.h.b16 %v126
  %v242 = vunpack.c.l.b16 %v127
  %v243 = vunpack.c.h.b16 %v127
  %v244 = vunpack.c.l.b16 %v128
  %v245 = vunpack.c.h.b16 %v128
  %v246 = vunpack.c.l.b16 %v129
  %v247 = vunpack.c.h.b16 %v129
  %v248 = vunpack.c.l.b16 %v130
  %v249 = vunpack.c.h.b16 %v130
  %v250 = vunpack.c.l.b16 %v131
  %v251 = vunpack.c.h.b16 %v131
  %v252 = vpack.c.b16 %v190, %v188
  %v253 = vpack.c.b16 %v191, %v189
  %v254 = vpack.c.b16 %v194, %v192
  %v255 = vpack.c.b16 %v195, %v193
  %v256 = vpack.c.b16 %v198, %v196
  %v257 = vpack.c.b16 %v199, %v197
  %v258 = vpack.c.b16 %v202, %v200
  %v259 = vpack.c.b16 %v203, %v201
  %v260 = vpack.c.b16 %v206, %v204
  %v261 = vpack.c.b16 %v207, %v205
  %v262 = vpack.c.b16 %v210, %v208
  %v263 = vpack.c.b16 %v211, %v209
  %v264 = vpack.c.b16 %v214, %v212
  %v265 = vpack.c.b16 %v215, %v213
  %v266 = vpack.c.b16 %v218, %v216
  %v267 = vpack.c.b16 %v219, %v217
  %v268 = vpack.c.b16 %v222, %v220
  %v269 = vpack.c.b16 %v223, %v221
  %v270 = vpack.c.b16 %v226, %v224
  %v271 = vpack.c.b16 %v227, %v225
  %v272 = vpack.c.b16 %v230, %v228
  %v273 = vpack.c.b16 %v231, %v229
  %v274 = vpack.c.b16 %v234, %v232
  %v275 = vpack.c.b16 %v235, %v233
  %v276 = vpack.c.b16 %v238, %v236
  %v277 = vpack.c.b16 %v239, %v237
  %v278 = vpack.c.b16 %v242, %v240
  %v279 = vpack.c.b16 %v243, %v241
  %v280 = vpack.c.b16 %v246, %v244
  %v281 = vpack.c.b16 %v247, %v245
  %v282 = vpack.c.b16 %v250, %v248
  %v283 = vpack.c.b16 %v251, %v249
  %316 = vmatprep.subr.bf16.mxu0 %v267
  %317 = vmatpush1.bf16.msra.mxu0 %v266
  %318 = vmatprep.subr.bf16.mxu0 %v265
  %319 = vmatpush1.bf16.msra.mxu0 %v264
  %320 = vmatprep.subr.bf16.mxu0 %v263
  %321 = vmatpush1.bf16.msra.mxu0 %v262
  %322 = vmatprep.subr.bf16.mxu0 %v261
  %323 = vmatpush1.bf16.msra.mxu0 %v260
  %324 = vmatprep.subr.bf16.mxu0 %v259
  %325 = vmatpush1.bf16.msra.mxu0 %v258
  %326 = vmatprep.subr.bf16.mxu0 %v257
  %327 = vmatpush1.bf16.msra.mxu0 %v256
  %328 = vmatprep.subr.bf16.mxu0 %v255
  %329 = vmatpush1.bf16.msra.mxu0 %v254
  %330 = vmatprep.subr.bf16.mxu0 %v253
  %331 = vmatpush1.bf16.msra.mxu0 %v252
  %332 = vmatprep.subr.bf16.mxu0 %v283
  %333 = vmatpush2.bf16.msra.mxu0 %v282
  %334 = vmatprep.subr.bf16.mxu0 %v281
  %335 = vmatpush2.bf16.msra.mxu0 %v280
  %336 = vmatprep.subr.bf16.mxu0 %v279
  %337 = vmatpush2.bf16.msra.mxu0 %v278
  %338 = vmatprep.subr.bf16.mxu0 %v277
  %339 = vmatpush2.bf16.msra.mxu0 %v276
  %340 = vmatprep.subr.bf16.mxu0 %v275
  %341 = vmatpush2.bf16.msra.mxu0 %v274
  %342 = vmatprep.subr.bf16.mxu0 %v273
  %343 = vmatpush2.bf16.msra.mxu0 %v272
  %344 = vmatprep.subr.bf16.mxu0 %v271
  %345 = vmatpush2.bf16.msra.mxu0 %v270
  %346 = vmatprep.subr.bf16.mxu0 %v269
  %347 = vmatpush2.bf16.msra.mxu0 %v268
  %348 = vmatprep.mubr.bf16.mxu0 %v153
  %349 = vmatmul.mubr.bf16.gmra.mxu0 %v146
  %v350 = vpop.f32.mrf.mxu0
  %v351 = vadd.f32 0.0, %v350
  %v352 = vpop.f32.mrf.mxu0
  %v353 = vadd.f32 0.0, %v352
  %v354 = vpop.f32.mrf.mxu0
  %v355 = vpop.f32.mrf.mxu0
  %356 = vdwg.mxu0
  %v357 = vpack.c.b16 %v134, %v134
  %v358 = vpack.c.b16 %v135, %v135
  %v393 = vunpack.c.l.b16 %v66
  %v394 = vunpack.c.h.b16 %v66
  %v395 = vunpack.c.l.b16 %v67
  %v396 = vunpack.c.h.b16 %v67
  %v397 = vunpack.c.l.b16 %v68
  %v398 = vunpack.c.h.b16 %v68
  %v399 = vunpack.c.l.b16 %v69
  %v400 = vunpack.c.h.b16 %v69
  %v401 = vunpack.c.l.b16 %v70
  %v402 = vunpack.c.h.b16 %v70
  %v403 = vunpack.c.l.b16 %v71
  %v404 = vunpack.c.h.b16 %v71
  %v405 = vunpack.c.l.b16 %v72
  %v406 = vunpack.c.h.b16 %v72
  %v407 = vunpack.c.l.b16 %v73
  %v408 = vunpack.c.h.b16 %v73
  %v409 = vunpack.c.l.b16 %v74
  %v410 = vunpack.c.h.b16 %v74
  %v411 = vunpack.c.l.b16 %v75
  %v412 = vunpack.c.h.b16 %v75
  %v413 = vunpack.c.l.b16 %v76
  %v414 = vunpack.c.h.b16 %v76
  %v415 = vunpack.c.l.b16 %v77
  %v416 = vunpack.c.h.b16 %v77
  %v417 = vunpack.c.l.b16 %v78
  %v418 = vunpack.c.h.b16 %v78
  %v419 = vunpack.c.l.b16 %v79
  %v420 = vunpack.c.h.b16 %v79
  %v421 = vunpack.c.l.b16 %v80
  %v422 = vunpack.c.h.b16 %v80
  %v423 = vunpack.c.l.b16 %v81
  %v424 = vunpack.c.h.b16 %v81
  %v425 = vunpack.c.l.b16 %v82
  %v426 = vunpack.c.h.b16 %v82
  %v427 = vunpack.c.l.b16 %v83
  %v428 = vunpack.c.h.b16 %v83
  %v429 = vunpack.c.l.b16 %v84
  %v430 = vunpack.c.h.b16 %v84
  %v431 = vunpack.c.l.b16 %v85
  %v432 = vunpack.c.h.b16 %v85
  %v433 = vunpack.c.l.b16 %v86
  %v434 = vunpack.c.h.b16 %v86
  %v435 = vunpack.c.l.b16 %v87
  %v436 = vunpack.c.h.b16 %v87
  %v437 = vunpack.c.l.b16 %v88
  %v438 = vunpack.c.h.b16 %v88
  %v439 = vunpack.c.l.b16 %v89
  %v440 = vunpack.c.h.b16 %v89
  %v441 = vunpack.c.l.b16 %v90
  %v442 = vunpack.c.h.b16 %v90
  %v443 = vunpack.c.l.b16 %v91
  %v444 = vunpack.c.h.b16 %v91
  %v445 = vunpack.c.l.b16 %v92
  %v446 = vunpack.c.h.b16 %v92
  %v447 = vunpack.c.l.b16 %v93
  %v448 = vunpack.c.h.b16 %v93
  %v449 = vunpack.c.l.b16 %v94
  %v450 = vunpack.c.h.b16 %v94
  %v451 = vunpack.c.l.b16 %v95
  %v452 = vunpack.c.h.b16 %v95
  %v453 = vunpack.c.l.b16 %v96
  %v454 = vunpack.c.h.b16 %v96
  %v455 = vunpack.c.l.b16 %v97
  %v456 = vunpack.c.h.b16 %v97
  %v457 = vpack.c.b16 %v395, %v393
  %v458 = vpack.c.b16 %v396, %v394
  %v459 = vpack.c.b16 %v399, %v397
  %v460 = vpack.c.b16 %v400, %v398
  %v461 = vpack.c.b16 %v403, %v401
  %v462 = vpack.c.b16 %v404, %v402
  %v463 = vpack.c.b16 %v407, %v405
  %v464 = vpack.c.b16 %v408, %v406
  %v465 = vpack.c.b16 %v411, %v409
  %v466 = vpack.c.b16 %v412, %v410
  %v467 = vpack.c.b16 %v415, %v413
  %v468 = vpack.c.b16 %v416, %v414
  %v469 = vpack.c.b16 %v419, %v417
  %v470 = vpack.c.b16 %v420, %v418
  %v471 = vpack.c.b16 %v423, %v421
  %v472 = vpack.c.b16 %v424, %v422
  %v473 = vpack.c.b16 %v427, %v425
  %v474 = vpack.c.b16 %v428, %v426
  %v475 = vpack.c.b16 %v431, %v429
  %v476 = vpack.c.b16 %v432, %v430
  %v477 = vpack.c.b16 %v435, %v433
  %v478 = vpack.c.b16 %v436, %v434
  %v479 = vpack.c.b16 %v439, %v437
  %v480 = vpack.c.b16 %v440, %v438
  %v481 = vpack.c.b16 %v443, %v441
  %v482 = vpack.c.b16 %v444, %v442
  %v483 = vpack.c.b16 %v447, %v445
  %v484 = vpack.c.b16 %v448, %v446
  %v485 = vpack.c.b16 %v451, %v449
  %v486 = vpack.c.b16 %v452, %v450
  %v487 = vpack.c.b16 %v455, %v453
  %v488 = vpack.c.b16 %v456, %v454
  %521 = vmatprep.subr.bf16.mxu0 %v472
  %522 = vmatpush1.bf16.msra.mxu0 %v471
  %523 = vmatprep.subr.bf16.mxu0 %v470
  %524 = vmatpush1.bf16.msra.mxu0 %v469
  %525 = vmatprep.subr.bf16.mxu0 %v468
  %526 = vmatpush1.bf16.msra.mxu0 %v467
  %527 = vmatprep.subr.bf16.mxu0 %v466
  %528 = vmatpush1.bf16.msra.mxu0 %v465
  %529 = vmatprep.subr.bf16.mxu0 %v464
  %530 = vmatpush1.bf16.msra.mxu0 %v463
  %531 = vmatprep.subr.bf16.mxu0 %v462
  %532 = vmatpush1.bf16.msra.mxu0 %v461
  %533 = vmatprep.subr.bf16.mxu0 %v460
  %534 = vmatpush1.bf16.msra.mxu0 %v459
  %535 = vmatprep.subr.bf16.mxu0 %v458
  %536 = vmatpush1.bf16.msra.mxu0 %v457
  %537 = vmatprep.subr.bf16.mxu0 %v488
  %538 = vmatpush2.bf16.msra.mxu0 %v487
  %539 = vmatprep.subr.bf16.mxu0 %v486
  %540 = vmatpush2.bf16.msra.mxu0 %v485
  %541 = vmatprep.subr.bf16.mxu0 %v484
  %542 = vmatpush2.bf16.msra.mxu0 %v483
  %543 = vmatprep.subr.bf16.mxu0 %v482
  %544 = vmatpush2.bf16.msra.mxu0 %v481
  %545 = vmatprep.subr.bf16.mxu0 %v480
  %546 = vmatpush2.bf16.msra.mxu0 %v479
  %547 = vmatprep.subr.bf16.mxu0 %v478
  %548 = vmatpush2.bf16.msra.mxu0 %v477
  %549 = vmatprep.subr.bf16.mxu0 %v476
  %550 = vmatpush2.bf16.msra.mxu0 %v475
  %551 = vmatprep.subr.bf16.mxu0 %v474
  %552 = vmatpush2.bf16.msra.mxu0 %v473
  %553 = vmatprep.mubr.bf16.mxu0 %v358
  %554 = vmatmul.mubr.bf16.gmra.mxu0 %v357
  %v555 = vpop.f32.mrf.mxu0
  %v556 = vadd.f32 %v351, %v555
  %v557 = vpop.f32.mrf.mxu0
  %v558 = vadd.f32 %v353, %v557
  %v559 = vpop.f32.mrf.mxu0
  %v560 = vpop.f32.mrf.mxu0
  %561 = vdwg.mxu0
  %v562 = vld [vmem:[%s43] sm:$0xee]
  %s563 = scalar_lea.vmem %s1, 512
  %v564 = vld [vmem:[%s563] sm:$0xff]
  %v565 = vld [vmem:[%s563 + $0x8] sm:$0xff]
  %v566 = vld [vmem:[%s563 + $0x10] sm:$0xff]
  %v567 = vld [vmem:[%s563 + $0x18] sm:$0xff]
  %v568 = vld [vmem:[%s563 + $0x20] sm:$0xff]
  %v569 = vld [vmem:[%s563 + $0x28] sm:$0xff]
  %v570 = vld [vmem:[%s563 + $0x30] sm:$0xff]
  %v571 = vld [vmem:[%s563 + $0x38] sm:$0xff]
  %v572 = vld [vmem:[%s563 + $0x40] sm:$0xff]
  %v573 = vld [vmem:[%s563 + $0x48] sm:$0xff]
  %v574 = vld [vmem:[%s563 + $0x50] sm:$0xff]
  %v575 = vld [vmem:[%s563 + $0x58] sm:$0xff]
  %v576 = vld [vmem:[%s563 + $0x60] sm:$0xff]
  %v577 = vld [vmem:[%s563 + $0x68] sm:$0xff]
  %v578 = vld [vmem:[%s563 + $0x70] sm:$0xff]
  %v579 = vld [vmem:[%s563 + $0x78] sm:$0xff]
  %v580 = vld [vmem:[%s563 + $0x80] sm:$0xff]
  %v581 = vld [vmem:[%s563 + $0x88] sm:$0xff]
  %v582 = vld [vmem:[%s563 + $0x90] sm:$0xff]
  %v583 = vld [vmem:[%s563 + $0x98] sm:$0xff]
  %v584 = vld [vmem:[%s563 + $0xa0] sm:$0xff]
  %v585 = vld [vmem:[%s563 + $0xa8] sm:$0xff]
  %v586 = vld [vmem:[%s563 + $0xb0] sm:$0xff]
  %v587 = vld [vmem:[%s563 + $0xb8] sm:$0xff]
  %v588 = vld [vmem:[%s563 + $0xc0] sm:$0xff]
  %v589 = vld [vmem:[%s563 + $0xc8] sm:$0xff]
  %v590 = vld [vmem:[%s563 + $0xd0] sm:$0xff]
  %v591 = vld [vmem:[%s563 + $0xd8] sm:$0xff]
  %v592 = vld [vmem:[%s563 + $0xe0] sm:$0xff]
  %v593 = vld [vmem:[%s563 + $0xe8] sm:$0xff]
  %v594 = vld [vmem:[%s563 + $0xf0] sm:$0xff]
  %v595 = vld [vmem:[%s563 + $0xf8] sm:$0xff]
  %v597 = vunpack.c.l.b16 %v562
  %v598 = vunpack.c.h.b16 %v562
  %v599 = vpack.c.b16 %v136, %v597
  %v600 = vpack.c.b16 %v137, %v598
  %v601 = vrot.slane %v599, 1
  %v602 = vrot.slane %v600, 1
  %v637 = vunpack.c.l.b16 %v564
  %v638 = vunpack.c.h.b16 %v564
  %v639 = vunpack.c.l.b16 %v565
  %v640 = vunpack.c.h.b16 %v565
  %v641 = vunpack.c.l.b16 %v566
  %v642 = vunpack.c.h.b16 %v566
  %v643 = vunpack.c.l.b16 %v567
  %v644 = vunpack.c.h.b16 %v567
  %v645 = vunpack.c.l.b16 %v568
  %v646 = vunpack.c.h.b16 %v568
  %v647 = vunpack.c.l.b16 %v569
  %v648 = vunpack.c.h.b16 %v569
  %v649 = vunpack.c.l.b16 %v570
  %v650 = vunpack.c.h.b16 %v570
  %v651 = vunpack.c.l.b16 %v571
  %v652 = vunpack.c.h.b16 %v571
  %v653 = vunpack.c.l.b16 %v572
  %v654 = vunpack.c.h.b16 %v572
  %v655 = vunpack.c.l.b16 %v573
  %v656 = vunpack.c.h.b16 %v573
  %v657 = vunpack.c.l.b16 %v574
  %v658 = vunpack.c.h.b16 %v574
  %v659 = vunpack.c.l.b16 %v575
  %v660 = vunpack.c.h.b16 %v575
  %v661 = vunpack.c.l.b16 %v576
  %v662 = vunpack.c.h.b16 %v576
  %v663 = vunpack.c.l.b16 %v577
  %v664 = vunpack.c.h.b16 %v577
  %v665 = vunpack.c.l.b16 %v578
  %v666 = vunpack.c.h.b16 %v578
  %v667 = vunpack.c.l.b16 %v579
  %v668 = vunpack.c.h.b16 %v579
  %v669 = vunpack.c.l.b16 %v580
  %v670 = vunpack.c.h.b16 %v580
  %v671 = vunpack.c.l.b16 %v581
  %v672 = vunpack.c.h.b16 %v581
  %v673 = vunpack.c.l.b16 %v582
  %v674 = vunpack.c.h.b16 %v582
  %v675 = vunpack.c.l.b16 %v583
  %v676 = vunpack.c.h.b16 %v583
  %v677 = vunpack.c.l.b16 %v584
  %v678 = vunpack.c.h.b16 %v584
  %v679 = vunpack.c.l.b16 %v585
  %v680 = vunpack.c.h.b16 %v585
  %v681 = vunpack.c.l.b16 %v586
  %v682 = vunpack.c.h.b16 %v586
  %v683 = vunpack.c.l.b16 %v587
  %v684 = vunpack.c.h.b16 %v587
  %v685 = vunpack.c.l.b16 %v588
  %v686 = vunpack.c.h.b16 %v588
  %v687 = vunpack.c.l.b16 %v589
  %v688 = vunpack.c.h.b16 %v589
  %v689 = vunpack.c.l.b16 %v590
  %v690 = vunpack.c.h.b16 %v590
  %v691 = vunpack.c.l.b16 %v591
  %v692 = vunpack.c.h.b16 %v591
  %v693 = vunpack.c.l.b16 %v592
  %v694 = vunpack.c.h.b16 %v592
  %v695 = vunpack.c.l.b16 %v593
  %v696 = vunpack.c.h.b16 %v593
  %v697 = vunpack.c.l.b16 %v594
  %v698 = vunpack.c.h.b16 %v594
  %v699 = vunpack.c.l.b16 %v595
  %v700 = vunpack.c.h.b16 %v595
  %v701 = vpack.c.b16 %v639, %v637
  %v702 = vpack.c.b16 %v640, %v638
  %v703 = vpack.c.b16 %v643, %v641
  %v704 = vpack.c.b16 %v644, %v642
  %v705 = vpack.c.b16 %v647, %v645
  %v706 = vpack.c.b16 %v648, %v646
  %v707 = vpack.c.b16 %v651, %v649
  %v708 = vpack.c.b16 %v652, %v650
  %v709 = vpack.c.b16 %v655, %v653
  %v710 = vpack.c.b16 %v656, %v654
  %v711 = vpack.c.b16 %v659, %v657
  %v712 = vpack.c.b16 %v660, %v658
  %v713 = vpack.c.b16 %v663, %v661
  %v714 = vpack.c.b16 %v664, %v662
  %v715 = vpack.c.b16 %v667, %v665
  %v716 = vpack.c.b16 %v668, %v666
  %v717 = vpack.c.b16 %v671, %v669
  %v718 = vpack.c.b16 %v672, %v670
  %v719 = vpack.c.b16 %v675, %v673
  %v720 = vpack.c.b16 %v676, %v674
  %v721 = vpack.c.b16 %v679, %v677
  %v722 = vpack.c.b16 %v680, %v678
  %v723 = vpack.c.b16 %v683, %v681
  %v724 = vpack.c.b16 %v684, %v682
  %v725 = vpack.c.b16 %v687, %v685
  %v726 = vpack.c.b16 %v688, %v686
  %v727 = vpack.c.b16 %v691, %v689
  %v728 = vpack.c.b16 %v692, %v690
  %v729 = vpack.c.b16 %v695, %v693
  %v730 = vpack.c.b16 %v696, %v694
  %v731 = vpack.c.b16 %v699, %v697
  %v732 = vpack.c.b16 %v700, %v698
  %765 = vmatprep.subr.bf16.mxu0 %v716
  %766 = vmatpush1.bf16.msra.mxu0 %v715
  %767 = vmatprep.subr.bf16.mxu0 %v714
  %768 = vmatpush1.bf16.msra.mxu0 %v713
  %769 = vmatprep.subr.bf16.mxu0 %v712
  %770 = vmatpush1.bf16.msra.mxu0 %v711
  %771 = vmatprep.subr.bf16.mxu0 %v710
  %772 = vmatpush1.bf16.msra.mxu0 %v709
  %773 = vmatprep.subr.bf16.mxu0 %v708
  %774 = vmatpush1.bf16.msra.mxu0 %v707
  %775 = vmatprep.subr.bf16.mxu0 %v706
  %776 = vmatpush1.bf16.msra.mxu0 %v705
  %777 = vmatprep.subr.bf16.mxu0 %v704
  %778 = vmatpush1.bf16.msra.mxu0 %v703
  %779 = vmatprep.subr.bf16.mxu0 %v702
  %780 = vmatpush1.bf16.msra.mxu0 %v701
  %781 = vmatprep.subr.bf16.mxu0 %v732
  %782 = vmatpush2.bf16.msra.mxu0 %v731
  %783 = vmatprep.subr.bf16.mxu0 %v730
  %784 = vmatpush2.bf16.msra.mxu0 %v729
  %785 = vmatprep.subr.bf16.mxu0 %v728
  %786 = vmatpush2.bf16.msra.mxu0 %v727
  %787 = vmatprep.subr.bf16.mxu0 %v726
  %788 = vmatpush2.bf16.msra.mxu0 %v725
  %789 = vmatprep.subr.bf16.mxu0 %v724
  %790 = vmatpush2.bf16.msra.mxu0 %v723
  %791 = vmatprep.subr.bf16.mxu0 %v722
  %792 = vmatpush2.bf16.msra.mxu0 %v721
  %793 = vmatprep.subr.bf16.mxu0 %v720
  %794 = vmatpush2.bf16.msra.mxu0 %v719
  %795 = vmatprep.subr.bf16.mxu0 %v718
  %796 = vmatpush2.bf16.msra.mxu0 %v717
  %797 = vmatprep.mubr.bf16.mxu0 %v602
  %798 = vmatmul.mubr.bf16.gmra.mxu0 %v601
  %v799 = vpop.f32.mrf.mxu0
  %v800 = vadd.f32 0.0, %v799
  %v801 = vpop.f32.mrf.mxu0
  %v802 = vadd.f32 0.0, %v801
  %v803 = vpop.f32.mrf.mxu0
  %v804 = vpop.f32.mrf.mxu0
  %805 = vdwg.mxu0
  %v806 = vadd.f32 %v556, %v800
  %v807 = vadd.f32 %v558, %v802
  %v808 = vpack.c.bf16 %v806, %v806
  %v809 = vpack.c.bf16 %v807, %v807
  %v812 = vunpack.c.l.b16 %v808
  %v813 = vunpack.c.l.b16 %v809
  %v814 = vpack.c.b16 %v813, %v812
  %816 = vst [vmem:[%s52] sm:$0xff] %v814
  %v817 = vrot.slane %v806, 4
  %v818 = vadd.f32 %v806, %v817
  %v819 = vrot.slane %v818, 2
  %v820 = vadd.f32 %v818, %v819
  %v821 = vrot.slane %v820, 1
  %v822 = vadd.f32 %v820, %v821
  %v823 = vrot.slane %v807, 4
  %v824 = vadd.f32 %v807, %v823
  %v825 = vrot.slane %v824, 2
  %v826 = vadd.f32 %v824, %v825
  %v827 = vrot.slane %v826, 1
  %v828 = vadd.f32 %v826, %v827
  %v829 = vadd.f32 %v822, 0.0
  %v830 = vadd.f32 %v828, 0.0
  %v831 = vmul.f32 %v806, %v806
  %v832 = vmul.f32 %v807, %v807
  %v833 = vrot.slane %v831, 4
  %v834 = vadd.f32 %v831, %v833
  %v835 = vrot.slane %v834, 2
  %v836 = vadd.f32 %v834, %v835
  %v837 = vrot.slane %v836, 1
  %v838 = vadd.f32 %v836, %v837
  %v839 = vrot.slane %v832, 4
  %v840 = vadd.f32 %v832, %v839
  %v841 = vrot.slane %v840, 2
  %v842 = vadd.f32 %v840, %v841
  %v843 = vrot.slane %v842, 1
  %v844 = vadd.f32 %v842, %v843
  %v845 = vadd.f32 %v838, 0.0
  %v846 = vadd.f32 %v844, 0.0
  %s847 = scalar_lea.vmem %s43, 16
  %v848 = vld [vmem:[%s847] sm:$0xff]
  %v849 = vld [vmem:[%s1] sm:$0xff]
  %v850 = vld [vmem:[%s1 + $0x8] sm:$0xff]
  %v851 = vld [vmem:[%s1 + $0x10] sm:$0xff]
  %v852 = vld [vmem:[%s1 + $0x18] sm:$0xff]
  %v853 = vld [vmem:[%s1 + $0x20] sm:$0xff]
  %v854 = vld [vmem:[%s1 + $0x28] sm:$0xff]
  %v855 = vld [vmem:[%s1 + $0x30] sm:$0xff]
  %v856 = vld [vmem:[%s1 + $0x38] sm:$0xff]
  %v857 = vld [vmem:[%s1 + $0x40] sm:$0xff]
  %v858 = vld [vmem:[%s1 + $0x48] sm:$0xff]
  %v859 = vld [vmem:[%s1 + $0x50] sm:$0xff]
  %v860 = vld [vmem:[%s1 + $0x58] sm:$0xff]
  %v861 = vld [vmem:[%s1 + $0x60] sm:$0xff]
  %v862 = vld [vmem:[%s1 + $0x68] sm:$0xff]
  %v863 = vld [vmem:[%s1 + $0x70] sm:$0xff]
  %v864 = vld [vmem:[%s1 + $0x78] sm:$0xff]
  %v865 = vld [vmem:[%s1 + $0x80] sm:$0xff]
  %v866 = vld [vmem:[%s1 + $0x88] sm:$0xff]
  %v867 = vld [vmem:[%s1 + $0x90] sm:$0xff]
  %v868 = vld [vmem:[%s1 + $0x98] sm:$0xff]
  %v869 = vld [vmem:[%s1 + $0xa0] sm:$0xff]
  %v870 = vld [vmem:[%s1 + $0xa8] sm:$0xff]
  %v871 = vld [vmem:[%s1 + $0xb0] sm:$0xff]
  %v872 = vld [vmem:[%s1 + $0xb8] sm:$0xff]
  %v873 = vld [vmem:[%s1 + $0xc0] sm:$0xff]
  %v874 = vld [vmem:[%s1 + $0xc8] sm:$0xff]
  %v875 = vld [vmem:[%s1 + $0xd0] sm:$0xff]
  %v876 = vld [vmem:[%s1 + $0xd8] sm:$0xff]
  %v877 = vld [vmem:[%s1 + $0xe0] sm:$0xff]
  %v878 = vld [vmem:[%s1 + $0xe8] sm:$0xff]
  %v879 = vld [vmem:[%s1 + $0xf0] sm:$0xff]
  %v880 = vld [vmem:[%s1 + $0xf8] sm:$0xff]
  %v881 = vld [vmem:[%s847 + $0x8] sm:$0x11]
  %v882 = vld [vmem:[%s99] sm:$0xff]
  %v883 = vld [vmem:[%s99 + $0x8] sm:$0xff]
  %v884 = vld [vmem:[%s99 + $0x10] sm:$0xff]
  %v885 = vld [vmem:[%s99 + $0x18] sm:$0xff]
  %v886 = vld [vmem:[%s99 + $0x20] sm:$0xff]
  %v887 = vld [vmem:[%s99 + $0x28] sm:$0xff]
  %v888 = vld [vmem:[%s99 + $0x30] sm:$0xff]
  %v889 = vld [vmem:[%s99 + $0x38] sm:$0xff]
  %v890 = vld [vmem:[%s99 + $0x40] sm:$0xff]
  %v891 = vld [vmem:[%s99 + $0x48] sm:$0xff]
  %v892 = vld [vmem:[%s99 + $0x50] sm:$0xff]
  %v893 = vld [vmem:[%s99 + $0x58] sm:$0xff]
  %v894 = vld [vmem:[%s99 + $0x60] sm:$0xff]
  %v895 = vld [vmem:[%s99 + $0x68] sm:$0xff]
  %v896 = vld [vmem:[%s99 + $0x70] sm:$0xff]
  %v897 = vld [vmem:[%s99 + $0x78] sm:$0xff]
  %v898 = vld [vmem:[%s99 + $0x80] sm:$0xff]
  %v899 = vld [vmem:[%s99 + $0x88] sm:$0xff]
  %v900 = vld [vmem:[%s99 + $0x90] sm:$0xff]
  %v901 = vld [vmem:[%s99 + $0x98] sm:$0xff]
  %v902 = vld [vmem:[%s99 + $0xa0] sm:$0xff]
  %v903 = vld [vmem:[%s99 + $0xa8] sm:$0xff]
  %v904 = vld [vmem:[%s99 + $0xb0] sm:$0xff]
  %v905 = vld [vmem:[%s99 + $0xb8] sm:$0xff]
  %v906 = vld [vmem:[%s99 + $0xc0] sm:$0xff]
  %v907 = vld [vmem:[%s99 + $0xc8] sm:$0xff]
  %v908 = vld [vmem:[%s99 + $0xd0] sm:$0xff]
  %v909 = vld [vmem:[%s99 + $0xd8] sm:$0xff]
  %v910 = vld [vmem:[%s99 + $0xe0] sm:$0xff]
  %v911 = vld [vmem:[%s99 + $0xe8] sm:$0xff]
  %v912 = vld [vmem:[%s99 + $0xf0] sm:$0xff]
  %v913 = vld [vmem:[%s99 + $0xf8] sm:$0xff]
  %v916 = vunpack.c.l.b16 %v848
  %v917 = vunpack.c.h.b16 %v848
  %v918 = vunpack.c.l.b16 %v881
  %v919 = vunpack.c.h.b16 %v881
  %v920 = vpack.c.b16 %v918, %v916
  %v921 = vpack.c.b16 %v919, %v917
  %v923 = vshrl.u32 %v920, 16
  %v925 = vshll.u32 %v920, 16
  %v927 = vrot.slane %v925, 1
  %v928 = vor.u32 %v923, %v927
  %v930 = vshrl.u32 %v921, 16
  %v932 = vshll.u32 %v921, 16
  %v934 = vrot.slane %v932, 1
  %v935 = vor.u32 %v930, %v934
  %v970 = vunpack.c.l.b16 %v882
  %v971 = vunpack.c.h.b16 %v882
  %v972 = vunpack.c.l.b16 %v883
  %v973 = vunpack.c.h.b16 %v883
  %v974 = vunpack.c.l.b16 %v884
  %v975 = vunpack.c.h.b16 %v884
  %v976 = vunpack.c.l.b16 %v885
  %v977 = vunpack.c.h.b16 %v885
  %v978 = vunpack.c.l.b16 %v886
  %v979 = vunpack.c.h.b16 %v886
  %v980 = vunpack.c.l.b16 %v887
  %v981 = vunpack.c.h.b16 %v887
  %v982 = vunpack.c.l.b16 %v888
  %v983 = vunpack.c.h.b16 %v888
  %v984 = vunpack.c.l.b16 %v889
  %v985 = vunpack.c.h.b16 %v889
  %v986 = vunpack.c.l.b16 %v890
  %v987 = vunpack.c.h.b16 %v890
  %v988 = vunpack.c.l.b16 %v891
  %v989 = vunpack.c.h.b16 %v891
  %v990 = vunpack.c.l.b16 %v892
  %v991 = vunpack.c.h.b16 %v892
  %v992 = vunpack.c.l.b16 %v893
  %v993 = vunpack.c.h.b16 %v893
  %v994 = vunpack.c.l.b16 %v894
  %v995 = vunpack.c.h.b16 %v894
  %v996 = vunpack.c.l.b16 %v895
  %v997 = vunpack.c.h.b16 %v895
  %v998 = vunpack.c.l.b16 %v896
  %v999 = vunpack.c.h.b16 %v896
  %v1000 = vunpack.c.l.b16 %v897
  %v1001 = vunpack.c.h.b16 %v897
  %v1002 = vunpack.c.l.b16 %v898
  %v1003 = vunpack.c.h.b16 %v898
  %v1004 = vunpack.c.l.b16 %v899
  %v1005 = vunpack.c.h.b16 %v899
  %v1006 = vunpack.c.l.b16 %v900
  %v1007 = vunpack.c.h.b16 %v900
  %v1008 = vunpack.c.l.b16 %v901
  %v1009 = vunpack.c.h.b16 %v901
  %v1010 = vunpack.c.l.b16 %v902
  %v1011 = vunpack.c.h.b16 %v902
  %v1012 = vunpack.c.l.b16 %v903
  %v1013 = vunpack.c.h.b16 %v903
  %v1014 = vunpack.c.l.b16 %v904
  %v1015 = vunpack.c.h.b16 %v904
  %v1016 = vunpack.c.l.b16 %v905
  %v1017 = vunpack.c.h.b16 %v905
  %v1018 = vunpack.c.l.b16 %v906
  %v1019 = vunpack.c.h.b16 %v906
  %v1020 = vunpack.c.l.b16 %v907
  %v1021 = vunpack.c.h.b16 %v907
  %v1022 = vunpack.c.l.b16 %v908
  %v1023 = vunpack.c.h.b16 %v908
  %v1024 = vunpack.c.l.b16 %v909
  %v1025 = vunpack.c.h.b16 %v909
  %v1026 = vunpack.c.l.b16 %v910
  %v1027 = vunpack.c.h.b16 %v910
  %v1028 = vunpack.c.l.b16 %v911
  %v1029 = vunpack.c.h.b16 %v911
  %v1030 = vunpack.c.l.b16 %v912
  %v1031 = vunpack.c.h.b16 %v912
  %v1032 = vunpack.c.l.b16 %v913
  %v1033 = vunpack.c.h.b16 %v913
  %v1034 = vpack.c.b16 %v972, %v970
  %v1035 = vpack.c.b16 %v973, %v971
  %v1036 = vpack.c.b16 %v976, %v974
  %v1037 = vpack.c.b16 %v977, %v975
  %v1038 = vpack.c.b16 %v980, %v978
  %v1039 = vpack.c.b16 %v981, %v979
  %v1040 = vpack.c.b16 %v984, %v982
  %v1041 = vpack.c.b16 %v985, %v983
  %v1042 = vpack.c.b16 %v988, %v986
  %v1043 = vpack.c.b16 %v989, %v987
  %v1044 = vpack.c.b16 %v992, %v990
  %v1045 = vpack.c.b16 %v993, %v991
  %v1046 = vpack.c.b16 %v996, %v994
  %v1047 = vpack.c.b16 %v997, %v995
  %v1048 = vpack.c.b16 %v1000, %v998
  %v1049 = vpack.c.b16 %v1001, %v999
  %v1050 = vpack.c.b16 %v1004, %v1002
  %v1051 = vpack.c.b16 %v1005, %v1003
  %v1052 = vpack.c.b16 %v1008, %v1006
  %v1053 = vpack.c.b16 %v1009, %v1007
  %v1054 = vpack.c.b16 %v1012, %v1010
  %v1055 = vpack.c.b16 %v1013, %v1011
  %v1056 = vpack.c.b16 %v1016, %v1014
  %v1057 = vpack.c.b16 %v1017, %v1015
  %v1058 = vpack.c.b16 %v1020, %v1018
  %v1059 = vpack.c.b16 %v1021, %v1019
  %v1060 = vpack.c.b16 %v1024, %v1022
  %v1061 = vpack.c.b16 %v1025, %v1023
  %v1062 = vpack.c.b16 %v1028, %v1026
  %v1063 = vpack.c.b16 %v1029, %v1027
  %v1064 = vpack.c.b16 %v1032, %v1030
  %v1065 = vpack.c.b16 %v1033, %v1031
  %1098 = vmatprep.subr.bf16.mxu0 %v1049
  %1099 = vmatpush1.bf16.msra.mxu0 %v1048
  %1100 = vmatprep.subr.bf16.mxu0 %v1047
  %1101 = vmatpush1.bf16.msra.mxu0 %v1046
  %1102 = vmatprep.subr.bf16.mxu0 %v1045
  %1103 = vmatpush1.bf16.msra.mxu0 %v1044
  %1104 = vmatprep.subr.bf16.mxu0 %v1043
  %1105 = vmatpush1.bf16.msra.mxu0 %v1042
  %1106 = vmatprep.subr.bf16.mxu0 %v1041
  %1107 = vmatpush1.bf16.msra.mxu0 %v1040
  %1108 = vmatprep.subr.bf16.mxu0 %v1039
  %1109 = vmatpush1.bf16.msra.mxu0 %v1038
  %1110 = vmatprep.subr.bf16.mxu0 %v1037
  %1111 = vmatpush1.bf16.msra.mxu0 %v1036
  %1112 = vmatprep.subr.bf16.mxu0 %v1035
  %1113 = vmatpush1.bf16.msra.mxu0 %v1034
  %1114 = vmatprep.subr.bf16.mxu0 %v1065
  %1115 = vmatpush2.bf16.msra.mxu0 %v1064
  %1116 = vmatprep.subr.bf16.mxu0 %v1063
  %1117 = vmatpush2.bf16.msra.mxu0 %v1062
  %1118 = vmatprep.subr.bf16.mxu0 %v1061
  %1119 = vmatpush2.bf16.msra.mxu0 %v1060
  %1120 = vmatprep.subr.bf16.mxu0 %v1059
  %1121 = vmatpush2.bf16.msra.mxu0 %v1058
  %1122 = vmatprep.subr.bf16.mxu0 %v1057
  %1123 = vmatpush2.bf16.msra.mxu0 %v1056
  %1124 = vmatprep.subr.bf16.mxu0 %v1055
  %1125 = vmatpush2.bf16.msra.mxu0 %v1054
  %1126 = vmatprep.subr.bf16.mxu0 %v1053
  %1127 = vmatpush2.bf16.msra.mxu0 %v1052
  %1128 = vmatprep.subr.bf16.mxu0 %v1051
  %1129 = vmatpush2.bf16.msra.mxu0 %v1050
  %1130 = vmatprep.mubr.bf16.mxu0 %v935
  %1131 = vmatmul.mubr.bf16.gmra.mxu0 %v928
  %v1132 = vpop.f32.mrf.mxu0
  %v1133 = vadd.f32 0.0, %v1132
  %v1134 = vpop.f32.mrf.mxu0
  %v1135 = vadd.f32 0.0, %v1134
  %v1136 = vpop.f32.mrf.mxu0
  %v1137 = vpop.f32.mrf.mxu0
  %1138 = vdwg.mxu0
  %v1139 = vpack.c.b16 %v916, %v916
  %v1140 = vpack.c.b16 %v917, %v917
  %v1175 = vunpack.c.l.b16 %v849
  %v1176 = vunpack.c.h.b16 %v849
  %v1177 = vunpack.c.l.b16 %v850
  %v1178 = vunpack.c.h.b16 %v850
  %v1179 = vunpack.c.l.b16 %v851
  %v1180 = vunpack.c.h.b16 %v851
  %v1181 = vunpack.c.l.b16 %v852
  %v1182 = vunpack.c.h.b16 %v852
  %v1183 = vunpack.c.l.b16 %v853
  %v1184 = vunpack.c.h.b16 %v853
  %v1185 = vunpack.c.l.b16 %v854
  %v1186 = vunpack.c.h.b16 %v854
  %v1187 = vunpack.c.l.b16 %v855
  %v1188 = vunpack.c.h.b16 %v855
  %v1189 = vunpack.c.l.b16 %v856
  %v1190 = vunpack.c.h.b16 %v856
  %v1191 = vunpack.c.l.b16 %v857
  %v1192 = vunpack.c.h.b16 %v857
  %v1193 = vunpack.c.l.b16 %v858
  %v1194 = vunpack.c.h.b16 %v858
  %v1195 = vunpack.c.l.b16 %v859
  %v1196 = vunpack.c.h.b16 %v859
  %v1197 = vunpack.c.l.b16 %v860
  %v1198 = vunpack.c.h.b16 %v860
  %v1199 = vunpack.c.l.b16 %v861
  %v1200 = vunpack.c.h.b16 %v861
  %v1201 = vunpack.c.l.b16 %v862
  %v1202 = vunpack.c.h.b16 %v862
  %v1203 = vunpack.c.l.b16 %v863
  %v1204 = vunpack.c.h.b16 %v863
  %v1205 = vunpack.c.l.b16 %v864
  %v1206 = vunpack.c.h.b16 %v864
  %v1207 = vunpack.c.l.b16 %v865
  %v1208 = vunpack.c.h.b16 %v865
  %v1209 = vunpack.c.l.b16 %v866
  %v1210 = vunpack.c.h.b16 %v866
  %v1211 = vunpack.c.l.b16 %v867
  %v1212 = vunpack.c.h.b16 %v867
  %v1213 = vunpack.c.l.b16 %v868
  %v1214 = vunpack.c.h.b16 %v868
  %v1215 = vunpack.c.l.b16 %v869
  %v1216 = vunpack.c.h.b16 %v869
  %v1217 = vunpack.c.l.b16 %v870
  %v1218 = vunpack.c.h.b16 %v870
  %v1219 = vunpack.c.l.b16 %v871
  %v1220 = vunpack.c.h.b16 %v871
  %v1221 = vunpack.c.l.b16 %v872
  %v1222 = vunpack.c.h.b16 %v872
  %v1223 = vunpack.c.l.b16 %v873
  %v1224 = vunpack.c.h.b16 %v873
  %v1225 = vunpack.c.l.b16 %v874
  %v1226 = vunpack.c.h.b16 %v874
  %v1227 = vunpack.c.l.b16 %v875
  %v1228 = vunpack.c.h.b16 %v875
  %v1229 = vunpack.c.l.b16 %v876
  %v1230 = vunpack.c.h.b16 %v876
  %v1231 = vunpack.c.l.b16 %v877
  %v1232 = vunpack.c.h.b16 %v877
  %v1233 = vunpack.c.l.b16 %v878
  %v1234 = vunpack.c.h.b16 %v878
  %v1235 = vunpack.c.l.b16 %v879
  %v1236 = vunpack.c.h.b16 %v879
  %v1237 = vunpack.c.l.b16 %v880
  %v1238 = vunpack.c.h.b16 %v880
  %v1239 = vpack.c.b16 %v1177, %v1175
  %v1240 = vpack.c.b16 %v1178, %v1176
  %v1241 = vpack.c.b16 %v1181, %v1179
  %v1242 = vpack.c.b16 %v1182, %v1180
  %v1243 = vpack.c.b16 %v1185, %v1183
  %v1244 = vpack.c.b16 %v1186, %v1184
  %v1245 = vpack.c.b16 %v1189, %v1187
  %v1246 = vpack.c.b16 %v1190, %v1188
  %v1247 = vpack.c.b16 %v1193, %v1191
  %v1248 = vpack.c.b16 %v1194, %v1192
  %v1249 = vpack.c.b16 %v1197, %v1195
  %v1250 = vpack.c.b16 %v1198, %v1196
  %v1251 = vpack.c.b16 %v1201, %v1199
  %v1252 = vpack.c.b16 %v1202, %v1200
  %v1253 = vpack.c.b16 %v1205, %v1203
  %v1254 = vpack.c.b16 %v1206, %v1204
  %v1255 = vpack.c.b16 %v1209, %v1207
  %v1256 = vpack.c.b16 %v1210, %v1208
  %v1257 = vpack.c.b16 %v1213, %v1211
  %v1258 = vpack.c.b16 %v1214, %v1212
  %v1259 = vpack.c.b16 %v1217, %v1215
  %v1260 = vpack.c.b16 %v1218, %v1216
  %v1261 = vpack.c.b16 %v1221, %v1219
  %v1262 = vpack.c.b16 %v1222, %v1220
  %v1263 = vpack.c.b16 %v1225, %v1223
  %v1264 = vpack.c.b16 %v1226, %v1224
  %v1265 = vpack.c.b16 %v1229, %v1227
  %v1266 = vpack.c.b16 %v1230, %v1228
  %v1267 = vpack.c.b16 %v1233, %v1231
  %v1268 = vpack.c.b16 %v1234, %v1232
  %v1269 = vpack.c.b16 %v1237, %v1235
  %v1270 = vpack.c.b16 %v1238, %v1236
  %1303 = vmatprep.subr.bf16.mxu0 %v1254
  %1304 = vmatpush1.bf16.msra.mxu0 %v1253
  %1305 = vmatprep.subr.bf16.mxu0 %v1252
  %1306 = vmatpush1.bf16.msra.mxu0 %v1251
  %1307 = vmatprep.subr.bf16.mxu0 %v1250
  %1308 = vmatpush1.bf16.msra.mxu0 %v1249
  %1309 = vmatprep.subr.bf16.mxu0 %v1248
  %1310 = vmatpush1.bf16.msra.mxu0 %v1247
  %1311 = vmatprep.subr.bf16.mxu0 %v1246
  %1312 = vmatpush1.bf16.msra.mxu0 %v1245
  %1313 = vmatprep.subr.bf16.mxu0 %v1244
  %1314 = vmatpush1.bf16.msra.mxu0 %v1243
  %1315 = vmatprep.subr.bf16.mxu0 %v1242
  %1316 = vmatpush1.bf16.msra.mxu0 %v1241
  %1317 = vmatprep.subr.bf16.mxu0 %v1240
  %1318 = vmatpush1.bf16.msra.mxu0 %v1239
  %1319 = vmatprep.subr.bf16.mxu0 %v1270
  %1320 = vmatpush2.bf16.msra.mxu0 %v1269
  %1321 = vmatprep.subr.bf16.mxu0 %v1268
  %1322 = vmatpush2.bf16.msra.mxu0 %v1267
  %1323 = vmatprep.subr.bf16.mxu0 %v1266
  %1324 = vmatpush2.bf16.msra.mxu0 %v1265
  %1325 = vmatprep.subr.bf16.mxu0 %v1264
  %1326 = vmatpush2.bf16.msra.mxu0 %v1263
  %1327 = vmatprep.subr.bf16.mxu0 %v1262
  %1328 = vmatpush2.bf16.msra.mxu0 %v1261
  %1329 = vmatprep.subr.bf16.mxu0 %v1260
  %1330 = vmatpush2.bf16.msra.mxu0 %v1259
  %1331 = vmatprep.subr.bf16.mxu0 %v1258
  %1332 = vmatpush2.bf16.msra.mxu0 %v1257
  %1333 = vmatprep.subr.bf16.mxu0 %v1256
  %1334 = vmatpush2.bf16.msra.mxu0 %v1255
  %1335 = vmatprep.mubr.bf16.mxu0 %v1140
  %1336 = vmatmul.mubr.bf16.gmra.mxu0 %v1139
  %v1337 = vpop.f32.mrf.mxu0
  %v1338 = vadd.f32 %v1133, %v1337
  %v1339 = vpop.f32.mrf.mxu0
  %v1340 = vadd.f32 %v1135, %v1339
  %v1341 = vpop.f32.mrf.mxu0
  %v1342 = vpop.f32.mrf.mxu0
  %1343 = vdwg.mxu0
  %v1344 = vld [vmem:[%s847] sm:$0xee]
  %v1345 = vld [vmem:[%s563] sm:$0xff]
  %v1346 = vld [vmem:[%s563 + $0x8] sm:$0xff]
  %v1347 = vld [vmem:[%s563 + $0x10] sm:$0xff]
  %v1348 = vld [vmem:[%s563 + $0x18] sm:$0xff]
  %v1349 = vld [vmem:[%s563 + $0x20] sm:$0xff]
  %v1350 = vld [vmem:[%s563 + $0x28] sm:$0xff]
  %v1351 = vld [vmem:[%s563 + $0x30] sm:$0xff]
  %v1352 = vld [vmem:[%s563 + $0x38] sm:$0xff]
  %v1353 = vld [vmem:[%s563 + $0x40] sm:$0xff]
  %v1354 = vld [vmem:[%s563 + $0x48] sm:$0xff]
  %v1355 = vld [vmem:[%s563 + $0x50] sm:$0xff]
  %v1356 = vld [vmem:[%s563 + $0x58] sm:$0xff]
  %v1357 = vld [vmem:[%s563 + $0x60] sm:$0xff]
  %v1358 = vld [vmem:[%s563 + $0x68] sm:$0xff]
  %v1359 = vld [vmem:[%s563 + $0x70] sm:$0xff]
  %v1360 = vld [vmem:[%s563 + $0x78] sm:$0xff]
  %v1361 = vld [vmem:[%s563 + $0x80] sm:$0xff]
  %v1362 = vld [vmem:[%s563 + $0x88] sm:$0xff]
  %v1363 = vld [vmem:[%s563 + $0x90] sm:$0xff]
  %v1364 = vld [vmem:[%s563 + $0x98] sm:$0xff]
  %v1365 = vld [vmem:[%s563 + $0xa0] sm:$0xff]
  %v1366 = vld [vmem:[%s563 + $0xa8] sm:$0xff]
  %v1367 = vld [vmem:[%s563 + $0xb0] sm:$0xff]
  %v1368 = vld [vmem:[%s563 + $0xb8] sm:$0xff]
  %v1369 = vld [vmem:[%s563 + $0xc0] sm:$0xff]
  %v1370 = vld [vmem:[%s563 + $0xc8] sm:$0xff]
  %v1371 = vld [vmem:[%s563 + $0xd0] sm:$0xff]
  %v1372 = vld [vmem:[%s563 + $0xd8] sm:$0xff]
  %v1373 = vld [vmem:[%s563 + $0xe0] sm:$0xff]
  %v1374 = vld [vmem:[%s563 + $0xe8] sm:$0xff]
  %v1375 = vld [vmem:[%s563 + $0xf0] sm:$0xff]
  %v1376 = vld [vmem:[%s563 + $0xf8] sm:$0xff]
  %v1378 = vunpack.c.l.b16 %v1344
  %v1379 = vunpack.c.h.b16 %v1344
  %v1380 = vpack.c.b16 %v918, %v1378
  %v1381 = vpack.c.b16 %v919, %v1379
  %v1382 = vrot.slane %v1380, 1
  %v1383 = vrot.slane %v1381, 1
  %v1418 = vunpack.c.l.b16 %v1345
  %v1419 = vunpack.c.h.b16 %v1345
  %v1420 = vunpack.c.l.b16 %v1346
  %v1421 = vunpack.c.h.b16 %v1346
  %v1422 = vunpack.c.l.b16 %v1347
  %v1423 = vunpack.c.h.b16 %v1347
  %v1424 = vunpack.c.l.b16 %v1348
  %v1425 = vunpack.c.h.b16 %v1348
  %v1426 = vunpack.c.l.b16 %v1349
  %v1427 = vunpack.c.h.b16 %v1349
  %v1428 = vunpack.c.l.b16 %v1350
  %v1429 = vunpack.c.h.b16 %v1350
  %v1430 = vunpack.c.l.b16 %v1351
  %v1431 = vunpack.c.h.b16 %v1351
  %v1432 = vunpack.c.l.b16 %v1352
  %v1433 = vunpack.c.h.b16 %v1352
  %v1434 = vunpack.c.l.b16 %v1353
  %v1435 = vunpack.c.h.b16 %v1353
  %v1436 = vunpack.c.l.b16 %v1354
  %v1437 = vunpack.c.h.b16 %v1354
  %v1438 = vunpack.c.l.b16 %v1355
  %v1439 = vunpack.c.h.b16 %v1355
  %v1440 = vunpack.c.l.b16 %v1356
  %v1441 = vunpack.c.h.b16 %v1356
  %v1442 = vunpack.c.l.b16 %v1357
  %v1443 = vunpack.c.h.b16 %v1357
  %v1444 = vunpack.c.l.b16 %v1358
  %v1445 = vunpack.c.h.b16 %v1358
  %v1446 = vunpack.c.l.b16 %v1359
  %v1447 = vunpack.c.h.b16 %v1359
  %v1448 = vunpack.c.l.b16 %v1360
  %v1449 = vunpack.c.h.b16 %v1360
  %v1450 = vunpack.c.l.b16 %v1361
  %v1451 = vunpack.c.h.b16 %v1361
  %v1452 = vunpack.c.l.b16 %v1362
  %v1453 = vunpack.c.h.b16 %v1362
  %v1454 = vunpack.c.l.b16 %v1363
  %v1455 = vunpack.c.h.b16 %v1363
  %v1456 = vunpack.c.l.b16 %v1364
  %v1457 = vunpack.c.h.b16 %v1364
  %v1458 = vunpack.c.l.b16 %v1365
  %v1459 = vunpack.c.h.b16 %v1365
  %v1460 = vunpack.c.l.b16 %v1366
  %v1461 = vunpack.c.h.b16 %v1366
  %v1462 = vunpack.c.l.b16 %v1367
  %v1463 = vunpack.c.h.b16 %v1367
  %v1464 = vunpack.c.l.b16 %v1368
  %v1465 = vunpack.c.h.b16 %v1368
  %v1466 = vunpack.c.l.b16 %v1369
  %v1467 = vunpack.c.h.b16 %v1369
  %v1468 = vunpack.c.l.b16 %v1370
  %v1469 = vunpack.c.h.b16 %v1370
  %v1470 = vunpack.c.l.b16 %v1371
  %v1471 = vunpack.c.h.b16 %v1371
  %v1472 = vunpack.c.l.b16 %v1372
  %v1473 = vunpack.c.h.b16 %v1372
  %v1474 = vunpack.c.l.b16 %v1373
  %v1475 = vunpack.c.h.b16 %v1373
  %v1476 = vunpack.c.l.b16 %v1374
  %v1477 = vunpack.c.h.b16 %v1374
  %v1478 = vunpack.c.l.b16 %v1375
  %v1479 = vunpack.c.h.b16 %v1375
  %v1480 = vunpack.c.l.b16 %v1376
  %v1481 = vunpack.c.h.b16 %v1376
  %v1482 = vpack.c.b16 %v1420, %v1418
  %v1483 = vpack.c.b16 %v1421, %v1419
  %v1484 = vpack.c.b16 %v1424, %v1422
  %v1485 = vpack.c.b16 %v1425, %v1423
  %v1486 = vpack.c.b16 %v1428, %v1426
  %v1487 = vpack.c.b16 %v1429, %v1427
  %v1488 = vpack.c.b16 %v1432, %v1430
  %v1489 = vpack.c.b16 %v1433, %v1431
  %v1490 = vpack.c.b16 %v1436, %v1434
  %v1491 = vpack.c.b16 %v1437, %v1435
  %v1492 = vpack.c.b16 %v1440, %v1438
  %v1493 = vpack.c.b16 %v1441, %v1439
  %v1494 = vpack.c.b16 %v1444, %v1442
  %v1495 = vpack.c.b16 %v1445, %v1443
  %v1496 = vpack.c.b16 %v1448, %v1446
  %v1497 = vpack.c.b16 %v1449, %v1447
  %v1498 = vpack.c.b16 %v1452, %v1450
  %v1499 = vpack.c.b16 %v1453, %v1451
  %v1500 = vpack.c.b16 %v1456, %v1454
  %v1501 = vpack.c.b16 %v1457, %v1455
  %v1502 = vpack.c.b16 %v1460, %v1458
  %v1503 = vpack.c.b16 %v1461, %v1459
  %v1504 = vpack.c.b16 %v1464, %v1462
  %v1505 = vpack.c.b16 %v1465, %v1463
  %v1506 = vpack.c.b16 %v1468, %v1466
  %v1507 = vpack.c.b16 %v1469, %v1467
  %v1508 = vpack.c.b16 %v1472, %v1470
  %v1509 = vpack.c.b16 %v1473, %v1471
  %v1510 = vpack.c.b16 %v1476, %v1474
  %v1511 = vpack.c.b16 %v1477, %v1475
  %v1512 = vpack.c.b16 %v1480, %v1478
  %v1513 = vpack.c.b16 %v1481, %v1479
  %1546 = vmatprep.subr.bf16.mxu0 %v1497
  %1547 = vmatpush1.bf16.msra.mxu0 %v1496
  %1548 = vmatprep.subr.bf16.mxu0 %v1495
  %1549 = vmatpush1.bf16.msra.mxu0 %v1494
  %1550 = vmatprep.subr.bf16.mxu0 %v1493
  %1551 = vmatpush1.bf16.msra.mxu0 %v1492
  %1552 = vmatprep.subr.bf16.mxu0 %v1491
  %1553 = vmatpush1.bf16.msra.mxu0 %v1490
  %1554 = vmatprep.subr.bf16.mxu0 %v1489
  %1555 = vmatpush1.bf16.msra.mxu0 %v1488
  %1556 = vmatprep.subr.bf16.mxu0 %v1487
  %1557 = vmatpush1.bf16.msra.mxu0 %v1486
  %1558 = vmatprep.subr.bf16.mxu0 %v1485
  %1559 = vmatpush1.bf16.msra.mxu0 %v1484
  %1560 = vmatprep.subr.bf16.mxu0 %v1483
  %1561 = vmatpush1.bf16.msra.mxu0 %v1482
  %1562 = vmatprep.subr.bf16.mxu0 %v1513
  %1563 = vmatpush2.bf16.msra.mxu0 %v1512
  %1564 = vmatprep.subr.bf16.mxu0 %v1511
  %1565 = vmatpush2.bf16.msra.mxu0 %v1510
  %1566 = vmatprep.subr.bf16.mxu0 %v1509
  %1567 = vmatpush2.bf16.msra.mxu0 %v1508
  %1568 = vmatprep.subr.bf16.mxu0 %v1507
  %1569 = vmatpush2.bf16.msra.mxu0 %v1506
  %1570 = vmatprep.subr.bf16.mxu0 %v1505
  %1571 = vmatpush2.bf16.msra.mxu0 %v1504
  %1572 = vmatprep.subr.bf16.mxu0 %v1503
  %1573 = vmatpush2.bf16.msra.mxu0 %v1502
  %1574 = vmatprep.subr.bf16.mxu0 %v1501
  %1575 = vmatpush2.bf16.msra.mxu0 %v1500
  %1576 = vmatprep.subr.bf16.mxu0 %v1499
  %1577 = vmatpush2.bf16.msra.mxu0 %v1498
  %1578 = vmatprep.mubr.bf16.mxu0 %v1383
  %1579 = vmatmul.mubr.bf16.gmra.mxu0 %v1382
  %v1580 = vpop.f32.mrf.mxu0
  %v1581 = vadd.f32 0.0, %v1580
  %v1582 = vpop.f32.mrf.mxu0
  %v1583 = vadd.f32 0.0, %v1582
  %v1584 = vpop.f32.mrf.mxu0
  %v1585 = vpop.f32.mrf.mxu0
  %1586 = vdwg.mxu0
  %v1587 = vadd.f32 %v1338, %v1581
  %v1588 = vadd.f32 %v1340, %v1583
  %v1589 = vpack.c.bf16 %v1587, %v1587
  %v1590 = vpack.c.bf16 %v1588, %v1588
  %v1593 = vunpack.c.l.b16 %v1589
  %v1594 = vunpack.c.l.b16 %v1590
  %v1595 = vpack.c.b16 %v1594, %v1593
  %s1597 = scalar_lea.vmem %s52, 8
  %1598 = vst [vmem:[%s1597] sm:$0xff] %v1595
  %v1599 = vrot.slane %v1587, 4
  %v1600 = vadd.f32 %v1587, %v1599
  %v1601 = vrot.slane %v1600, 2
  %v1602 = vadd.f32 %v1600, %v1601
  %v1603 = vrot.slane %v1602, 1
  %v1604 = vadd.f32 %v1602, %v1603
  %v1605 = vrot.slane %v1588, 4
  %v1606 = vadd.f32 %v1588, %v1605
  %v1607 = vrot.slane %v1606, 2
  %v1608 = vadd.f32 %v1606, %v1607
  %v1609 = vrot.slane %v1608, 1
  %v1610 = vadd.f32 %v1608, %v1609
  %v1611 = vadd.f32 %v829, %v1604
  %v1612 = vadd.f32 %v830, %v1610
  %v1613 = vmul.f32 %v1587, %v1587
  %v1614 = vmul.f32 %v1588, %v1588
  %v1615 = vrot.slane %v1613, 4
  %v1616 = vadd.f32 %v1613, %v1615
  %v1617 = vrot.slane %v1616, 2
  %v1618 = vadd.f32 %v1616, %v1617
  %v1619 = vrot.slane %v1618, 1
  %v1620 = vadd.f32 %v1618, %v1619
  %v1621 = vrot.slane %v1614, 4
  %v1622 = vadd.f32 %v1614, %v1621
  %v1623 = vrot.slane %v1622, 2
  %v1624 = vadd.f32 %v1622, %v1623
  %v1625 = vrot.slane %v1624, 1
  %v1626 = vadd.f32 %v1624, %v1625
  %v1627 = vadd.f32 %v845, %v1620
  %v1628 = vadd.f32 %v846, %v1626
  %v1629 = vld [vmem:[%s3] sm:$0x3]
  %v1632 = vcombine.low %v1611, %v1612
  %v1634 = vunpack.c.l.s4 1966171168
  %v1635 = vunpack.c.0.s8 %v1634
  %v1636 = vlaneseq
  %v1637 = vshrl.u32 %v1636, 7
  %v1638 = vsub.s32 %v1635, %v1637
  %v1639 = vrot.slane %v1632, %v1638
  %v1641 = vunpack.c.l.s4 1966171168
  %v1642 = vunpack.c.0.s8 %v1641
  %v1643 = vlaneseq
  %v1644 = vshrl.u32 %v1643, 7
  %v1645 = vsub.s32 %v1642, %v1644
  %v1646 = vrot.slane %v1639, %v1645
  %v1648 = vadd.f32 %v1629, %v1646
  %v1649 = vlaneseq
  %vm1650 = vcmp.ge.s32.totalorder %v1649, 0
  %vm1651 = vcmp.lt.s32.totalorder %v1649, 256
  %vm1652 = vmand %vm1650, %vm1651
  %1653 = vst.msk [vmem:[%s3] sm:$0x3] %vm1652, %v1648
  %v1654 = vld [vmem:[%s4] sm:$0x3]
  %v1657 = vcombine.low %v1627, %v1628
  %v1659 = vunpack.c.l.s4 1966171168
  %v1660 = vunpack.c.0.s8 %v1659
  %v1661 = vlaneseq
  %v1662 = vshrl.u32 %v1661, 7
  %v1663 = vsub.s32 %v1660, %v1662
  %v1664 = vrot.slane %v1657, %v1663
  %v1666 = vunpack.c.l.s4 1966171168
  %v1667 = vunpack.c.0.s8 %v1666
  %v1668 = vlaneseq
  %v1669 = vshrl.u32 %v1668, 7
  %v1670 = vsub.s32 %v1667, %v1669
  %v1671 = vrot.slane %v1664, %v1670
  %v1673 = vadd.f32 %v1654, %v1671
  %1674 = vst.msk [vmem:[%s4] sm:$0x3] %vm1652, %v1673
  %s1675 = sadd.s32 0, 0
  %s1676 = smul.u32 2, %s1675
  %p1677 = scmp.lt.s32.totalorder %s1676, 1
  %s1678 = scalar_select %p1677, %s1676, 1
  %s1679 = smul.addr %s1678, 2
  %s1680 = smul.addr %s1679, 4
  %s1681 = scalar_lea.vmem %s2, %s1680
  // Predicated region
  $region14: #{_lambda_.23} parent=0 // pred_check
    _
  $region15: #{_lambda_.23} parent=0 // pred_check_branch
    %1683 = sbr.rel (0) target = $region17
  $region16: #{_lambda_.23} parent=0 // pred_region
    %s1684 = sadd.s32 0, 0
    %s1685 = smul.u32 2, %s1684
  $region17: #{_lambda_.23} parent=0 // pred_fallthru
    _
  // Predicated region
  $region18: #{_lambda_.23} parent=0 // pred_check
    _
  $region19: #{_lambda_.23} parent=0 // pred_check_branch
    %1687 = sbr.rel (0) target = $region21
  $region20: #{_lambda_.23} parent=0 // pred_region
    _
  $region21: #{_lambda_.23} parent=0 // pred_fallthru
    _
  // Predicated region
  $region22: #{_lambda_.23} parent=0 // pred_check
    _
  $region23: #{_lambda_.23} parent=0 // pred_check_branch
    %1689 = sbr.rel (0) target = $region25
  $region24: #{_lambda_.23} parent=0 // pred_region
    _
  $region25: #{_lambda_.23} parent=0 // pred_fallthru
    _
  // Predicated region
  $region26: #{_lambda_.23} parent=0 // pred_check
    _
  $region27: #{_lambda_.23} parent=0 // pred_check_branch
    %1691 = sbr.rel (0) target = $region29
  $region28: #{_lambda_.23} parent=0 // pred_region
    %s1692 = sadd.s32 0, 0
    %s1693 = smul.u32 2, %s1692
    %p1694 = scmp.lt.s32.totalorder %s1693, 1
    %s1695 = scalar_select %p1694, %s1693, 1
    %s1696 = smul.addr %s1695, 2
    %s1697 = smul.addr %s1696, 4
    %s1698 = scalar_lea.vmem %s2, %s1697
  $region29: #{_lambda_.23} parent=0 // pred_fallthru
    _
  // Predicated region
  $region30: #{_lambda_.23} parent=0 // pred_check
    _
  $region31: #{_lambda_.23} parent=0 // pred_check_branch
    %1700 = sbr.rel (0) target = $region33
  $region32: #{_lambda_.23} parent=0 // pred_region
    _
  $region33: #{_lambda_.23} parent=0 // pred_fallthru
    _
  // Predicated region
  $region34: #{_lambda_.23} parent=0 // pred_check
    _
  $region35: #{_lambda_.23} parent=0 // pred_check_branch
    %1702 = sbr.rel (0) target = $region37
  $region36: #{_lambda_.23} parent=0 // pred_region
    _
  $region37: #{_lambda_.23} parent=0 // pred_fallthru
    _

// kernel: tile.132
$region0: #{tile.132}
  #allocation0 [shape = 's32[1]{0}', space=sflag, size = 0x4, scoped, tag = 'scoped memory for tile.132']
  %s0 = inlined_call_operand.vmem [shape: f32[64], index: 0, kind: input, shape index: {}]
  %s1 = inlined_call_operand.vmem [shape: f32[4,64], index: 1, kind: output, shape index: {}]
  // Predicated region
  $region2: #{tile.132} parent=0 // pred_check
    _
  $region3: #{tile.132} parent=0 // pred_check_branch
    %3 = sbr.rel (0) target = $region5
  $region4: #{tile.132} parent=0 // pred_region
    _
  $region5: #{tile.132} parent=0 // pred_fallthru
    _
  %v4 = vld [vmem:[%s0] ss:$0 sm:$0xff]
  %5 = vst [vmem:[%s1] sm:$0xf] %v4

// kernel: tile.133
$region0: #{tile.133}
  %s0 = inlined_call_operand.vmem [shape: f32[4,64], index: 0, kind: input, shape index: {}]
  %s1 = inlined_call_operand.vmem [shape: f32[1,1,256], index: 1, kind: output, shape index: {}]
  $region1: #{tile.133} parent=0
    #allocation0 [shape = 'u8[8192]{0}', space=vmem, size = 0x2000, scoped, tag = 'scoped mem for output reshape']
    #allocation1 [shape = 'u8[4096]{0}', space=vmem, size = 0x1000, scoped, tag = 'scoped mem for input reshape']
    %s3 = sshll.u32 1, 4
    %s4 = ssub.s32 %s3, 1
    %v5 = vld [vmem:[%s0] sm:%s4]
    %6 = vst [vmem:[#allocation1] sm:%s4] %v5
    %s7 = smov 3
    %v8 = vld [vmem:[#allocation1] ss:$2 sm:%s7]
    %vm9 = vcmask 523264
    %10 = vst.msk [vmem:[#allocation0] ss:$8 sm:$0x3] %vm9, %v8
    %s11 = scalar_lea.vmem [#allocation1], 1
    %s12 = smov 3
    %v13 = vld [vmem:[%s11] ss:$2 sm:%s12]
    %14 = vrot.lane.b32.xlu0 %v13, 64
    %v15 = vpop.permute.xlu0 %14
    %vm16 = vcmask 1048064
    %17 = vst.msk [vmem:[#allocation0] ss:$8 sm:$0x3] %vm16, %v15
    %s19 = sshll.u32 1, 1
    %s20 = ssub.s32 %s19, 1
    %v22 = vld [vmem:[#allocation0] sm:%s20]
    %s23 = sshll.u32 1, 1
    %s24 = ssub.s32 %s23, 1
    %25 = vst [vmem:[%s1] sm:%s24] %v22
    %s26 = scalar_lea.vmem [#allocation0], 8
    %v27 = vld [vmem:[%s26] sm:%s20]
    %s28 = sshll.u32 1, 1
    %s29 = ssub.s32 %s28, 1
    %s30 = scalar_lea.vmem %s1, 1
    %31 = vst [vmem:[%s30] sm:%s29] %v27

// kernel: _lambda_.26
$region0: #{_lambda_.26}
  #allocation0 [shape = 'u32[]', space=smem, size = 0x4, offset = 0x4, fixed_abs, tag = 'smem constant byte address 0x4 - core index']
  #allocation1 [shape = 'u32[144,128]{1,0:T(1,128)}', space=vmem, size = 0x12000, scoped, tag = 'internal scratch']
  %s0 = inlined_call_operand.vmem [shape: bf16[2,4,256], index: 0, kind: input, shape index: {}, may-alias: {0,3}]
  %s1 = inlined_call_operand.vmem [shape: f32[1,1,256], index: 1, kind: input, shape index: {}]
  %s2 = inlined_call_operand.vmem [shape: f32[1,1,256], index: 2, kind: input, shape index: {}]
  %s3 = inlined_call_operand.vmem [shape: bf16[2,4,256], index: 3, kind: output, shape index: {}, may-alias: {0,3}]
  %s4 = sld [smem:[#allocation0]]
  $region22: #{_lambda_.26} parent=0
    _
  %s6 = ssub.s32 1, %s4
  %s7 = scalar_select 0, %s6, %s4
  // Predicated region
  $region2: #{_lambda_.26} parent=0 // pred_check
    _
  $region3: #{_lambda_.26} parent=0 // pred_check_branch
    %9 = sbr.rel (0) target = $region5
  $region4: #{_lambda_.26} parent=0 // pred_region
    _
  $region5: #{_lambda_.26} parent=0 // pred_fallthru
    _
  // Predicated region
  $region6: #{_lambda_.26} parent=0 // pred_check
    _
  $region7: #{_lambda_.26} parent=0 // pred_check_branch
    %11 = sbr.rel (0) target = $region9
  $region8: #{_lambda_.26} parent=0 // pred_region
    _
  $region9: #{_lambda_.26} parent=0 // pred_fallthru
    _
  // Predicated region
  $region10: #{_lambda_.26} parent=0 // pred_check
    _
  $region11: #{_lambda_.26} parent=0 // pred_check_branch
    %13 = sbr.rel (0) target = $region13
  $region12: #{_lambda_.26} parent=0 // pred_region
    _
  $region13: #{_lambda_.26} parent=0 // pred_fallthru
    _
  %v14 = vld [vmem:[%s0] sm:$0xf]
  %v15 = vld [vmem:[%s0 + $0x4] sm:$0xf]
  %v16 = vunpack.c.l.bf16 %v14
  %v17 = vunpack.c.l.bf16 %v15
  %v18 = vld [vmem:[%s1] sm:$0x3]
  %v20 = vlaneseq
  %v21 = vshrl.u32 %v20, 7
  %v22 = vsub.s32 0, %v21
  %v23 = vrot.slane %v18, %v22
  %v24 = vlaneseq
  %v25 = vshrl.u32 %v24, 7
  %v26 = vsub.s32 1, %v25
  %v27 = vrot.slane %v18, %v26
  %v28 = vcombine.low %v23, %v27
  %v30 = vmul.f32 %v16, %v28
  %v31 = vmul.f32 %v17, %v28
  %v32 = vld [vmem:[%s2] sm:$0x3]
  %v34 = vlaneseq
  %v35 = vshrl.u32 %v34, 7
  %v36 = vsub.s32 0, %v35
  %v37 = vrot.slane %v32, %v36
  %v38 = vlaneseq
  %v39 = vshrl.u32 %v38, 7
  %v40 = vsub.s32 1, %v39
  %v41 = vrot.slane %v32, %v40
  %v42 = vcombine.low %v37, %v41
  %v44 = vadd.f32 %v30, %v42
  %v45 = vadd.f32 %v31, %v42
  %v46 = vmax.f32 %v44, 0.0
  %v47 = vmax.f32 %v45, 0.0
  %v50 = vcombine.high %v46, %v46
  %v51 = vcombine.high %v47, %v47
  %v54 = vpack.c.bf16 %v46, %v46
  %v55 = vpack.c.bf16 %v50, %v50
  %v56 = vpack.c.bf16 %v47, %v47
  %v57 = vpack.c.bf16 %v51, %v51
  %v62 = vcombine.low %v54, %v55
  %v64 = vunpack.c.l.s4 1983009808
  %v65 = vunpack.c.0.s8 %v64
  %v66 = vlaneseq
  %v67 = vshrl.u32 %v66, 7
  %v68 = vsub.s32 %v65, %v67
  %v69 = vrot.slane %v62, %v68
  %v70 = vcombine.low %v56, %v57
  %v72 = vunpack.c.l.s4 1983009808
  %v73 = vunpack.c.0.s8 %v72
  %v74 = vlaneseq
  %v75 = vshrl.u32 %v74, 7
  %v76 = vsub.s32 %v73, %v75
  %v77 = vrot.slane %v70, %v76
  %80 = vst [vmem:[%s3] sm:$0xf] %v69
  %81 = vst [vmem:[%s3 + $0x4] sm:$0xf] %v77
  // Predicated region
  $region14: #{_lambda_.26} parent=0 // pred_check
    _
  $region15: #{_lambda_.26} parent=0 // pred_check_branch
    %83 = sbr.rel (0) target = $region17
  $region16: #{_lambda_.26} parent=0 // pred_region
    _
  $region17: #{_lambda_.26} parent=0 // pred_fallthru
    _
  // Predicated region
  $region18: #{_lambda_.26} parent=0 // pred_check
    _
  $region19: #{_lambda_.26} parent=0 // pred_check_branch
    %85 = sbr.rel (0) target = $region21
  $region20: #{_lambda_.26} parent=0 // pred_region
    _
  $region21: #{_lambda_.26} parent=0 // pred_fallthru
    _

// kernel: _lambda_.28
$region0: #{_lambda_.28}
  #allocation0 [shape = 'u32[]', space=smem, size = 0x4, offset = 0x4, fixed_abs, tag = 'smem constant byte address 0x4 - core index']
  #allocation1 [shape = 'u32[144,128]{1,0:T(1,128)}', space=vmem, size = 0x12000, scoped, tag = 'internal scratch']
  %s0 = inlined_call_operand.vmem [shape: bf16[2,4,256], index: 0, kind: input, shape index: {}, may-alias: {0,4}]
  %s1 = inlined_call_operand.vmem [shape: f32[1,1,256], index: 1, kind: input, shape index: {}]
  %s2 = inlined_call_operand.vmem [shape: f32[1,1,256], index: 2, kind: input, shape index: {}]
  %s3 = inlined_call_operand.vmem [shape: bf16[2,4,256], index: 3, kind: input, shape index: {}]
  %s4 = inlined_call_operand.vmem [shape: bf16[2,4,256], index: 4, kind: output, shape index: {}, may-alias: {0,4}]
  %s5 = sld [smem:[#allocation0]]
  $region26: #{_lambda_.28} parent=0
    _
  %s7 = ssub.s32 1, %s5
  %s8 = scalar_select 0, %s7, %s5
  // Predicated region
  $region2: #{_lambda_.28} parent=0 // pred_check
    _
  $region3: #{_lambda_.28} parent=0 // pred_check_branch
    %10 = sbr.rel (0) target = $region5
  $region4: #{_lambda_.28} parent=0 // pred_region
    _
  $region5: #{_lambda_.28} parent=0 // pred_fallthru
    _
  // Predicated region
  $region6: #{_lambda_.28} parent=0 // pred_check
    _
  $region7: #{_lambda_.28} parent=0 // pred_check_branch
    %12 = sbr.rel (0) target = $region9
  $region8: #{_lambda_.28} parent=0 // pred_region
    _
  $region9: #{_lambda_.28} parent=0 // pred_fallthru
    _
  // Predicated region
  $region10: #{_lambda_.28} parent=0 // pred_check
    _
  $region11: #{_lambda_.28} parent=0 // pred_check_branch
    %14 = sbr.rel (0) target = $region13
  $region12: #{_lambda_.28} parent=0 // pred_region
    _
  $region13: #{_lambda_.28} parent=0 // pred_fallthru
    _
  // Predicated region
  $region14: #{_lambda_.28} parent=0 // pred_check
    _
  $region15: #{_lambda_.28} parent=0 // pred_check_branch
    %16 = sbr.rel (0) target = $region17
  $region16: #{_lambda_.28} parent=0 // pred_region
    _
  $region17: #{_lambda_.28} parent=0 // pred_fallthru
    _
  %v17 = vld [vmem:[%s0] sm:$0xf]
  %v18 = vld [vmem:[%s0 + $0x4] sm:$0xf]
  %v19 = vunpack.c.l.bf16 %v17
  %v20 = vunpack.c.l.bf16 %v18
  %v21 = vld [vmem:[%s1] sm:$0x3]
  %v23 = vlaneseq
  %v24 = vshrl.u32 %v23, 7
  %v25 = vsub.s32 0, %v24
  %v26 = vrot.slane %v21, %v25
  %v27 = vlaneseq
  %v28 = vshrl.u32 %v27, 7
  %v29 = vsub.s32 1, %v28
  %v30 = vrot.slane %v21, %v29
  %v31 = vcombine.low %v26, %v30
  %v33 = vmul.f32 %v19, %v31
  %v34 = vmul.f32 %v20, %v31
  %v35 = vld [vmem:[%s2] sm:$0x3]
  %v37 = vlaneseq
  %v38 = vshrl.u32 %v37, 7
  %v39 = vsub.s32 0, %v38
  %v40 = vrot.slane %v35, %v39
  %v41 = vlaneseq
  %v42 = vshrl.u32 %v41, 7
  %v43 = vsub.s32 1, %v42
  %v44 = vrot.slane %v35, %v43
  %v45 = vcombine.low %v40, %v44
  %v47 = vadd.f32 %v33, %v45
  %v48 = vadd.f32 %v34, %v45
  %v49 = vld [vmem:[%s3] sm:$0xf]
  %v50 = vld [vmem:[%s3 + $0x4] sm:$0xf]
  %v51 = vunpack.c.l.bf16 %v49
  %v52 = vunpack.c.l.bf16 %v50
  %v53 = vadd.f32 %v47, %v51
  %v54 = vadd.f32 %v48, %v52
  %v55 = vmax.f32 %v53, 0.0
  %v56 = vmax.f32 %v54, 0.0
  %v59 = vcombine.high %v55, %v55
  %v60 = vcombine.high %v56, %v56
  %v63 = vpack.c.bf16 %v55, %v55
  %v64 = vpack.c.bf16 %v59, %v59
  %v65 = vpack.c.bf16 %v56, %v56
  %v66 = vpack.c.bf16 %v60, %v60
  %v71 = vcombine.low %v63, %v64
  %v73 = vunpack.c.l.s4 1983009808
  %v74 = vunpack.c.0.s8 %v73
  %v75 = vlaneseq
  %v76 = vshrl.u32 %v75, 7
  %v77 = vsub.s32 %v74, %v76
  %v78 = vrot.slane %v71, %v77
  %v79 = vcombine.low %v65, %v66
  %v81 = vunpack.c.l.s4 1983009808
  %v82 = vunpack.c.0.s8 %v81
  %v83 = vlaneseq
  %v84 = vshrl.u32 %v83, 7
  %v85 = vsub.s32 %v82, %v84
  %v86 = vrot.slane %v79, %v85
  %89 = vst [vmem:[%s4] sm:$0xf] %v78
  %90 = vst [vmem:[%s4 + $0x4] sm:$0xf] %v86
  // Predicated region
  $region18: #{_lambda_.28} parent=0 // pred_check
    _
  $region19: #{_lambda_.28} parent=0 // pred_check_branch
    %92 = sbr.rel (0) target = $region21
  $region20: #{_lambda_.28} parent=0 // pred_region
    _
  $region21: #{_lambda_.28} parent=0 // pred_fallthru
    _
  // Predicated region
  $region22: #{_lambda_.28} parent=0 // pred_check
    _
  $region23: #{_lambda_.28} parent=0 // pred_check_branch
    %94 = sbr.rel (0) target = $region25
  $region24: #{_lambda_.28} parent=0 // pred_region
    _
  $region25: #{_lambda_.28} parent=0 // pred_fallthru
    _

// kernel: _lambda_.29
$region0: #{_lambda_.29}
  #allocation0 [shape = 'u32[]', space=smem, size = 0x4, offset = 0x4, fixed_abs, tag = 'smem constant byte address 0x4 - core index']
  #allocation1 [shape = 'u32[144,128]{1,0:T(1,128)}', space=vmem, size = 0x12000, scoped, tag = 'internal scratch']
  %s0 = inlined_call_operand.vmem [shape: bf16[2,4,256], index: 0, kind: input, shape index: {}]
  %s1 = inlined_call_operand.vmem [shape: f32[256,10], index: 1, kind: input, shape index: {}]
  %s2 = inlined_call_operand.vmem [shape: f32[1,10], index: 2, kind: input, shape index: {}]
  %s3 = inlined_call_operand.hbm [shape: f32[2,10], index: 3, kind: output, shape index: {}]
  %s4 = sld [smem:[#allocation0]]
  $region22: #{_lambda_.29} parent=0
    _
  %s6 = ssub.s32 1, %s4
  %s7 = scalar_select 0, %s6, %s4
  $region1: #{_lambda_.29} parent=0
    #allocation2 [shape = 'u8[1024]{0}', space=vmem, size = 0x400, scoped, tag = 'output window, operand 0, single buffered']
    #allocation3 [shape = 's32[1]{0}', space=sflag, size = 0x4, scoped, tag = 'scoped memory for _lambda_.29']
    %8 = vsyncpa [#allocation3], 0
    // Predicated region
    $region2: #{_lambda_.29} parent=1 // pred_check
      _
    $region3: #{_lambda_.29} parent=1 // pred_check_branch
      %10 = sbr.rel (0) target = $region5
    $region4: #{_lambda_.29} parent=1 // pred_region
      _
    $region5: #{_lambda_.29} parent=1 // pred_fallthru
      _
    // Predicated region
    $region6: #{_lambda_.29} parent=1 // pred_check
      _
    $region7: #{_lambda_.29} parent=1 // pred_check_branch
      %12 = sbr.rel (0) target = $region9
    $region8: #{_lambda_.29} parent=1 // pred_region
      _
    $region9: #{_lambda_.29} parent=1 // pred_fallthru
      _
    // Predicated region
    $region10: #{_lambda_.29} parent=1 // pred_check
      _
    $region11: #{_lambda_.29} parent=1 // pred_check_branch
      %14 = sbr.rel (0) target = $region13
    $region12: #{_lambda_.29} parent=1 // pred_region
      _
    $region13: #{_lambda_.29} parent=1 // pred_fallthru
      _
    %v15 = vld [vmem:[%s0] sm:$0xf]
    %v16 = vld [vmem:[%s0 + $0x4] sm:$0xf]
    %v17 = vunpack.c.l.bf16 %v15
    %v18 = vunpack.c.l.bf16 %v16
    %v21 = vcombine.high %v17, %v17
    %v22 = vcombine.high %v18, %v18
    %vm25 = vcmask 1043456
    %v26 = vsel %vm25, %v17, 0.0
    %v27 = vrot.slane %v26, 4
    %v28 = vadd.f32 %v26, %v27
    %v29 = vrot.slane %v28, 2
    %v30 = vadd.f32 %v28, %v29
    %v31 = vrot.slane %v30, 1
    %v32 = vadd.f32 %v30, %v31
    %v33 = vsel %vm25, %v21, 0.0
    %v34 = vrot.slane %v33, 4
    %v35 = vadd.f32 %v33, %v34
    %v36 = vrot.slane %v35, 2
    %v37 = vadd.f32 %v35, %v36
    %v38 = vrot.slane %v37, 1
    %v39 = vadd.f32 %v37, %v38
    %v40 = vsel %vm25, %v18, 0.0
    %v41 = vrot.slane %v40, 4
    %v42 = vadd.f32 %v40, %v41
    %v43 = vrot.slane %v42, 2
    %v44 = vadd.f32 %v42, %v43
    %v45 = vrot.slane %v44, 1
    %v46 = vadd.f32 %v44, %v45
    %v47 = vsel %vm25, %v22, 0.0
    %v48 = vrot.slane %v47, 4
    %v49 = vadd.f32 %v47, %v48
    %v50 = vrot.slane %v49, 2
    %v51 = vadd.f32 %v49, %v50
    %v52 = vrot.slane %v51, 1
    %v53 = vadd.f32 %v51, %v52
    %v54 = vld [vmem:[%s1] sm:$0xff]
    %v55 = vld [vmem:[%s1 + $0x8] sm:$0xff]
    %v56 = vld [vmem:[%s1 + $0x10] sm:$0xff]
    %v57 = vld [vmem:[%s1 + $0x18] sm:$0xff]
    %v58 = vld [vmem:[%s1 + $0x20] sm:$0xff]
    %v59 = vld [vmem:[%s1 + $0x28] sm:$0xff]
    %v60 = vld [vmem:[%s1 + $0x30] sm:$0xff]
    %v61 = vld [vmem:[%s1 + $0x38] sm:$0xff]
    %v62 = vld [vmem:[%s1 + $0x40] sm:$0xff]
    %v63 = vld [vmem:[%s1 + $0x48] sm:$0xff]
    %v64 = vld [vmem:[%s1 + $0x50] sm:$0xff]
    %v65 = vld [vmem:[%s1 + $0x58] sm:$0xff]
    %v66 = vld [vmem:[%s1 + $0x60] sm:$0xff]
    %v67 = vld [vmem:[%s1 + $0x68] sm:$0xff]
    %v68 = vld [vmem:[%s1 + $0x70] sm:$0xff]
    %v69 = vld [vmem:[%s1 + $0x78] sm:$0xff]
    %v70 = vld [vmem:[%s1 + $0x80] sm:$0xff]
    %v71 = vld [vmem:[%s1 + $0x88] sm:$0xff]
    %v72 = vld [vmem:[%s1 + $0x90] sm:$0xff]
    %v73 = vld [vmem:[%s1 + $0x98] sm:$0xff]
    %v74 = vld [vmem:[%s1 + $0xa0] sm:$0xff]
    %v75 = vld [vmem:[%s1 + $0xa8] sm:$0xff]
    %v76 = vld [vmem:[%s1 + $0xb0] sm:$0xff]
    %v77 = vld [vmem:[%s1 + $0xb8] sm:$0xff]
    %v78 = vld [vmem:[%s1 + $0xc0] sm:$0xff]
    %v79 = vld [vmem:[%s1 + $0xc8] sm:$0xff]
    %v80 = vld [vmem:[%s1 + $0xd0] sm:$0xff]
    %v81 = vld [vmem:[%s1 + $0xd8] sm:$0xff]
    %v82 = vld [vmem:[%s1 + $0xe0] sm:$0xff]
    %v83 = vld [vmem:[%s1 + $0xe8] sm:$0xff]
    %v84 = vld [vmem:[%s1 + $0xf0] sm:$0xff]
    %v85 = vld [vmem:[%s1 + $0xf8] sm:$0xff]
    %v86 = vld [vmem:[%s2] sm:$0x1]
    %v88 = vlaneseq
    %v89 = vshrl.u32 %v88, 7
    %v90 = vsub.s32 0, %v89
    %v91 = vrot.slane %v86, %v90
    %vm97 = vcmask 1041409
    %v98 = vsel %vm97, %v46, %v32
    %v99 = vsel %vm97, %v53, %v39
    %102 = vmatprep.subr.mxu0 0.0
    %103 = vmatpush1.msra.mxu0 %v69
    %104 = vmatprep.subr.mxu0 0.0
    %105 = vmatpush1.msra.mxu0 %v68
    %106 = vmatprep.subr.mxu0 0.0
    %107 = vmatpush1.msra.mxu0 %v67
    %108 = vmatprep.subr.mxu0 0.0
    %109 = vmatpush1.msra.mxu0 %v66
    %110 = vmatprep.subr.mxu0 0.0
    %111 = vmatpush1.msra.mxu0 %v65
    %112 = vmatprep.subr.mxu0 0.0
    %113 = vmatpush1.msra.mxu0 %v64
    %114 = vmatprep.subr.mxu0 0.0
    %115 = vmatpush1.msra.mxu0 %v63
    %116 = vmatprep.subr.mxu0 0.0
    %117 = vmatpush1.msra.mxu0 %v62
    %118 = vmatprep.subr.mxu0 0.0
    %119 = vmatpush1.msra.mxu0 %v61
    %120 = vmatprep.subr.mxu0 0.0
    %121 = vmatpush1.msra.mxu0 %v60
    %122 = vmatprep.subr.mxu0 0.0
    %123 = vmatpush1.msra.mxu0 %v59
    %124 = vmatprep.subr.mxu0 0.0
    %125 = vmatpush1.msra.mxu0 %v58
    %126 = vmatprep.subr.mxu0 0.0
    %127 = vmatpush1.msra.mxu0 %v57
    %128 = vmatprep.subr.mxu0 0.0
    %129 = vmatpush1.msra.mxu0 %v56
    %130 = vmatprep.subr.mxu0 0.0
    %131 = vmatpush1.msra.mxu0 %v55
    %132 = vmatprep.subr.mxu0 0.0
    %133 = vmatpush1.msra.mxu0 %v54
    %134 = vmatprep.subr.mxu0 0.0
    %135 = vmatpush2.msra.mxu0 %v85
    %136 = vmatprep.subr.mxu0 0.0
    %137 = vmatpush2.msra.mxu0 %v84
    %138 = vmatprep.subr.mxu0 0.0
    %139 = vmatpush2.msra.mxu0 %v83
    %140 = vmatprep.subr.mxu0 0.0
    %141 = vmatpush2.msra.mxu0 %v82
    %142 = vmatprep.subr.mxu0 0.0
    %143 = vmatpush2.msra.mxu0 %v81
    %144 = vmatprep.subr.mxu0 0.0
    %145 = vmatpush2.msra.mxu0 %v80
    %146 = vmatprep.subr.mxu0 0.0
    %147 = vmatpush2.msra.mxu0 %v79
    %148 = vmatprep.subr.mxu0 0.0
    %149 = vmatpush2.msra.mxu0 %v78
    %150 = vmatprep.subr.mxu0 0.0
    %151 = vmatpush2.msra.mxu0 %v77
    %152 = vmatprep.subr.mxu0 0.0
    %153 = vmatpush2.msra.mxu0 %v76
    %154 = vmatprep.subr.mxu0 0.0
    %155 = vmatpush2.msra.mxu0 %v75
    %156 = vmatprep.subr.mxu0 0.0
    %157 = vmatpush2.msra.mxu0 %v74
    %158 = vmatprep.subr.mxu0 0.0
    %159 = vmatpush2.msra.mxu0 %v73
    %160 = vmatprep.subr.mxu0 0.0
    %161 = vmatpush2.msra.mxu0 %v72
    %162 = vmatprep.subr.mxu0 0.0
    %163 = vmatpush2.msra.mxu0 %v71
    %164 = vmatprep.subr.mxu0 0.0
    %165 = vmatpush2.msra.mxu0 %v70
    %166 = vmatprep.mubr.f32.mxu0 %v99
    %167 = vmatmul.mubr.f32.gmra.mxu0 %v98
    %v168 = vpop.f32.mrf.mxu0
    %v169 = vadd.f32 %v91, %v168
    %v170 = vpop.f32.mrf.mxu0
    %171 = vdwg.mxu0
    %vm172 = vcmask 74752
    %173 = vst.msk [vmem:[#allocation2] sm:$0x3] %vm172, %v169
    // Predicated region
    $region14: #{_lambda_.29} parent=1 // pred_check
      _
    $region15: #{_lambda_.29} parent=1 // pred_check_branch
      %175 = sbr.rel (0) target = $region17
    $region16: #{_lambda_.29} parent=1 // pred_region
      %s177 = ssub.s32 32, 32
      %178 = vsyncadd [#allocation3], %s177
      %s180 = sshll.u32 [#allocation2], 4
      %s181 = int_to_ptr.vmem [resolvable:$true] %s180
      %183 = dma.vmem_to_hbm [thread:$0]  %s181, 32, %s3, [#allocation3]
    $region17: #{_lambda_.29} parent=1 // pred_fallthru
      _
    // Predicated region
    $region18: #{_lambda_.29} parent=1 // pred_check
      _
    $region19: #{_lambda_.29} parent=1 // pred_check_branch
      %185 = sbr.rel (0) target = $region21
    $region20: #{_lambda_.29} parent=1 // pred_region
      %186 = dma.done [#allocation3], 32
    $region21: #{_lambda_.29} parent=1 // pred_fallthru
      _
    %187 = vsyncpa [#allocation3], 1

// kernel: _lambda_.25
$region0: #{_lambda_.25}
  #allocation0 [shape = 'u32[]', space=smem, size = 0x4, offset = 0x4, fixed_abs, tag = 'smem constant byte address 0x4 - core index']
  #allocation1 [shape = 'u32[144,128]{1,0:T(1,128)}', space=vmem, size = 0x12000, scoped, tag = 'internal scratch']
  %s0 = inlined_call_operand.vmem [shape: bf16[2,2,5,256], index: 0, kind: input, shape index: {}]
  %s1 = inlined_call_operand.vmem [shape: bf16[3,256,256], index: 1, kind: input, shape index: {}]
  %s2 = inlined_call_operand.vmem [shape: bf16[2,4,256], index: 2, kind: output, shape index: {0}]
  %s3 = inlined_call_operand.vmem [shape: f32[1,1,256], index: 3, kind: output, shape index: {1}]
  %s4 = inlined_call_operand.vmem [shape: f32[1,1,256], index: 4, kind: output, shape index: {2}]
  %5 = xla_tuple %s2, %s3, %s4
  %s6 = sld [smem:[#allocation0]]
  $region38: #{_lambda_.25} parent=0
    _
  %s8 = ssub.s32 1, %s6
  %s9 = scalar_select 0, %s8, %s6
  // Predicated region
  $region2: #{_lambda_.25} parent=0 // pred_check
    _
  $region3: #{_lambda_.25} parent=0 // pred_check_branch
    %11 = sbr.rel (0) target = $region5
  $region4: #{_lambda_.25} parent=0 // pred_region
    %s12 = sadd.s32 0, 0
    %s13 = smul.u32 2, %s12
    %p14 = scmp.lt.s32.totalorder %s13, 1
    %s15 = scalar_select %p14, %s13, 1
    %s16 = smul.addr %s15, 2
    %s17 = smul.addr %s16, 4
    %s18 = scalar_lea.vmem %s0, %s17
    %s19 = sadd.s32 0, 0
    %s20 = smul.u32 2, %s19
  $region5: #{_lambda_.25} parent=0 // pred_fallthru
    _
  // Predicated region
  $region6: #{_lambda_.25} parent=0 // pred_check
    _
  $region7: #{_lambda_.25} parent=0 // pred_check_branch
    %22 = sbr.rel (0) target = $region9
  $region8: #{_lambda_.25} parent=0 // pred_region
    _
  $region9: #{_lambda_.25} parent=0 // pred_fallthru
    _
  %s23 = sadd.s32 0, 0
  %s24 = smul.u32 2, %s23
  %p25 = scmp.lt.s32.totalorder %s24, 1
  %s26 = scalar_select %p25, %s24, 1
  %s27 = smul.addr %s26, 2
  %s28 = smul.addr %s27, 4
  %s29 = scalar_lea.vmem %s0, %s28
  %s30 = sadd.s32 0, 0
  %s31 = smul.u32 2, %s30
  %p32 = scmp.lt.s32.totalorder %s31, 1
  %s33 = scalar_select %p32, %s31, 1
  %s34 = smul.addr %s33, 2
  %s35 = smul.addr %s34, 2
  %s36 = scalar_lea.vmem %s2, %s35
  %s37 = sadd.s32 0, 0
  %s38 = smul.u32 2, %s37
  %p39 = scmp.lt.s32.totalorder %s38, 1
  %s40 = scalar_select %p39, %s38, 1
  %s41 = smul.addr %s40, 2
  %s42 = smul.addr %s41, 4
  %s43 = scalar_lea.vmem %s0, %s42
  %s44 = sadd.s32 0, 0
  %s45 = smul.u32 2, %s44
  %s46 = sadd.s32 0, 0
  %s47 = smul.u32 2, %s46
  %p48 = scmp.lt.s32.totalorder %s47, 1
  %s49 = scalar_select %p48, %s47, 1
  %s50 = smul.addr %s49, 2
  %s51 = smul.addr %s50, 2
  %s52 = scalar_lea.vmem %s2, %s51
  %s53 = sadd.s32 0, 0
  %s54 = smul.u32 2, %s53
  %p55 = scmp.eq.s32.totalorder 0, 0
  // Predicated region
  $region10: #{_lambda_.25} parent=0 // pred_check
    %p56 = pneg %p55
  $region11: #{_lambda_.25} parent=0 // pred_check_branch
    %58 = sbr.rel (%p56) target = $region13
  $region12: #{_lambda_.25} parent=0 // pred_region
    %v59 = vlaneseq
    %vm60 = vcmp.ge.s32.totalorder %v59, 0
    %vm61 = vcmp.lt.s32.totalorder %v59, 256
    %vm62 = vmand %vm60, %vm61
    %63 = vst.msk [vmem:[%s3] sm:$0x3] %vm62, 0.0
    %64 = vst.msk [vmem:[%s4] sm:$0x3] %vm62, 0.0
  $region13: #{_lambda_.25} parent=0 // pred_fallthru
    _
  %v65 = vld [vmem:[%s43] sm:$0x33]
  %v66 = vld [vmem:[%s1] sm:$0xff]
  %v67 = vld [vmem:[%s1 + $0x8] sm:$0xff]
  %v68 = vld [vmem:[%s1 + $0x10] sm:$0xff]
  %v69 = vld [vmem:[%s1 + $0x18] sm:$0xff]
  %v70 = vld [vmem:[%s1 + $0x20] sm:$0xff]
  %v71 = vld [vmem:[%s1 + $0x28] sm:$0xff]
  %v72 = vld [vmem:[%s1 + $0x30] sm:$0xff]
  %v73 = vld [vmem:[%s1 + $0x38] sm:$0xff]
  %v74 = vld [vmem:[%s1 + $0x40] sm:$0xff]
  %v75 = vld [vmem:[%s1 + $0x48] sm:$0xff]
  %v76 = vld [vmem:[%s1 + $0x50] sm:$0xff]
  %v77 = vld [vmem:[%s1 + $0x58] sm:$0xff]
  %v78 = vld [vmem:[%s1 + $0x60] sm:$0xff]
  %v79 = vld [vmem:[%s1 + $0x68] sm:$0xff]
  %v80 = vld [vmem:[%s1 + $0x70] sm:$0xff]
  %v81 = vld [vmem:[%s1 + $0x78] sm:$0xff]
  %v82 = vld [vmem:[%s1 + $0x80] sm:$0xff]
  %v83 = vld [vmem:[%s1 + $0x88] sm:$0xff]
  %v84 = vld [vmem:[%s1 + $0x90] sm:$0xff]
  %v85 = vld [vmem:[%s1 + $0x98] sm:$0xff]
  %v86 = vld [vmem:[%s1 + $0xa0] sm:$0xff]
  %v87 = vld [vmem:[%s1 + $0xa8] sm:$0xff]
  %v88 = vld [vmem:[%s1 + $0xb0] sm:$0xff]
  %v89 = vld [vmem:[%s1 + $0xb8] sm:$0xff]
  %v90 = vld [vmem:[%s1 + $0xc0] sm:$0xff]
  %v91 = vld [vmem:[%s1 + $0xc8] sm:$0xff]
  %v92 = vld [vmem:[%s1 + $0xd0] sm:$0xff]
  %v93 = vld [vmem:[%s1 + $0xd8] sm:$0xff]
  %v94 = vld [vmem:[%s1 + $0xe0] sm:$0xff]
  %v95 = vld [vmem:[%s1 + $0xe8] sm:$0xff]
  %v96 = vld [vmem:[%s1 + $0xf0] sm:$0xff]
  %v97 = vld [vmem:[%s1 + $0xf8] sm:$0xff]
  %s98 = scalar_lea.vmem %s43, 16
  %v99 = vld [vmem:[%s98] sm:$0x33]
  %s100 = scalar_lea.vmem %s1, 256
  %v101 = vld [vmem:[%s100] sm:$0xff]
  %v102 = vld [vmem:[%s100 + $0x8] sm:$0xff]
  %v103 = vld [vmem:[%s100 + $0x10] sm:$0xff]
  %v104 = vld [vmem:[%s100 + $0x18] sm:$0xff]
  %v105 = vld [vmem:[%s100 + $0x20] sm:$0xff]
  %v106 = vld [vmem:[%s100 + $0x28] sm:$0xff]
  %v107 = vld [vmem:[%s100 + $0x30] sm:$0xff]
  %v108 = vld [vmem:[%s100 + $0x38] sm:$0xff]
  %v109 = vld [vmem:[%s100 + $0x40] sm:$0xff]
  %v110 = vld [vmem:[%s100 + $0x48] sm:$0xff]
  %v111 = vld [vmem:[%s100 + $0x50] sm:$0xff]
  %v112 = vld [vmem:[%s100 + $0x58] sm:$0xff]
  %v113 = vld [vmem:[%s100 + $0x60] sm:$0xff]
  %v114 = vld [vmem:[%s100 + $0x68] sm:$0xff]
  %v115 = vld [vmem:[%s100 + $0x70] sm:$0xff]
  %v116 = vld [vmem:[%s100 + $0x78] sm:$0xff]
  %v117 = vld [vmem:[%s100 + $0x80] sm:$0xff]
  %v118 = vld [vmem:[%s100 + $0x88] sm:$0xff]
  %v119 = vld [vmem:[%s100 + $0x90] sm:$0xff]
  %v120 = vld [vmem:[%s100 + $0x98] sm:$0xff]
  %v121 = vld [vmem:[%s100 + $0xa0] sm:$0xff]
  %v122 = vld [vmem:[%s100 + $0xa8] sm:$0xff]
  %v123 = vld [vmem:[%s100 + $0xb0] sm:$0xff]
  %v124 = vld [vmem:[%s100 + $0xb8] sm:$0xff]
  %v125 = vld [vmem:[%s100 + $0xc0] sm:$0xff]
  %v126 = vld [vmem:[%s100 + $0xc8] sm:$0xff]
  %v127 = vld [vmem:[%s100 + $0xd0] sm:$0xff]
  %v128 = vld [vmem:[%s100 + $0xd8] sm:$0xff]
  %v129 = vld [vmem:[%s100 + $0xe0] sm:$0xff]
  %v130 = vld [vmem:[%s100 + $0xe8] sm:$0xff]
  %v131 = vld [vmem:[%s100 + $0xf0] sm:$0xff]
  %v132 = vld [vmem:[%s100 + $0xf8] sm:$0xff]
  %v134 = vunpack.c.l.b16 %v99
  %v135 = vunpack.c.h.b16 %v99
  %v136 = vpack.c.b16 %v134, %v134
  %v137 = vpack.c.b16 %v135, %v135
  %v172 = vunpack.c.l.b16 %v101
  %v173 = vunpack.c.h.b16 %v101
  %v174 = vunpack.c.l.b16 %v102
  %v175 = vunpack.c.h.b16 %v102
  %v176 = vunpack.c.l.b16 %v103
  %v177 = vunpack.c.h.b16 %v103
  %v178 = vunpack.c.l.b16 %v104
  %v179 = vunpack.c.h.b16 %v104
  %v180 = vunpack.c.l.b16 %v105
  %v181 = vunpack.c.h.b16 %v105
  %v182 = vunpack.c.l.b16 %v106
  %v183 = vunpack.c.h.b16 %v106
  %v184 = vunpack.c.l.b16 %v107
  %v185 = vunpack.c.h.b16 %v107
  %v186 = vunpack.c.l.b16 %v108
  %v187 = vunpack.c.h.b16 %v108
  %v188 = vunpack.c.l.b16 %v109
  %v189 = vunpack.c.h.b16 %v109
  %v190 = vunpack.c.l.b16 %v110
  %v191 = vunpack.c.h.b16 %v110
  %v192 = vunpack.c.l.b16 %v111
  %v193 = vunpack.c.h.b16 %v111
  %v194 = vunpack.c.l.b16 %v112
  %v195 = vunpack.c.h.b16 %v112
  %v196 = vunpack.c.l.b16 %v113
  %v197 = vunpack.c.h.b16 %v113
  %v198 = vunpack.c.l.b16 %v114
  %v199 = vunpack.c.h.b16 %v114
  %v200 = vunpack.c.l.b16 %v115
  %v201 = vunpack.c.h.b16 %v115
  %v202 = vunpack.c.l.b16 %v116
  %v203 = vunpack.c.h.b16 %v116
  %v204 = vunpack.c.l.b16 %v117
  %v205 = vunpack.c.h.b16 %v117
  %v206 = vunpack.c.l.b16 %v118
  %v207 = vunpack.c.h.b16 %v118
  %v208 = vunpack.c.l.b16 %v119
  %v209 = vunpack.c.h.b16 %v119
  %v210 = vunpack.c.l.b16 %v120
  %v211 = vunpack.c.h.b16 %v120
  %v212 = vunpack.c.l.b16 %v121
  %v213 = vunpack.c.h.b16 %v121
  %v214 = vunpack.c.l.b16 %v122
  %v215 = vunpack.c.h.b16 %v122
  %v216 = vunpack.c.l.b16 %v123
  %v217 = vunpack.c.h.b16 %v123
  %v218 = vunpack.c.l.b16 %v124
  %v219 = vunpack.c.h.b16 %v124
  %v220 = vunpack.c.l.b16 %v125
  %v221 = vunpack.c.h.b16 %v125
  %v222 = vunpack.c.l.b16 %v126
  %v223 = vunpack.c.h.b16 %v126
  %v224 = vunpack.c.l.b16 %v127
  %v225 = vunpack.c.h.b16 %v127
  %v226 = vunpack.c.l.b16 %v128
  %v227 = vunpack.c.h.b16 %v128
  %v228 = vunpack.c.l.b16 %v129
  %v229 = vunpack.c.h.b16 %v129
  %v230 = vunpack.c.l.b16 %v130
  %v231 = vunpack.c.h.b16 %v130
  %v232 = vunpack.c.l.b16 %v131
  %v233 = vunpack.c.h.b16 %v131
  %v234 = vunpack.c.l.b16 %v132
  %v235 = vunpack.c.h.b16 %v132
  %v236 = vpack.c.b16 %v174, %v172
  %v237 = vpack.c.b16 %v175, %v173
  %v238 = vpack.c.b16 %v178, %v176
  %v239 = vpack.c.b16 %v179, %v177
  %v240 = vpack.c.b16 %v182, %v180
  %v241 = vpack.c.b16 %v183, %v181
  %v242 = vpack.c.b16 %v186, %v184
  %v243 = vpack.c.b16 %v187, %v185
  %v244 = vpack.c.b16 %v190, %v188
  %v245 = vpack.c.b16 %v191, %v189
  %v246 = vpack.c.b16 %v194, %v192
  %v247 = vpack.c.b16 %v195, %v193
  %v248 = vpack.c.b16 %v198, %v196
  %v249 = vpack.c.b16 %v199, %v197
  %v250 = vpack.c.b16 %v202, %v200
  %v251 = vpack.c.b16 %v203, %v201
  %v252 = vpack.c.b16 %v206, %v204
  %v253 = vpack.c.b16 %v207, %v205
  %v254 = vpack.c.b16 %v210, %v208
  %v255 = vpack.c.b16 %v211, %v209
  %v256 = vpack.c.b16 %v214, %v212
  %v257 = vpack.c.b16 %v215, %v213
  %v258 = vpack.c.b16 %v218, %v216
  %v259 = vpack.c.b16 %v219, %v217
  %v260 = vpack.c.b16 %v222, %v220
  %v261 = vpack.c.b16 %v223, %v221
  %v262 = vpack.c.b16 %v226, %v224
  %v263 = vpack.c.b16 %v227, %v225
  %v264 = vpack.c.b16 %v230, %v228
  %v265 = vpack.c.b16 %v231, %v229
  %v266 = vpack.c.b16 %v234, %v232
  %v267 = vpack.c.b16 %v235, %v233
  %300 = vmatprep.subr.bf16.mxu0 %v251
  %301 = vmatpush1.bf16.msra.mxu0 %v250
  %302 = vmatprep.subr.bf16.mxu0 %v249
  %303 = vmatpush1.bf16.msra.mxu0 %v248
  %304 = vmatprep.subr.bf16.mxu0 %v247
  %305 = vmatpush1.bf16.msra.mxu0 %v246
  %306 = vmatprep.subr.bf16.mxu0 %v245
  %307 = vmatpush1.bf16.msra.mxu0 %v244
  %308 = vmatprep.subr.bf16.mxu0 %v243
  %309 = vmatpush1.bf16.msra.mxu0 %v242
  %310 = vmatprep.subr.bf16.mxu0 %v241
  %311 = vmatpush1.bf16.msra.mxu0 %v240
  %312 = vmatprep.subr.bf16.mxu0 %v239
  %313 = vmatpush1.bf16.msra.mxu0 %v238
  %314 = vmatprep.subr.bf16.mxu0 %v237
  %315 = vmatpush1.bf16.msra.mxu0 %v236
  %316 = vmatprep.subr.bf16.mxu0 %v267
  %317 = vmatpush2.bf16.msra.mxu0 %v266
  %318 = vmatprep.subr.bf16.mxu0 %v265
  %319 = vmatpush2.bf16.msra.mxu0 %v264
  %320 = vmatprep.subr.bf16.mxu0 %v263
  %321 = vmatpush2.bf16.msra.mxu0 %v262
  %322 = vmatprep.subr.bf16.mxu0 %v261
  %323 = vmatpush2.bf16.msra.mxu0 %v260
  %324 = vmatprep.subr.bf16.mxu0 %v259
  %325 = vmatpush2.bf16.msra.mxu0 %v258
  %326 = vmatprep.subr.bf16.mxu0 %v257
  %327 = vmatpush2.bf16.msra.mxu0 %v256
  %328 = vmatprep.subr.bf16.mxu0 %v255
  %329 = vmatpush2.bf16.msra.mxu0 %v254
  %330 = vmatprep.subr.bf16.mxu0 %v253
  %331 = vmatpush2.bf16.msra.mxu0 %v252
  %332 = vmatprep.mubr.bf16.mxu0 %v137
  %333 = vmatmul.mubr.bf16.gmra.mxu0 %v136
  %v334 = vpop.f32.mrf.mxu0
  %v335 = vadd.f32 0.0, %v334
  %v336 = vpop.f32.mrf.mxu0
  %v337 = vadd.f32 0.0, %v336
  %v338 = vpop.f32.mrf.mxu0
  %v339 = vpop.f32.mrf.mxu0
  %340 = vdwg.mxu0
  %v342 = vunpack.c.l.b16 %v65
  %v343 = vunpack.c.h.b16 %v65
  %v344 = vpack.c.b16 %v342, %v342
  %v345 = vpack.c.b16 %v343, %v343
  %v380 = vunpack.c.l.b16 %v66
  %v381 = vunpack.c.h.b16 %v66
  %v382 = vunpack.c.l.b16 %v67
  %v383 = vunpack.c.h.b16 %v67
  %v384 = vunpack.c.l.b16 %v68
  %v385 = vunpack.c.h.b16 %v68
  %v386 = vunpack.c.l.b16 %v69
  %v387 = vunpack.c.h.b16 %v69
  %v388 = vunpack.c.l.b16 %v70
  %v389 = vunpack.c.h.b16 %v70
  %v390 = vunpack.c.l.b16 %v71
  %v391 = vunpack.c.h.b16 %v71
  %v392 = vunpack.c.l.b16 %v72
  %v393 = vunpack.c.h.b16 %v72
  %v394 = vunpack.c.l.b16 %v73
  %v395 = vunpack.c.h.b16 %v73
  %v396 = vunpack.c.l.b16 %v74
  %v397 = vunpack.c.h.b16 %v74
  %v398 = vunpack.c.l.b16 %v75
  %v399 = vunpack.c.h.b16 %v75
  %v400 = vunpack.c.l.b16 %v76
  %v401 = vunpack.c.h.b16 %v76
  %v402 = vunpack.c.l.b16 %v77
  %v403 = vunpack.c.h.b16 %v77
  %v404 = vunpack.c.l.b16 %v78
  %v405 = vunpack.c.h.b16 %v78
  %v406 = vunpack.c.l.b16 %v79
  %v407 = vunpack.c.h.b16 %v79
  %v408 = vunpack.c.l.b16 %v80
  %v409 = vunpack.c.h.b16 %v80
  %v410 = vunpack.c.l.b16 %v81
  %v411 = vunpack.c.h.b16 %v81
  %v412 = vunpack.c.l.b16 %v82
  %v413 = vunpack.c.h.b16 %v82
  %v414 = vunpack.c.l.b16 %v83
  %v415 = vunpack.c.h.b16 %v83
  %v416 = vunpack.c.l.b16 %v84
  %v417 = vunpack.c.h.b16 %v84
  %v418 = vunpack.c.l.b16 %v85
  %v419 = vunpack.c.h.b16 %v85
  %v420 = vunpack.c.l.b16 %v86
  %v421 = vunpack.c.h.b16 %v86
  %v422 = vunpack.c.l.b16 %v87
  %v423 = vunpack.c.h.b16 %v87
  %v424 = vunpack.c.l.b16 %v88
  %v425 = vunpack.c.h.b16 %v88
  %v426 = vunpack.c.l.b16 %v89
  %v427 = vunpack.c.h.b16 %v89
  %v428 = vunpack.c.l.b16 %v90
  %v429 = vunpack.c.h.b16 %v90
  %v430 = vunpack.c.l.b16 %v91
  %v431 = vunpack.c.h.b16 %v91
  %v432 = vunpack.c.l.b16 %v92
  %v433 = vunpack.c.h.b16 %v92
  %v434 = vunpack.c.l.b16 %v93
  %v435 = vunpack.c.h.b16 %v93
  %v436 = vunpack.c.l.b16 %v94
  %v437 = vunpack.c.h.b16 %v94
  %v438 = vunpack.c.l.b16 %v95
  %v439 = vunpack.c.h.b16 %v95
  %v440 = vunpack.c.l.b16 %v96
  %v441 = vunpack.c.h.b16 %v96
  %v442 = vunpack.c.l.b16 %v97
  %v443 = vunpack.c.h.b16 %v97
  %v444 = vpack.c.b16 %v382, %v380
  %v445 = vpack.c.b16 %v383, %v381
  %v446 = vpack.c.b16 %v386, %v384
  %v447 = vpack.c.b16 %v387, %v385
  %v448 = vpack.c.b16 %v390, %v388
  %v449 = vpack.c.b16 %v391, %v389
  %v450 = vpack.c.b16 %v394, %v392
  %v451 = vpack.c.b16 %v395, %v393
  %v452 = vpack.c.b16 %v398, %v396
  %v453 = vpack.c.b16 %v399, %v397
  %v454 = vpack.c.b16 %v402, %v400
  %v455 = vpack.c.b16 %v403, %v401
  %v456 = vpack.c.b16 %v406, %v404
  %v457 = vpack.c.b16 %v407, %v405
  %v458 = vpack.c.b16 %v410, %v408
  %v459 = vpack.c.b16 %v411, %v409
  %v460 = vpack.c.b16 %v414, %v412
  %v461 = vpack.c.b16 %v415, %v413
  %v462 = vpack.c.b16 %v418, %v416
  %v463 = vpack.c.b16 %v419, %v417
  %v464 = vpack.c.b16 %v422, %v420
  %v465 = vpack.c.b16 %v423, %v421
  %v466 = vpack.c.b16 %v426, %v424
  %v467 = vpack.c.b16 %v427, %v425
  %v468 = vpack.c.b16 %v430, %v428
  %v469 = vpack.c.b16 %v431, %v429
  %v470 = vpack.c.b16 %v434, %v432
  %v471 = vpack.c.b16 %v435, %v433
  %v472 = vpack.c.b16 %v438, %v436
  %v473 = vpack.c.b16 %v439, %v437
  %v474 = vpack.c.b16 %v442, %v440
  %v475 = vpack.c.b16 %v443, %v441
  %508 = vmatprep.subr.bf16.mxu0 %v459
  %509 = vmatpush1.bf16.msra.mxu0 %v458
  %510 = vmatprep.subr.bf16.mxu0 %v457
  %511 = vmatpush1.bf16.msra.mxu0 %v456
  %512 = vmatprep.subr.bf16.mxu0 %v455
  %513 = vmatpush1.bf16.msra.mxu0 %v454
  %514 = vmatprep.subr.bf16.mxu0 %v453
  %515 = vmatpush1.bf16.msra.mxu0 %v452
  %516 = vmatprep.subr.bf16.mxu0 %v451
  %517 = vmatpush1.bf16.msra.mxu0 %v450
  %518 = vmatprep.subr.bf16.mxu0 %v449
  %519 = vmatpush1.bf16.msra.mxu0 %v448
  %520 = vmatprep.subr.bf16.mxu0 %v447
  %521 = vmatpush1.bf16.msra.mxu0 %v446
  %522 = vmatprep.subr.bf16.mxu0 %v445
  %523 = vmatpush1.bf16.msra.mxu0 %v444
  %524 = vmatprep.subr.bf16.mxu0 %v475
  %525 = vmatpush2.bf16.msra.mxu0 %v474
  %526 = vmatprep.subr.bf16.mxu0 %v473
  %527 = vmatpush2.bf16.msra.mxu0 %v472
  %528 = vmatprep.subr.bf16.mxu0 %v471
  %529 = vmatpush2.bf16.msra.mxu0 %v470
  %530 = vmatprep.subr.bf16.mxu0 %v469
  %531 = vmatpush2.bf16.msra.mxu0 %v468
  %532 = vmatprep.subr.bf16.mxu0 %v467
  %533 = vmatpush2.bf16.msra.mxu0 %v466
  %534 = vmatprep.subr.bf16.mxu0 %v465
  %535 = vmatpush2.bf16.msra.mxu0 %v464
  %536 = vmatprep.subr.bf16.mxu0 %v463
  %537 = vmatpush2.bf16.msra.mxu0 %v462
  %538 = vmatprep.subr.bf16.mxu0 %v461
  %539 = vmatpush2.bf16.msra.mxu0 %v460
  %540 = vmatprep.mubr.bf16.mxu0 %v345
  %541 = vmatmul.mubr.bf16.gmra.mxu0 %v344
  %v542 = vpop.f32.mrf.mxu0
  %v543 = vadd.f32 %v335, %v542
  %v544 = vpop.f32.mrf.mxu0
  %v545 = vadd.f32 %v337, %v544
  %v546 = vpop.f32.mrf.mxu0
  %v547 = vpop.f32.mrf.mxu0
  %548 = vdwg.mxu0
  %v549 = vld [vmem:[%s43] sm:$0x77]
  %s550 = scalar_lea.vmem %s1, 512
  %v551 = vld [vmem:[%s550] sm:$0xff]
  %v552 = vld [vmem:[%s550 + $0x8] sm:$0xff]
  %v553 = vld [vmem:[%s550 + $0x10] sm:$0xff]
  %v554 = vld [vmem:[%s550 + $0x18] sm:$0xff]
  %v555 = vld [vmem:[%s550 + $0x20] sm:$0xff]
  %v556 = vld [vmem:[%s550 + $0x28] sm:$0xff]
  %v557 = vld [vmem:[%s550 + $0x30] sm:$0xff]
  %v558 = vld [vmem:[%s550 + $0x38] sm:$0xff]
  %v559 = vld [vmem:[%s550 + $0x40] sm:$0xff]
  %v560 = vld [vmem:[%s550 + $0x48] sm:$0xff]
  %v561 = vld [vmem:[%s550 + $0x50] sm:$0xff]
  %v562 = vld [vmem:[%s550 + $0x58] sm:$0xff]
  %v563 = vld [vmem:[%s550 + $0x60] sm:$0xff]
  %v564 = vld [vmem:[%s550 + $0x68] sm:$0xff]
  %v565 = vld [vmem:[%s550 + $0x70] sm:$0xff]
  %v566 = vld [vmem:[%s550 + $0x78] sm:$0xff]
  %v567 = vld [vmem:[%s550 + $0x80] sm:$0xff]
  %v568 = vld [vmem:[%s550 + $0x88] sm:$0xff]
  %v569 = vld [vmem:[%s550 + $0x90] sm:$0xff]
  %v570 = vld [vmem:[%s550 + $0x98] sm:$0xff]
  %v571 = vld [vmem:[%s550 + $0xa0] sm:$0xff]
  %v572 = vld [vmem:[%s550 + $0xa8] sm:$0xff]
  %v573 = vld [vmem:[%s550 + $0xb0] sm:$0xff]
  %v574 = vld [vmem:[%s550 + $0xb8] sm:$0xff]
  %v575 = vld [vmem:[%s550 + $0xc0] sm:$0xff]
  %v576 = vld [vmem:[%s550 + $0xc8] sm:$0xff]
  %v577 = vld [vmem:[%s550 + $0xd0] sm:$0xff]
  %v578 = vld [vmem:[%s550 + $0xd8] sm:$0xff]
  %v579 = vld [vmem:[%s550 + $0xe0] sm:$0xff]
  %v580 = vld [vmem:[%s550 + $0xe8] sm:$0xff]
  %v581 = vld [vmem:[%s550 + $0xf0] sm:$0xff]
  %v582 = vld [vmem:[%s550 + $0xf8] sm:$0xff]
  %v584 = vunpack.c.l.b16 %v549
  %v585 = vunpack.c.h.b16 %v549
  %v586 = vpack.c.b16 %v584, %v584
  %v587 = vpack.c.b16 %v585, %v585
  %v589 = vshrl.u32 %v586, 16
  %v591 = vshll.u32 %v586, 16
  %v593 = vrot.slane %v591, 1
  %v594 = vor.u32 %v589, %v593
  %v596 = vshrl.u32 %v587, 16
  %v598 = vshll.u32 %v587, 16
  %v600 = vrot.slane %v598, 1
  %v601 = vor.u32 %v596, %v600
  %v636 = vunpack.c.l.b16 %v551
  %v637 = vunpack.c.h.b16 %v551
  %v638 = vunpack.c.l.b16 %v552
  %v639 = vunpack.c.h.b16 %v552
  %v640 = vunpack.c.l.b16 %v553
  %v641 = vunpack.c.h.b16 %v553
  %v642 = vunpack.c.l.b16 %v554
  %v643 = vunpack.c.h.b16 %v554
  %v644 = vunpack.c.l.b16 %v555
  %v645 = vunpack.c.h.b16 %v555
  %v646 = vunpack.c.l.b16 %v556
  %v647 = vunpack.c.h.b16 %v556
  %v648 = vunpack.c.l.b16 %v557
  %v649 = vunpack.c.h.b16 %v557
  %v650 = vunpack.c.l.b16 %v558
  %v651 = vunpack.c.h.b16 %v558
  %v652 = vunpack.c.l.b16 %v559
  %v653 = vunpack.c.h.b16 %v559
  %v654 = vunpack.c.l.b16 %v560
  %v655 = vunpack.c.h.b16 %v560
  %v656 = vunpack.c.l.b16 %v561
  %v657 = vunpack.c.h.b16 %v561
  %v658 = vunpack.c.l.b16 %v562
  %v659 = vunpack.c.h.b16 %v562
  %v660 = vunpack.c.l.b16 %v563
  %v661 = vunpack.c.h.b16 %v563
  %v662 = vunpack.c.l.b16 %v564
  %v663 = vunpack.c.h.b16 %v564
  %v664 = vunpack.c.l.b16 %v565
  %v665 = vunpack.c.h.b16 %v565
  %v666 = vunpack.c.l.b16 %v566
  %v667 = vunpack.c.h.b16 %v566
  %v668 = vunpack.c.l.b16 %v567
  %v669 = vunpack.c.h.b16 %v567
  %v670 = vunpack.c.l.b16 %v568
  %v671 = vunpack.c.h.b16 %v568
  %v672 = vunpack.c.l.b16 %v569
  %v673 = vunpack.c.h.b16 %v569
  %v674 = vunpack.c.l.b16 %v570
  %v675 = vunpack.c.h.b16 %v570
  %v676 = vunpack.c.l.b16 %v571
  %v677 = vunpack.c.h.b16 %v571
  %v678 = vunpack.c.l.b16 %v572
  %v679 = vunpack.c.h.b16 %v572
  %v680 = vunpack.c.l.b16 %v573
  %v681 = vunpack.c.h.b16 %v573
  %v682 = vunpack.c.l.b16 %v574
  %v683 = vunpack.c.h.b16 %v574
  %v684 = vunpack.c.l.b16 %v575
  %v685 = vunpack.c.h.b16 %v575
  %v686 = vunpack.c.l.b16 %v576
  %v687 = vunpack.c.h.b16 %v576
  %v688 = vunpack.c.l.b16 %v577
  %v689 = vunpack.c.h.b16 %v577
  %v690 = vunpack.c.l.b16 %v578
  %v691 = vunpack.c.h.b16 %v578
  %v692 = vunpack.c.l.b16 %v579
  %v693 = vunpack.c.h.b16 %v579
  %v694 = vunpack.c.l.b16 %v580
  %v695 = vunpack.c.h.b16 %v580
  %v696 = vunpack.c.l.b16 %v581
  %v697 = vunpack.c.h.b16 %v581
  %v698 = vunpack.c.l.b16 %v582
  %v699 = vunpack.c.h.b16 %v582
  %v700 = vpack.c.b16 %v638, %v636
  %v701 = vpack.c.b16 %v639, %v637
  %v702 = vpack.c.b16 %v642, %v640
  %v703 = vpack.c.b16 %v643, %v641
  %v704 = vpack.c.b16 %v646, %v644
  %v705 = vpack.c.b16 %v647, %v645
  %v706 = vpack.c.b16 %v650, %v648
  %v707 = vpack.c.b16 %v651, %v649
  %v708 = vpack.c.b16 %v654, %v652
  %v709 = vpack.c.b16 %v655, %v653
  %v710 = vpack.c.b16 %v658, %v656
  %v711 = vpack.c.b16 %v659, %v657
  %v712 = vpack.c.b16 %v662, %v660
  %v713 = vpack.c.b16 %v663, %v661
  %v714 = vpack.c.b16 %v666, %v664
  %v715 = vpack.c.b16 %v667, %v665
  %v716 = vpack.c.b16 %v670, %v668
  %v717 = vpack.c.b16 %v671, %v669
  %v718 = vpack.c.b16 %v674, %v672
  %v719 = vpack.c.b16 %v675, %v673
  %v720 = vpack.c.b16 %v678, %v676
  %v721 = vpack.c.b16 %v679, %v677
  %v722 = vpack.c.b16 %v682, %v680
  %v723 = vpack.c.b16 %v683, %v681
  %v724 = vpack.c.b16 %v686, %v684
  %v725 = vpack.c.b16 %v687, %v685
  %v726 = vpack.c.b16 %v690, %v688
  %v727 = vpack.c.b16 %v691, %v689
  %v728 = vpack.c.b16 %v694, %v692
  %v729 = vpack.c.b16 %v695, %v693
  %v730 = vpack.c.b16 %v698, %v696
  %v731 = vpack.c.b16 %v699, %v697
  %764 = vmatprep.subr.bf16.mxu0 %v715
  %765 = vmatpush1.bf16.msra.mxu0 %v714
  %766 = vmatprep.subr.bf16.mxu0 %v713
  %767 = vmatpush1.bf16.msra.mxu0 %v712
  %768 = vmatprep.subr.bf16.mxu0 %v711
  %769 = vmatpush1.bf16.msra.mxu0 %v710
  %770 = vmatprep.subr.bf16.mxu0 %v709
  %771 = vmatpush1.bf16.msra.mxu0 %v708
  %772 = vmatprep.subr.bf16.mxu0 %v707
  %773 = vmatpush1.bf16.msra.mxu0 %v706
  %774 = vmatprep.subr.bf16.mxu0 %v705
  %775 = vmatpush1.bf16.msra.mxu0 %v704
  %776 = vmatprep.subr.bf16.mxu0 %v703
  %777 = vmatpush1.bf16.msra.mxu0 %v702
  %778 = vmatprep.subr.bf16.mxu0 %v701
  %779 = vmatpush1.bf16.msra.mxu0 %v700
  %780 = vmatprep.subr.bf16.mxu0 %v731
  %781 = vmatpush2.bf16.msra.mxu0 %v730
  %782 = vmatprep.subr.bf16.mxu0 %v729
  %783 = vmatpush2.bf16.msra.mxu0 %v728
  %784 = vmatprep.subr.bf16.mxu0 %v727
  %785 = vmatpush2.bf16.msra.mxu0 %v726
  %786 = vmatprep.subr.bf16.mxu0 %v725
  %787 = vmatpush2.bf16.msra.mxu0 %v724
  %788 = vmatprep.subr.bf16.mxu0 %v723
  %789 = vmatpush2.bf16.msra.mxu0 %v722
  %790 = vmatprep.subr.bf16.mxu0 %v721
  %791 = vmatpush2.bf16.msra.mxu0 %v720
  %792 = vmatprep.subr.bf16.mxu0 %v719
  %793 = vmatpush2.bf16.msra.mxu0 %v718
  %794 = vmatprep.subr.bf16.mxu0 %v717
  %795 = vmatpush2.bf16.msra.mxu0 %v716
  %796 = vmatprep.mubr.bf16.mxu0 %v601
  %797 = vmatmul.mubr.bf16.gmra.mxu0 %v594
  %v798 = vpop.f32.mrf.mxu0
  %v799 = vadd.f32 0.0, %v798
  %v800 = vpop.f32.mrf.mxu0
  %v801 = vadd.f32 0.0, %v800
  %v802 = vpop.f32.mrf.mxu0
  %v803 = vpop.f32.mrf.mxu0
  %804 = vdwg.mxu0
  %v805 = vadd.f32 %v543, %v799
  %v806 = vadd.f32 %v545, %v801
  %v807 = vpack.c.bf16 %v805, %v805
  %v808 = vpack.c.bf16 %v806, %v806
  %v811 = vcombine.low %v807, %v808
  %v813 = vunpack.c.l.s4 1983009808
  %v814 = vunpack.c.0.s8 %v813
  %v815 = vlaneseq
  %v816 = vshrl.u32 %v815, 7
  %v817 = vsub.s32 %v814, %v816
  %v818 = vrot.slane %v811, %v817
  %820 = vst [vmem:[%s52] sm:$0xf] %v818
  %vm821 = vcmask 1043456
  %v822 = vsel %vm821, %v805, 0.0
  %v823 = vrot.slane %v822, 4
  %v824 = vadd.f32 %v822, %v823
  %v825 = vrot.slane %v824, 2
  %v826 = vadd.f32 %v824, %v825
  %v827 = vrot.slane %v826, 1
  %v828 = vadd.f32 %v826, %v827
  %v829 = vsel %vm821, %v806, 0.0
  %v830 = vrot.slane %v829, 4
  %v831 = vadd.f32 %v829, %v830
  %v832 = vrot.slane %v831, 2
  %v833 = vadd.f32 %v831, %v832
  %v834 = vrot.slane %v833, 1
  %v835 = vadd.f32 %v833, %v834
  %v836 = vadd.f32 %v828, 0.0
  %v837 = vadd.f32 %v835, 0.0
  %v838 = vmul.f32 %v805, %v805
  %v839 = vmul.f32 %v806, %v806
  %v840 = vsel %vm821, %v838, 0.0
  %v841 = vrot.slane %v840, 4
  %v842 = vadd.f32 %v840, %v841
  %v843 = vrot.slane %v842, 2
  %v844 = vadd.f32 %v842, %v843
  %v845 = vrot.slane %v844, 1
  %v846 = vadd.f32 %v844, %v845
  %v847 = vsel %vm821, %v839, 0.0
  %v848 = vrot.slane %v847, 4
  %v849 = vadd.f32 %v847, %v848
  %v850 = vrot.slane %v849, 2
  %v851 = vadd.f32 %v849, %v850
  %v852 = vrot.slane %v851, 1
  %v853 = vadd.f32 %v851, %v852
  %v854 = vadd.f32 %v846, 0.0
  %v855 = vadd.f32 %v853, 0.0
  %s856 = scalar_lea.vmem %s43, 8
  %v857 = vld [vmem:[%s856] sm:$0x33]
  %v858 = vld [vmem:[%s1] sm:$0xff]
  %v859 = vld [vmem:[%s1 + $0x8] sm:$0xff]
  %v860 = vld [vmem:[%s1 + $0x10] sm:$0xff]
  %v861 = vld [vmem:[%s1 + $0x18] sm:$0xff]
  %v862 = vld [vmem:[%s1 + $0x20] sm:$0xff]
  %v863 = vld [vmem:[%s1 + $0x28] sm:$0xff]
  %v864 = vld [vmem:[%s1 + $0x30] sm:$0xff]
  %v865 = vld [vmem:[%s1 + $0x38] sm:$0xff]
  %v866 = vld [vmem:[%s1 + $0x40] sm:$0xff]
  %v867 = vld [vmem:[%s1 + $0x48] sm:$0xff]
  %v868 = vld [vmem:[%s1 + $0x50] sm:$0xff]
  %v869 = vld [vmem:[%s1 + $0x58] sm:$0xff]
  %v870 = vld [vmem:[%s1 + $0x60] sm:$0xff]
  %v871 = vld [vmem:[%s1 + $0x68] sm:$0xff]
  %v872 = vld [vmem:[%s1 + $0x70] sm:$0xff]
  %v873 = vld [vmem:[%s1 + $0x78] sm:$0xff]
  %v874 = vld [vmem:[%s1 + $0x80] sm:$0xff]
  %v875 = vld [vmem:[%s1 + $0x88] sm:$0xff]
  %v876 = vld [vmem:[%s1 + $0x90] sm:$0xff]
  %v877 = vld [vmem:[%s1 + $0x98] sm:$0xff]
  %v878 = vld [vmem:[%s1 + $0xa0] sm:$0xff]
  %v879 = vld [vmem:[%s1 + $0xa8] sm:$0xff]
  %v880 = vld [vmem:[%s1 + $0xb0] sm:$0xff]
  %v881 = vld [vmem:[%s1 + $0xb8] sm:$0xff]
  %v882 = vld [vmem:[%s1 + $0xc0] sm:$0xff]
  %v883 = vld [vmem:[%s1 + $0xc8] sm:$0xff]
  %v884 = vld [vmem:[%s1 + $0xd0] sm:$0xff]
  %v885 = vld [vmem:[%s1 + $0xd8] sm:$0xff]
  %v886 = vld [vmem:[%s1 + $0xe0] sm:$0xff]
  %v887 = vld [vmem:[%s1 + $0xe8] sm:$0xff]
  %v888 = vld [vmem:[%s1 + $0xf0] sm:$0xff]
  %v889 = vld [vmem:[%s1 + $0xf8] sm:$0xff]
  %s890 = scalar_lea.vmem %s43, 24
  %v891 = vld [vmem:[%s890] sm:$0x33]
  %v892 = vld [vmem:[%s100] sm:$0xff]
  %v893 = vld [vmem:[%s100 + $0x8] sm:$0xff]
  %v894 = vld [vmem:[%s100 + $0x10] sm:$0xff]
  %v895 = vld [vmem:[%s100 + $0x18] sm:$0xff]
  %v896 = vld [vmem:[%s100 + $0x20] sm:$0xff]
  %v897 = vld [vmem:[%s100 + $0x28] sm:$0xff]
  %v898 = vld [vmem:[%s100 + $0x30] sm:$0xff]
  %v899 = vld [vmem:[%s100 + $0x38] sm:$0xff]
  %v900 = vld [vmem:[%s100 + $0x40] sm:$0xff]
  %v901 = vld [vmem:[%s100 + $0x48] sm:$0xff]
  %v902 = vld [vmem:[%s100 + $0x50] sm:$0xff]
  %v903 = vld [vmem:[%s100 + $0x58] sm:$0xff]
  %v904 = vld [vmem:[%s100 + $0x60] sm:$0xff]
  %v905 = vld [vmem:[%s100 + $0x68] sm:$0xff]
  %v906 = vld [vmem:[%s100 + $0x70] sm:$0xff]
  %v907 = vld [vmem:[%s100 + $0x78] sm:$0xff]
  %v908 = vld [vmem:[%s100 + $0x80] sm:$0xff]
  %v909 = vld [vmem:[%s100 + $0x88] sm:$0xff]
  %v910 = vld [vmem:[%s100 + $0x90] sm:$0xff]
  %v911 = vld [vmem:[%s100 + $0x98] sm:$0xff]
  %v912 = vld [vmem:[%s100 + $0xa0] sm:$0xff]
  %v913 = vld [vmem:[%s100 + $0xa8] sm:$0xff]
  %v914 = vld [vmem:[%s100 + $0xb0] sm:$0xff]
  %v915 = vld [vmem:[%s100 + $0xb8] sm:$0xff]
  %v916 = vld [vmem:[%s100 + $0xc0] sm:$0xff]
  %v917 = vld [vmem:[%s100 + $0xc8] sm:$0xff]
  %v918 = vld [vmem:[%s100 + $0xd0] sm:$0xff]
  %v919 = vld [vmem:[%s100 + $0xd8] sm:$0xff]
  %v920 = vld [vmem:[%s100 + $0xe0] sm:$0xff]
  %v921 = vld [vmem:[%s100 + $0xe8] sm:$0xff]
  %v922 = vld [vmem:[%s100 + $0xf0] sm:$0xff]
  %v923 = vld [vmem:[%s100 + $0xf8] sm:$0xff]
  %v925 = vunpack.c.l.b16 %v891
  %v926 = vunpack.c.h.b16 %v891
  %v927 = vpack.c.b16 %v925, %v925
  %v928 = vpack.c.b16 %v926, %v926
  %v963 = vunpack.c.l.b16 %v892
  %v964 = vunpack.c.h.b16 %v892
  %v965 = vunpack.c.l.b16 %v893
  %v966 = vunpack.c.h.b16 %v893
  %v967 = vunpack.c.l.b16 %v894
  %v968 = vunpack.c.h.b16 %v894
  %v969 = vunpack.c.l.b16 %v895
  %v970 = vunpack.c.h.b16 %v895
  %v971 = vunpack.c.l.b16 %v896
  %v972 = vunpack.c.h.b16 %v896
  %v973 = vunpack.c.l.b16 %v897
  %v974 = vunpack.c.h.b16 %v897
  %v975 = vunpack.c.l.b16 %v898
  %v976 = vunpack.c.h.b16 %v898
  %v977 = vunpack.c.l.b16 %v899
  %v978 = vunpack.c.h.b16 %v899
  %v979 = vunpack.c.l.b16 %v900
  %v980 = vunpack.c.h.b16 %v900
  %v981 = vunpack.c.l.b16 %v901
  %v982 = vunpack.c.h.b16 %v901
  %v983 = vunpack.c.l.b16 %v902
  %v984 = vunpack.c.h.b16 %v902
  %v985 = vunpack.c.l.b16 %v903
  %v986 = vunpack.c.h.b16 %v903
  %v987 = vunpack.c.l.b16 %v904
  %v988 = vunpack.c.h.b16 %v904
  %v989 = vunpack.c.l.b16 %v905
  %v990 = vunpack.c.h.b16 %v905
  %v991 = vunpack.c.l.b16 %v906
  %v992 = vunpack.c.h.b16 %v906
  %v993 = vunpack.c.l.b16 %v907
  %v994 = vunpack.c.h.b16 %v907
  %v995 = vunpack.c.l.b16 %v908
  %v996 = vunpack.c.h.b16 %v908
  %v997 = vunpack.c.l.b16 %v909
  %v998 = vunpack.c.h.b16 %v909
  %v999 = vunpack.c.l.b16 %v910
  %v1000 = vunpack.c.h.b16 %v910
  %v1001 = vunpack.c.l.b16 %v911
  %v1002 = vunpack.c.h.b16 %v911
  %v1003 = vunpack.c.l.b16 %v912
  %v1004 = vunpack.c.h.b16 %v912
  %v1005 = vunpack.c.l.b16 %v913
  %v1006 = vunpack.c.h.b16 %v913
  %v1007 = vunpack.c.l.b16 %v914
  %v1008 = vunpack.c.h.b16 %v914
  %v1009 = vunpack.c.l.b16 %v915
  %v1010 = vunpack.c.h.b16 %v915
  %v1011 = vunpack.c.l.b16 %v916
  %v1012 = vunpack.c.h.b16 %v916
  %v1013 = vunpack.c.l.b16 %v917
  %v1014 = vunpack.c.h.b16 %v917
  %v1015 = vunpack.c.l.b16 %v918
  %v1016 = vunpack.c.h.b16 %v918
  %v1017 = vunpack.c.l.b16 %v919
  %v1018 = vunpack.c.h.b16 %v919
  %v1019 = vunpack.c.l.b16 %v920
  %v1020 = vunpack.c.h.b16 %v920
  %v1021 = vunpack.c.l.b16 %v921
  %v1022 = vunpack.c.h.b16 %v921
  %v1023 = vunpack.c.l.b16 %v922
  %v1024 = vunpack.c.h.b16 %v922
  %v1025 = vunpack.c.l.b16 %v923
  %v1026 = vunpack.c.h.b16 %v923
  %v1027 = vpack.c.b16 %v965, %v963
  %v1028 = vpack.c.b16 %v966, %v964
  %v1029 = vpack.c.b16 %v969, %v967
  %v1030 = vpack.c.b16 %v970, %v968
  %v1031 = vpack.c.b16 %v973, %v971
  %v1032 = vpack.c.b16 %v974, %v972
  %v1033 = vpack.c.b16 %v977, %v975
  %v1034 = vpack.c.b16 %v978, %v976
  %v1035 = vpack.c.b16 %v981, %v979
  %v1036 = vpack.c.b16 %v982, %v980
  %v1037 = vpack.c.b16 %v985, %v983
  %v1038 = vpack.c.b16 %v986, %v984
  %v1039 = vpack.c.b16 %v989, %v987
  %v1040 = vpack.c.b16 %v990, %v988
  %v1041 = vpack.c.b16 %v993, %v991
  %v1042 = vpack.c.b16 %v994, %v992
  %v1043 = vpack.c.b16 %v997, %v995
  %v1044 = vpack.c.b16 %v998, %v996
  %v1045 = vpack.c.b16 %v1001, %v999
  %v1046 = vpack.c.b16 %v1002, %v1000
  %v1047 = vpack.c.b16 %v1005, %v1003
  %v1048 = vpack.c.b16 %v1006, %v1004
  %v1049 = vpack.c.b16 %v1009, %v1007
  %v1050 = vpack.c.b16 %v1010, %v1008
  %v1051 = vpack.c.b16 %v1013, %v1011
  %v1052 = vpack.c.b16 %v1014, %v1012
  %v1053 = vpack.c.b16 %v1017, %v1015
  %v1054 = vpack.c.b16 %v1018, %v1016
  %v1055 = vpack.c.b16 %v1021, %v1019
  %v1056 = vpack.c.b16 %v1022, %v1020
  %v1057 = vpack.c.b16 %v1025, %v1023
  %v1058 = vpack.c.b16 %v1026, %v1024
  %1091 = vmatprep.subr.bf16.mxu0 %v1042
  %1092 = vmatpush1.bf16.msra.mxu0 %v1041
  %1093 = vmatprep.subr.bf16.mxu0 %v1040
  %1094 = vmatpush1.bf16.msra.mxu0 %v1039
  %1095 = vmatprep.subr.bf16.mxu0 %v1038
  %1096 = vmatpush1.bf16.msra.mxu0 %v1037
  %1097 = vmatprep.subr.bf16.mxu0 %v1036
  %1098 = vmatpush1.bf16.msra.mxu0 %v1035
  %1099 = vmatprep.subr.bf16.mxu0 %v1034
  %1100 = vmatpush1.bf16.msra.mxu0 %v1033
  %1101 = vmatprep.subr.bf16.mxu0 %v1032
  %1102 = vmatpush1.bf16.msra.mxu0 %v1031
  %1103 = vmatprep.subr.bf16.mxu0 %v1030
  %1104 = vmatpush1.bf16.msra.mxu0 %v1029
  %1105 = vmatprep.subr.bf16.mxu0 %v1028
  %1106 = vmatpush1.bf16.msra.mxu0 %v1027
  %1107 = vmatprep.subr.bf16.mxu0 %v1058
  %1108 = vmatpush2.bf16.msra.mxu0 %v1057
  %1109 = vmatprep.subr.bf16.mxu0 %v1056
  %1110 = vmatpush2.bf16.msra.mxu0 %v1055
  %1111 = vmatprep.subr.bf16.mxu0 %v1054
  %1112 = vmatpush2.bf16.msra.mxu0 %v1053
  %1113 = vmatprep.subr.bf16.mxu0 %v1052
  %1114 = vmatpush2.bf16.msra.mxu0 %v1051
  %1115 = vmatprep.subr.bf16.mxu0 %v1050
  %1116 = vmatpush2.bf16.msra.mxu0 %v1049
  %1117 = vmatprep.subr.bf16.mxu0 %v1048
  %1118 = vmatpush2.bf16.msra.mxu0 %v1047
  %1119 = vmatprep.subr.bf16.mxu0 %v1046
  %1120 = vmatpush2.bf16.msra.mxu0 %v1045
  %1121 = vmatprep.subr.bf16.mxu0 %v1044
  %1122 = vmatpush2.bf16.msra.mxu0 %v1043
  %1123 = vmatprep.mubr.bf16.mxu0 %v928
  %1124 = vmatmul.mubr.bf16.gmra.mxu0 %v927
  %v1125 = vpop.f32.mrf.mxu0
  %v1126 = vadd.f32 0.0, %v1125
  %v1127 = vpop.f32.mrf.mxu0
  %v1128 = vadd.f32 0.0, %v1127
  %v1129 = vpop.f32.mrf.mxu0
  %v1130 = vpop.f32.mrf.mxu0
  %1131 = vdwg.mxu0
  %v1133 = vunpack.c.l.b16 %v857
  %v1134 = vunpack.c.h.b16 %v857
  %v1135 = vpack.c.b16 %v1133, %v1133
  %v1136 = vpack.c.b16 %v1134, %v1134
  %v1171 = vunpack.c.l.b16 %v858
  %v1172 = vunpack.c.h.b16 %v858
  %v1173 = vunpack.c.l.b16 %v859
  %v1174 = vunpack.c.h.b16 %v859
  %v1175 = vunpack.c.l.b16 %v860
  %v1176 = vunpack.c.h.b16 %v860
  %v1177 = vunpack.c.l.b16 %v861
  %v1178 = vunpack.c.h.b16 %v861
  %v1179 = vunpack.c.l.b16 %v862
  %v1180 = vunpack.c.h.b16 %v862
  %v1181 = vunpack.c.l.b16 %v863
  %v1182 = vunpack.c.h.b16 %v863
  %v1183 = vunpack.c.l.b16 %v864
  %v1184 = vunpack.c.h.b16 %v864
  %v1185 = vunpack.c.l.b16 %v865
  %v1186 = vunpack.c.h.b16 %v865
  %v1187 = vunpack.c.l.b16 %v866
  %v1188 = vunpack.c.h.b16 %v866
  %v1189 = vunpack.c.l.b16 %v867
  %v1190 = vunpack.c.h.b16 %v867
  %v1191 = vunpack.c.l.b16 %v868
  %v1192 = vunpack.c.h.b16 %v868
  %v1193 = vunpack.c.l.b16 %v869
  %v1194 = vunpack.c.h.b16 %v869
  %v1195 = vunpack.c.l.b16 %v870
  %v1196 = vunpack.c.h.b16 %v870
  %v1197 = vunpack.c.l.b16 %v871
  %v1198 = vunpack.c.h.b16 %v871
  %v1199 = vunpack.c.l.b16 %v872
  %v1200 = vunpack.c.h.b16 %v872
  %v1201 = vunpack.c.l.b16 %v873
  %v1202 = vunpack.c.h.b16 %v873
  %v1203 = vunpack.c.l.b16 %v874
  %v1204 = vunpack.c.h.b16 %v874
  %v1205 = vunpack.c.l.b16 %v875
  %v1206 = vunpack.c.h.b16 %v875
  %v1207 = vunpack.c.l.b16 %v876
  %v1208 = vunpack.c.h.b16 %v876
  %v1209 = vunpack.c.l.b16 %v877
  %v1210 = vunpack.c.h.b16 %v877
  %v1211 = vunpack.c.l.b16 %v878
  %v1212 = vunpack.c.h.b16 %v878
  %v1213 = vunpack.c.l.b16 %v879
  %v1214 = vunpack.c.h.b16 %v879
  %v1215 = vunpack.c.l.b16 %v880
  %v1216 = vunpack.c.h.b16 %v880
  %v1217 = vunpack.c.l.b16 %v881
  %v1218 = vunpack.c.h.b16 %v881
  %v1219 = vunpack.c.l.b16 %v882
  %v1220 = vunpack.c.h.b16 %v882
  %v1221 = vunpack.c.l.b16 %v883
  %v1222 = vunpack.c.h.b16 %v883
  %v1223 = vunpack.c.l.b16 %v884
  %v1224 = vunpack.c.h.b16 %v884
  %v1225 = vunpack.c.l.b16 %v885
  %v1226 = vunpack.c.h.b16 %v885
  %v1227 = vunpack.c.l.b16 %v886
  %v1228 = vunpack.c.h.b16 %v886
  %v1229 = vunpack.c.l.b16 %v887
  %v1230 = vunpack.c.h.b16 %v887
  %v1231 = vunpack.c.l.b16 %v888
  %v1232 = vunpack.c.h.b16 %v888
  %v1233 = vunpack.c.l.b16 %v889
  %v1234 = vunpack.c.h.b16 %v889
  %v1235 = vpack.c.b16 %v1173, %v1171
  %v1236 = vpack.c.b16 %v1174, %v1172
  %v1237 = vpack.c.b16 %v1177, %v1175
  %v1238 = vpack.c.b16 %v1178, %v1176
  %v1239 = vpack.c.b16 %v1181, %v1179
  %v1240 = vpack.c.b16 %v1182, %v1180
  %v1241 = vpack.c.b16 %v1185, %v1183
  %v1242 = vpack.c.b16 %v1186, %v1184
  %v1243 = vpack.c.b16 %v1189, %v1187
  %v1244 = vpack.c.b16 %v1190, %v1188
  %v1245 = vpack.c.b16 %v1193, %v1191
  %v1246 = vpack.c.b16 %v1194, %v1192
  %v1247 = vpack.c.b16 %v1197, %v1195
  %v1248 = vpack.c.b16 %v1198, %v1196
  %v1249 = vpack.c.b16 %v1201, %v1199
  %v1250 = vpack.c.b16 %v1202, %v1200
  %v1251 = vpack.c.b16 %v1205, %v1203
  %v1252 = vpack.c.b16 %v1206, %v1204
  %v1253 = vpack.c.b16 %v1209, %v1207
  %v1254 = vpack.c.b16 %v1210, %v1208
  %v1255 = vpack.c.b16 %v1213, %v1211
  %v1256 = vpack.c.b16 %v1214, %v1212
  %v1257 = vpack.c.b16 %v1217, %v1215
  %v1258 = vpack.c.b16 %v1218, %v1216
  %v1259 = vpack.c.b16 %v1221, %v1219
  %v1260 = vpack.c.b16 %v1222, %v1220
  %v1261 = vpack.c.b16 %v1225, %v1223
  %v1262 = vpack.c.b16 %v1226, %v1224
  %v1263 = vpack.c.b16 %v1229, %v1227
  %v1264 = vpack.c.b16 %v1230, %v1228
  %v1265 = vpack.c.b16 %v1233, %v1231
  %v1266 = vpack.c.b16 %v1234, %v1232
  %1299 = vmatprep.subr.bf16.mxu0 %v1250
  %1300 = vmatpush1.bf16.msra.mxu0 %v1249
  %1301 = vmatprep.subr.bf16.mxu0 %v1248
  %1302 = vmatpush1.bf16.msra.mxu0 %v1247
  %1303 = vmatprep.subr.bf16.mxu0 %v1246
  %1304 = vmatpush1.bf16.msra.mxu0 %v1245
  %1305 = vmatprep.subr.bf16.mxu0 %v1244
  %1306 = vmatpush1.bf16.msra.mxu0 %v1243
  %1307 = vmatprep.subr.bf16.mxu0 %v1242
  %1308 = vmatpush1.bf16.msra.mxu0 %v1241
  %1309 = vmatprep.subr.bf16.mxu0 %v1240
  %1310 = vmatpush1.bf16.msra.mxu0 %v1239
  %1311 = vmatprep.subr.bf16.mxu0 %v1238
  %1312 = vmatpush1.bf16.msra.mxu0 %v1237
  %1313 = vmatprep.subr.bf16.mxu0 %v1236
  %1314 = vmatpush1.bf16.msra.mxu0 %v1235
  %1315 = vmatprep.subr.bf16.mxu0 %v1266
  %1316 = vmatpush2.bf16.msra.mxu0 %v1265
  %1317 = vmatprep.subr.bf16.mxu0 %v1264
  %1318 = vmatpush2.bf16.msra.mxu0 %v1263
  %1319 = vmatprep.subr.bf16.mxu0 %v1262
  %1320 = vmatpush2.bf16.msra.mxu0 %v1261
  %1321 = vmatprep.subr.bf16.mxu0 %v1260
  %1322 = vmatpush2.bf16.msra.mxu0 %v1259
  %1323 = vmatprep.subr.bf16.mxu0 %v1258
  %1324 = vmatpush2.bf16.msra.mxu0 %v1257
  %1325 = vmatprep.subr.bf16.mxu0 %v1256
  %1326 = vmatpush2.bf16.msra.mxu0 %v1255
  %1327 = vmatprep.subr.bf16.mxu0 %v1254
  %1328 = vmatpush2.bf16.msra.mxu0 %v1253
  %1329 = vmatprep.subr.bf16.mxu0 %v1252
  %1330 = vmatpush2.bf16.msra.mxu0 %v1251
  %1331 = vmatprep.mubr.bf16.mxu0 %v1136
  %1332 = vmatmul.mubr.bf16.gmra.mxu0 %v1135
  %v1333 = vpop.f32.mrf.mxu0
  %v1334 = vadd.f32 %v1126, %v1333
  %v1335 = vpop.f32.mrf.mxu0
  %v1336 = vadd.f32 %v1128, %v1335
  %v1337 = vpop.f32.mrf.mxu0
  %v1338 = vpop.f32.mrf.mxu0
  %1339 = vdwg.mxu0
  %v1340 = vld [vmem:[%s856] sm:$0x77]
  %v1341 = vld [vmem:[%s550] sm:$0xff]
  %v1342 = vld [vmem:[%s550 + $0x8] sm:$0xff]
  %v1343 = vld [vmem:[%s550 + $0x10] sm:$0xff]
  %v1344 = vld [vmem:[%s550 + $0x18] sm:$0xff]
  %v1345 = vld [vmem:[%s550 + $0x20] sm:$0xff]
  %v1346 = vld [vmem:[%s550 + $0x28] sm:$0xff]
  %v1347 = vld [vmem:[%s550 + $0x30] sm:$0xff]
  %v1348 = vld [vmem:[%s550 + $0x38] sm:$0xff]
  %v1349 = vld [vmem:[%s550 + $0x40] sm:$0xff]
  %v1350 = vld [vmem:[%s550 + $0x48] sm:$0xff]
  %v1351 = vld [vmem:[%s550 + $0x50] sm:$0xff]
  %v1352 = vld [vmem:[%s550 + $0x58] sm:$0xff]
  %v1353 = vld [vmem:[%s550 + $0x60] sm:$0xff]
  %v1354 = vld [vmem:[%s550 + $0x68] sm:$0xff]
  %v1355 = vld [vmem:[%s550 + $0x70] sm:$0xff]
  %v1356 = vld [vmem:[%s550 + $0x78] sm:$0xff]
  %v1357 = vld [vmem:[%s550 + $0x80] sm:$0xff]
  %v1358 = vld [vmem:[%s550 + $0x88] sm:$0xff]
  %v1359 = vld [vmem:[%s550 + $0x90] sm:$0xff]
  %v1360 = vld [vmem:[%s550 + $0x98] sm:$0xff]
  %v1361 = vld [vmem:[%s550 + $0xa0] sm:$0xff]
  %v1362 = vld [vmem:[%s550 + $0xa8] sm:$0xff]
  %v1363 = vld [vmem:[%s550 + $0xb0] sm:$0xff]
  %v1364 = vld [vmem:[%s550 + $0xb8] sm:$0xff]
  %v1365 = vld [vmem:[%s550 + $0xc0] sm:$0xff]
  %v1366 = vld [vmem:[%s550 + $0xc8] sm:$0xff]
  %v1367 = vld [vmem:[%s550 + $0xd0] sm:$0xff]
  %v1368 = vld [vmem:[%s550 + $0xd8] sm:$0xff]
  %v1369 = vld [vmem:[%s550 + $0xe0] sm:$0xff]
  %v1370 = vld [vmem:[%s550 + $0xe8] sm:$0xff]
  %v1371 = vld [vmem:[%s550 + $0xf0] sm:$0xff]
  %v1372 = vld [vmem:[%s550 + $0xf8] sm:$0xff]
  %v1374 = vunpack.c.l.b16 %v1340
  %v1375 = vunpack.c.h.b16 %v1340
  %v1376 = vpack.c.b16 %v1374, %v1374
  %v1377 = vpack.c.b16 %v1375, %v1375
  %v1379 = vshrl.u32 %v1376, 16
  %v1381 = vshll.u32 %v1376, 16
  %v1383 = vrot.slane %v1381, 1
  %v1384 = vor.u32 %v1379, %v1383
  %v1386 = vshrl.u32 %v1377, 16
  %v1388 = vshll.u32 %v1377, 16
  %v1390 = vrot.slane %v1388, 1
  %v1391 = vor.u32 %v1386, %v1390
  %v1426 = vunpack.c.l.b16 %v1341
  %v1427 = vunpack.c.h.b16 %v1341
  %v1428 = vunpack.c.l.b16 %v1342
  %v1429 = vunpack.c.h.b16 %v1342
  %v1430 = vunpack.c.l.b16 %v1343
  %v1431 = vunpack.c.h.b16 %v1343
  %v1432 = vunpack.c.l.b16 %v1344
  %v1433 = vunpack.c.h.b16 %v1344
  %v1434 = vunpack.c.l.b16 %v1345
  %v1435 = vunpack.c.h.b16 %v1345
  %v1436 = vunpack.c.l.b16 %v1346
  %v1437 = vunpack.c.h.b16 %v1346
  %v1438 = vunpack.c.l.b16 %v1347
  %v1439 = vunpack.c.h.b16 %v1347
  %v1440 = vunpack.c.l.b16 %v1348
  %v1441 = vunpack.c.h.b16 %v1348
  %v1442 = vunpack.c.l.b16 %v1349
  %v1443 = vunpack.c.h.b16 %v1349
  %v1444 = vunpack.c.l.b16 %v1350
  %v1445 = vunpack.c.h.b16 %v1350
  %v1446 = vunpack.c.l.b16 %v1351
  %v1447 = vunpack.c.h.b16 %v1351
  %v1448 = vunpack.c.l.b16 %v1352
  %v1449 = vunpack.c.h.b16 %v1352
  %v1450 = vunpack.c.l.b16 %v1353
  %v1451 = vunpack.c.h.b16 %v1353
  %v1452 = vunpack.c.l.b16 %v1354
  %v1453 = vunpack.c.h.b16 %v1354
  %v1454 = vunpack.c.l.b16 %v1355
  %v1455 = vunpack.c.h.b16 %v1355
  %v1456 = vunpack.c.l.b16 %v1356
  %v1457 = vunpack.c.h.b16 %v1356
  %v1458 = vunpack.c.l.b16 %v1357
  %v1459 = vunpack.c.h.b16 %v1357
  %v1460 = vunpack.c.l.b16 %v1358
  %v1461 = vunpack.c.h.b16 %v1358
  %v1462 = vunpack.c.l.b16 %v1359
  %v1463 = vunpack.c.h.b16 %v1359
  %v1464 = vunpack.c.l.b16 %v1360
  %v1465 = vunpack.c.h.b16 %v1360
  %v1466 = vunpack.c.l.b16 %v1361
  %v1467 = vunpack.c.h.b16 %v1361
  %v1468 = vunpack.c.l.b16 %v1362
  %v1469 = vunpack.c.h.b16 %v1362
  %v1470 = vunpack.c.l.b16 %v1363
  %v1471 = vunpack.c.h.b16 %v1363
  %v1472 = vunpack.c.l.b16 %v1364
  %v1473 = vunpack.c.h.b16 %v1364
  %v1474 = vunpack.c.l.b16 %v1365
  %v1475 = vunpack.c.h.b16 %v1365
  %v1476 = vunpack.c.l.b16 %v1366
  %v1477 = vunpack.c.h.b16 %v1366
  %v1478 = vunpack.c.l.b16 %v1367
  %v1479 = vunpack.c.h.b16 %v1367
  %v1480 = vunpack.c.l.b16 %v1368
  %v1481 = vunpack.c.h.b16 %v1368
  %v1482 = vunpack.c.l.b16 %v1369
  %v1483 = vunpack.c.h.b16 %v1369
  %v1484 = vunpack.c.l.b16 %v1370
  %v1485 = vunpack.c.h.b16 %v1370
  %v1486 = vunpack.c.l.b16 %v1371
  %v1487 = vunpack.c.h.b16 %v1371
  %v1488 = vunpack.c.l.b16 %v1372
  %v1489 = vunpack.c.h.b16 %v1372
  %v1490 = vpack.c.b16 %v1428, %v1426
  %v1491 = vpack.c.b16 %v1429, %v1427
  %v1492 = vpack.c.b16 %v1432, %v1430
  %v1493 = vpack.c.b16 %v1433, %v1431
  %v1494 = vpack.c.b16 %v1436, %v1434
  %v1495 = vpack.c.b16 %v1437, %v1435
  %v1496 = vpack.c.b16 %v1440, %v1438
  %v1497 = vpack.c.b16 %v1441, %v1439
  %v1498 = vpack.c.b16 %v1444, %v1442
  %v1499 = vpack.c.b16 %v1445, %v1443
  %v1500 = vpack.c.b16 %v1448, %v1446
  %v1501 = vpack.c.b16 %v1449, %v1447
  %v1502 = vpack.c.b16 %v1452, %v1450
  %v1503 = vpack.c.b16 %v1453, %v1451
  %v1504 = vpack.c.b16 %v1456, %v1454
  %v1505 = vpack.c.b16 %v1457, %v1455
  %v1506 = vpack.c.b16 %v1460, %v1458
  %v1507 = vpack.c.b16 %v1461, %v1459
  %v1508 = vpack.c.b16 %v1464, %v1462
  %v1509 = vpack.c.b16 %v1465, %v1463
  %v1510 = vpack.c.b16 %v1468, %v1466
  %v1511 = vpack.c.b16 %v1469, %v1467
  %v1512 = vpack.c.b16 %v1472, %v1470
  %v1513 = vpack.c.b16 %v1473, %v1471
  %v1514 = vpack.c.b16 %v1476, %v1474
  %v1515 = vpack.c.b16 %v1477, %v1475
  %v1516 = vpack.c.b16 %v1480, %v1478
  %v1517 = vpack.c.b16 %v1481, %v1479
  %v1518 = vpack.c.b16 %v1484, %v1482
  %v1519 = vpack.c.b16 %v1485, %v1483
  %v1520 = vpack.c.b16 %v1488, %v1486
  %v1521 = vpack.c.b16 %v1489, %v1487
  %1554 = vmatprep.subr.bf16.mxu0 %v1505
  %1555 = vmatpush1.bf16.msra.mxu0 %v1504
  %1556 = vmatprep.subr.bf16.mxu0 %v1503
  %1557 = vmatpush1.bf16.msra.mxu0 %v1502
  %1558 = vmatprep.subr.bf16.mxu0 %v1501
  %1559 = vmatpush1.bf16.msra.mxu0 %v1500
  %1560 = vmatprep.subr.bf16.mxu0 %v1499
  %1561 = vmatpush1.bf16.msra.mxu0 %v1498
  %1562 = vmatprep.subr.bf16.mxu0 %v1497
  %1563 = vmatpush1.bf16.msra.mxu0 %v1496
  %1564 = vmatprep.subr.bf16.mxu0 %v1495
  %1565 = vmatpush1.bf16.msra.mxu0 %v1494
  %1566 = vmatprep.subr.bf16.mxu0 %v1493
  %1567 = vmatpush1.bf16.msra.mxu0 %v1492
  %1568 = vmatprep.subr.bf16.mxu0 %v1491
  %1569 = vmatpush1.bf16.msra.mxu0 %v1490
  %1570 = vmatprep.subr.bf16.mxu0 %v1521
  %1571 = vmatpush2.bf16.msra.mxu0 %v1520
  %1572 = vmatprep.subr.bf16.mxu0 %v1519
  %1573 = vmatpush2.bf16.msra.mxu0 %v1518
  %1574 = vmatprep.subr.bf16.mxu0 %v1517
  %1575 = vmatpush2.bf16.msra.mxu0 %v1516
  %1576 = vmatprep.subr.bf16.mxu0 %v1515
  %1577 = vmatpush2.bf16.msra.mxu0 %v1514
  %1578 = vmatprep.subr.bf16.mxu0 %v1513
  %1579 = vmatpush2.bf16.msra.mxu0 %v1512
  %1580 = vmatprep.subr.bf16.mxu0 %v1511
  %1581 = vmatpush2.bf16.msra.mxu0 %v1510
  %1582 = vmatprep.subr.bf16.mxu0 %v1509
  %1583 = vmatpush2.bf16.msra.mxu0 %v1508
  %1584 = vmatprep.subr.bf16.mxu0 %v1507
  %1585 = vmatpush2.bf16.msra.mxu0 %v1506
  %1586 = vmatprep.mubr.bf16.mxu0 %v1391
  %1587 = vmatmul.mubr.bf16.gmra.mxu0 %v1384
  %v1588 = vpop.f32.mrf.mxu0
  %v1589 = vadd.f32 0.0, %v1588
  %v1590 = vpop.f32.mrf.mxu0
  %v1591 = vadd.f32 0.0, %v1590
  %v1592 = vpop.f32.mrf.mxu0
  %v1593 = vpop.f32.mrf.mxu0
  %1594 = vdwg.mxu0
  %v1595 = vadd.f32 %v1334, %v1589
  %v1596 = vadd.f32 %v1336, %v1591
  %v1597 = vpack.c.bf16 %v1595, %v1595
  %v1598 = vpack.c.bf16 %v1596, %v1596
  %v1601 = vcombine.low %v1597, %v1598
  %v1603 = vunpack.c.l.s4 1983009808
  %v1604 = vunpack.c.0.s8 %v1603
  %v1605 = vlaneseq
  %v1606 = vshrl.u32 %v1605, 7
  %v1607 = vsub.s32 %v1604, %v1606
  %v1608 = vrot.slane %v1601, %v1607
  %s1610 = scalar_lea.vmem %s52, 4
  %1611 = vst [vmem:[%s1610] sm:$0xf] %v1608
  %v1612 = vsel %vm821, %v1595, 0.0
  %v1613 = vrot.slane %v1612, 4
  %v1614 = vadd.f32 %v1612, %v1613
  %v1615 = vrot.slane %v1614, 2
  %v1616 = vadd.f32 %v1614, %v1615
  %v1617 = vrot.slane %v1616, 1
  %v1618 = vadd.f32 %v1616, %v1617
  %v1619 = vsel %vm821, %v1596, 0.0
  %v1620 = vrot.slane %v1619, 4
  %v1621 = vadd.f32 %v1619, %v1620
  %v1622 = vrot.slane %v1621, 2
  %v1623 = vadd.f32 %v1621, %v1622
  %v1624 = vrot.slane %v1623, 1
  %v1625 = vadd.f32 %v1623, %v1624
  %v1626 = vadd.f32 %v836, %v1618
  %v1627 = vadd.f32 %v837, %v1625
  %v1628 = vmul.f32 %v1595, %v1595
  %v1629 = vmul.f32 %v1596, %v1596
  %v1630 = vsel %vm821, %v1628, 0.0
  %v1631 = vrot.slane %v1630, 4
  %v1632 = vadd.f32 %v1630, %v1631
  %v1633 = vrot.slane %v1632, 2
  %v1634 = vadd.f32 %v1632, %v1633
  %v1635 = vrot.slane %v1634, 1
  %v1636 = vadd.f32 %v1634, %v1635
  %v1637 = vsel %vm821, %v1629, 0.0
  %v1638 = vrot.slane %v1637, 4
  %v1639 = vadd.f32 %v1637, %v1638
  %v1640 = vrot.slane %v1639, 2
  %v1641 = vadd.f32 %v1639, %v1640
  %v1642 = vrot.slane %v1641, 1
  %v1643 = vadd.f32 %v1641, %v1642
  %v1644 = vadd.f32 %v854, %v1636
  %v1645 = vadd.f32 %v855, %v1643
  %v1646 = vld [vmem:[%s3] sm:$0x3]
  %v1649 = vcombine.low %v1626, %v1627
  %v1651 = vunpack.c.l.s4 1966171168
  %v1652 = vunpack.c.0.s8 %v1651
  %v1653 = vlaneseq
  %v1654 = vshrl.u32 %v1653, 7
  %v1655 = vsub.s32 %v1652, %v1654
  %v1656 = vrot.slane %v1649, %v1655
  %v1658 = vunpack.c.l.s4 1966171168
  %v1659 = vunpack.c.0.s8 %v1658
  %v1660 = vlaneseq
  %v1661 = vshrl.u32 %v1660, 7
  %v1662 = vsub.s32 %v1659, %v1661
  %v1663 = vrot.slane %v1656, %v1662
  %v1665 = vadd.f32 %v1646, %v1663
  %v1666 = vlaneseq
  %vm1667 = vcmp.ge.s32.totalorder %v1666, 0
  %vm1668 = vcmp.lt.s32.totalorder %v1666, 256
  %vm1669 = vmand %vm1667, %vm1668
  %1670 = vst.msk [vmem:[%s3] sm:$0x3] %vm1669, %v1665
  %v1671 = vld [vmem:[%s4] sm:$0x3]
  %v1674 = vcombine.low %v1644, %v1645
  %v1676 = vunpack.c.l.s4 1966171168
  %v1677 = vunpack.c.0.s8 %v1676
  %v1678 = vlaneseq
  %v1679 = vshrl.u32 %v1678, 7
  %v1680 = vsub.s32 %v1677, %v1679
  %v1681 = vrot.slane %v1674, %v1680
  %v1683 = vunpack.c.l.s4 1966171168
  %v1684 = vunpack.c.0.s8 %v1683
  %v1685 = vlaneseq
  %v1686 = vshrl.u32 %v1685, 7
  %v1687 = vsub.s32 %v1684, %v1686
  %v1688 = vrot.slane %v1681, %v1687
  %v1690 = vadd.f32 %v1671, %v1688
  %1691 = vst.msk [vmem:[%s4] sm:$0x3] %vm1669, %v1690
  %s1692 = sadd.s32 0, 0
  %s1693 = smul.u32 2, %s1692
  %p1694 = scmp.lt.s32.totalorder %s1693, 1
  %s1695 = scalar_select %p1694, %s1693, 1
  %s1696 = smul.addr %s1695, 2
  %s1697 = smul.addr %s1696, 2
  %s1698 = scalar_lea.vmem %s2, %s1697
  // Predicated region
  $region14: #{_lambda_.25} parent=0 // pred_check
    _
  $region15: #{_lambda_.25} parent=0 // pred_check_branch
    %1700 = sbr.rel (0) target = $region17
  $region16: #{_lambda_.25} parent=0 // pred_region
    %s1701 = sadd.s32 0, 0
    %s1702 = smul.u32 2, %s1701
  $region17: #{_lambda_.25} parent=0 // pred_fallthru
    _
  // Predicated region
  $region18: #{_lambda_.25} parent=0 // pred_check
    _
  $region19: #{_lambda_.25} parent=0 // pred_check_branch
    %1704 = sbr.rel (0) target = $region21
  $region20: #{_lambda_.25} parent=0 // pred_region
    _
  $region21: #{_lambda_.25} parent=0 // pred_fallthru
    _
  // Predicated region
  $region22: #{_lambda_.25} parent=0 // pred_check
    _
  $region23: #{_lambda_.25} parent=0 // pred_check_branch
    %1706 = sbr.rel (0) target = $region25
  $region24: #{_lambda_.25} parent=0 // pred_region
    _
  $region25: #{_lambda_.25} parent=0 // pred_fallthru
    _
  // Predicated region
  $region26: #{_lambda_.25} parent=0 // pred_check
    _
  $region27: #{_lambda_.25} parent=0 // pred_check_branch
    %1708 = sbr.rel (0) target = $region29
  $region28: #{_lambda_.25} parent=0 // pred_region
    %s1709 = sadd.s32 0, 0
    %s1710 = smul.u32 2, %s1709
    %p1711 = scmp.lt.s32.totalorder %s1710, 1
    %s1712 = scalar_select %p1711, %s1710, 1
    %s1713 = smul.addr %s1712, 2
    %s1714 = smul.addr %s1713, 2
    %s1715 = scalar_lea.vmem %s2, %s1714
  $region29: #{_lambda_.25} parent=0 // pred_fallthru
    _
  // Predicated region
  $region30: #{_lambda_.25} parent=0 // pred_check
    _
  $region31: #{_lambda_.25} parent=0 // pred_check_branch
    %1717 = sbr.rel (0) target = $region33
  $region32: #{_lambda_.25} parent=0 // pred_region
    _
  $region33: #{_lambda_.25} parent=0 // pred_fallthru
    _
  // Predicated region
  $region34: #{_lambda_.25} parent=0 // pred_check
    _
  $region35: #{_lambda_.25} parent=0 // pred_check_branch
    %1719 = sbr.rel (0) target = $region37
  $region36: #{_lambda_.25} parent=0 // pred_region
    _
  $region37: #{_lambda_.25} parent=0 // pred_fallthru
    _

// kernel: _lambda_.27
$region0: #{_lambda_.27}
  #allocation0 [shape = 'u32[]', space=smem, size = 0x4, offset = 0x4, fixed_abs, tag = 'smem constant byte address 0x4 - core index']
  #allocation1 [shape = 'u32[144,128]{1,0:T(1,128)}', space=vmem, size = 0x12000, scoped, tag = 'internal scratch']
  %s0 = inlined_call_operand.vmem [shape: bf16[1,2,6,256], index: 0, kind: input, shape index: {}]
  %s1 = inlined_call_operand.vmem [shape: bf16[3,256,256], index: 1, kind: input, shape index: {}]
  %s2 = inlined_call_operand.vmem [shape: bf16[2,4,256], index: 2, kind: output, shape index: {0}]
  %s3 = inlined_call_operand.vmem [shape: f32[1,1,256], index: 3, kind: output, shape index: {1}]
  %s4 = inlined_call_operand.vmem [shape: f32[1,1,256], index: 4, kind: output, shape index: {2}]
  %5 = xla_tuple %s2, %s3, %s4
  %s6 = sld [smem:[#allocation0]]
  $region38: #{_lambda_.27} parent=0
    _
  %s8 = ssub.s32 1, %s6
  %s9 = scalar_select 0, %s8, %s6
  // Predicated region
  $region2: #{_lambda_.27} parent=0 // pred_check
    _
  $region3: #{_lambda_.27} parent=0 // pred_check_branch
    %11 = sbr.rel (0) target = $region5
  $region4: #{_lambda_.27} parent=0 // pred_region
    %s12 = sadd.s32 0, 0
    %s13 = smul.u32 2, %s12
    %p14 = scmp.lt.s32.totalorder %s13, 1
    %s15 = scalar_select %p14, %s13, 1
    %s16 = smul.addr %s15, 2
    %s17 = smul.addr %s16, 4
    %s18 = scalar_lea.vmem %s0, %s17
    %s19 = sadd.s32 0, 0
    %s20 = smul.u32 2, %s19
  $region5: #{_lambda_.27} parent=0 // pred_fallthru
    _
  // Predicated region
  $region6: #{_lambda_.27} parent=0 // pred_check
    _
  $region7: #{_lambda_.27} parent=0 // pred_check_branch
    %22 = sbr.rel (0) target = $region9
  $region8: #{_lambda_.27} parent=0 // pred_region
    _
  $region9: #{_lambda_.27} parent=0 // pred_fallthru
    _
  %s23 = sadd.s32 0, 0
  %s24 = smul.u32 2, %s23
  %p25 = scmp.lt.s32.totalorder %s24, 1
  %s26 = scalar_select %p25, %s24, 1
  %s27 = smul.addr %s26, 2
  %s28 = smul.addr %s27, 4
  %s29 = scalar_lea.vmem %s0, %s28
  %s30 = sadd.s32 0, 0
  %s31 = smul.u32 2, %s30
  %p32 = scmp.lt.s32.totalorder %s31, 1
  %s33 = scalar_select %p32, %s31, 1
  %s34 = smul.addr %s33, 2
  %s35 = smul.addr %s34, 2
  %s36 = scalar_lea.vmem %s2, %s35
  %s37 = sadd.s32 0, 0
  %s38 = smul.u32 2, %s37
  %p39 = scmp.lt.s32.totalorder %s38, 1
  %s40 = scalar_select %p39, %s38, 1
  %s41 = smul.addr %s40, 2
  %s42 = smul.addr %s41, 4
  %s43 = scalar_lea.vmem %s0, %s42
  %s44 = sadd.s32 0, 0
  %s45 = smul.u32 2, %s44
  %s46 = sadd.s32 0, 0
  %s47 = smul.u32 2, %s46
  %p48 = scmp.lt.s32.totalorder %s47, 1
  %s49 = scalar_select %p48, %s47, 1
  %s50 = smul.addr %s49, 2
  %s51 = smul.addr %s50, 2
  %s52 = scalar_lea.vmem %s2, %s51
  %s53 = sadd.s32 0, 0
  %s54 = smul.u32 2, %s53
  %p55 = scmp.eq.s32.totalorder 0, 0
  // Predicated region
  $region10: #{_lambda_.27} parent=0 // pred_check
    %p56 = pneg %p55
  $region11: #{_lambda_.27} parent=0 // pred_check_branch
    %58 = sbr.rel (%p56) target = $region13
  $region12: #{_lambda_.27} parent=0 // pred_region
    %v59 = vlaneseq
    %vm60 = vcmp.ge.s32.totalorder %v59, 0
    %vm61 = vcmp.lt.s32.totalorder %v59, 256
    %vm62 = vmand %vm60, %vm61
    %63 = vst.msk [vmem:[%s3] sm:$0x3] %vm62, 0.0
    %64 = vst.msk [vmem:[%s4] sm:$0x3] %vm62, 0.0
  $region13: #{_lambda_.27} parent=0 // pred_fallthru
    _
  %v65 = vld [vmem:[%s43] sm:$0x33]
  %v66 = vld [vmem:[%s1] sm:$0xff]
  %v67 = vld [vmem:[%s1 + $0x8] sm:$0xff]
  %v68 = vld [vmem:[%s1 + $0x10] sm:$0xff]
  %v69 = vld [vmem:[%s1 + $0x18] sm:$0xff]
  %v70 = vld [vmem:[%s1 + $0x20] sm:$0xff]
  %v71 = vld [vmem:[%s1 + $0x28] sm:$0xff]
  %v72 = vld [vmem:[%s1 + $0x30] sm:$0xff]
  %v73 = vld [vmem:[%s1 + $0x38] sm:$0xff]
  %v74 = vld [vmem:[%s1 + $0x40] sm:$0xff]
  %v75 = vld [vmem:[%s1 + $0x48] sm:$0xff]
  %v76 = vld [vmem:[%s1 + $0x50] sm:$0xff]
  %v77 = vld [vmem:[%s1 + $0x58] sm:$0xff]
  %v78 = vld [vmem:[%s1 + $0x60] sm:$0xff]
  %v79 = vld [vmem:[%s1 + $0x68] sm:$0xff]
  %v80 = vld [vmem:[%s1 + $0x70] sm:$0xff]
  %v81 = vld [vmem:[%s1 + $0x78] sm:$0xff]
  %v82 = vld [vmem:[%s1 + $0x80] sm:$0xff]
  %v83 = vld [vmem:[%s1 + $0x88] sm:$0xff]
  %v84 = vld [vmem:[%s1 + $0x90] sm:$0xff]
  %v85 = vld [vmem:[%s1 + $0x98] sm:$0xff]
  %v86 = vld [vmem:[%s1 + $0xa0] sm:$0xff]
  %v87 = vld [vmem:[%s1 + $0xa8] sm:$0xff]
  %v88 = vld [vmem:[%s1 + $0xb0] sm:$0xff]
  %v89 = vld [vmem:[%s1 + $0xb8] sm:$0xff]
  %v90 = vld [vmem:[%s1 + $0xc0] sm:$0xff]
  %v91 = vld [vmem:[%s1 + $0xc8] sm:$0xff]
  %v92 = vld [vmem:[%s1 + $0xd0] sm:$0xff]
  %v93 = vld [vmem:[%s1 + $0xd8] sm:$0xff]
  %v94 = vld [vmem:[%s1 + $0xe0] sm:$0xff]
  %v95 = vld [vmem:[%s1 + $0xe8] sm:$0xff]
  %v96 = vld [vmem:[%s1 + $0xf0] sm:$0xff]
  %v97 = vld [vmem:[%s1 + $0xf8] sm:$0xff]
  %v98 = vld [vmem:[%s43] sm:$0x77]
  %s99 = scalar_lea.vmem %s1, 256
  %v100 = vld [vmem:[%s99] sm:$0xff]
  %v101 = vld [vmem:[%s99 + $0x8] sm:$0xff]
  %v102 = vld [vmem:[%s99 + $0x10] sm:$0xff]
  %v103 = vld [vmem:[%s99 + $0x18] sm:$0xff]
  %v104 = vld [vmem:[%s99 + $0x20] sm:$0xff]
  %v105 = vld [vmem:[%s99 + $0x28] sm:$0xff]
  %v106 = vld [vmem:[%s99 + $0x30] sm:$0xff]
  %v107 = vld [vmem:[%s99 + $0x38] sm:$0xff]
  %v108 = vld [vmem:[%s99 + $0x40] sm:$0xff]
  %v109 = vld [vmem:[%s99 + $0x48] sm:$0xff]
  %v110 = vld [vmem:[%s99 + $0x50] sm:$0xff]
  %v111 = vld [vmem:[%s99 + $0x58] sm:$0xff]
  %v112 = vld [vmem:[%s99 + $0x60] sm:$0xff]
  %v113 = vld [vmem:[%s99 + $0x68] sm:$0xff]
  %v114 = vld [vmem:[%s99 + $0x70] sm:$0xff]
  %v115 = vld [vmem:[%s99 + $0x78] sm:$0xff]
  %v116 = vld [vmem:[%s99 + $0x80] sm:$0xff]
  %v117 = vld [vmem:[%s99 + $0x88] sm:$0xff]
  %v118 = vld [vmem:[%s99 + $0x90] sm:$0xff]
  %v119 = vld [vmem:[%s99 + $0x98] sm:$0xff]
  %v120 = vld [vmem:[%s99 + $0xa0] sm:$0xff]
  %v121 = vld [vmem:[%s99 + $0xa8] sm:$0xff]
  %v122 = vld [vmem:[%s99 + $0xb0] sm:$0xff]
  %v123 = vld [vmem:[%s99 + $0xb8] sm:$0xff]
  %v124 = vld [vmem:[%s99 + $0xc0] sm:$0xff]
  %v125 = vld [vmem:[%s99 + $0xc8] sm:$0xff]
  %v126 = vld [vmem:[%s99 + $0xd0] sm:$0xff]
  %v127 = vld [vmem:[%s99 + $0xd8] sm:$0xff]
  %v128 = vld [vmem:[%s99 + $0xe0] sm:$0xff]
  %v129 = vld [vmem:[%s99 + $0xe8] sm:$0xff]
  %v130 = vld [vmem:[%s99 + $0xf0] sm:$0xff]
  %v131 = vld [vmem:[%s99 + $0xf8] sm:$0xff]
  %v133 = vunpack.c.l.b16 %v98
  %v134 = vunpack.c.h.b16 %v98
  %v135 = vpack.c.b16 %v133, %v133
  %v136 = vpack.c.b16 %v134, %v134
  %v138 = vshrl.u32 %v135, 16
  %v140 = vshll.u32 %v135, 16
  %v142 = vrot.slane %v140, 1
  %v143 = vor.u32 %v138, %v142
  %v145 = vshrl.u32 %v136, 16
  %v147 = vshll.u32 %v136, 16
  %v149 = vrot.slane %v147, 1
  %v150 = vor.u32 %v145, %v149
  %v185 = vunpack.c.l.b16 %v100
  %v186 = vunpack.c.h.b16 %v100
  %v187 = vunpack.c.l.b16 %v101
  %v188 = vunpack.c.h.b16 %v101
  %v189 = vunpack.c.l.b16 %v102
  %v190 = vunpack.c.h.b16 %v102
  %v191 = vunpack.c.l.b16 %v103
  %v192 = vunpack.c.h.b16 %v103
  %v193 = vunpack.c.l.b16 %v104
  %v194 = vunpack.c.h.b16 %v104
  %v195 = vunpack.c.l.b16 %v105
  %v196 = vunpack.c.h.b16 %v105
  %v197 = vunpack.c.l.b16 %v106
  %v198 = vunpack.c.h.b16 %v106
  %v199 = vunpack.c.l.b16 %v107
  %v200 = vunpack.c.h.b16 %v107
  %v201 = vunpack.c.l.b16 %v108
  %v202 = vunpack.c.h.b16 %v108
  %v203 = vunpack.c.l.b16 %v109
  %v204 = vunpack.c.h.b16 %v109
  %v205 = vunpack.c.l.b16 %v110
  %v206 = vunpack.c.h.b16 %v110
  %v207 = vunpack.c.l.b16 %v111
  %v208 = vunpack.c.h.b16 %v111
  %v209 = vunpack.c.l.b16 %v112
  %v210 = vunpack.c.h.b16 %v112
  %v211 = vunpack.c.l.b16 %v113
  %v212 = vunpack.c.h.b16 %v113
  %v213 = vunpack.c.l.b16 %v114
  %v214 = vunpack.c.h.b16 %v114
  %v215 = vunpack.c.l.b16 %v115
  %v216 = vunpack.c.h.b16 %v115
  %v217 = vunpack.c.l.b16 %v116
  %v218 = vunpack.c.h.b16 %v116
  %v219 = vunpack.c.l.b16 %v117
  %v220 = vunpack.c.h.b16 %v117
  %v221 = vunpack.c.l.b16 %v118
  %v222 = vunpack.c.h.b16 %v118
  %v223 = vunpack.c.l.b16 %v119
  %v224 = vunpack.c.h.b16 %v119
  %v225 = vunpack.c.l.b16 %v120
  %v226 = vunpack.c.h.b16 %v120
  %v227 = vunpack.c.l.b16 %v121
  %v228 = vunpack.c.h.b16 %v121
  %v229 = vunpack.c.l.b16 %v122
  %v230 = vunpack.c.h.b16 %v122
  %v231 = vunpack.c.l.b16 %v123
  %v232 = vunpack.c.h.b16 %v123
  %v233 = vunpack.c.l.b16 %v124
  %v234 = vunpack.c.h.b16 %v124
  %v235 = vunpack.c.l.b16 %v125
  %v236 = vunpack.c.h.b16 %v125
  %v237 = vunpack.c.l.b16 %v126
  %v238 = vunpack.c.h.b16 %v126
  %v239 = vunpack.c.l.b16 %v127
  %v240 = vunpack.c.h.b16 %v127
  %v241 = vunpack.c.l.b16 %v128
  %v242 = vunpack.c.h.b16 %v128
  %v243 = vunpack.c.l.b16 %v129
  %v244 = vunpack.c.h.b16 %v129
  %v245 = vunpack.c.l.b16 %v130
  %v246 = vunpack.c.h.b16 %v130
  %v247 = vunpack.c.l.b16 %v131
  %v248 = vunpack.c.h.b16 %v131
  %v249 = vpack.c.b16 %v187, %v185
  %v250 = vpack.c.b16 %v188, %v186
  %v251 = vpack.c.b16 %v191, %v189
  %v252 = vpack.c.b16 %v192, %v190
  %v253 = vpack.c.b16 %v195, %v193
  %v254 = vpack.c.b16 %v196, %v194
  %v255 = vpack.c.b16 %v199, %v197
  %v256 = vpack.c.b16 %v200, %v198
  %v257 = vpack.c.b16 %v203, %v201
  %v258 = vpack.c.b16 %v204, %v202
  %v259 = vpack.c.b16 %v207, %v205
  %v260 = vpack.c.b16 %v208, %v206
  %v261 = vpack.c.b16 %v211, %v209
  %v262 = vpack.c.b16 %v212, %v210
  %v263 = vpack.c.b16 %v215, %v213
  %v264 = vpack.c.b16 %v216, %v214
  %v265 = vpack.c.b16 %v219, %v217
  %v266 = vpack.c.b16 %v220, %v218
  %v267 = vpack.c.b16 %v223, %v221
  %v268 = vpack.c.b16 %v224, %v222
  %v269 = vpack.c.b16 %v227, %v225
  %v270 = vpack.c.b16 %v228, %v226
  %v271 = vpack.c.b16 %v231, %v229
  %v272 = vpack.c.b16 %v232, %v230
  %v273 = vpack.c.b16 %v235, %v233
  %v274 = vpack.c.b16 %v236, %v234
  %v275 = vpack.c.b16 %v239, %v237
  %v276 = vpack.c.b16 %v240, %v238
  %v277 = vpack.c.b16 %v243, %v241
  %v278 = vpack.c.b16 %v244, %v242
  %v279 = vpack.c.b16 %v247, %v245
  %v280 = vpack.c.b16 %v248, %v246
  %313 = vmatprep.subr.bf16.mxu0 %v264
  %314 = vmatpush1.bf16.msra.mxu0 %v263
  %315 = vmatprep.subr.bf16.mxu0 %v262
  %316 = vmatpush1.bf16.msra.mxu0 %v261
  %317 = vmatprep.subr.bf16.mxu0 %v260
  %318 = vmatpush1.bf16.msra.mxu0 %v259
  %319 = vmatprep.subr.bf16.mxu0 %v258
  %320 = vmatpush1.bf16.msra.mxu0 %v257
  %321 = vmatprep.subr.bf16.mxu0 %v256
  %322 = vmatpush1.bf16.msra.mxu0 %v255
  %323 = vmatprep.subr.bf16.mxu0 %v254
  %324 = vmatpush1.bf16.msra.mxu0 %v253
  %325 = vmatprep.subr.bf16.mxu0 %v252
  %326 = vmatpush1.bf16.msra.mxu0 %v251
  %327 = vmatprep.subr.bf16.mxu0 %v250
  %328 = vmatpush1.bf16.msra.mxu0 %v249
  %329 = vmatprep.subr.bf16.mxu0 %v280
  %330 = vmatpush2.bf16.msra.mxu0 %v279
  %331 = vmatprep.subr.bf16.mxu0 %v278
  %332 = vmatpush2.bf16.msra.mxu0 %v277
  %333 = vmatprep.subr.bf16.mxu0 %v276
  %334 = vmatpush2.bf16.msra.mxu0 %v275
  %335 = vmatprep.subr.bf16.mxu0 %v274
  %336 = vmatpush2.bf16.msra.mxu0 %v273
  %337 = vmatprep.subr.bf16.mxu0 %v272
  %338 = vmatpush2.bf16.msra.mxu0 %v271
  %339 = vmatprep.subr.bf16.mxu0 %v270
  %340 = vmatpush2.bf16.msra.mxu0 %v269
  %341 = vmatprep.subr.bf16.mxu0 %v268
  %342 = vmatpush2.bf16.msra.mxu0 %v267
  %343 = vmatprep.subr.bf16.mxu0 %v266
  %344 = vmatpush2.bf16.msra.mxu0 %v265
  %345 = vmatprep.mubr.bf16.mxu0 %v150
  %346 = vmatmul.mubr.bf16.gmra.mxu0 %v143
  %v347 = vpop.f32.mrf.mxu0
  %v348 = vadd.f32 0.0, %v347
  %v349 = vpop.f32.mrf.mxu0
  %v350 = vadd.f32 0.0, %v349
  %v351 = vpop.f32.mrf.mxu0
  %v352 = vpop.f32.mrf.mxu0
  %353 = vdwg.mxu0
  %v355 = vunpack.c.l.b16 %v65
  %v356 = vunpack.c.h.b16 %v65
  %v357 = vpack.c.b16 %v355, %v355
  %v358 = vpack.c.b16 %v356, %v356
  %v393 = vunpack.c.l.b16 %v66
  %v394 = vunpack.c.h.b16 %v66
  %v395 = vunpack.c.l.b16 %v67
  %v396 = vunpack.c.h.b16 %v67
  %v397 = vunpack.c.l.b16 %v68
  %v398 = vunpack.c.h.b16 %v68
  %v399 = vunpack.c.l.b16 %v69
  %v400 = vunpack.c.h.b16 %v69
  %v401 = vunpack.c.l.b16 %v70
  %v402 = vunpack.c.h.b16 %v70
  %v403 = vunpack.c.l.b16 %v71
  %v404 = vunpack.c.h.b16 %v71
  %v405 = vunpack.c.l.b16 %v72
  %v406 = vunpack.c.h.b16 %v72
  %v407 = vunpack.c.l.b16 %v73
  %v408 = vunpack.c.h.b16 %v73
  %v409 = vunpack.c.l.b16 %v74
  %v410 = vunpack.c.h.b16 %v74
  %v411 = vunpack.c.l.b16 %v75
  %v412 = vunpack.c.h.b16 %v75
  %v413 = vunpack.c.l.b16 %v76
  %v414 = vunpack.c.h.b16 %v76
  %v415 = vunpack.c.l.b16 %v77
  %v416 = vunpack.c.h.b16 %v77
  %v417 = vunpack.c.l.b16 %v78
  %v418 = vunpack.c.h.b16 %v78
  %v419 = vunpack.c.l.b16 %v79
  %v420 = vunpack.c.h.b16 %v79
  %v421 = vunpack.c.l.b16 %v80
  %v422 = vunpack.c.h.b16 %v80
  %v423 = vunpack.c.l.b16 %v81
  %v424 = vunpack.c.h.b16 %v81
  %v425 = vunpack.c.l.b16 %v82
  %v426 = vunpack.c.h.b16 %v82
  %v427 = vunpack.c.l.b16 %v83
  %v428 = vunpack.c.h.b16 %v83
  %v429 = vunpack.c.l.b16 %v84
  %v430 = vunpack.c.h.b16 %v84
  %v431 = vunpack.c.l.b16 %v85
  %v432 = vunpack.c.h.b16 %v85
  %v433 = vunpack.c.l.b16 %v86
  %v434 = vunpack.c.h.b16 %v86
  %v435 = vunpack.c.l.b16 %v87
  %v436 = vunpack.c.h.b16 %v87
  %v437 = vunpack.c.l.b16 %v88
  %v438 = vunpack.c.h.b16 %v88
  %v439 = vunpack.c.l.b16 %v89
  %v440 = vunpack.c.h.b16 %v89
  %v441 = vunpack.c.l.b16 %v90
  %v442 = vunpack.c.h.b16 %v90
  %v443 = vunpack.c.l.b16 %v91
  %v444 = vunpack.c.h.b16 %v91
  %v445 = vunpack.c.l.b16 %v92
  %v446 = vunpack.c.h.b16 %v92
  %v447 = vunpack.c.l.b16 %v93
  %v448 = vunpack.c.h.b16 %v93
  %v449 = vunpack.c.l.b16 %v94
  %v450 = vunpack.c.h.b16 %v94
  %v451 = vunpack.c.l.b16 %v95
  %v452 = vunpack.c.h.b16 %v95
  %v453 = vunpack.c.l.b16 %v96
  %v454 = vunpack.c.h.b16 %v96
  %v455 = vunpack.c.l.b16 %v97
  %v456 = vunpack.c.h.b16 %v97
  %v457 = vpack.c.b16 %v395, %v393
  %v458 = vpack.c.b16 %v396, %v394
  %v459 = vpack.c.b16 %v399, %v397
  %v460 = vpack.c.b16 %v400, %v398
  %v461 = vpack.c.b16 %v403, %v401
  %v462 = vpack.c.b16 %v404, %v402
  %v463 = vpack.c.b16 %v407, %v405
  %v464 = vpack.c.b16 %v408, %v406
  %v465 = vpack.c.b16 %v411, %v409
  %v466 = vpack.c.b16 %v412, %v410
  %v467 = vpack.c.b16 %v415, %v413
  %v468 = vpack.c.b16 %v416, %v414
  %v469 = vpack.c.b16 %v419, %v417
  %v470 = vpack.c.b16 %v420, %v418
  %v471 = vpack.c.b16 %v423, %v421
  %v472 = vpack.c.b16 %v424, %v422
  %v473 = vpack.c.b16 %v427, %v425
  %v474 = vpack.c.b16 %v428, %v426
  %v475 = vpack.c.b16 %v431, %v429
  %v476 = vpack.c.b16 %v432, %v430
  %v477 = vpack.c.b16 %v435, %v433
  %v478 = vpack.c.b16 %v436, %v434
  %v479 = vpack.c.b16 %v439, %v437
  %v480 = vpack.c.b16 %v440, %v438
  %v481 = vpack.c.b16 %v443, %v441
  %v482 = vpack.c.b16 %v444, %v442
  %v483 = vpack.c.b16 %v447, %v445
  %v484 = vpack.c.b16 %v448, %v446
  %v485 = vpack.c.b16 %v451, %v449
  %v486 = vpack.c.b16 %v452, %v450
  %v487 = vpack.c.b16 %v455, %v453
  %v488 = vpack.c.b16 %v456, %v454
  %521 = vmatprep.subr.bf16.mxu0 %v472
  %522 = vmatpush1.bf16.msra.mxu0 %v471
  %523 = vmatprep.subr.bf16.mxu0 %v470
  %524 = vmatpush1.bf16.msra.mxu0 %v469
  %525 = vmatprep.subr.bf16.mxu0 %v468
  %526 = vmatpush1.bf16.msra.mxu0 %v467
  %527 = vmatprep.subr.bf16.mxu0 %v466
  %528 = vmatpush1.bf16.msra.mxu0 %v465
  %529 = vmatprep.subr.bf16.mxu0 %v464
  %530 = vmatpush1.bf16.msra.mxu0 %v463
  %531 = vmatprep.subr.bf16.mxu0 %v462
  %532 = vmatpush1.bf16.msra.mxu0 %v461
  %533 = vmatprep.subr.bf16.mxu0 %v460
  %534 = vmatpush1.bf16.msra.mxu0 %v459
  %535 = vmatprep.subr.bf16.mxu0 %v458
  %536 = vmatpush1.bf16.msra.mxu0 %v457
  %537 = vmatprep.subr.bf16.mxu0 %v488
  %538 = vmatpush2.bf16.msra.mxu0 %v487
  %539 = vmatprep.subr.bf16.mxu0 %v486
  %540 = vmatpush2.bf16.msra.mxu0 %v485
  %541 = vmatprep.subr.bf16.mxu0 %v484
  %542 = vmatpush2.bf16.msra.mxu0 %v483
  %543 = vmatprep.subr.bf16.mxu0 %v482
  %544 = vmatpush2.bf16.msra.mxu0 %v481
  %545 = vmatprep.subr.bf16.mxu0 %v480
  %546 = vmatpush2.bf16.msra.mxu0 %v479
  %547 = vmatprep.subr.bf16.mxu0 %v478
  %548 = vmatpush2.bf16.msra.mxu0 %v477
  %549 = vmatprep.subr.bf16.mxu0 %v476
  %550 = vmatpush2.bf16.msra.mxu0 %v475
  %551 = vmatprep.subr.bf16.mxu0 %v474
  %552 = vmatpush2.bf16.msra.mxu0 %v473
  %553 = vmatprep.mubr.bf16.mxu0 %v358
  %554 = vmatmul.mubr.bf16.gmra.mxu0 %v357
  %v555 = vpop.f32.mrf.mxu0
  %v556 = vadd.f32 %v348, %v555
  %v557 = vpop.f32.mrf.mxu0
  %v558 = vadd.f32 %v350, %v557
  %v559 = vpop.f32.mrf.mxu0
  %v560 = vpop.f32.mrf.mxu0
  %561 = vdwg.mxu0
  %v562 = vld [vmem:[%s43] sm:$0x66]
  %s563 = scalar_lea.vmem %s1, 512
  %v564 = vld [vmem:[%s563] sm:$0xff]
  %v565 = vld [vmem:[%s563 + $0x8] sm:$0xff]
  %v566 = vld [vmem:[%s563 + $0x10] sm:$0xff]
  %v567 = vld [vmem:[%s563 + $0x18] sm:$0xff]
  %v568 = vld [vmem:[%s563 + $0x20] sm:$0xff]
  %v569 = vld [vmem:[%s563 + $0x28] sm:$0xff]
  %v570 = vld [vmem:[%s563 + $0x30] sm:$0xff]
  %v571 = vld [vmem:[%s563 + $0x38] sm:$0xff]
  %v572 = vld [vmem:[%s563 + $0x40] sm:$0xff]
  %v573 = vld [vmem:[%s563 + $0x48] sm:$0xff]
  %v574 = vld [vmem:[%s563 + $0x50] sm:$0xff]
  %v575 = vld [vmem:[%s563 + $0x58] sm:$0xff]
  %v576 = vld [vmem:[%s563 + $0x60] sm:$0xff]
  %v577 = vld [vmem:[%s563 + $0x68] sm:$0xff]
  %v578 = vld [vmem:[%s563 + $0x70] sm:$0xff]
  %v579 = vld [vmem:[%s563 + $0x78] sm:$0xff]
  %v580 = vld [vmem:[%s563 + $0x80] sm:$0xff]
  %v581 = vld [vmem:[%s563 + $0x88] sm:$0xff]
  %v582 = vld [vmem:[%s563 + $0x90] sm:$0xff]
  %v583 = vld [vmem:[%s563 + $0x98] sm:$0xff]
  %v584 = vld [vmem:[%s563 + $0xa0] sm:$0xff]
  %v585 = vld [vmem:[%s563 + $0xa8] sm:$0xff]
  %v586 = vld [vmem:[%s563 + $0xb0] sm:$0xff]
  %v587 = vld [vmem:[%s563 + $0xb8] sm:$0xff]
  %v588 = vld [vmem:[%s563 + $0xc0] sm:$0xff]
  %v589 = vld [vmem:[%s563 + $0xc8] sm:$0xff]
  %v590 = vld [vmem:[%s563 + $0xd0] sm:$0xff]
  %v591 = vld [vmem:[%s563 + $0xd8] sm:$0xff]
  %v592 = vld [vmem:[%s563 + $0xe0] sm:$0xff]
  %v593 = vld [vmem:[%s563 + $0xe8] sm:$0xff]
  %v594 = vld [vmem:[%s563 + $0xf0] sm:$0xff]
  %v595 = vld [vmem:[%s563 + $0xf8] sm:$0xff]
  %v597 = vunpack.c.l.b16 %v562
  %v598 = vunpack.c.h.b16 %v562
  %v599 = vpack.c.b16 %v597, %v597
  %v600 = vpack.c.b16 %v598, %v598
  %v601 = vrot.slane %v599, 1
  %v602 = vrot.slane %v600, 1
  %v637 = vunpack.c.l.b16 %v564
  %v638 = vunpack.c.h.b16 %v564
  %v639 = vunpack.c.l.b16 %v565
  %v640 = vunpack.c.h.b16 %v565
  %v641 = vunpack.c.l.b16 %v566
  %v642 = vunpack.c.h.b16 %v566
  %v643 = vunpack.c.l.b16 %v567
  %v644 = vunpack.c.h.b16 %v567
  %v645 = vunpack.c.l.b16 %v568
  %v646 = vunpack.c.h.b16 %v568
  %v647 = vunpack.c.l.b16 %v569
  %v648 = vunpack.c.h.b16 %v569
  %v649 = vunpack.c.l.b16 %v570
  %v650 = vunpack.c.h.b16 %v570
  %v651 = vunpack.c.l.b16 %v571
  %v652 = vunpack.c.h.b16 %v571
  %v653 = vunpack.c.l.b16 %v572
  %v654 = vunpack.c.h.b16 %v572
  %v655 = vunpack.c.l.b16 %v573
  %v656 = vunpack.c.h.b16 %v573
  %v657 = vunpack.c.l.b16 %v574
  %v658 = vunpack.c.h.b16 %v574
  %v659 = vunpack.c.l.b16 %v575
  %v660 = vunpack.c.h.b16 %v575
  %v661 = vunpack.c.l.b16 %v576
  %v662 = vunpack.c.h.b16 %v576
  %v663 = vunpack.c.l.b16 %v577
  %v664 = vunpack.c.h.b16 %v577
  %v665 = vunpack.c.l.b16 %v578
  %v666 = vunpack.c.h.b16 %v578
  %v667 = vunpack.c.l.b16 %v579
  %v668 = vunpack.c.h.b16 %v579
  %v669 = vunpack.c.l.b16 %v580
  %v670 = vunpack.c.h.b16 %v580
  %v671 = vunpack.c.l.b16 %v581
  %v672 = vunpack.c.h.b16 %v581
  %v673 = vunpack.c.l.b16 %v582
  %v674 = vunpack.c.h.b16 %v582
  %v675 = vunpack.c.l.b16 %v583
  %v676 = vunpack.c.h.b16 %v583
  %v677 = vunpack.c.l.b16 %v584
  %v678 = vunpack.c.h.b16 %v584
  %v679 = vunpack.c.l.b16 %v585
  %v680 = vunpack.c.h.b16 %v585
  %v681 = vunpack.c.l.b16 %v586
  %v682 = vunpack.c.h.b16 %v586
  %v683 = vunpack.c.l.b16 %v587
  %v684 = vunpack.c.h.b16 %v587
  %v685 = vunpack.c.l.b16 %v588
  %v686 = vunpack.c.h.b16 %v588
  %v687 = vunpack.c.l.b16 %v589
  %v688 = vunpack.c.h.b16 %v589
  %v689 = vunpack.c.l.b16 %v590
  %v690 = vunpack.c.h.b16 %v590
  %v691 = vunpack.c.l.b16 %v591
  %v692 = vunpack.c.h.b16 %v591
  %v693 = vunpack.c.l.b16 %v592
  %v694 = vunpack.c.h.b16 %v592
  %v695 = vunpack.c.l.b16 %v593
  %v696 = vunpack.c.h.b16 %v593
  %v697 = vunpack.c.l.b16 %v594
  %v698 = vunpack.c.h.b16 %v594
  %v699 = vunpack.c.l.b16 %v595
  %v700 = vunpack.c.h.b16 %v595
  %v701 = vpack.c.b16 %v639, %v637
  %v702 = vpack.c.b16 %v640, %v638
  %v703 = vpack.c.b16 %v643, %v641
  %v704 = vpack.c.b16 %v644, %v642
  %v705 = vpack.c.b16 %v647, %v645
  %v706 = vpack.c.b16 %v648, %v646
  %v707 = vpack.c.b16 %v651, %v649
  %v708 = vpack.c.b16 %v652, %v650
  %v709 = vpack.c.b16 %v655, %v653
  %v710 = vpack.c.b16 %v656, %v654
  %v711 = vpack.c.b16 %v659, %v657
  %v712 = vpack.c.b16 %v660, %v658
  %v713 = vpack.c.b16 %v663, %v661
  %v714 = vpack.c.b16 %v664, %v662
  %v715 = vpack.c.b16 %v667, %v665
  %v716 = vpack.c.b16 %v668, %v666
  %v717 = vpack.c.b16 %v671, %v669
  %v718 = vpack.c.b16 %v672, %v670
  %v719 = vpack.c.b16 %v675, %v673
  %v720 = vpack.c.b16 %v676, %v674
  %v721 = vpack.c.b16 %v679, %v677
  %v722 = vpack.c.b16 %v680, %v678
  %v723 = vpack.c.b16 %v683, %v681
  %v724 = vpack.c.b16 %v684, %v682
  %v725 = vpack.c.b16 %v687, %v685
  %v726 = vpack.c.b16 %v688, %v686
  %v727 = vpack.c.b16 %v691, %v689
  %v728 = vpack.c.b16 %v692, %v690
  %v729 = vpack.c.b16 %v695, %v693
  %v730 = vpack.c.b16 %v696, %v694
  %v731 = vpack.c.b16 %v699, %v697
  %v732 = vpack.c.b16 %v700, %v698
  %765 = vmatprep.subr.bf16.mxu0 %v716
  %766 = vmatpush1.bf16.msra.mxu0 %v715
  %767 = vmatprep.subr.bf16.mxu0 %v714
  %768 = vmatpush1.bf16.msra.mxu0 %v713
  %769 = vmatprep.subr.bf16.mxu0 %v712
  %770 = vmatpush1.bf16.msra.mxu0 %v711
  %771 = vmatprep.subr.bf16.mxu0 %v710
  %772 = vmatpush1.bf16.msra.mxu0 %v709
  %773 = vmatprep.subr.bf16.mxu0 %v708
  %774 = vmatpush1.bf16.msra.mxu0 %v707
  %775 = vmatprep.subr.bf16.mxu0 %v706
  %776 = vmatpush1.bf16.msra.mxu0 %v705
  %777 = vmatprep.subr.bf16.mxu0 %v704
  %778 = vmatpush1.bf16.msra.mxu0 %v703
  %779 = vmatprep.subr.bf16.mxu0 %v702
  %780 = vmatpush1.bf16.msra.mxu0 %v701
  %781 = vmatprep.subr.bf16.mxu0 %v732
  %782 = vmatpush2.bf16.msra.mxu0 %v731
  %783 = vmatprep.subr.bf16.mxu0 %v730
  %784 = vmatpush2.bf16.msra.mxu0 %v729
  %785 = vmatprep.subr.bf16.mxu0 %v728
  %786 = vmatpush2.bf16.msra.mxu0 %v727
  %787 = vmatprep.subr.bf16.mxu0 %v726
  %788 = vmatpush2.bf16.msra.mxu0 %v725
  %789 = vmatprep.subr.bf16.mxu0 %v724
  %790 = vmatpush2.bf16.msra.mxu0 %v723
  %791 = vmatprep.subr.bf16.mxu0 %v722
  %792 = vmatpush2.bf16.msra.mxu0 %v721
  %793 = vmatprep.subr.bf16.mxu0 %v720
  %794 = vmatpush2.bf16.msra.mxu0 %v719
  %795 = vmatprep.subr.bf16.mxu0 %v718
  %796 = vmatpush2.bf16.msra.mxu0 %v717
  %797 = vmatprep.mubr.bf16.mxu0 %v602
  %798 = vmatmul.mubr.bf16.gmra.mxu0 %v601
  %v799 = vpop.f32.mrf.mxu0
  %v800 = vadd.f32 0.0, %v799
  %v801 = vpop.f32.mrf.mxu0
  %v802 = vadd.f32 0.0, %v801
  %v803 = vpop.f32.mrf.mxu0
  %v804 = vpop.f32.mrf.mxu0
  %805 = vdwg.mxu0
  %v806 = vadd.f32 %v556, %v800
  %v807 = vadd.f32 %v558, %v802
  %v808 = vpack.c.bf16 %v806, %v806
  %v809 = vpack.c.bf16 %v807, %v807
  %v812 = vcombine.low %v808, %v809
  %v814 = vunpack.c.l.s4 1983009808
  %v815 = vunpack.c.0.s8 %v814
  %v816 = vlaneseq
  %v817 = vshrl.u32 %v816, 7
  %v818 = vsub.s32 %v815, %v817
  %v819 = vrot.slane %v812, %v818
  %821 = vst [vmem:[%s52] sm:$0xf] %v819
  %vm822 = vcmask 1043456
  %v823 = vsel %vm822, %v806, 0.0
  %v824 = vrot.slane %v823, 4
  %v825 = vadd.f32 %v823, %v824
  %v826 = vrot.slane %v825, 2
  %v827 = vadd.f32 %v825, %v826
  %v828 = vrot.slane %v827, 1
  %v829 = vadd.f32 %v827, %v828
  %v830 = vsel %vm822, %v807, 0.0
  %v831 = vrot.slane %v830, 4
  %v832 = vadd.f32 %v830, %v831
  %v833 = vrot.slane %v832, 2
  %v834 = vadd.f32 %v832, %v833
  %v835 = vrot.slane %v834, 1
  %v836 = vadd.f32 %v834, %v835
  %v837 = vadd.f32 %v829, 0.0
  %v838 = vadd.f32 %v836, 0.0
  %v839 = vmul.f32 %v806, %v806
  %v840 = vmul.f32 %v807, %v807
  %v841 = vsel %vm822, %v839, 0.0
  %v842 = vrot.slane %v841, 4
  %v843 = vadd.f32 %v841, %v842
  %v844 = vrot.slane %v843, 2
  %v845 = vadd.f32 %v843, %v844
  %v846 = vrot.slane %v845, 1
  %v847 = vadd.f32 %v845, %v846
  %v848 = vsel %vm822, %v840, 0.0
  %v849 = vrot.slane %v848, 4
  %v850 = vadd.f32 %v848, %v849
  %v851 = vrot.slane %v850, 2
  %v852 = vadd.f32 %v850, %v851
  %v853 = vrot.slane %v852, 1
  %v854 = vadd.f32 %v852, %v853
  %v855 = vadd.f32 %v847, 0.0
  %v856 = vadd.f32 %v854, 0.0
  %s857 = scalar_lea.vmem %s43, 8
  %v858 = vld [vmem:[%s857] sm:$0x33]
  %v859 = vld [vmem:[%s1] sm:$0xff]
  %v860 = vld [vmem:[%s1 + $0x8] sm:$0xff]
  %v861 = vld [vmem:[%s1 + $0x10] sm:$0xff]
  %v862 = vld [vmem:[%s1 + $0x18] sm:$0xff]
  %v863 = vld [vmem:[%s1 + $0x20] sm:$0xff]
  %v864 = vld [vmem:[%s1 + $0x28] sm:$0xff]
  %v865 = vld [vmem:[%s1 + $0x30] sm:$0xff]
  %v866 = vld [vmem:[%s1 + $0x38] sm:$0xff]
  %v867 = vld [vmem:[%s1 + $0x40] sm:$0xff]
  %v868 = vld [vmem:[%s1 + $0x48] sm:$0xff]
  %v869 = vld [vmem:[%s1 + $0x50] sm:$0xff]
  %v870 = vld [vmem:[%s1 + $0x58] sm:$0xff]
  %v871 = vld [vmem:[%s1 + $0x60] sm:$0xff]
  %v872 = vld [vmem:[%s1 + $0x68] sm:$0xff]
  %v873 = vld [vmem:[%s1 + $0x70] sm:$0xff]
  %v874 = vld [vmem:[%s1 + $0x78] sm:$0xff]
  %v875 = vld [vmem:[%s1 + $0x80] sm:$0xff]
  %v876 = vld [vmem:[%s1 + $0x88] sm:$0xff]
  %v877 = vld [vmem:[%s1 + $0x90] sm:$0xff]
  %v878 = vld [vmem:[%s1 + $0x98] sm:$0xff]
  %v879 = vld [vmem:[%s1 + $0xa0] sm:$0xff]
  %v880 = vld [vmem:[%s1 + $0xa8] sm:$0xff]
  %v881 = vld [vmem:[%s1 + $0xb0] sm:$0xff]
  %v882 = vld [vmem:[%s1 + $0xb8] sm:$0xff]
  %v883 = vld [vmem:[%s1 + $0xc0] sm:$0xff]
  %v884 = vld [vmem:[%s1 + $0xc8] sm:$0xff]
  %v885 = vld [vmem:[%s1 + $0xd0] sm:$0xff]
  %v886 = vld [vmem:[%s1 + $0xd8] sm:$0xff]
  %v887 = vld [vmem:[%s1 + $0xe0] sm:$0xff]
  %v888 = vld [vmem:[%s1 + $0xe8] sm:$0xff]
  %v889 = vld [vmem:[%s1 + $0xf0] sm:$0xff]
  %v890 = vld [vmem:[%s1 + $0xf8] sm:$0xff]
  %v891 = vld [vmem:[%s857] sm:$0x77]
  %v892 = vld [vmem:[%s99] sm:$0xff]
  %v893 = vld [vmem:[%s99 + $0x8] sm:$0xff]
  %v894 = vld [vmem:[%s99 + $0x10] sm:$0xff]
  %v895 = vld [vmem:[%s99 + $0x18] sm:$0xff]
  %v896 = vld [vmem:[%s99 + $0x20] sm:$0xff]
  %v897 = vld [vmem:[%s99 + $0x28] sm:$0xff]
  %v898 = vld [vmem:[%s99 + $0x30] sm:$0xff]
  %v899 = vld [vmem:[%s99 + $0x38] sm:$0xff]
  %v900 = vld [vmem:[%s99 + $0x40] sm:$0xff]
  %v901 = vld [vmem:[%s99 + $0x48] sm:$0xff]
  %v902 = vld [vmem:[%s99 + $0x50] sm:$0xff]
  %v903 = vld [vmem:[%s99 + $0x58] sm:$0xff]
  %v904 = vld [vmem:[%s99 + $0x60] sm:$0xff]
  %v905 = vld [vmem:[%s99 + $0x68] sm:$0xff]
  %v906 = vld [vmem:[%s99 + $0x70] sm:$0xff]
  %v907 = vld [vmem:[%s99 + $0x78] sm:$0xff]
  %v908 = vld [vmem:[%s99 + $0x80] sm:$0xff]
  %v909 = vld [vmem:[%s99 + $0x88] sm:$0xff]
  %v910 = vld [vmem:[%s99 + $0x90] sm:$0xff]
  %v911 = vld [vmem:[%s99 + $0x98] sm:$0xff]
  %v912 = vld [vmem:[%s99 + $0xa0] sm:$0xff]
  %v913 = vld [vmem:[%s99 + $0xa8] sm:$0xff]
  %v914 = vld [vmem:[%s99 + $0xb0] sm:$0xff]
  %v915 = vld [vmem:[%s99 + $0xb8] sm:$0xff]
  %v916 = vld [vmem:[%s99 + $0xc0] sm:$0xff]
  %v917 = vld [vmem:[%s99 + $0xc8] sm:$0xff]
  %v918 = vld [vmem:[%s99 + $0xd0] sm:$0xff]
  %v919 = vld [vmem:[%s99 + $0xd8] sm:$0xff]
  %v920 = vld [vmem:[%s99 + $0xe0] sm:$0xff]
  %v921 = vld [vmem:[%s99 + $0xe8] sm:$0xff]
  %v922 = vld [vmem:[%s99 + $0xf0] sm:$0xff]
  %v923 = vld [vmem:[%s99 + $0xf8] sm:$0xff]
  %v925 = vunpack.c.l.b16 %v891
  %v926 = vunpack.c.h.b16 %v891
  %v927 = vpack.c.b16 %v925, %v925
  %v928 = vpack.c.b16 %v926, %v926
  %v930 = vshrl.u32 %v927, 16
  %v932 = vshll.u32 %v927, 16
  %v934 = vrot.slane %v932, 1
  %v935 = vor.u32 %v930, %v934
  %v937 = vshrl.u32 %v928, 16
  %v939 = vshll.u32 %v928, 16
  %v941 = vrot.slane %v939, 1
  %v942 = vor.u32 %v937, %v941
  %v977 = vunpack.c.l.b16 %v892
  %v978 = vunpack.c.h.b16 %v892
  %v979 = vunpack.c.l.b16 %v893
  %v980 = vunpack.c.h.b16 %v893
  %v981 = vunpack.c.l.b16 %v894
  %v982 = vunpack.c.h.b16 %v894
  %v983 = vunpack.c.l.b16 %v895
  %v984 = vunpack.c.h.b16 %v895
  %v985 = vunpack.c.l.b16 %v896
  %v986 = vunpack.c.h.b16 %v896
  %v987 = vunpack.c.l.b16 %v897
  %v988 = vunpack.c.h.b16 %v897
  %v989 = vunpack.c.l.b16 %v898
  %v990 = vunpack.c.h.b16 %v898
  %v991 = vunpack.c.l.b16 %v899
  %v992 = vunpack.c.h.b16 %v899
  %v993 = vunpack.c.l.b16 %v900
  %v994 = vunpack.c.h.b16 %v900
  %v995 = vunpack.c.l.b16 %v901
  %v996 = vunpack.c.h.b16 %v901
  %v997 = vunpack.c.l.b16 %v902
  %v998 = vunpack.c.h.b16 %v902
  %v999 = vunpack.c.l.b16 %v903
  %v1000 = vunpack.c.h.b16 %v903
  %v1001 = vunpack.c.l.b16 %v904
  %v1002 = vunpack.c.h.b16 %v904
  %v1003 = vunpack.c.l.b16 %v905
  %v1004 = vunpack.c.h.b16 %v905
  %v1005 = vunpack.c.l.b16 %v906
  %v1006 = vunpack.c.h.b16 %v906
  %v1007 = vunpack.c.l.b16 %v907
  %v1008 = vunpack.c.h.b16 %v907
  %v1009 = vunpack.c.l.b16 %v908
  %v1010 = vunpack.c.h.b16 %v908
  %v1011 = vunpack.c.l.b16 %v909
  %v1012 = vunpack.c.h.b16 %v909
  %v1013 = vunpack.c.l.b16 %v910
  %v1014 = vunpack.c.h.b16 %v910
  %v1015 = vunpack.c.l.b16 %v911
  %v1016 = vunpack.c.h.b16 %v911
  %v1017 = vunpack.c.l.b16 %v912
  %v1018 = vunpack.c.h.b16 %v912
  %v1019 = vunpack.c.l.b16 %v913
  %v1020 = vunpack.c.h.b16 %v913
  %v1021 = vunpack.c.l.b16 %v914
  %v1022 = vunpack.c.h.b16 %v914
  %v1023 = vunpack.c.l.b16 %v915
  %v1024 = vunpack.c.h.b16 %v915
  %v1025 = vunpack.c.l.b16 %v916
  %v1026 = vunpack.c.h.b16 %v916
  %v1027 = vunpack.c.l.b16 %v917
  %v1028 = vunpack.c.h.b16 %v917
  %v1029 = vunpack.c.l.b16 %v918
  %v1030 = vunpack.c.h.b16 %v918
  %v1031 = vunpack.c.l.b16 %v919
  %v1032 = vunpack.c.h.b16 %v919
  %v1033 = vunpack.c.l.b16 %v920
  %v1034 = vunpack.c.h.b16 %v920
  %v1035 = vunpack.c.l.b16 %v921
  %v1036 = vunpack.c.h.b16 %v921
  %v1037 = vunpack.c.l.b16 %v922
  %v1038 = vunpack.c.h.b16 %v922
  %v1039 = vunpack.c.l.b16 %v923
  %v1040 = vunpack.c.h.b16 %v923
  %v1041 = vpack.c.b16 %v979, %v977
  %v1042 = vpack.c.b16 %v980, %v978
  %v1043 = vpack.c.b16 %v983, %v981
  %v1044 = vpack.c.b16 %v984, %v982
  %v1045 = vpack.c.b16 %v987, %v985
  %v1046 = vpack.c.b16 %v988, %v986
  %v1047 = vpack.c.b16 %v991, %v989
  %v1048 = vpack.c.b16 %v992, %v990
  %v1049 = vpack.c.b16 %v995, %v993
  %v1050 = vpack.c.b16 %v996, %v994
  %v1051 = vpack.c.b16 %v999, %v997
  %v1052 = vpack.c.b16 %v1000, %v998
  %v1053 = vpack.c.b16 %v1003, %v1001
  %v1054 = vpack.c.b16 %v1004, %v1002
  %v1055 = vpack.c.b16 %v1007, %v1005
  %v1056 = vpack.c.b16 %v1008, %v1006
  %v1057 = vpack.c.b16 %v1011, %v1009
  %v1058 = vpack.c.b16 %v1012, %v1010
  %v1059 = vpack.c.b16 %v1015, %v1013
  %v1060 = vpack.c.b16 %v1016, %v1014
  %v1061 = vpack.c.b16 %v1019, %v1017
  %v1062 = vpack.c.b16 %v1020, %v1018
  %v1063 = vpack.c.b16 %v1023, %v1021
  %v1064 = vpack.c.b16 %v1024, %v1022
  %v1065 = vpack.c.b16 %v1027, %v1025
  %v1066 = vpack.c.b16 %v1028, %v1026
  %v1067 = vpack.c.b16 %v1031, %v1029
  %v1068 = vpack.c.b16 %v1032, %v1030
  %v1069 = vpack.c.b16 %v1035, %v1033
  %v1070 = vpack.c.b16 %v1036, %v1034
  %v1071 = vpack.c.b16 %v1039, %v1037
  %v1072 = vpack.c.b16 %v1040, %v1038
  %1105 = vmatprep.subr.bf16.mxu0 %v1056
  %1106 = vmatpush1.bf16.msra.mxu0 %v1055
  %1107 = vmatprep.subr.bf16.mxu0 %v1054
  %1108 = vmatpush1.bf16.msra.mxu0 %v1053
  %1109 = vmatprep.subr.bf16.mxu0 %v1052
  %1110 = vmatpush1.bf16.msra.mxu0 %v1051
  %1111 = vmatprep.subr.bf16.mxu0 %v1050
  %1112 = vmatpush1.bf16.msra.mxu0 %v1049
  %1113 = vmatprep.subr.bf16.mxu0 %v1048
  %1114 = vmatpush1.bf16.msra.mxu0 %v1047
  %1115 = vmatprep.subr.bf16.mxu0 %v1046
  %1116 = vmatpush1.bf16.msra.mxu0 %v1045
  %1117 = vmatprep.subr.bf16.mxu0 %v1044
  %1118 = vmatpush1.bf16.msra.mxu0 %v1043
  %1119 = vmatprep.subr.bf16.mxu0 %v1042
  %1120 = vmatpush1.bf16.msra.mxu0 %v1041
  %1121 = vmatprep.subr.bf16.mxu0 %v1072
  %1122 = vmatpush2.bf16.msra.mxu0 %v1071
  %1123 = vmatprep.subr.bf16.mxu0 %v1070
  %1124 = vmatpush2.bf16.msra.mxu0 %v1069
  %1125 = vmatprep.subr.bf16.mxu0 %v1068
  %1126 = vmatpush2.bf16.msra.mxu0 %v1067
  %1127 = vmatprep.subr.bf16.mxu0 %v1066
  %1128 = vmatpush2.bf16.msra.mxu0 %v1065
  %1129 = vmatprep.subr.bf16.mxu0 %v1064
  %1130 = vmatpush2.bf16.msra.mxu0 %v1063
  %1131 = vmatprep.subr.bf16.mxu0 %v1062
  %1132 = vmatpush2.bf16.msra.mxu0 %v1061
  %1133 = vmatprep.subr.bf16.mxu0 %v1060
  %1134 = vmatpush2.bf16.msra.mxu0 %v1059
  %1135 = vmatprep.subr.bf16.mxu0 %v1058
  %1136 = vmatpush2.bf16.msra.mxu0 %v1057
  %1137 = vmatprep.mubr.bf16.mxu0 %v942
  %1138 = vmatmul.mubr.bf16.gmra.mxu0 %v935
  %v1139 = vpop.f32.mrf.mxu0
  %v1140 = vadd.f32 0.0, %v1139
  %v1141 = vpop.f32.mrf.mxu0
  %v1142 = vadd.f32 0.0, %v1141
  %v1143 = vpop.f32.mrf.mxu0
  %v1144 = vpop.f32.mrf.mxu0
  %1145 = vdwg.mxu0
  %v1147 = vunpack.c.l.b16 %v858
  %v1148 = vunpack.c.h.b16 %v858
  %v1149 = vpack.c.b16 %v1147, %v1147
  %v1150 = vpack.c.b16 %v1148, %v1148
  %v1185 = vunpack.c.l.b16 %v859
  %v1186 = vunpack.c.h.b16 %v859
  %v1187 = vunpack.c.l.b16 %v860
  %v1188 = vunpack.c.h.b16 %v860
  %v1189 = vunpack.c.l.b16 %v861
  %v1190 = vunpack.c.h.b16 %v861
  %v1191 = vunpack.c.l.b16 %v862
  %v1192 = vunpack.c.h.b16 %v862
  %v1193 = vunpack.c.l.b16 %v863
  %v1194 = vunpack.c.h.b16 %v863
  %v1195 = vunpack.c.l.b16 %v864
  %v1196 = vunpack.c.h.b16 %v864
  %v1197 = vunpack.c.l.b16 %v865
  %v1198 = vunpack.c.h.b16 %v865
  %v1199 = vunpack.c.l.b16 %v866
  %v1200 = vunpack.c.h.b16 %v866
  %v1201 = vunpack.c.l.b16 %v867
  %v1202 = vunpack.c.h.b16 %v867
  %v1203 = vunpack.c.l.b16 %v868
  %v1204 = vunpack.c.h.b16 %v868
  %v1205 = vunpack.c.l.b16 %v869
  %v1206 = vunpack.c.h.b16 %v869
  %v1207 = vunpack.c.l.b16 %v870
  %v1208 = vunpack.c.h.b16 %v870
  %v1209 = vunpack.c.l.b16 %v871
  %v1210 = vunpack.c.h.b16 %v871
  %v1211 = vunpack.c.l.b16 %v872
  %v1212 = vunpack.c.h.b16 %v872
  %v1213 = vunpack.c.l.b16 %v873
  %v1214 = vunpack.c.h.b16 %v873
  %v1215 = vunpack.c.l.b16 %v874
  %v1216 = vunpack.c.h.b16 %v874
  %v1217 = vunpack.c.l.b16 %v875
  %v1218 = vunpack.c.h.b16 %v875
  %v1219 = vunpack.c.l.b16 %v876
  %v1220 = vunpack.c.h.b16 %v876
  %v1221 = vunpack.c.l.b16 %v877
  %v1222 = vunpack.c.h.b16 %v877
  %v1223 = vunpack.c.l.b16 %v878
  %v1224 = vunpack.c.h.b16 %v878
  %v1225 = vunpack.c.l.b16 %v879
  %v1226 = vunpack.c.h.b16 %v879
  %v1227 = vunpack.c.l.b16 %v880
  %v1228 = vunpack.c.h.b16 %v880
  %v1229 = vunpack.c.l.b16 %v881
  %v1230 = vunpack.c.h.b16 %v881
  %v1231 = vunpack.c.l.b16 %v882
  %v1232 = vunpack.c.h.b16 %v882
  %v1233 = vunpack.c.l.b16 %v883
  %v1234 = vunpack.c.h.b16 %v883
  %v1235 = vunpack.c.l.b16 %v884
  %v1236 = vunpack.c.h.b16 %v884
  %v1237 = vunpack.c.l.b16 %v885
  %v1238 = vunpack.c.h.b16 %v885
  %v1239 = vunpack.c.l.b16 %v886
  %v1240 = vunpack.c.h.b16 %v886
  %v1241 = vunpack.c.l.b16 %v887
  %v1242 = vunpack.c.h.b16 %v887
  %v1243 = vunpack.c.l.b16 %v888
  %v1244 = vunpack.c.h.b16 %v888
  %v1245 = vunpack.c.l.b16 %v889
  %v1246 = vunpack.c.h.b16 %v889
  %v1247 = vunpack.c.l.b16 %v890
  %v1248 = vunpack.c.h.b16 %v890
  %v1249 = vpack.c.b16 %v1187, %v1185
  %v1250 = vpack.c.b16 %v1188, %v1186
  %v1251 = vpack.c.b16 %v1191, %v1189
  %v1252 = vpack.c.b16 %v1192, %v1190
  %v1253 = vpack.c.b16 %v1195, %v1193
  %v1254 = vpack.c.b16 %v1196, %v1194
  %v1255 = vpack.c.b16 %v1199, %v1197
  %v1256 = vpack.c.b16 %v1200, %v1198
  %v1257 = vpack.c.b16 %v1203, %v1201
  %v1258 = vpack.c.b16 %v1204, %v1202
  %v1259 = vpack.c.b16 %v1207, %v1205
  %v1260 = vpack.c.b16 %v1208, %v1206
  %v1261 = vpack.c.b16 %v1211, %v1209
  %v1262 = vpack.c.b16 %v1212, %v1210
  %v1263 = vpack.c.b16 %v1215, %v1213
  %v1264 = vpack.c.b16 %v1216, %v1214
  %v1265 = vpack.c.b16 %v1219, %v1217
  %v1266 = vpack.c.b16 %v1220, %v1218
  %v1267 = vpack.c.b16 %v1223, %v1221
  %v1268 = vpack.c.b16 %v1224, %v1222
  %v1269 = vpack.c.b16 %v1227, %v1225
  %v1270 = vpack.c.b16 %v1228, %v1226
  %v1271 = vpack.c.b16 %v1231, %v1229
  %v1272 = vpack.c.b16 %v1232, %v1230
  %v1273 = vpack.c.b16 %v1235, %v1233
  %v1274 = vpack.c.b16 %v1236, %v1234
  %v1275 = vpack.c.b16 %v1239, %v1237
  %v1276 = vpack.c.b16 %v1240, %v1238
  %v1277 = vpack.c.b16 %v1243, %v1241
  %v1278 = vpack.c.b16 %v1244, %v1242
  %v1279 = vpack.c.b16 %v1247, %v1245
  %v1280 = vpack.c.b16 %v1248, %v1246
  %1313 = vmatprep.subr.bf16.mxu0 %v1264
  %1314 = vmatpush1.bf16.msra.mxu0 %v1263
  %1315 = vmatprep.subr.bf16.mxu0 %v1262
  %1316 = vmatpush1.bf16.msra.mxu0 %v1261
  %1317 = vmatprep.subr.bf16.mxu0 %v1260
  %1318 = vmatpush1.bf16.msra.mxu0 %v1259
  %1319 = vmatprep.subr.bf16.mxu0 %v1258
  %1320 = vmatpush1.bf16.msra.mxu0 %v1257
  %1321 = vmatprep.subr.bf16.mxu0 %v1256
  %1322 = vmatpush1.bf16.msra.mxu0 %v1255
  %1323 = vmatprep.subr.bf16.mxu0 %v1254
  %1324 = vmatpush1.bf16.msra.mxu0 %v1253
  %1325 = vmatprep.subr.bf16.mxu0 %v1252
  %1326 = vmatpush1.bf16.msra.mxu0 %v1251
  %1327 = vmatprep.subr.bf16.mxu0 %v1250
  %1328 = vmatpush1.bf16.msra.mxu0 %v1249
  %1329 = vmatprep.subr.bf16.mxu0 %v1280
  %1330 = vmatpush2.bf16.msra.mxu0 %v1279
  %1331 = vmatprep.subr.bf16.mxu0 %v1278
  %1332 = vmatpush2.bf16.msra.mxu0 %v1277
  %1333 = vmatprep.subr.bf16.mxu0 %v1276
  %1334 = vmatpush2.bf16.msra.mxu0 %v1275
  %1335 = vmatprep.subr.bf16.mxu0 %v1274
  %1336 = vmatpush2.bf16.msra.mxu0 %v1273
  %1337 = vmatprep.subr.bf16.mxu0 %v1272
  %1338 = vmatpush2.bf16.msra.mxu0 %v1271
  %1339 = vmatprep.subr.bf16.mxu0 %v1270
  %1340 = vmatpush2.bf16.msra.mxu0 %v1269
  %1341 = vmatprep.subr.bf16.mxu0 %v1268
  %1342 = vmatpush2.bf16.msra.mxu0 %v1267
  %1343 = vmatprep.subr.bf16.mxu0 %v1266
  %1344 = vmatpush2.bf16.msra.mxu0 %v1265
  %1345 = vmatprep.mubr.bf16.mxu0 %v1150
  %1346 = vmatmul.mubr.bf16.gmra.mxu0 %v1149
  %v1347 = vpop.f32.mrf.mxu0
  %v1348 = vadd.f32 %v1140, %v1347
  %v1349 = vpop.f32.mrf.mxu0
  %v1350 = vadd.f32 %v1142, %v1349
  %v1351 = vpop.f32.mrf.mxu0
  %v1352 = vpop.f32.mrf.mxu0
  %1353 = vdwg.mxu0
  %v1354 = vld [vmem:[%s857] sm:$0x66]
  %v1355 = vld [vmem:[%s563] sm:$0xff]
  %v1356 = vld [vmem:[%s563 + $0x8] sm:$0xff]
  %v1357 = vld [vmem:[%s563 + $0x10] sm:$0xff]
  %v1358 = vld [vmem:[%s563 + $0x18] sm:$0xff]
  %v1359 = vld [vmem:[%s563 + $0x20] sm:$0xff]
  %v1360 = vld [vmem:[%s563 + $0x28] sm:$0xff]
  %v1361 = vld [vmem:[%s563 + $0x30] sm:$0xff]
  %v1362 = vld [vmem:[%s563 + $0x38] sm:$0xff]
  %v1363 = vld [vmem:[%s563 + $0x40] sm:$0xff]
  %v1364 = vld [vmem:[%s563 + $0x48] sm:$0xff]
  %v1365 = vld [vmem:[%s563 + $0x50] sm:$0xff]
  %v1366 = vld [vmem:[%s563 + $0x58] sm:$0xff]
  %v1367 = vld [vmem:[%s563 + $0x60] sm:$0xff]
  %v1368 = vld [vmem:[%s563 + $0x68] sm:$0xff]
  %v1369 = vld [vmem:[%s563 + $0x70] sm:$0xff]
  %v1370 = vld [vmem:[%s563 + $0x78] sm:$0xff]
  %v1371 = vld [vmem:[%s563 + $0x80] sm:$0xff]
  %v1372 = vld [vmem:[%s563 + $0x88] sm:$0xff]
  %v1373 = vld [vmem:[%s563 + $0x90] sm:$0xff]
  %v1374 = vld [vmem:[%s563 + $0x98] sm:$0xff]
  %v1375 = vld [vmem:[%s563 + $0xa0] sm:$0xff]
  %v1376 = vld [vmem:[%s563 + $0xa8] sm:$0xff]
  %v1377 = vld [vmem:[%s563 + $0xb0] sm:$0xff]
  %v1378 = vld [vmem:[%s563 + $0xb8] sm:$0xff]
  %v1379 = vld [vmem:[%s563 + $0xc0] sm:$0xff]
  %v1380 = vld [vmem:[%s563 + $0xc8] sm:$0xff]
  %v1381 = vld [vmem:[%s563 + $0xd0] sm:$0xff]
  %v1382 = vld [vmem:[%s563 + $0xd8] sm:$0xff]
  %v1383 = vld [vmem:[%s563 + $0xe0] sm:$0xff]
  %v1384 = vld [vmem:[%s563 + $0xe8] sm:$0xff]
  %v1385 = vld [vmem:[%s563 + $0xf0] sm:$0xff]
  %v1386 = vld [vmem:[%s563 + $0xf8] sm:$0xff]
  %v1388 = vunpack.c.l.b16 %v1354
  %v1389 = vunpack.c.h.b16 %v1354
  %v1390 = vpack.c.b16 %v1388, %v1388
  %v1391 = vpack.c.b16 %v1389, %v1389
  %v1392 = vrot.slane %v1390, 1
  %v1393 = vrot.slane %v1391, 1
  %v1428 = vunpack.c.l.b16 %v1355
  %v1429 = vunpack.c.h.b16 %v1355
  %v1430 = vunpack.c.l.b16 %v1356
  %v1431 = vunpack.c.h.b16 %v1356
  %v1432 = vunpack.c.l.b16 %v1357
  %v1433 = vunpack.c.h.b16 %v1357
  %v1434 = vunpack.c.l.b16 %v1358
  %v1435 = vunpack.c.h.b16 %v1358
  %v1436 = vunpack.c.l.b16 %v1359
  %v1437 = vunpack.c.h.b16 %v1359
  %v1438 = vunpack.c.l.b16 %v1360
  %v1439 = vunpack.c.h.b16 %v1360
  %v1440 = vunpack.c.l.b16 %v1361
  %v1441 = vunpack.c.h.b16 %v1361
  %v1442 = vunpack.c.l.b16 %v1362
  %v1443 = vunpack.c.h.b16 %v1362
  %v1444 = vunpack.c.l.b16 %v1363
  %v1445 = vunpack.c.h.b16 %v1363
  %v1446 = vunpack.c.l.b16 %v1364
  %v1447 = vunpack.c.h.b16 %v1364
  %v1448 = vunpack.c.l.b16 %v1365
  %v1449 = vunpack.c.h.b16 %v1365
  %v1450 = vunpack.c.l.b16 %v1366
  %v1451 = vunpack.c.h.b16 %v1366
  %v1452 = vunpack.c.l.b16 %v1367
  %v1453 = vunpack.c.h.b16 %v1367
  %v1454 = vunpack.c.l.b16 %v1368
  %v1455 = vunpack.c.h.b16 %v1368
  %v1456 = vunpack.c.l.b16 %v1369
  %v1457 = vunpack.c.h.b16 %v1369
  %v1458 = vunpack.c.l.b16 %v1370
  %v1459 = vunpack.c.h.b16 %v1370
  %v1460 = vunpack.c.l.b16 %v1371
  %v1461 = vunpack.c.h.b16 %v1371
  %v1462 = vunpack.c.l.b16 %v1372
  %v1463 = vunpack.c.h.b16 %v1372
  %v1464 = vunpack.c.l.b16 %v1373
  %v1465 = vunpack.c.h.b16 %v1373
  %v1466 = vunpack.c.l.b16 %v1374
  %v1467 = vunpack.c.h.b16 %v1374
  %v1468 = vunpack.c.l.b16 %v1375
  %v1469 = vunpack.c.h.b16 %v1375
  %v1470 = vunpack.c.l.b16 %v1376
  %v1471 = vunpack.c.h.b16 %v1376
  %v1472 = vunpack.c.l.b16 %v1377
  %v1473 = vunpack.c.h.b16 %v1377
  %v1474 = vunpack.c.l.b16 %v1378
  %v1475 = vunpack.c.h.b16 %v1378
  %v1476 = vunpack.c.l.b16 %v1379
  %v1477 = vunpack.c.h.b16 %v1379
  %v1478 = vunpack.c.l.b16 %v1380
  %v1479 = vunpack.c.h.b16 %v1380
  %v1480 = vunpack.c.l.b16 %v1381
  %v1481 = vunpack.c.h.b16 %v1381
  %v1482 = vunpack.c.l.b16 %v1382
  %v1483 = vunpack.c.h.b16 %v1382
  %v1484 = vunpack.c.l.b16 %v1383
  %v1485 = vunpack.c.h.b16 %v1383
  %v1486 = vunpack.c.l.b16 %v1384
  %v1487 = vunpack.c.h.b16 %v1384
  %v1488 = vunpack.c.l.b16 %v1385
  %v1489 = vunpack.c.h.b16 %v1385
  %v1490 = vunpack.c.l.b16 %v1386
  %v1491 = vunpack.c.h.b16 %v1386
  %v1492 = vpack.c.b16 %v1430, %v1428
  %v1493 = vpack.c.b16 %v1431, %v1429
  %v1494 = vpack.c.b16 %v1434, %v1432
  %v1495 = vpack.c.b16 %v1435, %v1433
  %v1496 = vpack.c.b16 %v1438, %v1436
  %v1497 = vpack.c.b16 %v1439, %v1437
  %v1498 = vpack.c.b16 %v1442, %v1440
  %v1499 = vpack.c.b16 %v1443, %v1441
  %v1500 = vpack.c.b16 %v1446, %v1444
  %v1501 = vpack.c.b16 %v1447, %v1445
  %v1502 = vpack.c.b16 %v1450, %v1448
  %v1503 = vpack.c.b16 %v1451, %v1449
  %v1504 = vpack.c.b16 %v1454, %v1452
  %v1505 = vpack.c.b16 %v1455, %v1453
  %v1506 = vpack.c.b16 %v1458, %v1456
  %v1507 = vpack.c.b16 %v1459, %v1457
  %v1508 = vpack.c.b16 %v1462, %v1460
  %v1509 = vpack.c.b16 %v1463, %v1461
  %v1510 = vpack.c.b16 %v1466, %v1464
  %v1511 = vpack.c.b16 %v1467, %v1465
  %v1512 = vpack.c.b16 %v1470, %v1468
  %v1513 = vpack.c.b16 %v1471, %v1469
  %v1514 = vpack.c.b16 %v1474, %v1472
  %v1515 = vpack.c.b16 %v1475, %v1473
  %v1516 = vpack.c.b16 %v1478, %v1476
  %v1517 = vpack.c.b16 %v1479, %v1477
  %v1518 = vpack.c.b16 %v1482, %v1480
  %v1519 = vpack.c.b16 %v1483, %v1481
  %v1520 = vpack.c.b16 %v1486, %v1484
  %v1521 = vpack.c.b16 %v1487, %v1485
  %v1522 = vpack.c.b16 %v1490, %v1488
  %v1523 = vpack.c.b16 %v1491, %v1489
  %1556 = vmatprep.subr.bf16.mxu0 %v1507
  %1557 = vmatpush1.bf16.msra.mxu0 %v1506
  %1558 = vmatprep.subr.bf16.mxu0 %v1505
  %1559 = vmatpush1.bf16.msra.mxu0 %v1504
  %1560 = vmatprep.subr.bf16.mxu0 %v1503
  %1561 = vmatpush1.bf16.msra.mxu0 %v1502
  %1562 = vmatprep.subr.bf16.mxu0 %v1501
  %1563 = vmatpush1.bf16.msra.mxu0 %v1500
  %1564 = vmatprep.subr.bf16.mxu0 %v1499
  %1565 = vmatpush1.bf16.msra.mxu0 %v1498
  %1566 = vmatprep.subr.bf16.mxu0 %v1497
  %1567 = vmatpush1.bf16.msra.mxu0 %v1496
  %1568 = vmatprep.subr.bf16.mxu0 %v1495
  %1569 = vmatpush1.bf16.msra.mxu0 %v1494
  %1570 = vmatprep.subr.bf16.mxu0 %v1493
  %1571 = vmatpush1.bf16.msra.mxu0 %v1492
  %1572 = vmatprep.subr.bf16.mxu0 %v1523
  %1573 = vmatpush2.bf16.msra.mxu0 %v1522
  %1574 = vmatprep.subr.bf16.mxu0 %v1521
  %1575 = vmatpush2.bf16.msra.mxu0 %v1520
  %1576 = vmatprep.subr.bf16.mxu0 %v1519
  %1577 = vmatpush2.bf16.msra.mxu0 %v1518
  %1578 = vmatprep.subr.bf16.mxu0 %v1517
  %1579 = vmatpush2.bf16.msra.mxu0 %v1516
  %1580 = vmatprep.subr.bf16.mxu0 %v1515
  %1581 = vmatpush2.bf16.msra.mxu0 %v1514
  %1582 = vmatprep.subr.bf16.mxu0 %v1513
  %1583 = vmatpush2.bf16.msra.mxu0 %v1512
  %1584 = vmatprep.subr.bf16.mxu0 %v1511
  %1585 = vmatpush2.bf16.msra.mxu0 %v1510
  %1586 = vmatprep.subr.bf16.mxu0 %v1509
  %1587 = vmatpush2.bf16.msra.mxu0 %v1508
  %1588 = vmatprep.mubr.bf16.mxu0 %v1393
  %1589 = vmatmul.mubr.bf16.gmra.mxu0 %v1392
  %v1590 = vpop.f32.mrf.mxu0
  %v1591 = vadd.f32 0.0, %v1590
  %v1592 = vpop.f32.mrf.mxu0
  %v1593 = vadd.f32 0.0, %v1592
  %v1594 = vpop.f32.mrf.mxu0
  %v1595 = vpop.f32.mrf.mxu0
  %1596 = vdwg.mxu0
  %v1597 = vadd.f32 %v1348, %v1591
  %v1598 = vadd.f32 %v1350, %v1593
  %v1599 = vpack.c.bf16 %v1597, %v1597
  %v1600 = vpack.c.bf16 %v1598, %v1598
  %v1603 = vcombine.low %v1599, %v1600
  %v1605 = vunpack.c.l.s4 1983009808
  %v1606 = vunpack.c.0.s8 %v1605
  %v1607 = vlaneseq
  %v1608 = vshrl.u32 %v1607, 7
  %v1609 = vsub.s32 %v1606, %v1608
  %v1610 = vrot.slane %v1603, %v1609
  %s1612 = scalar_lea.vmem %s52, 4
  %1613 = vst [vmem:[%s1612] sm:$0xf] %v1610
  %v1614 = vsel %vm822, %v1597, 0.0
  %v1615 = vrot.slane %v1614, 4
  %v1616 = vadd.f32 %v1614, %v1615
  %v1617 = vrot.slane %v1616, 2
  %v1618 = vadd.f32 %v1616, %v1617
  %v1619 = vrot.slane %v1618, 1
  %v1620 = vadd.f32 %v1618, %v1619
  %v1621 = vsel %vm822, %v1598, 0.0
  %v1622 = vrot.slane %v1621, 4
  %v1623 = vadd.f32 %v1621, %v1622
  %v1624 = vrot.slane %v1623, 2
  %v1625 = vadd.f32 %v1623, %v1624
  %v1626 = vrot.slane %v1625, 1
  %v1627 = vadd.f32 %v1625, %v1626
  %v1628 = vadd.f32 %v837, %v1620
  %v1629 = vadd.f32 %v838, %v1627
  %v1630 = vmul.f32 %v1597, %v1597
  %v1631 = vmul.f32 %v1598, %v1598
  %v1632 = vsel %vm822, %v1630, 0.0
  %v1633 = vrot.slane %v1632, 4
  %v1634 = vadd.f32 %v1632, %v1633
  %v1635 = vrot.slane %v1634, 2
  %v1636 = vadd.f32 %v1634, %v1635
  %v1637 = vrot.slane %v1636, 1
  %v1638 = vadd.f32 %v1636, %v1637
  %v1639 = vsel %vm822, %v1631, 0.0
  %v1640 = vrot.slane %v1639, 4
  %v1641 = vadd.f32 %v1639, %v1640
  %v1642 = vrot.slane %v1641, 2
  %v1643 = vadd.f32 %v1641, %v1642
  %v1644 = vrot.slane %v1643, 1
  %v1645 = vadd.f32 %v1643, %v1644
  %v1646 = vadd.f32 %v855, %v1638
  %v1647 = vadd.f32 %v856, %v1645
  %v1648 = vld [vmem:[%s3] sm:$0x3]
  %v1651 = vcombine.low %v1628, %v1629
  %v1653 = vunpack.c.l.s4 1966171168
  %v1654 = vunpack.c.0.s8 %v1653
  %v1655 = vlaneseq
  %v1656 = vshrl.u32 %v1655, 7
  %v1657 = vsub.s32 %v1654, %v1656
  %v1658 = vrot.slane %v1651, %v1657
  %v1660 = vunpack.c.l.s4 1966171168
  %v1661 = vunpack.c.0.s8 %v1660
  %v1662 = vlaneseq
  %v1663 = vshrl.u32 %v1662, 7
  %v1664 = vsub.s32 %v1661, %v1663
  %v1665 = vrot.slane %v1658, %v1664
  %v1667 = vadd.f32 %v1648, %v1665
  %v1668 = vlaneseq
  %vm1669 = vcmp.ge.s32.totalorder %v1668, 0
  %vm1670 = vcmp.lt.s32.totalorder %v1668, 256
  %vm1671 = vmand %vm1669, %vm1670
  %1672 = vst.msk [vmem:[%s3] sm:$0x3] %vm1671, %v1667
  %v1673 = vld [vmem:[%s4] sm:$0x3]
  %v1676 = vcombine.low %v1646, %v1647
  %v1678 = vunpack.c.l.s4 1966171168
  %v1679 = vunpack.c.0.s8 %v1678
  %v1680 = vlaneseq
  %v1681 = vshrl.u32 %v1680, 7
  %v1682 = vsub.s32 %v1679, %v1681
  %v1683 = vrot.slane %v1676, %v1682
  %v1685 = vunpack.c.l.s4 1966171168
  %v1686 = vunpack.c.0.s8 %v1685
  %v1687 = vlaneseq
  %v1688 = vshrl.u32 %v1687, 7
  %v1689 = vsub.s32 %v1686, %v1688
  %v1690 = vrot.slane %v1683, %v1689
  %v1692 = vadd.f32 %v1673, %v1690
  %1693 = vst.msk [vmem:[%s4] sm:$0x3] %vm1671, %v1692
  %s1694 = sadd.s32 0, 0
  %s1695 = smul.u32 2, %s1694
  %p1696 = scmp.lt.s32.totalorder %s1695, 1
  %s1697 = scalar_select %p1696, %s1695, 1
  %s1698 = smul.addr %s1697, 2
  %s1699 = smul.addr %s1698, 2
  %s1700 = scalar_lea.vmem %s2, %s1699
  // Predicated region
  $region14: #{_lambda_.27} parent=0 // pred_check
    _
  $region15: #{_lambda_.27} parent=0 // pred_check_branch
    %1702 = sbr.rel (0) target = $region17
  $region16: #{_lambda_.27} parent=0 // pred_region
    %s1703 = sadd.s32 0, 0
    %s1704 = smul.u32 2, %s1703
  $region17: #{_lambda_.27} parent=0 // pred_fallthru
    _
  // Predicated region
  $region18: #{_lambda_.27} parent=0 // pred_check
    _
  $region19: #{_lambda_.27} parent=0 // pred_check_branch
    %1706 = sbr.rel (0) target = $region21
  $region20: #{_lambda_.27} parent=0 // pred_region
    _
  $region21: #{_lambda_.27} parent=0 // pred_fallthru
    _
  // Predicated region
  $region22: #{_lambda_.27} parent=0 // pred_check
    _
  $region23: #{_lambda_.27} parent=0 // pred_check_branch
    %1708 = sbr.rel (0) target = $region25
  $region24: #{_lambda_.27} parent=0 // pred_region
    _
  $region25: #{_lambda_.27} parent=0 // pred_fallthru
    _
  // Predicated region
  $region26: #{_lambda_.27} parent=0 // pred_check
    _
  $region27: #{_lambda_.27} parent=0 // pred_check_branch
    %1710 = sbr.rel (0) target = $region29
  $region28: #{_lambda_.27} parent=0 // pred_region
    %s1711 = sadd.s32 0, 0
    %s1712 = smul.u32 2, %s1711
    %p1713 = scmp.lt.s32.totalorder %s1712, 1
    %s1714 = scalar_select %p1713, %s1712, 1
    %s1715 = smul.addr %s1714, 2
    %s1716 = smul.addr %s1715, 2
    %s1717 = scalar_lea.vmem %s2, %s1716
  $region29: #{_lambda_.27} parent=0 // pred_fallthru
    _
  // Predicated region
  $region30: #{_lambda_.27} parent=0 // pred_check
    _
  $region31: #{_lambda_.27} parent=0 // pred_check_branch
    %1719 = sbr.rel (0) target = $region33
  $region32: #{_lambda_.27} parent=0 // pred_region
    _
  $region33: #{_lambda_.27} parent=0 // pred_fallthru
    _
  // Predicated region
  $region34: #{_lambda_.27} parent=0 // pred_check
    _
  $region35: #{_lambda_.27} parent=0 // pred_check_branch
    %1721 = sbr.rel (0) target = $region37
  $region36: #{_lambda_.27} parent=0 // pred_region
    _
  $region37: #{_lambda_.27} parent=0 // pred_fallthru
    _

</llo_original>
